<compile_context>
chip_gen: v5e
topology: v5e:2x2
jax: 0.10.0
libtpu: 0.0.40
codegen_flags: <defaults>
</compile_context>

<pallas_src>
import numpy as np
import jax
import jax.numpy as jnp
from jax import lax
from jax.experimental import pallas as pl
from jax.experimental.pallas import tpu as pltpu

HIDDEN = 128    # hidden_size  (lane-aligned)
VOCAB = 256     # output_size  (multiple of 128)
MAX_LEN = 128   # max_length   (multiple of 128)
SEQ_T = 8       # teacher-forced decode steps executed inside the single pallas_call
N_LAYERS = 1


def _attn_decoder_kernel(
    tok_ref,        # SMEM (T,) int32   : scalar-prefetched token indices
    emb_ref,        # VMEM (V, H)       : embedding table (resident)
    hid0_ref,       # VMEM (1, H)       : initial hidden state
    enc_ref,        # VMEM (L, H)       : encoder_outputs
    attn_w_ref,     # VMEM (2H, L)
    attn_b_ref,     # VMEM (1, L)
    comb_w_ref,     # VMEM (2H, H)
    comb_b_ref,     # VMEM (1, H)
    w_ih_ref,       # VMEM (H, 3H)      : GRU input weights [r|z|n]
    b_ih_ref,       # VMEM (1, 3H)
    w_hh_ref,       # VMEM (H, 3H)      : GRU hidden weights [r|z|n]
    b_hh_ref,       # VMEM (1, 3H)
    out_w_ref,      # VMEM (H, V)
    out_b_ref,      # VMEM (1, V)
    logp_ref,       # out VMEM (T, V)   : per-step log_softmax over vocab (resident)
    newhid_ref,     # out VMEM (1, H)   : final hidden state
    attn_out_ref,   # out VMEM (T, L)   : per-step attention weights (resident)
):
    H = HIDDEN
    V = emb_ref.shape[0]
    T = logp_ref.shape[0]

    def step(t, hidden):
        tok = jnp.clip(tok_ref[t], 0, V - 1)       # clamp: VMEM access has no OOB check
        embedded = emb_ref[pl.ds(tok, 1), :]       # (1, H) dynamic row lookup in VMEM
        # TODO(synk): nn.Dropout(p=0.1) is treated as identity (inference/eval semantics).

        # --- independent K-halves first: only depend on `hidden` / `embedded`,
        #     issued before the serial attention chain (shortens MXU dependency chain). ---
        a_h = jnp.dot(hidden, attn_w_ref[H:2 * H, :], preferred_element_type=jnp.float32)
        gh = jnp.dot(hidden, w_hh_ref[...], preferred_element_type=jnp.float32) + b_hh_ref[...]
        a_e = jnp.dot(embedded, attn_w_ref[0:H, :], preferred_element_type=jnp.float32)
        c_e = jnp.dot(embedded, comb_w_ref[0:H, :], preferred_element_type=jnp.float32)

        # --- attention weights: softmax(Linear(cat(embedded, hidden))), exact division ---
        attn_logits = a_e + a_h + attn_b_ref[...]                          # (1, L)
        attn_logits = attn_logits - jnp.max(attn_logits, axis=1, keepdims=True)
        e = jnp.exp(attn_logits)
        attn_w = e / jnp.sum(e, axis=1, keepdims=True)                     # (1, L)

        # --- attention applied: attn_w @ encoder_outputs ---
        attn_applied = jnp.dot(attn_w, enc_ref[...],
                               preferred_element_type=jnp.float32)         # (1, H)

        # --- attn_combine (split-K: embedded half precomputed as c_e) ---
        output = (
            c_e
            + jnp.dot(attn_applied, comb_w_ref[H:2 * H, :],
                      preferred_element_type=jnp.float32)
            + comb_b_ref[...]
        )                                                                  # (1, H)

        # --- n_layers x (ReLU -> GRU cell); gate lanes 128-aligned ---
        for layer in range(N_LAYERS):
            x = jnp.maximum(output, 0.0)
            if layer > 0:   # first layer reuses the gh issued at the top of the step
                gh = (jnp.dot(hidden, w_hh_ref[...], preferred_element_type=jnp.float32)
                      + b_hh_ref[...])
            gi = jnp.dot(x, w_ih_ref[...], preferred_element_type=jnp.float32) + b_ih_ref[...]
            r = jax.nn.sigmoid(gi[:, 0:H] + gh[:, 0:H])
            z = jax.nn.sigmoid(gi[:, H:2 * H] + gh[:, H:2 * H])
            n = jnp.tanh(gi[:, 2 * H:3 * H] + r * gh[:, 2 * H:3 * H])
            hidden = (1.0 - z) * n + z * hidden                            # (1, H)
            output = hidden

        # --- output projection + log_softmax (exact) ---
        logits = (jnp.dot(output, out_w_ref[...], preferred_element_type=jnp.float32)
                  + out_b_ref[...])                                        # (1, V)
        m = jnp.max(logits, axis=1, keepdims=True)
        lse = jnp.log(jnp.sum(jnp.exp(logits - m), axis=1, keepdims=True)) + m

        # lane-dense row stores into resident outputs
        logp_ref[pl.ds(t, 1), :] = logits - lse
        attn_out_ref[pl.ds(t, 1), :] = attn_w
        return hidden

    hidden = lax.fori_loop(0, T, step, hid0_ref[...], unroll=True)
    newhid_ref[...] = hidden


def attn_decoder_forward(token_ids, hidden0, encoder_outputs, params):
    """Run T teacher-forced decoder steps inside a single pallas_call.

    token_ids: (T,) int32; hidden0: (1, H) f32; encoder_outputs: (L, H) f32.
    Returns (log_probs (T, V), final hidden (1, H), attention weights (T, L))."""
    T = int(token_ids.shape[0])

    def resident(shape):
        nd = len(shape)
        return pl.BlockSpec(shape, lambda i, tok: (0,) * nd)   # loaded once, stays in VMEM

    grid_spec = pltpu.PrefetchScalarGridSpec(
        num_scalar_prefetch=1,                        # token_ids -> SMEM
        grid=(1,),                                    # time loop lives inside the kernel
        in_specs=[
            resident((VOCAB, HIDDEN)),                # embedding table (128 KiB, resident)
            resident((1, HIDDEN)),                    # initial hidden
            resident((MAX_LEN, HIDDEN)),              # encoder_outputs
            resident((2 * HIDDEN, MAX_LEN)),          # attn.W^T
            resident((1, MAX_LEN)),                   # attn.b
            resident((2 * HIDDEN, HIDDEN)),           # attn_combine.W^T
            resident((1, HIDDEN)),                    # attn_combine.b
            resident((HIDDEN, 3 * HIDDEN)),           # GRU weight_ih^T [r|z|n]
            resident((1, 3 * HIDDEN)),                # GRU bias_ih
            resident((HIDDEN, 3 * HIDDEN)),           # GRU weight_hh^T [r|z|n]
            resident((1, 3 * HIDDEN)),                # GRU bias_hh
            resident((HIDDEN, VOCAB)),                # out.W^T
            resident((1, VOCAB)),                     # out.b
        ],
        out_specs=(
            pl.BlockSpec((T, VOCAB), lambda i, tok: (0, 0)),    # resident, single writeback
            pl.BlockSpec((1, HIDDEN), lambda i, tok: (0, 0)),
            pl.BlockSpec((T, MAX_LEN), lambda i, tok: (0, 0)),
        ),
    )

    out_shapes = (
        jax.ShapeDtypeStruct((T, VOCAB), jnp.float32),
        jax.ShapeDtypeStruct((1, HIDDEN), jnp.float32),
        jax.ShapeDtypeStruct((T, MAX_LEN), jnp.float32),
    )

    logp, new_hidden, attn_w = pl.pallas_call(
        _attn_decoder_kernel,
        out_shape=out_shapes,
        grid_spec=grid_spec,
        compiler_params=pltpu.CompilerParams(
            dimension_semantics=("arbitrary",),
        ),
    )(
        token_ids.astype(jnp.int32),
        params["embedding"],
        hidden0,
        encoder_outputs,
        params["attn_w"], params["attn_b"],
        params["comb_w"], params["comb_b"],
        params["w_ih"], params["b_ih"],
        params["w_hh"], params["b_hh"],
        params["out_w"], params["out_b"],
    )
    return logp, new_hidden, attn_w


def _reference_forward(token_ids, hidden, encoder_outputs, p):
    """Pure-JAX reference: T sequential calls of the PyTorch forward (eval-mode dropout)."""
    H = HIDDEN
    logps, attns = [], []
    h = hidden
    for t in range(int(token_ids.shape[0])):
        emb = p["embedding"][token_ids[t]][None, :]                  # (1, H)
        cat1 = jnp.concatenate([emb, h], axis=1)
        aw = jax.nn.softmax(cat1 @ p["attn_w"] + p["attn_b"], axis=1)
        applied = aw @ encoder_outputs
        cat2 = jnp.concatenate([emb, applied], axis=1)
        output = cat2 @ p["comb_w"] + p["comb_b"]
        for _ in range(N_LAYERS):
            x = jax.nn.relu(output)
            gi = x @ p["w_ih"] + p["b_ih"]
            gh = h @ p["w_hh"] + p["b_hh"]
            r = jax.nn.sigmoid(gi[:, :H] + gh[:, :H])
            z = jax.nn.sigmoid(gi[:, H:2 * H] + gh[:, H:2 * H])
            n = jnp.tanh(gi[:, 2 * H:] + r * gh[:, 2 * H:])
            h = (1.0 - z) * n + z * h
            output = h
        logps.append(jax.nn.log_softmax(output @ p["out_w"] + p["out_b"], axis=1))
        attns.append(aw)
    return jnp.concatenate(logps, axis=0), h, jnp.concatenate(attns, axis=0)


def _init_params(key):
    ks = jax.random.split(key, 12)
    s = 0.1
    return {
        # nn.Embedding(output_size, hidden_size)
        "embedding": s * jax.random.normal(ks[0], (VOCAB, HIDDEN), jnp.float32),
        # nn.Linear(2H, max_length) stored transposed (in, out)
        "attn_w": s * jax.random.normal(ks[1], (2 * HIDDEN, MAX_LEN), jnp.float32),
        "attn_b": s * jax.random.normal(ks[2], (1, MAX_LEN), jnp.float32),
        # nn.Linear(2H, H)
        "comb_w": s * jax.random.normal(ks[3], (2 * HIDDEN, HIDDEN), jnp.float32),
        "comb_b": s * jax.random.normal(ks[4], (1, HIDDEN), jnp.float32),
        # nn.GRU(H, H): weight_ih / weight_hh stored transposed (H, 3H), gate order [r, z, n]
        "w_ih": s * jax.random.normal(ks[5], (HIDDEN, 3 * HIDDEN), jnp.float32),
        "w_hh": s * jax.random.normal(ks[6], (HIDDEN, 3 * HIDDEN), jnp.float32),
        "b_ih": s * jax.random.normal(ks[7], (1, 3 * HIDDEN), jnp.float32),
        "b_hh": s * jax.random.normal(ks[8], (1, 3 * HIDDEN), jnp.float32),
        # nn.Linear(H, output_size)
        "out_w": s * jax.random.normal(ks[9], (HIDDEN, VOCAB), jnp.float32),
        "out_b": s * jax.random.normal(ks[10], (1, VOCAB), jnp.float32),
    }


if __name__ == "__main__":
    key = jax.random.PRNGKey(0)
    pkey, ikey, hkey, ekey = jax.random.split(key, 4)

    params = _init_params(pkey)
    token_ids = jax.random.randint(ikey, (SEQ_T,), 0, VOCAB, dtype=jnp.int32)    # teacher-forced tokens
    hidden0 = jax.random.normal(hkey, (1, HIDDEN), jnp.float32)                  # initial hidden (1,1,H) squeezed
    encoder_outputs = jax.random.normal(ekey, (MAX_LEN, HIDDEN), jnp.float32)
    # NOTE: the `encoder_output` arg of the PyTorch forward is unused, so it is omitted here.

    logp, new_hidden, attn_w = jax.block_until_ready(
        attn_decoder_forward(token_ids, hidden0, encoder_outputs, params)
    )

    ref_logp, ref_hidden, ref_attn = _reference_forward(token_ids, hidden0, encoder_outputs, params)
    assert np.allclose(np.asarray(logp), np.asarray(ref_logp), atol=2e-3)
    assert np.allclose(np.asarray(new_hidden), np.asarray(ref_hidden), atol=2e-3)
    assert np.allclose(np.asarray(attn_w), np.asarray(ref_attn), atol=2e-3)

    print("KERNEL_OK")
</pallas_src>

<mosaic_0001>
module attributes {stable_mosaic.version = 11 : i64} {
  func.func @_attn_decoder_kernel(%arg0: i32, %arg1: memref<8xi32, #tpu.memory_space<smem>>, %arg2: memref<256x128xf32, #tpu.memory_space<vmem>>, %arg3: memref<1x128xf32, #tpu.memory_space<vmem>>, %arg4: memref<128x128xf32, #tpu.memory_space<vmem>>, %arg5: memref<256x128xf32, #tpu.memory_space<vmem>>, %arg6: memref<1x128xf32, #tpu.memory_space<vmem>>, %arg7: memref<256x128xf32, #tpu.memory_space<vmem>>, %arg8: memref<1x128xf32, #tpu.memory_space<vmem>>, %arg9: memref<128x384xf32, #tpu.memory_space<vmem>>, %arg10: memref<1x384xf32, #tpu.memory_space<vmem>>, %arg11: memref<128x384xf32, #tpu.memory_space<vmem>>, %arg12: memref<1x384xf32, #tpu.memory_space<vmem>>, %arg13: memref<128x256xf32, #tpu.memory_space<vmem>>, %arg14: memref<1x256xf32, #tpu.memory_space<vmem>>, %arg15: memref<8x256xf32, #tpu.memory_space<vmem>>, %arg16: memref<1x128xf32, #tpu.memory_space<vmem>>, %arg17: memref<8x128xf32, #tpu.memory_space<vmem>>) attributes {dimension_semantics = [#tpu.dimension_semantics<arbitrary>], iteration_bounds = array<i64: 1>, scalar_prefetch = 1 : i64, scratch_operands = 0 : i64, tpu.core_type = #tpu.core_type<tc>, window_params = [{pipeline_mode = #tpu.pipeline_mode<synchronous>, transform_indices = @transform_0, window_bounds = array<i64: 256, 128>}, {pipeline_mode = #tpu.pipeline_mode<synchronous>, transform_indices = @transform_1, window_bounds = array<i64: 1, 128>}, {pipeline_mode = #tpu.pipeline_mode<synchronous>, transform_indices = @transform_2, window_bounds = array<i64: 128, 128>}, {pipeline_mode = #tpu.pipeline_mode<synchronous>, transform_indices = @transform_3, window_bounds = array<i64: 256, 128>}, {pipeline_mode = #tpu.pipeline_mode<synchronous>, transform_indices = @transform_4, window_bounds = array<i64: 1, 128>}, {pipeline_mode = #tpu.pipeline_mode<synchronous>, transform_indices = @transform_5, window_bounds = array<i64: 256, 128>}, {pipeline_mode = #tpu.pipeline_mode<synchronous>, transform_indices = @transform_6, window_bounds = array<i64: 1, 128>}, {pipeline_mode = #tpu.pipeline_mode<synchronous>, transform_indices = @transform_7, window_bounds = array<i64: 128, 384>}, {pipeline_mode = #tpu.pipeline_mode<synchronous>, transform_indices = @transform_8, window_bounds = array<i64: 1, 384>}, {pipeline_mode = #tpu.pipeline_mode<synchronous>, transform_indices = @transform_9, window_bounds = array<i64: 128, 384>}, {pipeline_mode = #tpu.pipeline_mode<synchronous>, transform_indices = @transform_10, window_bounds = array<i64: 1, 384>}, {pipeline_mode = #tpu.pipeline_mode<synchronous>, transform_indices = @transform_11, window_bounds = array<i64: 128, 256>}, {pipeline_mode = #tpu.pipeline_mode<synchronous>, transform_indices = @transform_12, window_bounds = array<i64: 1, 256>}, {pipeline_mode = #tpu.pipeline_mode<synchronous>, transform_indices = @transform_13, window_bounds = array<i64: 8, 256>}, {pipeline_mode = #tpu.pipeline_mode<synchronous>, transform_indices = @transform_14, window_bounds = array<i64: 1, 128>}, {pipeline_mode = #tpu.pipeline_mode<synchronous>, transform_indices = @transform_15, window_bounds = array<i64: 8, 128>}]} {
    %c0 = arith.constant 0 : index
    %c0_0 = arith.constant 0 : index
    %0 = vector.load %arg3[%c0, %c0_0] : memref<1x128xf32, #tpu.memory_space<vmem>>, vector<1x128xf32>
    %c0_i32 = arith.constant 0 : i32
    %1 = arith.index_cast %c0_i32 : i32 to index
    %2 = memref.load %arg1[%1] : memref<8xi32, #tpu.memory_space<smem>>
    %c0_i32_1 = arith.constant 0 : i32
    %c255_i32 = arith.constant 255 : i32
    %3 = arith.maxsi %c0_i32_1, %2 : i32
    %4 = arith.minsi %c255_i32, %3 : i32
    %5 = arith.index_cast %4 : i32 to index
    %c0_2 = arith.constant 0 : index
    %6 = vector.load %arg2[%5, %c0_2] : memref<256x128xf32, #tpu.memory_space<vmem>>, vector<1x128xf32>
    %c128 = arith.constant 128 : index
    %c0_3 = arith.constant 0 : index
    %7 = vector.load %arg5[%c128, %c0_3] : memref<256x128xf32, #tpu.memory_space<vmem>>, vector<128x128xf32>
    %cst = arith.constant dense<0.000000e+00> : vector<1x128xf32>
    %8 = tpu.matmul %0, %7, %cst {dimension_numbers = #tpu.dot_dimension_numbers<[1], [0], [0], [1], [0, 0, 1, 1], [], []>} : vector<1x128xf32>, vector<128x128xf32>, vector<1x128xf32> -> vector<1x128xf32>
    %c0_4 = arith.constant 0 : index
    %c0_5 = arith.constant 0 : index
    %9 = vector.load %arg11[%c0_4, %c0_5] : memref<128x384xf32, #tpu.memory_space<vmem>>, vector<128x384xf32>
    %cst_6 = arith.constant dense<0.000000e+00> : vector<1x384xf32>
    %10 = tpu.matmul %0, %9, %cst_6 {dimension_numbers = #tpu.dot_dimension_numbers<[1], [0], [0], [1], [0, 0, 1, 1], [], []>} : vector<1x128xf32>, vector<128x384xf32>, vector<1x384xf32> -> vector<1x384xf32>
    %c0_7 = arith.constant 0 : index
    %c0_8 = arith.constant 0 : index
    %11 = vector.load %arg12[%c0_7, %c0_8] : memref<1x384xf32, #tpu.memory_space<vmem>>, vector<1x384xf32>
    %12 = arith.addf %10, %11 : vector<1x384xf32>
    %c0_9 = arith.constant 0 : index
    %c0_10 = arith.constant 0 : index
    %13 = vector.load %arg5[%c0_9, %c0_10] : memref<256x128xf32, #tpu.memory_space<vmem>>, vector<128x128xf32>
    %cst_11 = arith.constant dense<0.000000e+00> : vector<1x128xf32>
    %14 = tpu.matmul %6, %13, %cst_11 {dimension_numbers = #tpu.dot_dimension_numbers<[1], [0], [0], [1], [0, 0, 1, 1], [], []>} : vector<1x128xf32>, vector<128x128xf32>, vector<1x128xf32> -> vector<1x128xf32>
    %c0_12 = arith.constant 0 : index
    %c0_13 = arith.constant 0 : index
    %15 = vector.load %arg7[%c0_12, %c0_13] : memref<256x128xf32, #tpu.memory_space<vmem>>, vector<128x128xf32>
    %cst_14 = arith.constant dense<0.000000e+00> : vector<1x128xf32>
    %16 = tpu.matmul %6, %15, %cst_14 {dimension_numbers = #tpu.dot_dimension_numbers<[1], [0], [0], [1], [0, 0, 1, 1], [], []>} : vector<1x128xf32>, vector<128x128xf32>, vector<1x128xf32> -> vector<1x128xf32>
    %17 = arith.addf %14, %8 : vector<1x128xf32>
    %c0_15 = arith.constant 0 : index
    %c0_16 = arith.constant 0 : index
    %18 = vector.load %arg6[%c0_15, %c0_16] : memref<1x128xf32, #tpu.memory_space<vmem>>, vector<1x128xf32>
    %19 = arith.addf %17, %18 : vector<1x128xf32>
    %cst_17 = arith.constant dense<0xFF800000> : vector<1xf32>
    %20 = vector.multi_reduction <maximumf>, %19, %cst_17 [1] : vector<1x128xf32> to vector<1xf32>
    %21 = vector.shape_cast %20 : vector<1xf32> to vector<1x1xf32>
    %22 = vector.broadcast %21 : vector<1x1xf32> to vector<1x128xf32>
    %23 = arith.subf %19, %22 : vector<1x128xf32>
    %24 = math.exp %23 : vector<1x128xf32>
    %cst_18 = arith.constant dense<0.000000e+00> : vector<1xf32>
    %25 = vector.multi_reduction <add>, %24, %cst_18 [1] : vector<1x128xf32> to vector<1xf32>
    %26 = vector.shape_cast %25 : vector<1xf32> to vector<1x1xf32>
    %27 = vector.broadcast %26 : vector<1x1xf32> to vector<1x128xf32>
    %28 = arith.divf %24, %27 : vector<1x128xf32>
    %c0_19 = arith.constant 0 : index
    %c0_20 = arith.constant 0 : index
    %29 = vector.load %arg4[%c0_19, %c0_20] : memref<128x128xf32, #tpu.memory_space<vmem>>, vector<128x128xf32>
    %cst_21 = arith.constant dense<0.000000e+00> : vector<1x128xf32>
    %30 = tpu.matmul %28, %29, %cst_21 {dimension_numbers = #tpu.dot_dimension_numbers<[1], [0], [0], [1], [0, 0, 1, 1], [], []>} : vector<1x128xf32>, vector<128x128xf32>, vector<1x128xf32> -> vector<1x128xf32>
    %c128_22 = arith.constant 128 : index
    %c0_23 = arith.constant 0 : index
    %31 = vector.load %arg7[%c128_22, %c0_23] : memref<256x128xf32, #tpu.memory_space<vmem>>, vector<128x128xf32>
    %cst_24 = arith.constant dense<0.000000e+00> : vector<1x128xf32>
    %32 = tpu.matmul %30, %31, %cst_24 {dimension_numbers = #tpu.dot_dimension_numbers<[1], [0], [0], [1], [0, 0, 1, 1], [], []>} : vector<1x128xf32>, vector<128x128xf32>, vector<1x128xf32> -> vector<1x128xf32>
    %33 = arith.addf %16, %32 : vector<1x128xf32>
    %c0_25 = arith.constant 0 : index
    %c0_26 = arith.constant 0 : index
    %34 = vector.load %arg8[%c0_25, %c0_26] : memref<1x128xf32, #tpu.memory_space<vmem>>, vector<1x128xf32>
    %35 = arith.addf %33, %34 : vector<1x128xf32>
    %cst_27 = arith.constant 0.000000e+00 : f32
    %36 = vector.broadcast %cst_27 : f32 to vector<1x128xf32>
    %37 = arith.maximumf %35, %36 : vector<1x128xf32>
    %c0_28 = arith.constant 0 : index
    %c0_29 = arith.constant 0 : index
    %38 = vector.load %arg9[%c0_28, %c0_29] : memref<128x384xf32, #tpu.memory_space<vmem>>, vector<128x384xf32>
    %cst_30 = arith.constant dense<0.000000e+00> : vector<1x384xf32>
    %39 = tpu.matmul %37, %38, %cst_30 {dimension_numbers = #tpu.dot_dimension_numbers<[1], [0], [0], [1], [0, 0, 1, 1], [], []>} : vector<1x128xf32>, vector<128x384xf32>, vector<1x384xf32> -> vector<1x384xf32>
    %c0_31 = arith.constant 0 : index
    %c0_32 = arith.constant 0 : index
    %40 = vector.load %arg10[%c0_31, %c0_32] : memref<1x384xf32, #tpu.memory_space<vmem>>, vector<1x384xf32>
    %41 = arith.addf %39, %40 : vector<1x384xf32>
    %42 = vector.extract_strided_slice %41 {offsets = [0, 0], sizes = [1, 128], strides = [1, 1]} : vector<1x384xf32> to vector<1x128xf32>
    %43 = vector.extract_strided_slice %12 {offsets = [0, 0], sizes = [1, 128], strides = [1, 1]} : vector<1x384xf32> to vector<1x128xf32>
    %44 = arith.addf %42, %43 : vector<1x128xf32>
    %45 = arith.negf %44 : vector<1x128xf32>
    %46 = math.exp %45 : vector<1x128xf32>
    %cst_33 = arith.constant 1.000000e+00 : f32
    %47 = vector.broadcast %cst_33 : f32 to vector<1x128xf32>
    %48 = arith.addf %47, %46 : vector<1x128xf32>
    %49 = arith.divf %47, %48 : vector<1x128xf32>
    %50 = vector.extract_strided_slice %41 {offsets = [0, 128], sizes = [1, 128], strides = [1, 1]} : vector<1x384xf32> to vector<1x128xf32>
    %51 = vector.extract_strided_slice %12 {offsets = [0, 128], sizes = [1, 128], strides = [1, 1]} : vector<1x384xf32> to vector<1x128xf32>
    %52 = arith.addf %50, %51 : vector<1x128xf32>
    %53 = arith.negf %52 : vector<1x128xf32>
    %54 = math.exp %53 : vector<1x128xf32>
    %cst_34 = arith.constant 1.000000e+00 : f32
    %55 = vector.broadcast %cst_34 : f32 to vector<1x128xf32>
    %56 = arith.addf %55, %54 : vector<1x128xf32>
    %57 = arith.divf %55, %56 : vector<1x128xf32>
    %58 = vector.extract_strided_slice %41 {offsets = [0, 256], sizes = [1, 128], strides = [1, 1]} : vector<1x384xf32> to vector<1x128xf32>
    %59 = vector.extract_strided_slice %12 {offsets = [0, 256], sizes = [1, 128], strides = [1, 1]} : vector<1x384xf32> to vector<1x128xf32>
    %60 = arith.mulf %49, %59 : vector<1x128xf32>
    %61 = arith.addf %58, %60 : vector<1x128xf32>
    %62 = math.tanh %61 : vector<1x128xf32>
    %cst_35 = arith.constant 1.000000e+00 : f32
    %63 = vector.broadcast %cst_35 : f32 to vector<1x128xf32>
    %64 = arith.subf %63, %57 : vector<1x128xf32>
    %65 = arith.mulf %64, %62 : vector<1x128xf32>
    %66 = arith.mulf %57, %0 : vector<1x128xf32>
    %67 = arith.addf %65, %66 : vector<1x128xf32>
    %c0_36 = arith.constant 0 : index
    %c0_37 = arith.constant 0 : index
    %68 = vector.load %arg13[%c0_36, %c0_37] : memref<128x256xf32, #tpu.memory_space<vmem>>, vector<128x256xf32>
    %cst_38 = arith.constant dense<0.000000e+00> : vector<1x256xf32>
    %69 = tpu.matmul %67, %68, %cst_38 {dimension_numbers = #tpu.dot_dimension_numbers<[1], [0], [0], [1], [0, 0, 1, 1], [], []>} : vector<1x128xf32>, vector<128x256xf32>, vector<1x256xf32> -> vector<1x256xf32>
    %c0_39 = arith.constant 0 : index
    %c0_40 = arith.constant 0 : index
    %70 = vector.load %arg14[%c0_39, %c0_40] : memref<1x256xf32, #tpu.memory_space<vmem>>, vector<1x256xf32>
    %71 = arith.addf %69, %70 : vector<1x256xf32>
    %cst_41 = arith.constant dense<0xFF800000> : vector<1xf32>
    %72 = vector.multi_reduction <maximumf>, %71, %cst_41 [1] : vector<1x256xf32> to vector<1xf32>
    %73 = vector.shape_cast %72 : vector<1xf32> to vector<1x1xf32>
    %74 = vector.broadcast %73 : vector<1x1xf32> to vector<1x256xf32>
    %75 = arith.subf %71, %74 : vector<1x256xf32>
    %76 = math.exp %75 : vector<1x256xf32>
    %cst_42 = arith.constant dense<0.000000e+00> : vector<1xf32>
    %77 = vector.multi_reduction <add>, %76, %cst_42 [1] : vector<1x256xf32> to vector<1xf32>
    %78 = vector.shape_cast %77 : vector<1xf32> to vector<1x1xf32>
    %79 = math.log %78 : vector<1x1xf32>
    %80 = arith.addf %79, %73 : vector<1x1xf32>
    %81 = vector.broadcast %80 : vector<1x1xf32> to vector<1x256xf32>
    %82 = arith.subf %71, %81 : vector<1x256xf32>
    %83 = arith.index_cast %c0_i32 : i32 to index
    %c0_43 = arith.constant 0 : index
    %84 = vector.load %arg15[%83, %c0_43] : memref<8x256xf32, #tpu.memory_space<vmem>>, vector<1x256xf32>
    tpu.vector_store %arg15[%83, %c0_43], %82 {strides = array<i32>} : memref<8x256xf32, #tpu.memory_space<vmem>>, vector<1x256xf32>,
    %85 = arith.index_cast %c0_i32 : i32 to index
    %c0_44 = arith.constant 0 : index
    %86 = vector.load %arg17[%85, %c0_44] : memref<8x128xf32, #tpu.memory_space<vmem>>, vector<1x128xf32>
    tpu.vector_store %arg17[%85, %c0_44], %28 {strides = array<i32>} : memref<8x128xf32, #tpu.memory_space<vmem>>, vector<1x128xf32>,
    %c1_i32 = arith.constant 1 : i32
    %87 = arith.index_cast %c1_i32 : i32 to index
    %88 = memref.load %arg1[%87] : memref<8xi32, #tpu.memory_space<smem>>
    %c0_i32_45 = arith.constant 0 : i32
    %c255_i32_46 = arith.constant 255 : i32
    %89 = arith.maxsi %c0_i32_45, %88 : i32
    %90 = arith.minsi %c255_i32_46, %89 : i32
    %91 = arith.index_cast %90 : i32 to index
    %c0_47 = arith.constant 0 : index
    %92 = vector.load %arg2[%91, %c0_47] : memref<256x128xf32, #tpu.memory_space<vmem>>, vector<1x128xf32>
    %c128_48 = arith.constant 128 : index
    %c0_49 = arith.constant 0 : index
    %93 = vector.load %arg5[%c128_48, %c0_49] : memref<256x128xf32, #tpu.memory_space<vmem>>, vector<128x128xf32>
    %cst_50 = arith.constant dense<0.000000e+00> : vector<1x128xf32>
    %94 = tpu.matmul %67, %93, %cst_50 {dimension_numbers = #tpu.dot_dimension_numbers<[1], [0], [0], [1], [0, 0, 1, 1], [], []>} : vector<1x128xf32>, vector<128x128xf32>, vector<1x128xf32> -> vector<1x128xf32>
    %c0_51 = arith.constant 0 : index
    %c0_52 = arith.constant 0 : index
    %95 = vector.load %arg11[%c0_51, %c0_52] : memref<128x384xf32, #tpu.memory_space<vmem>>, vector<128x384xf32>
    %cst_53 = arith.constant dense<0.000000e+00> : vector<1x384xf32>
    %96 = tpu.matmul %67, %95, %cst_53 {dimension_numbers = #tpu.dot_dimension_numbers<[1], [0], [0], [1], [0, 0, 1, 1], [], []>} : vector<1x128xf32>, vector<128x384xf32>, vector<1x384xf32> -> vector<1x384xf32>
    %c0_54 = arith.constant 0 : index
    %c0_55 = arith.constant 0 : index
    %97 = vector.load %arg12[%c0_54, %c0_55] : memref<1x384xf32, #tpu.memory_space<vmem>>, vector<1x384xf32>
    %98 = arith.addf %96, %97 : vector<1x384xf32>
    %c0_56 = arith.constant 0 : index
    %c0_57 = arith.constant 0 : index
    %99 = vector.load %arg5[%c0_56, %c0_57] : memref<256x128xf32, #tpu.memory_space<vmem>>, vector<128x128xf32>
    %cst_58 = arith.constant dense<0.000000e+00> : vector<1x128xf32>
    %100 = tpu.matmul %92, %99, %cst_58 {dimension_numbers = #tpu.dot_dimension_numbers<[1], [0], [0], [1], [0, 0, 1, 1], [], []>} : vector<1x128xf32>, vector<128x128xf32>, vector<1x128xf32> -> vector<1x128xf32>
    %c0_59 = arith.constant 0 : index
    %c0_60 = arith.constant 0 : index
    %101 = vector.load %arg7[%c0_59, %c0_60] : memref<256x128xf32, #tpu.memory_space<vmem>>, vector<128x128xf32>
    %cst_61 = arith.constant dense<0.000000e+00> : vector<1x128xf32>
    %102 = tpu.matmul %92, %101, %cst_61 {dimension_numbers = #tpu.dot_dimension_numbers<[1], [0], [0], [1], [0, 0, 1, 1], [], []>} : vector<1x128xf32>, vector<128x128xf32>, vector<1x128xf32> -> vector<1x128xf32>
    %103 = arith.addf %100, %94 : vector<1x128xf32>
    %c0_62 = arith.constant 0 : index
    %c0_63 = arith.constant 0 : index
    %104 = vector.load %arg6[%c0_62, %c0_63] : memref<1x128xf32, #tpu.memory_space<vmem>>, vector<1x128xf32>
    %105 = arith.addf %103, %104 : vector<1x128xf32>
    %cst_64 = arith.constant dense<0xFF800000> : vector<1xf32>
    %106 = vector.multi_reduction <maximumf>, %105, %cst_64 [1] : vector<1x128xf32> to vector<1xf32>
    %107 = vector.shape_cast %106 : vector<1xf32> to vector<1x1xf32>
    %108 = vector.broadcast %107 : vector<1x1xf32> to vector<1x128xf32>
    %109 = arith.subf %105, %108 : vector<1x128xf32>
    %110 = math.exp %109 : vector<1x128xf32>
    %cst_65 = arith.constant dense<0.000000e+00> : vector<1xf32>
    %111 = vector.multi_reduction <add>, %110, %cst_65 [1] : vector<1x128xf32> to vector<1xf32>
    %112 = vector.shape_cast %111 : vector<1xf32> to vector<1x1xf32>
    %113 = vector.broadcast %112 : vector<1x1xf32> to vector<1x128xf32>
    %114 = arith.divf %110, %113 : vector<1x128xf32>
    %c0_66 = arith.constant 0 : index
    %c0_67 = arith.constant 0 : index
    %115 = vector.load %arg4[%c0_66, %c0_67] : memref<128x128xf32, #tpu.memory_space<vmem>>, vector<128x128xf32>
    %cst_68 = arith.constant dense<0.000000e+00> : vector<1x128xf32>
    %116 = tpu.matmul %114, %115, %cst_68 {dimension_numbers = #tpu.dot_dimension_numbers<[1], [0], [0], [1], [0, 0, 1, 1], [], []>} : vector<1x128xf32>, vector<128x128xf32>, vector<1x128xf32> -> vector<1x128xf32>
    %c128_69 = arith.constant 128 : index
    %c0_70 = arith.constant 0 : index
    %117 = vector.load %arg7[%c128_69, %c0_70] : memref<256x128xf32, #tpu.memory_space<vmem>>, vector<128x128xf32>
    %cst_71 = arith.constant dense<0.000000e+00> : vector<1x128xf32>
    %118 = tpu.matmul %116, %117, %cst_71 {dimension_numbers = #tpu.dot_dimension_numbers<[1], [0], [0], [1], [0, 0, 1, 1], [], []>} : vector<1x128xf32>, vector<128x128xf32>, vector<1x128xf32> -> vector<1x128xf32>
    %119 = arith.addf %102, %118 : vector<1x128xf32>
    %c0_72 = arith.constant 0 : index
    %c0_73 = arith.constant 0 : index
    %120 = vector.load %arg8[%c0_72, %c0_73] : memref<1x128xf32, #tpu.memory_space<vmem>>, vector<1x128xf32>
    %121 = arith.addf %119, %120 : vector<1x128xf32>
    %cst_74 = arith.constant 0.000000e+00 : f32
    %122 = vector.broadcast %cst_74 : f32 to vector<1x128xf32>
    %123 = arith.maximumf %121, %122 : vector<1x128xf32>
    %c0_75 = arith.constant 0 : index
    %c0_76 = arith.constant 0 : index
    %124 = vector.load %arg9[%c0_75, %c0_76] : memref<128x384xf32, #tpu.memory_space<vmem>>, vector<128x384xf32>
    %cst_77 = arith.constant dense<0.000000e+00> : vector<1x384xf32>
    %125 = tpu.matmul %123, %124, %cst_77 {dimension_numbers = #tpu.dot_dimension_numbers<[1], [0], [0], [1], [0, 0, 1, 1], [], []>} : vector<1x128xf32>, vector<128x384xf32>, vector<1x384xf32> -> vector<1x384xf32>
    %c0_78 = arith.constant 0 : index
    %c0_79 = arith.constant 0 : index
    %126 = vector.load %arg10[%c0_78, %c0_79] : memref<1x384xf32, #tpu.memory_space<vmem>>, vector<1x384xf32>
    %127 = arith.addf %125, %126 : vector<1x384xf32>
    %128 = vector.extract_strided_slice %127 {offsets = [0, 0], sizes = [1, 128], strides = [1, 1]} : vector<1x384xf32> to vector<1x128xf32>
    %129 = vector.extract_strided_slice %98 {offsets = [0, 0], sizes = [1, 128], strides = [1, 1]} : vector<1x384xf32> to vector<1x128xf32>
    %130 = arith.addf %128, %129 : vector<1x128xf32>
    %131 = arith.negf %130 : vector<1x128xf32>
    %132 = math.exp %131 : vector<1x128xf32>
    %cst_80 = arith.constant 1.000000e+00 : f32
    %133 = vector.broadcast %cst_80 : f32 to vector<1x128xf32>
    %134 = arith.addf %133, %132 : vector<1x128xf32>
    %135 = arith.divf %133, %134 : vector<1x128xf32>
    %136 = vector.extract_strided_slice %127 {offsets = [0, 128], sizes = [1, 128], strides = [1, 1]} : vector<1x384xf32> to vector<1x128xf32>
    %137 = vector.extract_strided_slice %98 {offsets = [0, 128], sizes = [1, 128], strides = [1, 1]} : vector<1x384xf32> to vector<1x128xf32>
    %138 = arith.addf %136, %137 : vector<1x128xf32>
    %139 = arith.negf %138 : vector<1x128xf32>
    %140 = math.exp %139 : vector<1x128xf32>
    %cst_81 = arith.constant 1.000000e+00 : f32
    %141 = vector.broadcast %cst_81 : f32 to vector<1x128xf32>
    %142 = arith.addf %141, %140 : vector<1x128xf32>
    %143 = arith.divf %141, %142 : vector<1x128xf32>
    %144 = vector.extract_strided_slice %127 {offsets = [0, 256], sizes = [1, 128], strides = [1, 1]} : vector<1x384xf32> to vector<1x128xf32>
    %145 = vector.extract_strided_slice %98 {offsets = [0, 256], sizes = [1, 128], strides = [1, 1]} : vector<1x384xf32> to vector<1x128xf32>
    %146 = arith.mulf %135, %145 : vector<1x128xf32>
    %147 = arith.addf %144, %146 : vector<1x128xf32>
    %148 = math.tanh %147 : vector<1x128xf32>
    %cst_82 = arith.constant 1.000000e+00 : f32
    %149 = vector.broadcast %cst_82 : f32 to vector<1x128xf32>
    %150 = arith.subf %149, %143 : vector<1x128xf32>
    %151 = arith.mulf %150, %148 : vector<1x128xf32>
    %152 = arith.mulf %143, %67 : vector<1x128xf32>
    %153 = arith.addf %151, %152 : vector<1x128xf32>
    %c0_83 = arith.constant 0 : index
    %c0_84 = arith.constant 0 : index
    %154 = vector.load %arg13[%c0_83, %c0_84] : memref<128x256xf32, #tpu.memory_space<vmem>>, vector<128x256xf32>
    %cst_85 = arith.constant dense<0.000000e+00> : vector<1x256xf32>
    %155 = tpu.matmul %153, %154, %cst_85 {dimension_numbers = #tpu.dot_dimension_numbers<[1], [0], [0], [1], [0, 0, 1, 1], [], []>} : vector<1x128xf32>, vector<128x256xf32>, vector<1x256xf32> -> vector<1x256xf32>
    %c0_86 = arith.constant 0 : index
    %c0_87 = arith.constant 0 : index
    %156 = vector.load %arg14[%c0_86, %c0_87] : memref<1x256xf32, #tpu.memory_space<vmem>>, vector<1x256xf32>
    %157 = arith.addf %155, %156 : vector<1x256xf32>
    %cst_88 = arith.constant dense<0xFF800000> : vector<1xf32>
    %158 = vector.multi_reduction <maximumf>, %157, %cst_88 [1] : vector<1x256xf32> to vector<1xf32>
    %159 = vector.shape_cast %158 : vector<1xf32> to vector<1x1xf32>
    %160 = vector.broadcast %159 : vector<1x1xf32> to vector<1x256xf32>
    %161 = arith.subf %157, %160 : vector<1x256xf32>
    %162 = math.exp %161 : vector<1x256xf32>
    %cst_89 = arith.constant dense<0.000000e+00> : vector<1xf32>
    %163 = vector.multi_reduction <add>, %162, %cst_89 [1] : vector<1x256xf32> to vector<1xf32>
    %164 = vector.shape_cast %163 : vector<1xf32> to vector<1x1xf32>
    %165 = math.log %164 : vector<1x1xf32>
    %166 = arith.addf %165, %159 : vector<1x1xf32>
    %167 = vector.broadcast %166 : vector<1x1xf32> to vector<1x256xf32>
    %168 = arith.subf %157, %167 : vector<1x256xf32>
    %169 = arith.index_cast %c1_i32 : i32 to index
    %c0_90 = arith.constant 0 : index
    %170 = vector.load %arg15[%169, %c0_90] : memref<8x256xf32, #tpu.memory_space<vmem>>, vector<1x256xf32>
    tpu.vector_store %arg15[%169, %c0_90], %168 {strides = array<i32>} : memref<8x256xf32, #tpu.memory_space<vmem>>, vector<1x256xf32>,
    %171 = arith.index_cast %c1_i32 : i32 to index
    %c0_91 = arith.constant 0 : index
    %172 = vector.load %arg17[%171, %c0_91] : memref<8x128xf32, #tpu.memory_space<vmem>>, vector<1x128xf32>
    tpu.vector_store %arg17[%171, %c0_91], %114 {strides = array<i32>} : memref<8x128xf32, #tpu.memory_space<vmem>>, vector<1x128xf32>,
    %c2_i32 = arith.constant 2 : i32
    %173 = arith.index_cast %c2_i32 : i32 to index
    %174 = memref.load %arg1[%173] : memref<8xi32, #tpu.memory_space<smem>>
    %c0_i32_92 = arith.constant 0 : i32
    %c255_i32_93 = arith.constant 255 : i32
    %175 = arith.maxsi %c0_i32_92, %174 : i32
    %176 = arith.minsi %c255_i32_93, %175 : i32
    %177 = arith.index_cast %176 : i32 to index
    %c0_94 = arith.constant 0 : index
    %178 = vector.load %arg2[%177, %c0_94] : memref<256x128xf32, #tpu.memory_space<vmem>>, vector<1x128xf32>
    %c128_95 = arith.constant 128 : index
    %c0_96 = arith.constant 0 : index
    %179 = vector.load %arg5[%c128_95, %c0_96] : memref<256x128xf32, #tpu.memory_space<vmem>>, vector<128x128xf32>
    %cst_97 = arith.constant dense<0.000000e+00> : vector<1x128xf32>
    %180 = tpu.matmul %153, %179, %cst_97 {dimension_numbers = #tpu.dot_dimension_numbers<[1], [0], [0], [1], [0, 0, 1, 1], [], []>} : vector<1x128xf32>, vector<128x128xf32>, vector<1x128xf32> -> vector<1x128xf32>
    %c0_98 = arith.constant 0 : index
    %c0_99 = arith.constant 0 : index
    %181 = vector.load %arg11[%c0_98, %c0_99] : memref<128x384xf32, #tpu.memory_space<vmem>>, vector<128x384xf32>
    %cst_100 = arith.constant dense<0.000000e+00> : vector<1x384xf32>
    %182 = tpu.matmul %153, %181, %cst_100 {dimension_numbers = #tpu.dot_dimension_numbers<[1], [0], [0], [1], [0, 0, 1, 1], [], []>} : vector<1x128xf32>, vector<128x384xf32>, vector<1x384xf32> -> vector<1x384xf32>
    %c0_101 = arith.constant 0 : index
    %c0_102 = arith.constant 0 : index
    %183 = vector.load %arg12[%c0_101, %c0_102] : memref<1x384xf32, #tpu.memory_space<vmem>>, vector<1x384xf32>
    %184 = arith.addf %182, %183 : vector<1x384xf32>
    %c0_103 = arith.constant 0 : index
    %c0_104 = arith.constant 0 : index
    %185 = vector.load %arg5[%c0_103, %c0_104] : memref<256x128xf32, #tpu.memory_space<vmem>>, vector<128x128xf32>
    %cst_105 = arith.constant dense<0.000000e+00> : vector<1x128xf32>
    %186 = tpu.matmul %178, %185, %cst_105 {dimension_numbers = #tpu.dot_dimension_numbers<[1], [0], [0], [1], [0, 0, 1, 1], [], []>} : vector<1x128xf32>, vector<128x128xf32>, vector<1x128xf32> -> vector<1x128xf32>
    %c0_106 = arith.constant 0 : index
    %c0_107 = arith.constant 0 : index
    %187 = vector.load %arg7[%c0_106, %c0_107] : memref<256x128xf32, #tpu.memory_space<vmem>>, vector<128x128xf32>
    %cst_108 = arith.constant dense<0.000000e+00> : vector<1x128xf32>
    %188 = tpu.matmul %178, %187, %cst_108 {dimension_numbers = #tpu.dot_dimension_numbers<[1], [0], [0], [1], [0, 0, 1, 1], [], []>} : vector<1x128xf32>, vector<128x128xf32>, vector<1x128xf32> -> vector<1x128xf32>
    %189 = arith.addf %186, %180 : vector<1x128xf32>
    %c0_109 = arith.constant 0 : index
    %c0_110 = arith.constant 0 : index
    %190 = vector.load %arg6[%c0_109, %c0_110] : memref<1x128xf32, #tpu.memory_space<vmem>>, vector<1x128xf32>
    %191 = arith.addf %189, %190 : vector<1x128xf32>
    %cst_111 = arith.constant dense<0xFF800000> : vector<1xf32>
    %192 = vector.multi_reduction <maximumf>, %191, %cst_111 [1] : vector<1x128xf32> to vector<1xf32>
    %193 = vector.shape_cast %192 : vector<1xf32> to vector<1x1xf32>
    %194 = vector.broadcast %193 : vector<1x1xf32> to vector<1x128xf32>
    %195 = arith.subf %191, %194 : vector<1x128xf32>
    %196 = math.exp %195 : vector<1x128xf32>
    %cst_112 = arith.constant dense<0.000000e+00> : vector<1xf32>
    %197 = vector.multi_reduction <add>, %196, %cst_112 [1] : vector<1x128xf32> to vector<1xf32>
    %198 = vector.shape_cast %197 : vector<1xf32> to vector<1x1xf32>
    %199 = vector.broadcast %198 : vector<1x1xf32> to vector<1x128xf32>
    %200 = arith.divf %196, %199 : vector<1x128xf32>
    %c0_113 = arith.constant 0 : index
    %c0_114 = arith.constant 0 : index
    %201 = vector.load %arg4[%c0_113, %c0_114] : memref<128x128xf32, #tpu.memory_space<vmem>>, vector<128x128xf32>
    %cst_115 = arith.constant dense<0.000000e+00> : vector<1x128xf32>
    %202 = tpu.matmul %200, %201, %cst_115 {dimension_numbers = #tpu.dot_dimension_numbers<[1], [0], [0], [1], [0, 0, 1, 1], [], []>} : vector<1x128xf32>, vector<128x128xf32>, vector<1x128xf32> -> vector<1x128xf32>
    %c128_116 = arith.constant 128 : index
    %c0_117 = arith.constant 0 : index
    %203 = vector.load %arg7[%c128_116, %c0_117] : memref<256x128xf32, #tpu.memory_space<vmem>>, vector<128x128xf32>
    %cst_118 = arith.constant dense<0.000000e+00> : vector<1x128xf32>
    %204 = tpu.matmul %202, %203, %cst_118 {dimension_numbers = #tpu.dot_dimension_numbers<[1], [0], [0], [1], [0, 0, 1, 1], [], []>} : vector<1x128xf32>, vector<128x128xf32>, vector<1x128xf32> -> vector<1x128xf32>
    %205 = arith.addf %188, %204 : vector<1x128xf32>
    %c0_119 = arith.constant 0 : index
    %c0_120 = arith.constant 0 : index
    %206 = vector.load %arg8[%c0_119, %c0_120] : memref<1x128xf32, #tpu.memory_space<vmem>>, vector<1x128xf32>
    %207 = arith.addf %205, %206 : vector<1x128xf32>
    %cst_121 = arith.constant 0.000000e+00 : f32
    %208 = vector.broadcast %cst_121 : f32 to vector<1x128xf32>
    %209 = arith.maximumf %207, %208 : vector<1x128xf32>
    %c0_122 = arith.constant 0 : index
    %c0_123 = arith.constant 0 : index
    %210 = vector.load %arg9[%c0_122, %c0_123] : memref<128x384xf32, #tpu.memory_space<vmem>>, vector<128x384xf32>
    %cst_124 = arith.constant dense<0.000000e+00> : vector<1x384xf32>
    %211 = tpu.matmul %209, %210, %cst_124 {dimension_numbers = #tpu.dot_dimension_numbers<[1], [0], [0], [1], [0, 0, 1, 1], [], []>} : vector<1x128xf32>, vector<128x384xf32>, vector<1x384xf32> -> vector<1x384xf32>
    %c0_125 = arith.constant 0 : index
    %c0_126 = arith.constant 0 : index
    %212 = vector.load %arg10[%c0_125, %c0_126] : memref<1x384xf32, #tpu.memory_space<vmem>>, vector<1x384xf32>
    %213 = arith.addf %211, %212 : vector<1x384xf32>
    %214 = vector.extract_strided_slice %213 {offsets = [0, 0], sizes = [1, 128], strides = [1, 1]} : vector<1x384xf32> to vector<1x128xf32>
    %215 = vector.extract_strided_slice %184 {offsets = [0, 0], sizes = [1, 128], strides = [1, 1]} : vector<1x384xf32> to vector<1x128xf32>
    %216 = arith.addf %214, %215 : vector<1x128xf32>
    %217 = arith.negf %216 : vector<1x128xf32>
    %218 = math.exp %217 : vector<1x128xf32>
    %cst_127 = arith.constant 1.000000e+00 : f32
    %219 = vector.broadcast %cst_127 : f32 to vector<1x128xf32>
    %220 = arith.addf %219, %218 : vector<1x128xf32>
    %221 = arith.divf %219, %220 : vector<1x128xf32>
    %222 = vector.extract_strided_slice %213 {offsets = [0, 128], sizes = [1, 128], strides = [1, 1]} : vector<1x384xf32> to vector<1x128xf32>
    %223 = vector.extract_strided_slice %184 {offsets = [0, 128], sizes = [1, 128], strides = [1, 1]} : vector<1x384xf32> to vector<1x128xf32>
    %224 = arith.addf %222, %223 : vector<1x128xf32>
    %225 = arith.negf %224 : vector<1x128xf32>
    %226 = math.exp %225 : vector<1x128xf32>
    %cst_128 = arith.constant 1.000000e+00 : f32
    %227 = vector.broadcast %cst_128 : f32 to vector<1x128xf32>
    %228 = arith.addf %227, %226 : vector<1x128xf32>
    %229 = arith.divf %227, %228 : vector<1x128xf32>
    %230 = vector.extract_strided_slice %213 {offsets = [0, 256], sizes = [1, 128], strides = [1, 1]} : vector<1x384xf32> to vector<1x128xf32>
    %231 = vector.extract_strided_slice %184 {offsets = [0, 256], sizes = [1, 128], strides = [1, 1]} : vector<1x384xf32> to vector<1x128xf32>
    %232 = arith.mulf %221, %231 : vector<1x128xf32>
    %233 = arith.addf %230, %232 : vector<1x128xf32>
    %234 = math.tanh %233 : vector<1x128xf32>
    %cst_129 = arith.constant 1.000000e+00 : f32
    %235 = vector.broadcast %cst_129 : f32 to vector<1x128xf32>
    %236 = arith.subf %235, %229 : vector<1x128xf32>
    %237 = arith.mulf %236, %234 : vector<1x128xf32>
    %238 = arith.mulf %229, %153 : vector<1x128xf32>
    %239 = arith.addf %237, %238 : vector<1x128xf32>
    %c0_130 = arith.constant 0 : index
    %c0_131 = arith.constant 0 : index
    %240 = vector.load %arg13[%c0_130, %c0_131] : memref<128x256xf32, #tpu.memory_space<vmem>>, vector<128x256xf32>
    %cst_132 = arith.constant dense<0.000000e+00> : vector<1x256xf32>
    %241 = tpu.matmul %239, %240, %cst_132 {dimension_numbers = #tpu.dot_dimension_numbers<[1], [0], [0], [1], [0, 0, 1, 1], [], []>} : vector<1x128xf32>, vector<128x256xf32>, vector<1x256xf32> -> vector<1x256xf32>
    %c0_133 = arith.constant 0 : index
    %c0_134 = arith.constant 0 : index
    %242 = vector.load %arg14[%c0_133, %c0_134] : memref<1x256xf32, #tpu.memory_space<vmem>>, vector<1x256xf32>
    %243 = arith.addf %241, %242 : vector<1x256xf32>
    %cst_135 = arith.constant dense<0xFF800000> : vector<1xf32>
    %244 = vector.multi_reduction <maximumf>, %243, %cst_135 [1] : vector<1x256xf32> to vector<1xf32>
    %245 = vector.shape_cast %244 : vector<1xf32> to vector<1x1xf32>
    %246 = vector.broadcast %245 : vector<1x1xf32> to vector<1x256xf32>
    %247 = arith.subf %243, %246 : vector<1x256xf32>
    %248 = math.exp %247 : vector<1x256xf32>
    %cst_136 = arith.constant dense<0.000000e+00> : vector<1xf32>
    %249 = vector.multi_reduction <add>, %248, %cst_136 [1] : vector<1x256xf32> to vector<1xf32>
    %250 = vector.shape_cast %249 : vector<1xf32> to vector<1x1xf32>
    %251 = math.log %250 : vector<1x1xf32>
    %252 = arith.addf %251, %245 : vector<1x1xf32>
    %253 = vector.broadcast %252 : vector<1x1xf32> to vector<1x256xf32>
    %254 = arith.subf %243, %253 : vector<1x256xf32>
    %255 = arith.index_cast %c2_i32 : i32 to index
    %c0_137 = arith.constant 0 : index
    %256 = vector.load %arg15[%255, %c0_137] : memref<8x256xf32, #tpu.memory_space<vmem>>, vector<1x256xf32>
    tpu.vector_store %arg15[%255, %c0_137], %254 {strides = array<i32>} : memref<8x256xf32, #tpu.memory_space<vmem>>, vector<1x256xf32>,
    %257 = arith.index_cast %c2_i32 : i32 to index
    %c0_138 = arith.constant 0 : index
    %258 = vector.load %arg17[%257, %c0_138] : memref<8x128xf32, #tpu.memory_space<vmem>>, vector<1x128xf32>
    tpu.vector_store %arg17[%257, %c0_138], %200 {strides = array<i32>} : memref<8x128xf32, #tpu.memory_space<vmem>>, vector<1x128xf32>,
    %c3_i32 = arith.constant 3 : i32
    %259 = arith.index_cast %c3_i32 : i32 to index
    %260 = memref.load %arg1[%259] : memref<8xi32, #tpu.memory_space<smem>>
    %c0_i32_139 = arith.constant 0 : i32
    %c255_i32_140 = arith.constant 255 : i32
    %261 = arith.maxsi %c0_i32_139, %260 : i32
    %262 = arith.minsi %c255_i32_140, %261 : i32
    %263 = arith.index_cast %262 : i32 to index
    %c0_141 = arith.constant 0 : index
    %264 = vector.load %arg2[%263, %c0_141] : memref<256x128xf32, #tpu.memory_space<vmem>>, vector<1x128xf32>
    %c128_142 = arith.constant 128 : index
    %c0_143 = arith.constant 0 : index
    %265 = vector.load %arg5[%c128_142, %c0_143] : memref<256x128xf32, #tpu.memory_space<vmem>>, vector<128x128xf32>
    %cst_144 = arith.constant dense<0.000000e+00> : vector<1x128xf32>
    %266 = tpu.matmul %239, %265, %cst_144 {dimension_numbers = #tpu.dot_dimension_numbers<[1], [0], [0], [1], [0, 0, 1, 1], [], []>} : vector<1x128xf32>, vector<128x128xf32>, vector<1x128xf32> -> vector<1x128xf32>
    %c0_145 = arith.constant 0 : index
    %c0_146 = arith.constant 0 : index
    %267 = vector.load %arg11[%c0_145, %c0_146] : memref<128x384xf32, #tpu.memory_space<vmem>>, vector<128x384xf32>
    %cst_147 = arith.constant dense<0.000000e+00> : vector<1x384xf32>
    %268 = tpu.matmul %239, %267, %cst_147 {dimension_numbers = #tpu.dot_dimension_numbers<[1], [0], [0], [1], [0, 0, 1, 1], [], []>} : vector<1x128xf32>, vector<128x384xf32>, vector<1x384xf32> -> vector<1x384xf32>
    %c0_148 = arith.constant 0 : index
    %c0_149 = arith.constant 0 : index
    %269 = vector.load %arg12[%c0_148, %c0_149] : memref<1x384xf32, #tpu.memory_space<vmem>>, vector<1x384xf32>
    %270 = arith.addf %268, %269 : vector<1x384xf32>
    %c0_150 = arith.constant 0 : index
    %c0_151 = arith.constant 0 : index
    %271 = vector.load %arg5[%c0_150, %c0_151] : memref<256x128xf32, #tpu.memory_space<vmem>>, vector<128x128xf32>
    %cst_152 = arith.constant dense<0.000000e+00> : vector<1x128xf32>
    %272 = tpu.matmul %264, %271, %cst_152 {dimension_numbers = #tpu.dot_dimension_numbers<[1], [0], [0], [1], [0, 0, 1, 1], [], []>} : vector<1x128xf32>, vector<128x128xf32>, vector<1x128xf32> -> vector<1x128xf32>
    %c0_153 = arith.constant 0 : index
    %c0_154 = arith.constant 0 : index
    %273 = vector.load %arg7[%c0_153, %c0_154] : memref<256x128xf32, #tpu.memory_space<vmem>>, vector<128x128xf32>
    %cst_155 = arith.constant dense<0.000000e+00> : vector<1x128xf32>
    %274 = tpu.matmul %264, %273, %cst_155 {dimension_numbers = #tpu.dot_dimension_numbers<[1], [0], [0], [1], [0, 0, 1, 1], [], []>} : vector<1x128xf32>, vector<128x128xf32>, vector<1x128xf32> -> vector<1x128xf32>
    %275 = arith.addf %272, %266 : vector<1x128xf32>
    %c0_156 = arith.constant 0 : index
    %c0_157 = arith.constant 0 : index
    %276 = vector.load %arg6[%c0_156, %c0_157] : memref<1x128xf32, #tpu.memory_space<vmem>>, vector<1x128xf32>
    %277 = arith.addf %275, %276 : vector<1x128xf32>
    %cst_158 = arith.constant dense<0xFF800000> : vector<1xf32>
    %278 = vector.multi_reduction <maximumf>, %277, %cst_158 [1] : vector<1x128xf32> to vector<1xf32>
    %279 = vector.shape_cast %278 : vector<1xf32> to vector<1x1xf32>
    %280 = vector.broadcast %279 : vector<1x1xf32> to vector<1x128xf32>
    %281 = arith.subf %277, %280 : vector<1x128xf32>
    %282 = math.exp %281 : vector<1x128xf32>
    %cst_159 = arith.constant dense<0.000000e+00> : vector<1xf32>
    %283 = vector.multi_reduction <add>, %282, %cst_159 [1] : vector<1x128xf32> to vector<1xf32>
    %284 = vector.shape_cast %283 : vector<1xf32> to vector<1x1xf32>
    %285 = vector.broadcast %284 : vector<1x1xf32> to vector<1x128xf32>
    %286 = arith.divf %282, %285 : vector<1x128xf32>
    %c0_160 = arith.constant 0 : index
    %c0_161 = arith.constant 0 : index
    %287 = vector.load %arg4[%c0_160, %c0_161] : memref<128x128xf32, #tpu.memory_space<vmem>>, vector<128x128xf32>
    %cst_162 = arith.constant dense<0.000000e+00> : vector<1x128xf32>
    %288 = tpu.matmul %286, %287, %cst_162 {dimension_numbers = #tpu.dot_dimension_numbers<[1], [0], [0], [1], [0, 0, 1, 1], [], []>} : vector<1x128xf32>, vector<128x128xf32>, vector<1x128xf32> -> vector<1x128xf32>
    %c128_163 = arith.constant 128 : index
    %c0_164 = arith.constant 0 : index
    %289 = vector.load %arg7[%c128_163, %c0_164] : memref<256x128xf32, #tpu.memory_space<vmem>>, vector<128x128xf32>
    %cst_165 = arith.constant dense<0.000000e+00> : vector<1x128xf32>
    %290 = tpu.matmul %288, %289, %cst_165 {dimension_numbers = #tpu.dot_dimension_numbers<[1], [0], [0], [1], [0, 0, 1, 1], [], []>} : vector<1x128xf32>, vector<128x128xf32>, vector<1x128xf32> -> vector<1x128xf32>
    %291 = arith.addf %274, %290 : vector<1x128xf32>
    %c0_166 = arith.constant 0 : index
    %c0_167 = arith.constant 0 : index
    %292 = vector.load %arg8[%c0_166, %c0_167] : memref<1x128xf32, #tpu.memory_space<vmem>>, vector<1x128xf32>
    %293 = arith.addf %291, %292 : vector<1x128xf32>
    %cst_168 = arith.constant 0.000000e+00 : f32
    %294 = vector.broadcast %cst_168 : f32 to vector<1x128xf32>
    %295 = arith.maximumf %293, %294 : vector<1x128xf32>
    %c0_169 = arith.constant 0 : index
    %c0_170 = arith.constant 0 : index
    %296 = vector.load %arg9[%c0_169, %c0_170] : memref<128x384xf32, #tpu.memory_space<vmem>>, vector<128x384xf32>
    %cst_171 = arith.constant dense<0.000000e+00> : vector<1x384xf32>
    %297 = tpu.matmul %295, %296, %cst_171 {dimension_numbers = #tpu.dot_dimension_numbers<[1], [0], [0], [1], [0, 0, 1, 1], [], []>} : vector<1x128xf32>, vector<128x384xf32>, vector<1x384xf32> -> vector<1x384xf32>
    %c0_172 = arith.constant 0 : index
    %c0_173 = arith.constant 0 : index
    %298 = vector.load %arg10[%c0_172, %c0_173] : memref<1x384xf32, #tpu.memory_space<vmem>>, vector<1x384xf32>
    %299 = arith.addf %297, %298 : vector<1x384xf32>
    %300 = vector.extract_strided_slice %299 {offsets = [0, 0], sizes = [1, 128], strides = [1, 1]} : vector<1x384xf32> to vector<1x128xf32>
    %301 = vector.extract_strided_slice %270 {offsets = [0, 0], sizes = [1, 128], strides = [1, 1]} : vector<1x384xf32> to vector<1x128xf32>
    %302 = arith.addf %300, %301 : vector<1x128xf32>
    %303 = arith.negf %302 : vector<1x128xf32>
    %304 = math.exp %303 : vector<1x128xf32>
    %cst_174 = arith.constant 1.000000e+00 : f32
    %305 = vector.broadcast %cst_174 : f32 to vector<1x128xf32>
    %306 = arith.addf %305, %304 : vector<1x128xf32>
    %307 = arith.divf %305, %306 : vector<1x128xf32>
    %308 = vector.extract_strided_slice %299 {offsets = [0, 128], sizes = [1, 128], strides = [1, 1]} : vector<1x384xf32> to vector<1x128xf32>
    %309 = vector.extract_strided_slice %270 {offsets = [0, 128], sizes = [1, 128], strides = [1, 1]} : vector<1x384xf32> to vector<1x128xf32>
    %310 = arith.addf %308, %309 : vector<1x128xf32>
    %311 = arith.negf %310 : vector<1x128xf32>
    %312 = math.exp %311 : vector<1x128xf32>
    %cst_175 = arith.constant 1.000000e+00 : f32
    %313 = vector.broadcast %cst_175 : f32 to vector<1x128xf32>
    %314 = arith.addf %313, %312 : vector<1x128xf32>
    %315 = arith.divf %313, %314 : vector<1x128xf32>
    %316 = vector.extract_strided_slice %299 {offsets = [0, 256], sizes = [1, 128], strides = [1, 1]} : vector<1x384xf32> to vector<1x128xf32>
    %317 = vector.extract_strided_slice %270 {offsets = [0, 256], sizes = [1, 128], strides = [1, 1]} : vector<1x384xf32> to vector<1x128xf32>
    %318 = arith.mulf %307, %317 : vector<1x128xf32>
    %319 = arith.addf %316, %318 : vector<1x128xf32>
    %320 = math.tanh %319 : vector<1x128xf32>
    %cst_176 = arith.constant 1.000000e+00 : f32
    %321 = vector.broadcast %cst_176 : f32 to vector<1x128xf32>
    %322 = arith.subf %321, %315 : vector<1x128xf32>
    %323 = arith.mulf %322, %320 : vector<1x128xf32>
    %324 = arith.mulf %315, %239 : vector<1x128xf32>
    %325 = arith.addf %323, %324 : vector<1x128xf32>
    %c0_177 = arith.constant 0 : index
    %c0_178 = arith.constant 0 : index
    %326 = vector.load %arg13[%c0_177, %c0_178] : memref<128x256xf32, #tpu.memory_space<vmem>>, vector<128x256xf32>
    %cst_179 = arith.constant dense<0.000000e+00> : vector<1x256xf32>
    %327 = tpu.matmul %325, %326, %cst_179 {dimension_numbers = #tpu.dot_dimension_numbers<[1], [0], [0], [1], [0, 0, 1, 1], [], []>} : vector<1x128xf32>, vector<128x256xf32>, vector<1x256xf32> -> vector<1x256xf32>
    %c0_180 = arith.constant 0 : index
    %c0_181 = arith.constant 0 : index
    %328 = vector.load %arg14[%c0_180, %c0_181] : memref<1x256xf32, #tpu.memory_space<vmem>>, vector<1x256xf32>
    %329 = arith.addf %327, %328 : vector<1x256xf32>
    %cst_182 = arith.constant dense<0xFF800000> : vector<1xf32>
    %330 = vector.multi_reduction <maximumf>, %329, %cst_182 [1] : vector<1x256xf32> to vector<1xf32>
    %331 = vector.shape_cast %330 : vector<1xf32> to vector<1x1xf32>
    %332 = vector.broadcast %331 : vector<1x1xf32> to vector<1x256xf32>
    %333 = arith.subf %329, %332 : vector<1x256xf32>
    %334 = math.exp %333 : vector<1x256xf32>
    %cst_183 = arith.constant dense<0.000000e+00> : vector<1xf32>
    %335 = vector.multi_reduction <add>, %334, %cst_183 [1] : vector<1x256xf32> to vector<1xf32>
    %336 = vector.shape_cast %335 : vector<1xf32> to vector<1x1xf32>
    %337 = math.log %336 : vector<1x1xf32>
    %338 = arith.addf %337, %331 : vector<1x1xf32>
    %339 = vector.broadcast %338 : vector<1x1xf32> to vector<1x256xf32>
    %340 = arith.subf %329, %339 : vector<1x256xf32>
    %341 = arith.index_cast %c3_i32 : i32 to index
    %c0_184 = arith.constant 0 : index
    %342 = vector.load %arg15[%341, %c0_184] : memref<8x256xf32, #tpu.memory_space<vmem>>, vector<1x256xf32>
    tpu.vector_store %arg15[%341, %c0_184], %340 {strides = array<i32>} : memref<8x256xf32, #tpu.memory_space<vmem>>, vector<1x256xf32>,
    %343 = arith.index_cast %c3_i32 : i32 to index
    %c0_185 = arith.constant 0 : index
    %344 = vector.load %arg17[%343, %c0_185] : memref<8x128xf32, #tpu.memory_space<vmem>>, vector<1x128xf32>
    tpu.vector_store %arg17[%343, %c0_185], %286 {strides = array<i32>} : memref<8x128xf32, #tpu.memory_space<vmem>>, vector<1x128xf32>,
    %c4_i32 = arith.constant 4 : i32
    %345 = arith.index_cast %c4_i32 : i32 to index
    %346 = memref.load %arg1[%345] : memref<8xi32, #tpu.memory_space<smem>>
    %c0_i32_186 = arith.constant 0 : i32
    %c255_i32_187 = arith.constant 255 : i32
    %347 = arith.maxsi %c0_i32_186, %346 : i32
    %348 = arith.minsi %c255_i32_187, %347 : i32
    %349 = arith.index_cast %348 : i32 to index
    %c0_188 = arith.constant 0 : index
    %350 = vector.load %arg2[%349, %c0_188] : memref<256x128xf32, #tpu.memory_space<vmem>>, vector<1x128xf32>
    %c128_189 = arith.constant 128 : index
    %c0_190 = arith.constant 0 : index
    %351 = vector.load %arg5[%c128_189, %c0_190] : memref<256x128xf32, #tpu.memory_space<vmem>>, vector<128x128xf32>
    %cst_191 = arith.constant dense<0.000000e+00> : vector<1x128xf32>
    %352 = tpu.matmul %325, %351, %cst_191 {dimension_numbers = #tpu.dot_dimension_numbers<[1], [0], [0], [1], [0, 0, 1, 1], [], []>} : vector<1x128xf32>, vector<128x128xf32>, vector<1x128xf32> -> vector<1x128xf32>
    %c0_192 = arith.constant 0 : index
    %c0_193 = arith.constant 0 : index
    %353 = vector.load %arg11[%c0_192, %c0_193] : memref<128x384xf32, #tpu.memory_space<vmem>>, vector<128x384xf32>
    %cst_194 = arith.constant dense<0.000000e+00> : vector<1x384xf32>
    %354 = tpu.matmul %325, %353, %cst_194 {dimension_numbers = #tpu.dot_dimension_numbers<[1], [0], [0], [1], [0, 0, 1, 1], [], []>} : vector<1x128xf32>, vector<128x384xf32>, vector<1x384xf32> -> vector<1x384xf32>
    %c0_195 = arith.constant 0 : index
    %c0_196 = arith.constant 0 : index
    %355 = vector.load %arg12[%c0_195, %c0_196] : memref<1x384xf32, #tpu.memory_space<vmem>>, vector<1x384xf32>
    %356 = arith.addf %354, %355 : vector<1x384xf32>
    %c0_197 = arith.constant 0 : index
    %c0_198 = arith.constant 0 : index
    %357 = vector.load %arg5[%c0_197, %c0_198] : memref<256x128xf32, #tpu.memory_space<vmem>>, vector<128x128xf32>
    %cst_199 = arith.constant dense<0.000000e+00> : vector<1x128xf32>
    %358 = tpu.matmul %350, %357, %cst_199 {dimension_numbers = #tpu.dot_dimension_numbers<[1], [0], [0], [1], [0, 0, 1, 1], [], []>} : vector<1x128xf32>, vector<128x128xf32>, vector<1x128xf32> -> vector<1x128xf32>
    %c0_200 = arith.constant 0 : index
    %c0_201 = arith.constant 0 : index
    %359 = vector.load %arg7[%c0_200, %c0_201] : memref<256x128xf32, #tpu.memory_space<vmem>>, vector<128x128xf32>
    %cst_202 = arith.constant dense<0.000000e+00> : vector<1x128xf32>
    %360 = tpu.matmul %350, %359, %cst_202 {dimension_numbers = #tpu.dot_dimension_numbers<[1], [0], [0], [1], [0, 0, 1, 1], [], []>} : vector<1x128xf32>, vector<128x128xf32>, vector<1x128xf32> -> vector<1x128xf32>
    %361 = arith.addf %358, %352 : vector<1x128xf32>
    %c0_203 = arith.constant 0 : index
    %c0_204 = arith.constant 0 : index
    %362 = vector.load %arg6[%c0_203, %c0_204] : memref<1x128xf32, #tpu.memory_space<vmem>>, vector<1x128xf32>
    %363 = arith.addf %361, %362 : vector<1x128xf32>
    %cst_205 = arith.constant dense<0xFF800000> : vector<1xf32>
    %364 = vector.multi_reduction <maximumf>, %363, %cst_205 [1] : vector<1x128xf32> to vector<1xf32>
    %365 = vector.shape_cast %364 : vector<1xf32> to vector<1x1xf32>
    %366 = vector.broadcast %365 : vector<1x1xf32> to vector<1x128xf32>
    %367 = arith.subf %363, %366 : vector<1x128xf32>
    %368 = math.exp %367 : vector<1x128xf32>
    %cst_206 = arith.constant dense<0.000000e+00> : vector<1xf32>
    %369 = vector.multi_reduction <add>, %368, %cst_206 [1] : vector<1x128xf32> to vector<1xf32>
    %370 = vector.shape_cast %369 : vector<1xf32> to vector<1x1xf32>
    %371 = vector.broadcast %370 : vector<1x1xf32> to vector<1x128xf32>
    %372 = arith.divf %368, %371 : vector<1x128xf32>
    %c0_207 = arith.constant 0 : index
    %c0_208 = arith.constant 0 : index
    %373 = vector.load %arg4[%c0_207, %c0_208] : memref<128x128xf32, #tpu.memory_space<vmem>>, vector<128x128xf32>
    %cst_209 = arith.constant dense<0.000000e+00> : vector<1x128xf32>
    %374 = tpu.matmul %372, %373, %cst_209 {dimension_numbers = #tpu.dot_dimension_numbers<[1], [0], [0], [1], [0, 0, 1, 1], [], []>} : vector<1x128xf32>, vector<128x128xf32>, vector<1x128xf32> -> vector<1x128xf32>
    %c128_210 = arith.constant 128 : index
    %c0_211 = arith.constant 0 : index
    %375 = vector.load %arg7[%c128_210, %c0_211] : memref<256x128xf32, #tpu.memory_space<vmem>>, vector<128x128xf32>
    %cst_212 = arith.constant dense<0.000000e+00> : vector<1x128xf32>
    %376 = tpu.matmul %374, %375, %cst_212 {dimension_numbers = #tpu.dot_dimension_numbers<[1], [0], [0], [1], [0, 0, 1, 1], [], []>} : vector<1x128xf32>, vector<128x128xf32>, vector<1x128xf32> -> vector<1x128xf32>
    %377 = arith.addf %360, %376 : vector<1x128xf32>
    %c0_213 = arith.constant 0 : index
    %c0_214 = arith.constant 0 : index
    %378 = vector.load %arg8[%c0_213, %c0_214] : memref<1x128xf32, #tpu.memory_space<vmem>>, vector<1x128xf32>
    %379 = arith.addf %377, %378 : vector<1x128xf32>
    %cst_215 = arith.constant 0.000000e+00 : f32
    %380 = vector.broadcast %cst_215 : f32 to vector<1x128xf32>
    %381 = arith.maximumf %379, %380 : vector<1x128xf32>
    %c0_216 = arith.constant 0 : index
    %c0_217 = arith.constant 0 : index
    %382 = vector.load %arg9[%c0_216, %c0_217] : memref<128x384xf32, #tpu.memory_space<vmem>>, vector<128x384xf32>
    %cst_218 = arith.constant dense<0.000000e+00> : vector<1x384xf32>
    %383 = tpu.matmul %381, %382, %cst_218 {dimension_numbers = #tpu.dot_dimension_numbers<[1], [0], [0], [1], [0, 0, 1, 1], [], []>} : vector<1x128xf32>, vector<128x384xf32>, vector<1x384xf32> -> vector<1x384xf32>
    %c0_219 = arith.constant 0 : index
    %c0_220 = arith.constant 0 : index
    %384 = vector.load %arg10[%c0_219, %c0_220] : memref<1x384xf32, #tpu.memory_space<vmem>>, vector<1x384xf32>
    %385 = arith.addf %383, %384 : vector<1x384xf32>
    %386 = vector.extract_strided_slice %385 {offsets = [0, 0], sizes = [1, 128], strides = [1, 1]} : vector<1x384xf32> to vector<1x128xf32>
    %387 = vector.extract_strided_slice %356 {offsets = [0, 0], sizes = [1, 128], strides = [1, 1]} : vector<1x384xf32> to vector<1x128xf32>
    %388 = arith.addf %386, %387 : vector<1x128xf32>
    %389 = arith.negf %388 : vector<1x128xf32>
    %390 = math.exp %389 : vector<1x128xf32>
    %cst_221 = arith.constant 1.000000e+00 : f32
    %391 = vector.broadcast %cst_221 : f32 to vector<1x128xf32>
    %392 = arith.addf %391, %390 : vector<1x128xf32>
    %393 = arith.divf %391, %392 : vector<1x128xf32>
    %394 = vector.extract_strided_slice %385 {offsets = [0, 128], sizes = [1, 128], strides = [1, 1]} : vector<1x384xf32> to vector<1x128xf32>
    %395 = vector.extract_strided_slice %356 {offsets = [0, 128], sizes = [1, 128], strides = [1, 1]} : vector<1x384xf32> to vector<1x128xf32>
    %396 = arith.addf %394, %395 : vector<1x128xf32>
    %397 = arith.negf %396 : vector<1x128xf32>
    %398 = math.exp %397 : vector<1x128xf32>
    %cst_222 = arith.constant 1.000000e+00 : f32
    %399 = vector.broadcast %cst_222 : f32 to vector<1x128xf32>
    %400 = arith.addf %399, %398 : vector<1x128xf32>
    %401 = arith.divf %399, %400 : vector<1x128xf32>
    %402 = vector.extract_strided_slice %385 {offsets = [0, 256], sizes = [1, 128], strides = [1, 1]} : vector<1x384xf32> to vector<1x128xf32>
    %403 = vector.extract_strided_slice %356 {offsets = [0, 256], sizes = [1, 128], strides = [1, 1]} : vector<1x384xf32> to vector<1x128xf32>
    %404 = arith.mulf %393, %403 : vector<1x128xf32>
    %405 = arith.addf %402, %404 : vector<1x128xf32>
    %406 = math.tanh %405 : vector<1x128xf32>
    %cst_223 = arith.constant 1.000000e+00 : f32
    %407 = vector.broadcast %cst_223 : f32 to vector<1x128xf32>
    %408 = arith.subf %407, %401 : vector<1x128xf32>
    %409 = arith.mulf %408, %406 : vector<1x128xf32>
    %410 = arith.mulf %401, %325 : vector<1x128xf32>
    %411 = arith.addf %409, %410 : vector<1x128xf32>
    %c0_224 = arith.constant 0 : index
    %c0_225 = arith.constant 0 : index
    %412 = vector.load %arg13[%c0_224, %c0_225] : memref<128x256xf32, #tpu.memory_space<vmem>>, vector<128x256xf32>
    %cst_226 = arith.constant dense<0.000000e+00> : vector<1x256xf32>
    %413 = tpu.matmul %411, %412, %cst_226 {dimension_numbers = #tpu.dot_dimension_numbers<[1], [0], [0], [1], [0, 0, 1, 1], [], []>} : vector<1x128xf32>, vector<128x256xf32>, vector<1x256xf32> -> vector<1x256xf32>
    %c0_227 = arith.constant 0 : index
    %c0_228 = arith.constant 0 : index
    %414 = vector.load %arg14[%c0_227, %c0_228] : memref<1x256xf32, #tpu.memory_space<vmem>>, vector<1x256xf32>
    %415 = arith.addf %413, %414 : vector<1x256xf32>
    %cst_229 = arith.constant dense<0xFF800000> : vector<1xf32>
    %416 = vector.multi_reduction <maximumf>, %415, %cst_229 [1] : vector<1x256xf32> to vector<1xf32>
    %417 = vector.shape_cast %416 : vector<1xf32> to vector<1x1xf32>
    %418 = vector.broadcast %417 : vector<1x1xf32> to vector<1x256xf32>
    %419 = arith.subf %415, %418 : vector<1x256xf32>
    %420 = math.exp %419 : vector<1x256xf32>
    %cst_230 = arith.constant dense<0.000000e+00> : vector<1xf32>
    %421 = vector.multi_reduction <add>, %420, %cst_230 [1] : vector<1x256xf32> to vector<1xf32>
    %422 = vector.shape_cast %421 : vector<1xf32> to vector<1x1xf32>
    %423 = math.log %422 : vector<1x1xf32>
    %424 = arith.addf %423, %417 : vector<1x1xf32>
    %425 = vector.broadcast %424 : vector<1x1xf32> to vector<1x256xf32>
    %426 = arith.subf %415, %425 : vector<1x256xf32>
    %427 = arith.index_cast %c4_i32 : i32 to index
    %c0_231 = arith.constant 0 : index
    %428 = vector.load %arg15[%427, %c0_231] : memref<8x256xf32, #tpu.memory_space<vmem>>, vector<1x256xf32>
    tpu.vector_store %arg15[%427, %c0_231], %426 {strides = array<i32>} : memref<8x256xf32, #tpu.memory_space<vmem>>, vector<1x256xf32>,
    %429 = arith.index_cast %c4_i32 : i32 to index
    %c0_232 = arith.constant 0 : index
    %430 = vector.load %arg17[%429, %c0_232] : memref<8x128xf32, #tpu.memory_space<vmem>>, vector<1x128xf32>
    tpu.vector_store %arg17[%429, %c0_232], %372 {strides = array<i32>} : memref<8x128xf32, #tpu.memory_space<vmem>>, vector<1x128xf32>,
    %c5_i32 = arith.constant 5 : i32
    %431 = arith.index_cast %c5_i32 : i32 to index
    %432 = memref.load %arg1[%431] : memref<8xi32, #tpu.memory_space<smem>>
    %c0_i32_233 = arith.constant 0 : i32
    %c255_i32_234 = arith.constant 255 : i32
    %433 = arith.maxsi %c0_i32_233, %432 : i32
    %434 = arith.minsi %c255_i32_234, %433 : i32
    %435 = arith.index_cast %434 : i32 to index
    %c0_235 = arith.constant 0 : index
    %436 = vector.load %arg2[%435, %c0_235] : memref<256x128xf32, #tpu.memory_space<vmem>>, vector<1x128xf32>
    %c128_236 = arith.constant 128 : index
    %c0_237 = arith.constant 0 : index
    %437 = vector.load %arg5[%c128_236, %c0_237] : memref<256x128xf32, #tpu.memory_space<vmem>>, vector<128x128xf32>
    %cst_238 = arith.constant dense<0.000000e+00> : vector<1x128xf32>
    %438 = tpu.matmul %411, %437, %cst_238 {dimension_numbers = #tpu.dot_dimension_numbers<[1], [0], [0], [1], [0, 0, 1, 1], [], []>} : vector<1x128xf32>, vector<128x128xf32>, vector<1x128xf32> -> vector<1x128xf32>
    %c0_239 = arith.constant 0 : index
    %c0_240 = arith.constant 0 : index
    %439 = vector.load %arg11[%c0_239, %c0_240] : memref<128x384xf32, #tpu.memory_space<vmem>>, vector<128x384xf32>
    %cst_241 = arith.constant dense<0.000000e+00> : vector<1x384xf32>
    %440 = tpu.matmul %411, %439, %cst_241 {dimension_numbers = #tpu.dot_dimension_numbers<[1], [0], [0], [1], [0, 0, 1, 1], [], []>} : vector<1x128xf32>, vector<128x384xf32>, vector<1x384xf32> -> vector<1x384xf32>
    %c0_242 = arith.constant 0 : index
    %c0_243 = arith.constant 0 : index
    %441 = vector.load %arg12[%c0_242, %c0_243] : memref<1x384xf32, #tpu.memory_space<vmem>>, vector<1x384xf32>
    %442 = arith.addf %440, %441 : vector<1x384xf32>
    %c0_244 = arith.constant 0 : index
    %c0_245 = arith.constant 0 : index
    %443 = vector.load %arg5[%c0_244, %c0_245] : memref<256x128xf32, #tpu.memory_space<vmem>>, vector<128x128xf32>
    %cst_246 = arith.constant dense<0.000000e+00> : vector<1x128xf32>
    %444 = tpu.matmul %436, %443, %cst_246 {dimension_numbers = #tpu.dot_dimension_numbers<[1], [0], [0], [1], [0, 0, 1, 1], [], []>} : vector<1x128xf32>, vector<128x128xf32>, vector<1x128xf32> -> vector<1x128xf32>
    %c0_247 = arith.constant 0 : index
    %c0_248 = arith.constant 0 : index
    %445 = vector.load %arg7[%c0_247, %c0_248] : memref<256x128xf32, #tpu.memory_space<vmem>>, vector<128x128xf32>
    %cst_249 = arith.constant dense<0.000000e+00> : vector<1x128xf32>
    %446 = tpu.matmul %436, %445, %cst_249 {dimension_numbers = #tpu.dot_dimension_numbers<[1], [0], [0], [1], [0, 0, 1, 1], [], []>} : vector<1x128xf32>, vector<128x128xf32>, vector<1x128xf32> -> vector<1x128xf32>
    %447 = arith.addf %444, %438 : vector<1x128xf32>
    %c0_250 = arith.constant 0 : index
    %c0_251 = arith.constant 0 : index
    %448 = vector.load %arg6[%c0_250, %c0_251] : memref<1x128xf32, #tpu.memory_space<vmem>>, vector<1x128xf32>
    %449 = arith.addf %447, %448 : vector<1x128xf32>
    %cst_252 = arith.constant dense<0xFF800000> : vector<1xf32>
    %450 = vector.multi_reduction <maximumf>, %449, %cst_252 [1] : vector<1x128xf32> to vector<1xf32>
    %451 = vector.shape_cast %450 : vector<1xf32> to vector<1x1xf32>
    %452 = vector.broadcast %451 : vector<1x1xf32> to vector<1x128xf32>
    %453 = arith.subf %449, %452 : vector<1x128xf32>
    %454 = math.exp %453 : vector<1x128xf32>
    %cst_253 = arith.constant dense<0.000000e+00> : vector<1xf32>
    %455 = vector.multi_reduction <add>, %454, %cst_253 [1] : vector<1x128xf32> to vector<1xf32>
    %456 = vector.shape_cast %455 : vector<1xf32> to vector<1x1xf32>
    %457 = vector.broadcast %456 : vector<1x1xf32> to vector<1x128xf32>
    %458 = arith.divf %454, %457 : vector<1x128xf32>
    %c0_254 = arith.constant 0 : index
    %c0_255 = arith.constant 0 : index
    %459 = vector.load %arg4[%c0_254, %c0_255] : memref<128x128xf32, #tpu.memory_space<vmem>>, vector<128x128xf32>
    %cst_256 = arith.constant dense<0.000000e+00> : vector<1x128xf32>
    %460 = tpu.matmul %458, %459, %cst_256 {dimension_numbers = #tpu.dot_dimension_numbers<[1], [0], [0], [1], [0, 0, 1, 1], [], []>} : vector<1x128xf32>, vector<128x128xf32>, vector<1x128xf32> -> vector<1x128xf32>
    %c128_257 = arith.constant 128 : index
    %c0_258 = arith.constant 0 : index
    %461 = vector.load %arg7[%c128_257, %c0_258] : memref<256x128xf32, #tpu.memory_space<vmem>>, vector<128x128xf32>
    %cst_259 = arith.constant dense<0.000000e+00> : vector<1x128xf32>
    %462 = tpu.matmul %460, %461, %cst_259 {dimension_numbers = #tpu.dot_dimension_numbers<[1], [0], [0], [1], [0, 0, 1, 1], [], []>} : vector<1x128xf32>, vector<128x128xf32>, vector<1x128xf32> -> vector<1x128xf32>
    %463 = arith.addf %446, %462 : vector<1x128xf32>
    %c0_260 = arith.constant 0 : index
    %c0_261 = arith.constant 0 : index
    %464 = vector.load %arg8[%c0_260, %c0_261] : memref<1x128xf32, #tpu.memory_space<vmem>>, vector<1x128xf32>
    %465 = arith.addf %463, %464 : vector<1x128xf32>
    %cst_262 = arith.constant 0.000000e+00 : f32
    %466 = vector.broadcast %cst_262 : f32 to vector<1x128xf32>
    %467 = arith.maximumf %465, %466 : vector<1x128xf32>
    %c0_263 = arith.constant 0 : index
    %c0_264 = arith.constant 0 : index
    %468 = vector.load %arg9[%c0_263, %c0_264] : memref<128x384xf32, #tpu.memory_space<vmem>>, vector<128x384xf32>
    %cst_265 = arith.constant dense<0.000000e+00> : vector<1x384xf32>
    %469 = tpu.matmul %467, %468, %cst_265 {dimension_numbers = #tpu.dot_dimension_numbers<[1], [0], [0], [1], [0, 0, 1, 1], [], []>} : vector<1x128xf32>, vector<128x384xf32>, vector<1x384xf32> -> vector<1x384xf32>
    %c0_266 = arith.constant 0 : index
    %c0_267 = arith.constant 0 : index
    %470 = vector.load %arg10[%c0_266, %c0_267] : memref<1x384xf32, #tpu.memory_space<vmem>>, vector<1x384xf32>
    %471 = arith.addf %469, %470 : vector<1x384xf32>
    %472 = vector.extract_strided_slice %471 {offsets = [0, 0], sizes = [1, 128], strides = [1, 1]} : vector<1x384xf32> to vector<1x128xf32>
    %473 = vector.extract_strided_slice %442 {offsets = [0, 0], sizes = [1, 128], strides = [1, 1]} : vector<1x384xf32> to vector<1x128xf32>
    %474 = arith.addf %472, %473 : vector<1x128xf32>
    %475 = arith.negf %474 : vector<1x128xf32>
    %476 = math.exp %475 : vector<1x128xf32>
    %cst_268 = arith.constant 1.000000e+00 : f32
    %477 = vector.broadcast %cst_268 : f32 to vector<1x128xf32>
    %478 = arith.addf %477, %476 : vector<1x128xf32>
    %479 = arith.divf %477, %478 : vector<1x128xf32>
    %480 = vector.extract_strided_slice %471 {offsets = [0, 128], sizes = [1, 128], strides = [1, 1]} : vector<1x384xf32> to vector<1x128xf32>
    %481 = vector.extract_strided_slice %442 {offsets = [0, 128], sizes = [1, 128], strides = [1, 1]} : vector<1x384xf32> to vector<1x128xf32>
    %482 = arith.addf %480, %481 : vector<1x128xf32>
    %483 = arith.negf %482 : vector<1x128xf32>
    %484 = math.exp %483 : vector<1x128xf32>
    %cst_269 = arith.constant 1.000000e+00 : f32
    %485 = vector.broadcast %cst_269 : f32 to vector<1x128xf32>
    %486 = arith.addf %485, %484 : vector<1x128xf32>
    %487 = arith.divf %485, %486 : vector<1x128xf32>
    %488 = vector.extract_strided_slice %471 {offsets = [0, 256], sizes = [1, 128], strides = [1, 1]} : vector<1x384xf32> to vector<1x128xf32>
    %489 = vector.extract_strided_slice %442 {offsets = [0, 256], sizes = [1, 128], strides = [1, 1]} : vector<1x384xf32> to vector<1x128xf32>
    %490 = arith.mulf %479, %489 : vector<1x128xf32>
    %491 = arith.addf %488, %490 : vector<1x128xf32>
    %492 = math.tanh %491 : vector<1x128xf32>
    %cst_270 = arith.constant 1.000000e+00 : f32
    %493 = vector.broadcast %cst_270 : f32 to vector<1x128xf32>
    %494 = arith.subf %493, %487 : vector<1x128xf32>
    %495 = arith.mulf %494, %492 : vector<1x128xf32>
    %496 = arith.mulf %487, %411 : vector<1x128xf32>
    %497 = arith.addf %495, %496 : vector<1x128xf32>
    %c0_271 = arith.constant 0 : index
    %c0_272 = arith.constant 0 : index
    %498 = vector.load %arg13[%c0_271, %c0_272] : memref<128x256xf32, #tpu.memory_space<vmem>>, vector<128x256xf32>
    %cst_273 = arith.constant dense<0.000000e+00> : vector<1x256xf32>
    %499 = tpu.matmul %497, %498, %cst_273 {dimension_numbers = #tpu.dot_dimension_numbers<[1], [0], [0], [1], [0, 0, 1, 1], [], []>} : vector<1x128xf32>, vector<128x256xf32>, vector<1x256xf32> -> vector<1x256xf32>
    %c0_274 = arith.constant 0 : index
    %c0_275 = arith.constant 0 : index
    %500 = vector.load %arg14[%c0_274, %c0_275] : memref<1x256xf32, #tpu.memory_space<vmem>>, vector<1x256xf32>
    %501 = arith.addf %499, %500 : vector<1x256xf32>
    %cst_276 = arith.constant dense<0xFF800000> : vector<1xf32>
    %502 = vector.multi_reduction <maximumf>, %501, %cst_276 [1] : vector<1x256xf32> to vector<1xf32>
    %503 = vector.shape_cast %502 : vector<1xf32> to vector<1x1xf32>
    %504 = vector.broadcast %503 : vector<1x1xf32> to vector<1x256xf32>
    %505 = arith.subf %501, %504 : vector<1x256xf32>
    %506 = math.exp %505 : vector<1x256xf32>
    %cst_277 = arith.constant dense<0.000000e+00> : vector<1xf32>
    %507 = vector.multi_reduction <add>, %506, %cst_277 [1] : vector<1x256xf32> to vector<1xf32>
    %508 = vector.shape_cast %507 : vector<1xf32> to vector<1x1xf32>
    %509 = math.log %508 : vector<1x1xf32>
    %510 = arith.addf %509, %503 : vector<1x1xf32>
    %511 = vector.broadcast %510 : vector<1x1xf32> to vector<1x256xf32>
    %512 = arith.subf %501, %511 : vector<1x256xf32>
    %513 = arith.index_cast %c5_i32 : i32 to index
    %c0_278 = arith.constant 0 : index
    %514 = vector.load %arg15[%513, %c0_278] : memref<8x256xf32, #tpu.memory_space<vmem>>, vector<1x256xf32>
    tpu.vector_store %arg15[%513, %c0_278], %512 {strides = array<i32>} : memref<8x256xf32, #tpu.memory_space<vmem>>, vector<1x256xf32>,
    %515 = arith.index_cast %c5_i32 : i32 to index
    %c0_279 = arith.constant 0 : index
    %516 = vector.load %arg17[%515, %c0_279] : memref<8x128xf32, #tpu.memory_space<vmem>>, vector<1x128xf32>
    tpu.vector_store %arg17[%515, %c0_279], %458 {strides = array<i32>} : memref<8x128xf32, #tpu.memory_space<vmem>>, vector<1x128xf32>,
    %c6_i32 = arith.constant 6 : i32
    %517 = arith.index_cast %c6_i32 : i32 to index
    %518 = memref.load %arg1[%517] : memref<8xi32, #tpu.memory_space<smem>>
    %c0_i32_280 = arith.constant 0 : i32
    %c255_i32_281 = arith.constant 255 : i32
    %519 = arith.maxsi %c0_i32_280, %518 : i32
    %520 = arith.minsi %c255_i32_281, %519 : i32
    %521 = arith.index_cast %520 : i32 to index
    %c0_282 = arith.constant 0 : index
    %522 = vector.load %arg2[%521, %c0_282] : memref<256x128xf32, #tpu.memory_space<vmem>>, vector<1x128xf32>
    %c128_283 = arith.constant 128 : index
    %c0_284 = arith.constant 0 : index
    %523 = vector.load %arg5[%c128_283, %c0_284] : memref<256x128xf32, #tpu.memory_space<vmem>>, vector<128x128xf32>
    %cst_285 = arith.constant dense<0.000000e+00> : vector<1x128xf32>
    %524 = tpu.matmul %497, %523, %cst_285 {dimension_numbers = #tpu.dot_dimension_numbers<[1], [0], [0], [1], [0, 0, 1, 1], [], []>} : vector<1x128xf32>, vector<128x128xf32>, vector<1x128xf32> -> vector<1x128xf32>
    %c0_286 = arith.constant 0 : index
    %c0_287 = arith.constant 0 : index
    %525 = vector.load %arg11[%c0_286, %c0_287] : memref<128x384xf32, #tpu.memory_space<vmem>>, vector<128x384xf32>
    %cst_288 = arith.constant dense<0.000000e+00> : vector<1x384xf32>
    %526 = tpu.matmul %497, %525, %cst_288 {dimension_numbers = #tpu.dot_dimension_numbers<[1], [0], [0], [1], [0, 0, 1, 1], [], []>} : vector<1x128xf32>, vector<128x384xf32>, vector<1x384xf32> -> vector<1x384xf32>
    %c0_289 = arith.constant 0 : index
    %c0_290 = arith.constant 0 : index
    %527 = vector.load %arg12[%c0_289, %c0_290] : memref<1x384xf32, #tpu.memory_space<vmem>>, vector<1x384xf32>
    %528 = arith.addf %526, %527 : vector<1x384xf32>
    %c0_291 = arith.constant 0 : index
    %c0_292 = arith.constant 0 : index
    %529 = vector.load %arg5[%c0_291, %c0_292] : memref<256x128xf32, #tpu.memory_space<vmem>>, vector<128x128xf32>
    %cst_293 = arith.constant dense<0.000000e+00> : vector<1x128xf32>
    %530 = tpu.matmul %522, %529, %cst_293 {dimension_numbers = #tpu.dot_dimension_numbers<[1], [0], [0], [1], [0, 0, 1, 1], [], []>} : vector<1x128xf32>, vector<128x128xf32>, vector<1x128xf32> -> vector<1x128xf32>
    %c0_294 = arith.constant 0 : index
    %c0_295 = arith.constant 0 : index
    %531 = vector.load %arg7[%c0_294, %c0_295] : memref<256x128xf32, #tpu.memory_space<vmem>>, vector<128x128xf32>
    %cst_296 = arith.constant dense<0.000000e+00> : vector<1x128xf32>
    %532 = tpu.matmul %522, %531, %cst_296 {dimension_numbers = #tpu.dot_dimension_numbers<[1], [0], [0], [1], [0, 0, 1, 1], [], []>} : vector<1x128xf32>, vector<128x128xf32>, vector<1x128xf32> -> vector<1x128xf32>
    %533 = arith.addf %530, %524 : vector<1x128xf32>
    %c0_297 = arith.constant 0 : index
    %c0_298 = arith.constant 0 : index
    %534 = vector.load %arg6[%c0_297, %c0_298] : memref<1x128xf32, #tpu.memory_space<vmem>>, vector<1x128xf32>
    %535 = arith.addf %533, %534 : vector<1x128xf32>
    %cst_299 = arith.constant dense<0xFF800000> : vector<1xf32>
    %536 = vector.multi_reduction <maximumf>, %535, %cst_299 [1] : vector<1x128xf32> to vector<1xf32>
    %537 = vector.shape_cast %536 : vector<1xf32> to vector<1x1xf32>
    %538 = vector.broadcast %537 : vector<1x1xf32> to vector<1x128xf32>
    %539 = arith.subf %535, %538 : vector<1x128xf32>
    %540 = math.exp %539 : vector<1x128xf32>
    %cst_300 = arith.constant dense<0.000000e+00> : vector<1xf32>
    %541 = vector.multi_reduction <add>, %540, %cst_300 [1] : vector<1x128xf32> to vector<1xf32>
    %542 = vector.shape_cast %541 : vector<1xf32> to vector<1x1xf32>
    %543 = vector.broadcast %542 : vector<1x1xf32> to vector<1x128xf32>
    %544 = arith.divf %540, %543 : vector<1x128xf32>
    %c0_301 = arith.constant 0 : index
    %c0_302 = arith.constant 0 : index
    %545 = vector.load %arg4[%c0_301, %c0_302] : memref<128x128xf32, #tpu.memory_space<vmem>>, vector<128x128xf32>
    %cst_303 = arith.constant dense<0.000000e+00> : vector<1x128xf32>
    %546 = tpu.matmul %544, %545, %cst_303 {dimension_numbers = #tpu.dot_dimension_numbers<[1], [0], [0], [1], [0, 0, 1, 1], [], []>} : vector<1x128xf32>, vector<128x128xf32>, vector<1x128xf32> -> vector<1x128xf32>
    %c128_304 = arith.constant 128 : index
    %c0_305 = arith.constant 0 : index
    %547 = vector.load %arg7[%c128_304, %c0_305] : memref<256x128xf32, #tpu.memory_space<vmem>>, vector<128x128xf32>
    %cst_306 = arith.constant dense<0.000000e+00> : vector<1x128xf32>
    %548 = tpu.matmul %546, %547, %cst_306 {dimension_numbers = #tpu.dot_dimension_numbers<[1], [0], [0], [1], [0, 0, 1, 1], [], []>} : vector<1x128xf32>, vector<128x128xf32>, vector<1x128xf32> -> vector<1x128xf32>
    %549 = arith.addf %532, %548 : vector<1x128xf32>
    %c0_307 = arith.constant 0 : index
    %c0_308 = arith.constant 0 : index
    %550 = vector.load %arg8[%c0_307, %c0_308] : memref<1x128xf32, #tpu.memory_space<vmem>>, vector<1x128xf32>
    %551 = arith.addf %549, %550 : vector<1x128xf32>
    %cst_309 = arith.constant 0.000000e+00 : f32
    %552 = vector.broadcast %cst_309 : f32 to vector<1x128xf32>
    %553 = arith.maximumf %551, %552 : vector<1x128xf32>
    %c0_310 = arith.constant 0 : index
    %c0_311 = arith.constant 0 : index
    %554 = vector.load %arg9[%c0_310, %c0_311] : memref<128x384xf32, #tpu.memory_space<vmem>>, vector<128x384xf32>
    %cst_312 = arith.constant dense<0.000000e+00> : vector<1x384xf32>
    %555 = tpu.matmul %553, %554, %cst_312 {dimension_numbers = #tpu.dot_dimension_numbers<[1], [0], [0], [1], [0, 0, 1, 1], [], []>} : vector<1x128xf32>, vector<128x384xf32>, vector<1x384xf32> -> vector<1x384xf32>
    %c0_313 = arith.constant 0 : index
    %c0_314 = arith.constant 0 : index
    %556 = vector.load %arg10[%c0_313, %c0_314] : memref<1x384xf32, #tpu.memory_space<vmem>>, vector<1x384xf32>
    %557 = arith.addf %555, %556 : vector<1x384xf32>
    %558 = vector.extract_strided_slice %557 {offsets = [0, 0], sizes = [1, 128], strides = [1, 1]} : vector<1x384xf32> to vector<1x128xf32>
    %559 = vector.extract_strided_slice %528 {offsets = [0, 0], sizes = [1, 128], strides = [1, 1]} : vector<1x384xf32> to vector<1x128xf32>
    %560 = arith.addf %558, %559 : vector<1x128xf32>
    %561 = arith.negf %560 : vector<1x128xf32>
    %562 = math.exp %561 : vector<1x128xf32>
    %cst_315 = arith.constant 1.000000e+00 : f32
    %563 = vector.broadcast %cst_315 : f32 to vector<1x128xf32>
    %564 = arith.addf %563, %562 : vector<1x128xf32>
    %565 = arith.divf %563, %564 : vector<1x128xf32>
    %566 = vector.extract_strided_slice %557 {offsets = [0, 128], sizes = [1, 128], strides = [1, 1]} : vector<1x384xf32> to vector<1x128xf32>
    %567 = vector.extract_strided_slice %528 {offsets = [0, 128], sizes = [1, 128], strides = [1, 1]} : vector<1x384xf32> to vector<1x128xf32>
    %568 = arith.addf %566, %567 : vector<1x128xf32>
    %569 = arith.negf %568 : vector<1x128xf32>
    %570 = math.exp %569 : vector<1x128xf32>
    %cst_316 = arith.constant 1.000000e+00 : f32
    %571 = vector.broadcast %cst_316 : f32 to vector<1x128xf32>
    %572 = arith.addf %571, %570 : vector<1x128xf32>
    %573 = arith.divf %571, %572 : vector<1x128xf32>
    %574 = vector.extract_strided_slice %557 {offsets = [0, 256], sizes = [1, 128], strides = [1, 1]} : vector<1x384xf32> to vector<1x128xf32>
    %575 = vector.extract_strided_slice %528 {offsets = [0, 256], sizes = [1, 128], strides = [1, 1]} : vector<1x384xf32> to vector<1x128xf32>
    %576 = arith.mulf %565, %575 : vector<1x128xf32>
    %577 = arith.addf %574, %576 : vector<1x128xf32>
    %578 = math.tanh %577 : vector<1x128xf32>
    %cst_317 = arith.constant 1.000000e+00 : f32
    %579 = vector.broadcast %cst_317 : f32 to vector<1x128xf32>
    %580 = arith.subf %579, %573 : vector<1x128xf32>
    %581 = arith.mulf %580, %578 : vector<1x128xf32>
    %582 = arith.mulf %573, %497 : vector<1x128xf32>
    %583 = arith.addf %581, %582 : vector<1x128xf32>
    %c0_318 = arith.constant 0 : index
    %c0_319 = arith.constant 0 : index
    %584 = vector.load %arg13[%c0_318, %c0_319] : memref<128x256xf32, #tpu.memory_space<vmem>>, vector<128x256xf32>
    %cst_320 = arith.constant dense<0.000000e+00> : vector<1x256xf32>
    %585 = tpu.matmul %583, %584, %cst_320 {dimension_numbers = #tpu.dot_dimension_numbers<[1], [0], [0], [1], [0, 0, 1, 1], [], []>} : vector<1x128xf32>, vector<128x256xf32>, vector<1x256xf32> -> vector<1x256xf32>
    %c0_321 = arith.constant 0 : index
    %c0_322 = arith.constant 0 : index
    %586 = vector.load %arg14[%c0_321, %c0_322] : memref<1x256xf32, #tpu.memory_space<vmem>>, vector<1x256xf32>
    %587 = arith.addf %585, %586 : vector<1x256xf32>
    %cst_323 = arith.constant dense<0xFF800000> : vector<1xf32>
    %588 = vector.multi_reduction <maximumf>, %587, %cst_323 [1] : vector<1x256xf32> to vector<1xf32>
    %589 = vector.shape_cast %588 : vector<1xf32> to vector<1x1xf32>
    %590 = vector.broadcast %589 : vector<1x1xf32> to vector<1x256xf32>
    %591 = arith.subf %587, %590 : vector<1x256xf32>
    %592 = math.exp %591 : vector<1x256xf32>
    %cst_324 = arith.constant dense<0.000000e+00> : vector<1xf32>
    %593 = vector.multi_reduction <add>, %592, %cst_324 [1] : vector<1x256xf32> to vector<1xf32>
    %594 = vector.shape_cast %593 : vector<1xf32> to vector<1x1xf32>
    %595 = math.log %594 : vector<1x1xf32>
    %596 = arith.addf %595, %589 : vector<1x1xf32>
    %597 = vector.broadcast %596 : vector<1x1xf32> to vector<1x256xf32>
    %598 = arith.subf %587, %597 : vector<1x256xf32>
    %599 = arith.index_cast %c6_i32 : i32 to index
    %c0_325 = arith.constant 0 : index
    %600 = vector.load %arg15[%599, %c0_325] : memref<8x256xf32, #tpu.memory_space<vmem>>, vector<1x256xf32>
    tpu.vector_store %arg15[%599, %c0_325], %598 {strides = array<i32>} : memref<8x256xf32, #tpu.memory_space<vmem>>, vector<1x256xf32>,
    %601 = arith.index_cast %c6_i32 : i32 to index
    %c0_326 = arith.constant 0 : index
    %602 = vector.load %arg17[%601, %c0_326] : memref<8x128xf32, #tpu.memory_space<vmem>>, vector<1x128xf32>
    tpu.vector_store %arg17[%601, %c0_326], %544 {strides = array<i32>} : memref<8x128xf32, #tpu.memory_space<vmem>>, vector<1x128xf32>,
    %c7_i32 = arith.constant 7 : i32
    %603 = arith.index_cast %c7_i32 : i32 to index
    %604 = memref.load %arg1[%603] : memref<8xi32, #tpu.memory_space<smem>>
    %c0_i32_327 = arith.constant 0 : i32
    %c255_i32_328 = arith.constant 255 : i32
    %605 = arith.maxsi %c0_i32_327, %604 : i32
    %606 = arith.minsi %c255_i32_328, %605 : i32
    %607 = arith.index_cast %606 : i32 to index
    %c0_329 = arith.constant 0 : index
    %608 = vector.load %arg2[%607, %c0_329] : memref<256x128xf32, #tpu.memory_space<vmem>>, vector<1x128xf32>
    %c128_330 = arith.constant 128 : index
    %c0_331 = arith.constant 0 : index
    %609 = vector.load %arg5[%c128_330, %c0_331] : memref<256x128xf32, #tpu.memory_space<vmem>>, vector<128x128xf32>
    %cst_332 = arith.constant dense<0.000000e+00> : vector<1x128xf32>
    %610 = tpu.matmul %583, %609, %cst_332 {dimension_numbers = #tpu.dot_dimension_numbers<[1], [0], [0], [1], [0, 0, 1, 1], [], []>} : vector<1x128xf32>, vector<128x128xf32>, vector<1x128xf32> -> vector<1x128xf32>
    %c0_333 = arith.constant 0 : index
    %c0_334 = arith.constant 0 : index
    %611 = vector.load %arg11[%c0_333, %c0_334] : memref<128x384xf32, #tpu.memory_space<vmem>>, vector<128x384xf32>
    %cst_335 = arith.constant dense<0.000000e+00> : vector<1x384xf32>
    %612 = tpu.matmul %583, %611, %cst_335 {dimension_numbers = #tpu.dot_dimension_numbers<[1], [0], [0], [1], [0, 0, 1, 1], [], []>} : vector<1x128xf32>, vector<128x384xf32>, vector<1x384xf32> -> vector<1x384xf32>
    %c0_336 = arith.constant 0 : index
    %c0_337 = arith.constant 0 : index
    %613 = vector.load %arg12[%c0_336, %c0_337] : memref<1x384xf32, #tpu.memory_space<vmem>>, vector<1x384xf32>
    %614 = arith.addf %612, %613 : vector<1x384xf32>
    %c0_338 = arith.constant 0 : index
    %c0_339 = arith.constant 0 : index
    %615 = vector.load %arg5[%c0_338, %c0_339] : memref<256x128xf32, #tpu.memory_space<vmem>>, vector<128x128xf32>
    %cst_340 = arith.constant dense<0.000000e+00> : vector<1x128xf32>
    %616 = tpu.matmul %608, %615, %cst_340 {dimension_numbers = #tpu.dot_dimension_numbers<[1], [0], [0], [1], [0, 0, 1, 1], [], []>} : vector<1x128xf32>, vector<128x128xf32>, vector<1x128xf32> -> vector<1x128xf32>
    %c0_341 = arith.constant 0 : index
    %c0_342 = arith.constant 0 : index
    %617 = vector.load %arg7[%c0_341, %c0_342] : memref<256x128xf32, #tpu.memory_space<vmem>>, vector<128x128xf32>
    %cst_343 = arith.constant dense<0.000000e+00> : vector<1x128xf32>
    %618 = tpu.matmul %608, %617, %cst_343 {dimension_numbers = #tpu.dot_dimension_numbers<[1], [0], [0], [1], [0, 0, 1, 1], [], []>} : vector<1x128xf32>, vector<128x128xf32>, vector<1x128xf32> -> vector<1x128xf32>
    %619 = arith.addf %616, %610 : vector<1x128xf32>
    %c0_344 = arith.constant 0 : index
    %c0_345 = arith.constant 0 : index
    %620 = vector.load %arg6[%c0_344, %c0_345] : memref<1x128xf32, #tpu.memory_space<vmem>>, vector<1x128xf32>
    %621 = arith.addf %619, %620 : vector<1x128xf32>
    %cst_346 = arith.constant dense<0xFF800000> : vector<1xf32>
    %622 = vector.multi_reduction <maximumf>, %621, %cst_346 [1] : vector<1x128xf32> to vector<1xf32>
    %623 = vector.shape_cast %622 : vector<1xf32> to vector<1x1xf32>
    %624 = vector.broadcast %623 : vector<1x1xf32> to vector<1x128xf32>
    %625 = arith.subf %621, %624 : vector<1x128xf32>
    %626 = math.exp %625 : vector<1x128xf32>
    %cst_347 = arith.constant dense<0.000000e+00> : vector<1xf32>
    %627 = vector.multi_reduction <add>, %626, %cst_347 [1] : vector<1x128xf32> to vector<1xf32>
    %628 = vector.shape_cast %627 : vector<1xf32> to vector<1x1xf32>
    %629 = vector.broadcast %628 : vector<1x1xf32> to vector<1x128xf32>
    %630 = arith.divf %626, %629 : vector<1x128xf32>
    %c0_348 = arith.constant 0 : index
    %c0_349 = arith.constant 0 : index
    %631 = vector.load %arg4[%c0_348, %c0_349] : memref<128x128xf32, #tpu.memory_space<vmem>>, vector<128x128xf32>
    %cst_350 = arith.constant dense<0.000000e+00> : vector<1x128xf32>
    %632 = tpu.matmul %630, %631, %cst_350 {dimension_numbers = #tpu.dot_dimension_numbers<[1], [0], [0], [1], [0, 0, 1, 1], [], []>} : vector<1x128xf32>, vector<128x128xf32>, vector<1x128xf32> -> vector<1x128xf32>
    %c128_351 = arith.constant 128 : index
    %c0_352 = arith.constant 0 : index
    %633 = vector.load %arg7[%c128_351, %c0_352] : memref<256x128xf32, #tpu.memory_space<vmem>>, vector<128x128xf32>
    %cst_353 = arith.constant dense<0.000000e+00> : vector<1x128xf32>
    %634 = tpu.matmul %632, %633, %cst_353 {dimension_numbers = #tpu.dot_dimension_numbers<[1], [0], [0], [1], [0, 0, 1, 1], [], []>} : vector<1x128xf32>, vector<128x128xf32>, vector<1x128xf32> -> vector<1x128xf32>
    %635 = arith.addf %618, %634 : vector<1x128xf32>
    %c0_354 = arith.constant 0 : index
    %c0_355 = arith.constant 0 : index
    %636 = vector.load %arg8[%c0_354, %c0_355] : memref<1x128xf32, #tpu.memory_space<vmem>>, vector<1x128xf32>
    %637 = arith.addf %635, %636 : vector<1x128xf32>
    %cst_356 = arith.constant 0.000000e+00 : f32
    %638 = vector.broadcast %cst_356 : f32 to vector<1x128xf32>
    %639 = arith.maximumf %637, %638 : vector<1x128xf32>
    %c0_357 = arith.constant 0 : index
    %c0_358 = arith.constant 0 : index
    %640 = vector.load %arg9[%c0_357, %c0_358] : memref<128x384xf32, #tpu.memory_space<vmem>>, vector<128x384xf32>
    %cst_359 = arith.constant dense<0.000000e+00> : vector<1x384xf32>
    %641 = tpu.matmul %639, %640, %cst_359 {dimension_numbers = #tpu.dot_dimension_numbers<[1], [0], [0], [1], [0, 0, 1, 1], [], []>} : vector<1x128xf32>, vector<128x384xf32>, vector<1x384xf32> -> vector<1x384xf32>
    %c0_360 = arith.constant 0 : index
    %c0_361 = arith.constant 0 : index
    %642 = vector.load %arg10[%c0_360, %c0_361] : memref<1x384xf32, #tpu.memory_space<vmem>>, vector<1x384xf32>
    %643 = arith.addf %641, %642 : vector<1x384xf32>
    %644 = vector.extract_strided_slice %643 {offsets = [0, 0], sizes = [1, 128], strides = [1, 1]} : vector<1x384xf32> to vector<1x128xf32>
    %645 = vector.extract_strided_slice %614 {offsets = [0, 0], sizes = [1, 128], strides = [1, 1]} : vector<1x384xf32> to vector<1x128xf32>
    %646 = arith.addf %644, %645 : vector<1x128xf32>
    %647 = arith.negf %646 : vector<1x128xf32>
    %648 = math.exp %647 : vector<1x128xf32>
    %cst_362 = arith.constant 1.000000e+00 : f32
    %649 = vector.broadcast %cst_362 : f32 to vector<1x128xf32>
    %650 = arith.addf %649, %648 : vector<1x128xf32>
    %651 = arith.divf %649, %650 : vector<1x128xf32>
    %652 = vector.extract_strided_slice %643 {offsets = [0, 128], sizes = [1, 128], strides = [1, 1]} : vector<1x384xf32> to vector<1x128xf32>
    %653 = vector.extract_strided_slice %614 {offsets = [0, 128], sizes = [1, 128], strides = [1, 1]} : vector<1x384xf32> to vector<1x128xf32>
    %654 = arith.addf %652, %653 : vector<1x128xf32>
    %655 = arith.negf %654 : vector<1x128xf32>
    %656 = math.exp %655 : vector<1x128xf32>
    %cst_363 = arith.constant 1.000000e+00 : f32
    %657 = vector.broadcast %cst_363 : f32 to vector<1x128xf32>
    %658 = arith.addf %657, %656 : vector<1x128xf32>
    %659 = arith.divf %657, %658 : vector<1x128xf32>
    %660 = vector.extract_strided_slice %643 {offsets = [0, 256], sizes = [1, 128], strides = [1, 1]} : vector<1x384xf32> to vector<1x128xf32>
    %661 = vector.extract_strided_slice %614 {offsets = [0, 256], sizes = [1, 128], strides = [1, 1]} : vector<1x384xf32> to vector<1x128xf32>
    %662 = arith.mulf %651, %661 : vector<1x128xf32>
    %663 = arith.addf %660, %662 : vector<1x128xf32>
    %664 = math.tanh %663 : vector<1x128xf32>
    %cst_364 = arith.constant 1.000000e+00 : f32
    %665 = vector.broadcast %cst_364 : f32 to vector<1x128xf32>
    %666 = arith.subf %665, %659 : vector<1x128xf32>
    %667 = arith.mulf %666, %664 : vector<1x128xf32>
    %668 = arith.mulf %659, %583 : vector<1x128xf32>
    %669 = arith.addf %667, %668 : vector<1x128xf32>
    %c0_365 = arith.constant 0 : index
    %c0_366 = arith.constant 0 : index
    %670 = vector.load %arg13[%c0_365, %c0_366] : memref<128x256xf32, #tpu.memory_space<vmem>>, vector<128x256xf32>
    %cst_367 = arith.constant dense<0.000000e+00> : vector<1x256xf32>
    %671 = tpu.matmul %669, %670, %cst_367 {dimension_numbers = #tpu.dot_dimension_numbers<[1], [0], [0], [1], [0, 0, 1, 1], [], []>} : vector<1x128xf32>, vector<128x256xf32>, vector<1x256xf32> -> vector<1x256xf32>
    %c0_368 = arith.constant 0 : index
    %c0_369 = arith.constant 0 : index
    %672 = vector.load %arg14[%c0_368, %c0_369] : memref<1x256xf32, #tpu.memory_space<vmem>>, vector<1x256xf32>
    %673 = arith.addf %671, %672 : vector<1x256xf32>
    %cst_370 = arith.constant dense<0xFF800000> : vector<1xf32>
    %674 = vector.multi_reduction <maximumf>, %673, %cst_370 [1] : vector<1x256xf32> to vector<1xf32>
    %675 = vector.shape_cast %674 : vector<1xf32> to vector<1x1xf32>
    %676 = vector.broadcast %675 : vector<1x1xf32> to vector<1x256xf32>
    %677 = arith.subf %673, %676 : vector<1x256xf32>
    %678 = math.exp %677 : vector<1x256xf32>
    %cst_371 = arith.constant dense<0.000000e+00> : vector<1xf32>
    %679 = vector.multi_reduction <add>, %678, %cst_371 [1] : vector<1x256xf32> to vector<1xf32>
    %680 = vector.shape_cast %679 : vector<1xf32> to vector<1x1xf32>
    %681 = math.log %680 : vector<1x1xf32>
    %682 = arith.addf %681, %675 : vector<1x1xf32>
    %683 = vector.broadcast %682 : vector<1x1xf32> to vector<1x256xf32>
    %684 = arith.subf %673, %683 : vector<1x256xf32>
    %685 = arith.index_cast %c7_i32 : i32 to index
    %c0_372 = arith.constant 0 : index
    %686 = vector.load %arg15[%685, %c0_372] : memref<8x256xf32, #tpu.memory_space<vmem>>, vector<1x256xf32>
    tpu.vector_store %arg15[%685, %c0_372], %684 {strides = array<i32>} : memref<8x256xf32, #tpu.memory_space<vmem>>, vector<1x256xf32>,
    %687 = arith.index_cast %c7_i32 : i32 to index
    %c0_373 = arith.constant 0 : index
    %688 = vector.load %arg17[%687, %c0_373] : memref<8x128xf32, #tpu.memory_space<vmem>>, vector<1x128xf32>
    tpu.vector_store %arg17[%687, %c0_373], %630 {strides = array<i32>} : memref<8x128xf32, #tpu.memory_space<vmem>>, vector<1x128xf32>,
    %c8_i32 = arith.constant 8 : i32
    %c0_374 = arith.constant 0 : index
    %c0_375 = arith.constant 0 : index
    %689 = vector.load %arg16[%c0_374, %c0_375] : memref<1x128xf32, #tpu.memory_space<vmem>>, vector<1x128xf32>
    tpu.vector_store %arg16[%c0_374, %c0_375], %669 {strides = array<i32>} : memref<1x128xf32, #tpu.memory_space<vmem>>, vector<1x128xf32>,
    return
  }
  func.func @transform_0(%arg0: i32, %arg1: memref<8xi32, #tpu.memory_space<smem>>) -> (i32, i32) {
    %c0_i32 = arith.constant 0 : i32
    %c0_i32_0 = arith.constant 0 : i32
    %c0_i32_1 = arith.constant 0 : i32
    return %c0_i32, %c0_i32_0 : i32, i32
  }
  func.func @transform_1(%arg0: i32, %arg1: memref<8xi32, #tpu.memory_space<smem>>) -> (i32, i32) {
    %c0_i32 = arith.constant 0 : i32
    %c0_i32_0 = arith.constant 0 : i32
    %c0_i32_1 = arith.constant 0 : i32
    return %c0_i32, %c0_i32_0 : i32, i32
  }
  func.func @transform_2(%arg0: i32, %arg1: memref<8xi32, #tpu.memory_space<smem>>) -> (i32, i32) {
    %c0_i32 = arith.constant 0 : i32
    %c0_i32_0 = arith.constant 0 : i32
    %c0_i32_1 = arith.constant 0 : i32
    return %c0_i32, %c0_i32_0 : i32, i32
  }
  func.func @transform_3(%arg0: i32, %arg1: memref<8xi32, #tpu.memory_space<smem>>) -> (i32, i32) {
    %c0_i32 = arith.constant 0 : i32
    %c0_i32_0 = arith.constant 0 : i32
    %c0_i32_1 = arith.constant 0 : i32
    return %c0_i32, %c0_i32_0 : i32, i32
  }
  func.func @transform_4(%arg0: i32, %arg1: memref<8xi32, #tpu.memory_space<smem>>) -> (i32, i32) {
    %c0_i32 = arith.constant 0 : i32
    %c0_i32_0 = arith.constant 0 : i32
    %c0_i32_1 = arith.constant 0 : i32
    return %c0_i32, %c0_i32_0 : i32, i32
  }
  func.func @transform_5(%arg0: i32, %arg1: memref<8xi32, #tpu.memory_space<smem>>) -> (i32, i32) {
    %c0_i32 = arith.constant 0 : i32
    %c0_i32_0 = arith.constant 0 : i32
    %c0_i32_1 = arith.constant 0 : i32
    return %c0_i32, %c0_i32_0 : i32, i32
  }
  func.func @transform_6(%arg0: i32, %arg1: memref<8xi32, #tpu.memory_space<smem>>) -> (i32, i32) {
    %c0_i32 = arith.constant 0 : i32
    %c0_i32_0 = arith.constant 0 : i32
    %c0_i32_1 = arith.constant 0 : i32
    return %c0_i32, %c0_i32_0 : i32, i32
  }
  func.func @transform_7(%arg0: i32, %arg1: memref<8xi32, #tpu.memory_space<smem>>) -> (i32, i32) {
    %c0_i32 = arith.constant 0 : i32
    %c0_i32_0 = arith.constant 0 : i32
    %c0_i32_1 = arith.constant 0 : i32
    return %c0_i32, %c0_i32_0 : i32, i32
  }
  func.func @transform_8(%arg0: i32, %arg1: memref<8xi32, #tpu.memory_space<smem>>) -> (i32, i32) {
    %c0_i32 = arith.constant 0 : i32
    %c0_i32_0 = arith.constant 0 : i32
    %c0_i32_1 = arith.constant 0 : i32
    return %c0_i32, %c0_i32_0 : i32, i32
  }
  func.func @transform_9(%arg0: i32, %arg1: memref<8xi32, #tpu.memory_space<smem>>) -> (i32, i32) {
    %c0_i32 = arith.constant 0 : i32
    %c0_i32_0 = arith.constant 0 : i32
    %c0_i32_1 = arith.constant 0 : i32
    return %c0_i32, %c0_i32_0 : i32, i32
  }
  func.func @transform_10(%arg0: i32, %arg1: memref<8xi32, #tpu.memory_space<smem>>) -> (i32, i32) {
    %c0_i32 = arith.constant 0 : i32
    %c0_i32_0 = arith.constant 0 : i32
    %c0_i32_1 = arith.constant 0 : i32
    return %c0_i32, %c0_i32_0 : i32, i32
  }
  func.func @transform_11(%arg0: i32, %arg1: memref<8xi32, #tpu.memory_space<smem>>) -> (i32, i32) {
    %c0_i32 = arith.constant 0 : i32
    %c0_i32_0 = arith.constant 0 : i32
    %c0_i32_1 = arith.constant 0 : i32
    return %c0_i32, %c0_i32_0 : i32, i32
  }
  func.func @transform_12(%arg0: i32, %arg1: memref<8xi32, #tpu.memory_space<smem>>) -> (i32, i32) {
    %c0_i32 = arith.constant 0 : i32
    %c0_i32_0 = arith.constant 0 : i32
    %c0_i32_1 = arith.constant 0 : i32
    return %c0_i32, %c0_i32_0 : i32, i32
  }
  func.func @transform_13(%arg0: i32, %arg1: memref<8xi32, #tpu.memory_space<smem>>) -> (i32, i32) {
    %c0_i32 = arith.constant 0 : i32
    %c0_i32_0 = arith.constant 0 : i32
    %c0_i32_1 = arith.constant 0 : i32
    return %c0_i32, %c0_i32_0 : i32, i32
  }
  func.func @transform_14(%arg0: i32, %arg1: memref<8xi32, #tpu.memory_space<smem>>) -> (i32, i32) {
    %c0_i32 = arith.constant 0 : i32
    %c0_i32_0 = arith.constant 0 : i32
    %c0_i32_1 = arith.constant 0 : i32
    return %c0_i32, %c0_i32_0 : i32, i32
  }
  func.func @transform_15(%arg0: i32, %arg1: memref<8xi32, #tpu.memory_space<smem>>) -> (i32, i32) {
    %c0_i32 = arith.constant 0 : i32
    %c0_i32_0 = arith.constant 0 : i32
    %c0_i32_1 = arith.constant 0 : i32
    return %c0_i32, %c0_i32_0 : i32, i32
  }
}

</mosaic_0001>

<llo_original>
// kernel: tpu_custom_call.1
$region0: #{tpu_custom_call.1}
  #allocation0 [shape = 'u32[]', space=smem, size = 0x4, offset = 0x4, fixed_abs, tag = 'smem constant byte address 0x4 - core index']
  #allocation1 [shape = 'u32[72,128]{1,0:T(1,128)}', space=vmem, size = 0x9000, scoped, tag = 'internal scratch']
  #allocation2 [shape = 's32[1]{0}', space=sflag, size = 0x4, scoped, tag = 'scoped memory for tpu_custom_call.1']
  #allocation3 [shape = 'u8[512]{0}', space=smem, size = 0x200, scoped, tag = 'prefetched SMEM operand 0']
  %s0 = inlined_call_operand.hbm [shape: s32[8], index: 0, kind: input, shape index: {}]
  %s1 = inlined_call_operand.hbm [shape: f32[256,128], index: 1, kind: input, shape index: {}]
  %s2 = inlined_call_operand.hbm [shape: f32[1,128], index: 2, kind: input, shape index: {}]
  %s3 = inlined_call_operand.hbm [shape: f32[128,128], index: 3, kind: input, shape index: {}]
  %s4 = inlined_call_operand.hbm [shape: f32[256,128], index: 4, kind: input, shape index: {}]
  %s5 = inlined_call_operand.hbm [shape: f32[1,128], index: 5, kind: input, shape index: {}]
  %s6 = inlined_call_operand.hbm [shape: f32[256,128], index: 6, kind: input, shape index: {}]
  %s7 = inlined_call_operand.hbm [shape: f32[1,128], index: 7, kind: input, shape index: {}]
  %s8 = inlined_call_operand.hbm [shape: f32[128,384], index: 8, kind: input, shape index: {}]
  %s9 = inlined_call_operand.vmem [shape: f32[1,384], index: 9, kind: input, shape index: {}]
  %s10 = inlined_call_operand.hbm [shape: f32[128,384], index: 10, kind: input, shape index: {}]
  %s11 = inlined_call_operand.vmem [shape: f32[1,384], index: 11, kind: input, shape index: {}]
  %s12 = inlined_call_operand.hbm [shape: f32[128,256], index: 12, kind: input, shape index: {}]
  %s13 = inlined_call_operand.vmem [shape: f32[1,256], index: 13, kind: input, shape index: {}]
  %s14 = inlined_call_operand.hbm [shape: f32[8,256], index: 14, kind: output, shape index: {0}]
  %s15 = inlined_call_operand.hbm [shape: f32[1,128], index: 15, kind: output, shape index: {1}]
  %s16 = inlined_call_operand.hbm [shape: f32[8,128], index: 16, kind: output, shape index: {2}]
  %17 = xla_tuple %s14, %s15, %s16
  %s18 = sld [smem:[#allocation0]]
  $region118: #{tpu_custom_call.1} parent=0
    _
  %s20 = ssub.s32 1, %s18
  %s21 = scalar_select 0, %s20, %s18
  %s23 = sshll.u32 %s0, 4
  %s24 = int_to_ptr.hbm [resolvable:$true] %s23
  %26 = dma.hbm_to_smem %s24, 16, [#allocation3], [#allocation2]
  %28 = dma.done [#allocation2], 16
  %29 = sfence
  $region1: #{tpu_custom_call.1} parent=0
    #allocation4 [shape = 'u8[131072]{0}', space=vmem, size = 0x20000, scoped, tag = 'input window, operand 1, single buffered']
    #allocation5 [shape = 's32[1]{0}', space=sflag, size = 0x4, scoped, tag = 'scoped memory for tpu_custom_call.1']
    #allocation6 [shape = 's32[1]{0}', space=sflag, size = 0x4, scoped, tag = 'scoped memory for tpu_custom_call.1']
    #allocation7 [shape = 'u8[512]{0}', space=vmem, size = 0x400, scoped, tag = 'input window, operand 2, single buffered']
    #allocation8 [shape = 's32[1]{0}', space=sflag, size = 0x4, scoped, tag = 'scoped memory for tpu_custom_call.1']
    #allocation9 [shape = 'u8[65536]{0}', space=vmem, size = 0x10000, scoped, tag = 'input window, operand 3, single buffered']
    #allocation10 [shape = 'u8[131072]{0}', space=vmem, size = 0x20000, scoped, tag = 'input window, operand 4, single buffered']
    #allocation11 [shape = 's32[1]{0}', space=sflag, size = 0x4, scoped, tag = 'scoped memory for tpu_custom_call.1']
    #allocation12 [shape = 'u8[512]{0}', space=vmem, size = 0x400, scoped, tag = 'input window, operand 5, single buffered']
    #allocation13 [shape = 'u8[131072]{0}', space=vmem, size = 0x20000, scoped, tag = 'input window, operand 6, single buffered']
    #allocation14 [shape = 's32[1]{0}', space=sflag, size = 0x4, scoped, tag = 'scoped memory for tpu_custom_call.1']
    #allocation15 [shape = 'u8[512]{0}', space=vmem, size = 0x400, scoped, tag = 'input window, operand 7, single buffered']
    #allocation16 [shape = 'u8[196608]{0}', space=vmem, size = 0x30000, scoped, tag = 'input window, operand 8, single buffered']
    #allocation17 [shape = 's32[1]{0}', space=sflag, size = 0x4, scoped, tag = 'scoped memory for tpu_custom_call.1']
    #allocation18 [shape = 'u8[196608]{0}', space=vmem, size = 0x30000, scoped, tag = 'input window, operand 10, single buffered']
    #allocation19 [shape = 'u8[131072]{0}', space=vmem, size = 0x20000, scoped, tag = 'input window, operand 12, single buffered']
    #allocation20 [shape = 's32[1]{0}', space=sflag, size = 0x4, scoped, tag = 'scoped memory for tpu_custom_call.1']
    #allocation21 [shape = 'u8[8192]{0}', space=vmem, size = 0x2000, scoped, tag = 'output window, operand 0, single buffered']
    #allocation22 [shape = 'u8[512]{0}', space=vmem, size = 0x400, scoped, tag = 'output window, operand 1, single buffered']
    #allocation23 [shape = 's32[1]{0}', space=sflag, size = 0x4, scoped, tag = 'scoped memory for tpu_custom_call.1']
    #allocation24 [shape = 'u8[4096]{0}', space=vmem, size = 0x1000, scoped, tag = 'output window, operand 2, single buffered']
    %30 = vsyncpa [#allocation5], 0
    %31 = vsyncpa [#allocation8], 0
    %32 = vsyncpa [#allocation11], 0
    %33 = vsyncpa [#allocation14], 0
    %34 = vsyncpa [#allocation17], 0
    %35 = vsyncpa [#allocation20], 0
    %36 = vsyncpa [#allocation6], 0
    %37 = vsyncpa [#allocation23], 0
    // Predicated region
    $region2: #{tpu_custom_call.1} parent=1 // pred_check
      _
    $region3: #{tpu_custom_call.1} parent=1 // pred_check_branch
      %39 = sbr.rel (0) target = $region5
    $region4: #{tpu_custom_call.1} parent=1 // pred_region
      %41 = vsyncadd [#allocation5], 0
      %s42 = sshll.u32 %s1, 4
      %s43 = int_to_ptr.hbm [resolvable:$true] %s42
      %s44 = sshll.u32 [#allocation4], 4
      %s45 = int_to_ptr.vmem [resolvable:$true] %s44
      %50 = dma.hbm_to_vmem [thread:$0]  %s43, 4096, %s45, [#allocation5], 128, 128, 8
    $region5: #{tpu_custom_call.1} parent=1 // pred_fallthru
      _
    // Predicated region
    $region6: #{tpu_custom_call.1} parent=1 // pred_check
      _
    $region7: #{tpu_custom_call.1} parent=1 // pred_check_branch
      %52 = sbr.rel (0) target = $region9
    $region8: #{tpu_custom_call.1} parent=1 // pred_region
      %54 = vsyncadd [#allocation8], 0
      %s56 = sshll.u32 %s2, 4
      %s57 = int_to_ptr.hbm [resolvable:$true] %s56
      %s58 = sshll.u32 [#allocation7], 4
      %s59 = int_to_ptr.vmem [resolvable:$true] %s58
      %61 = dma.hbm_to_vmem [thread:$0]  %s57, 16, %s59, [#allocation8]
    $region9: #{tpu_custom_call.1} parent=1 // pred_fallthru
      _
    // Predicated region
    $region10: #{tpu_custom_call.1} parent=1 // pred_check
      _
    $region11: #{tpu_custom_call.1} parent=1 // pred_check_branch
      %63 = sbr.rel (0) target = $region13
    $region12: #{tpu_custom_call.1} parent=1 // pred_region
      %65 = vsyncadd [#allocation8], 0
      %s66 = sshll.u32 %s3, 4
      %s67 = int_to_ptr.hbm [resolvable:$true] %s66
      %s68 = sshll.u32 [#allocation9], 4
      %s69 = int_to_ptr.vmem [resolvable:$true] %s68
      %74 = dma.hbm_to_vmem [thread:$0]  %s67, 2048, %s69, [#allocation8], 128, 128, 8
    $region13: #{tpu_custom_call.1} parent=1 // pred_fallthru
      _
    // Predicated region
    $region14: #{tpu_custom_call.1} parent=1 // pred_check
      _
    $region15: #{tpu_custom_call.1} parent=1 // pred_check_branch
      %76 = sbr.rel (0) target = $region17
    $region16: #{tpu_custom_call.1} parent=1 // pred_region
      %78 = vsyncadd [#allocation11], 0
      %s79 = sshll.u32 %s4, 4
      %s80 = int_to_ptr.hbm [resolvable:$true] %s79
      %s81 = sshll.u32 [#allocation10], 4
      %s82 = int_to_ptr.vmem [resolvable:$true] %s81
      %87 = dma.hbm_to_vmem [thread:$0]  %s80, 4096, %s82, [#allocation11], 128, 128, 8
    $region17: #{tpu_custom_call.1} parent=1 // pred_fallthru
      _
    // Predicated region
    $region18: #{tpu_custom_call.1} parent=1 // pred_check
      _
    $region19: #{tpu_custom_call.1} parent=1 // pred_check_branch
      %89 = sbr.rel (0) target = $region21
    $region20: #{tpu_custom_call.1} parent=1 // pred_region
      %91 = vsyncadd [#allocation11], 0
      %s93 = sshll.u32 %s5, 4
      %s94 = int_to_ptr.hbm [resolvable:$true] %s93
      %s95 = sshll.u32 [#allocation12], 4
      %s96 = int_to_ptr.vmem [resolvable:$true] %s95
      %98 = dma.hbm_to_vmem [thread:$0]  %s94, 16, %s96, [#allocation11]
    $region21: #{tpu_custom_call.1} parent=1 // pred_fallthru
      _
    // Predicated region
    $region22: #{tpu_custom_call.1} parent=1 // pred_check
      _
    $region23: #{tpu_custom_call.1} parent=1 // pred_check_branch
      %100 = sbr.rel (0) target = $region25
    $region24: #{tpu_custom_call.1} parent=1 // pred_region
      %102 = vsyncadd [#allocation14], 0
      %s103 = sshll.u32 %s6, 4
      %s104 = int_to_ptr.hbm [resolvable:$true] %s103
      %s105 = sshll.u32 [#allocation13], 4
      %s106 = int_to_ptr.vmem [resolvable:$true] %s105
      %111 = dma.hbm_to_vmem [thread:$0]  %s104, 4096, %s106, [#allocation14], 128, 128, 8
    $region25: #{tpu_custom_call.1} parent=1 // pred_fallthru
      _
    // Predicated region
    $region26: #{tpu_custom_call.1} parent=1 // pred_check
      _
    $region27: #{tpu_custom_call.1} parent=1 // pred_check_branch
      %113 = sbr.rel (0) target = $region29
    $region28: #{tpu_custom_call.1} parent=1 // pred_region
      %115 = vsyncadd [#allocation14], 0
      %s117 = sshll.u32 %s7, 4
      %s118 = int_to_ptr.hbm [resolvable:$true] %s117
      %s119 = sshll.u32 [#allocation15], 4
      %s120 = int_to_ptr.vmem [resolvable:$true] %s119
      %122 = dma.hbm_to_vmem [thread:$0]  %s118, 16, %s120, [#allocation14]
    $region29: #{tpu_custom_call.1} parent=1 // pred_fallthru
      _
    // Predicated region
    $region30: #{tpu_custom_call.1} parent=1 // pred_check
      _
    $region31: #{tpu_custom_call.1} parent=1 // pred_check_branch
      %124 = sbr.rel (0) target = $region33
    $region32: #{tpu_custom_call.1} parent=1 // pred_region
      %126 = vsyncadd [#allocation17], 0
      %s127 = sshll.u32 %s8, 4
      %s128 = int_to_ptr.hbm [resolvable:$true] %s127
      %s129 = sshll.u32 [#allocation16], 4
      %s130 = int_to_ptr.vmem [resolvable:$true] %s129
      %135 = dma.hbm_to_vmem [thread:$0]  %s128, 6144, %s130, [#allocation17], 384, 384, 24
    $region33: #{tpu_custom_call.1} parent=1 // pred_fallthru
      _
    // Predicated region
    $region34: #{tpu_custom_call.1} parent=1 // pred_check
      _
    $region35: #{tpu_custom_call.1} parent=1 // pred_check_branch
      %137 = sbr.rel (0) target = $region37
    $region36: #{tpu_custom_call.1} parent=1 // pred_region
      _
    $region37: #{tpu_custom_call.1} parent=1 // pred_fallthru
      _
    // Predicated region
    $region38: #{tpu_custom_call.1} parent=1 // pred_check
      _
    $region39: #{tpu_custom_call.1} parent=1 // pred_check_branch
      %139 = sbr.rel (0) target = $region41
    $region40: #{tpu_custom_call.1} parent=1 // pred_region
      %141 = vsyncadd [#allocation17], 0
      %s142 = sshll.u32 %s10, 4
      %s143 = int_to_ptr.hbm [resolvable:$true] %s142
      %s144 = sshll.u32 [#allocation18], 4
      %s145 = int_to_ptr.vmem [resolvable:$true] %s144
      %150 = dma.hbm_to_vmem [thread:$0]  %s143, 6144, %s145, [#allocation17], 384, 384, 24
    $region41: #{tpu_custom_call.1} parent=1 // pred_fallthru
      _
    // Predicated region
    $region42: #{tpu_custom_call.1} parent=1 // pred_check
      _
    $region43: #{tpu_custom_call.1} parent=1 // pred_check_branch
      %152 = sbr.rel (0) target = $region45
    $region44: #{tpu_custom_call.1} parent=1 // pred_region
      _
    $region45: #{tpu_custom_call.1} parent=1 // pred_fallthru
      _
    // Predicated region
    $region46: #{tpu_custom_call.1} parent=1 // pred_check
      _
    $region47: #{tpu_custom_call.1} parent=1 // pred_check_branch
      %154 = sbr.rel (0) target = $region49
    $region48: #{tpu_custom_call.1} parent=1 // pred_region
      %156 = vsyncadd [#allocation20], 0
      %s157 = sshll.u32 %s12, 4
      %s158 = int_to_ptr.hbm [resolvable:$true] %s157
      %s159 = sshll.u32 [#allocation19], 4
      %s160 = int_to_ptr.vmem [resolvable:$true] %s159
      %165 = dma.hbm_to_vmem [thread:$0]  %s158, 4096, %s160, [#allocation20], 256, 256, 16
    $region49: #{tpu_custom_call.1} parent=1 // pred_fallthru
      _
    // Predicated region
    $region50: #{tpu_custom_call.1} parent=1 // pred_check
      _
    $region51: #{tpu_custom_call.1} parent=1 // pred_check_branch
      %167 = sbr.rel (0) target = $region53
    $region52: #{tpu_custom_call.1} parent=1 // pred_region
      _
    $region53: #{tpu_custom_call.1} parent=1 // pred_fallthru
      _
    // Predicated region
    $region54: #{tpu_custom_call.1} parent=1 // pred_check
      _
    $region55: #{tpu_custom_call.1} parent=1 // pred_check_branch
      %169 = sbr.rel (0) target = $region57
    $region56: #{tpu_custom_call.1} parent=1 // pred_region
      %171 = dma.done [#allocation5], 4096
    $region57: #{tpu_custom_call.1} parent=1 // pred_fallthru
      _
    // Predicated region
    $region58: #{tpu_custom_call.1} parent=1 // pred_check
      _
    $region59: #{tpu_custom_call.1} parent=1 // pred_check_branch
      %173 = sbr.rel (0) target = $region61
    $region60: #{tpu_custom_call.1} parent=1 // pred_region
      %175 = dma.done [#allocation8], 16
    $region61: #{tpu_custom_call.1} parent=1 // pred_fallthru
      _
    // Predicated region
    $region62: #{tpu_custom_call.1} parent=1 // pred_check
      _
    $region63: #{tpu_custom_call.1} parent=1 // pred_check_branch
      %177 = sbr.rel (0) target = $region65
    $region64: #{tpu_custom_call.1} parent=1 // pred_region
      %179 = dma.done [#allocation8], 2048
    $region65: #{tpu_custom_call.1} parent=1 // pred_fallthru
      _
    // Predicated region
    $region66: #{tpu_custom_call.1} parent=1 // pred_check
      _
    $region67: #{tpu_custom_call.1} parent=1 // pred_check_branch
      %181 = sbr.rel (0) target = $region69
    $region68: #{tpu_custom_call.1} parent=1 // pred_region
      %183 = dma.done [#allocation11], 4096
    $region69: #{tpu_custom_call.1} parent=1 // pred_fallthru
      _
    // Predicated region
    $region70: #{tpu_custom_call.1} parent=1 // pred_check
      _
    $region71: #{tpu_custom_call.1} parent=1 // pred_check_branch
      %185 = sbr.rel (0) target = $region73
    $region72: #{tpu_custom_call.1} parent=1 // pred_region
      %187 = dma.done [#allocation11], 16
    $region73: #{tpu_custom_call.1} parent=1 // pred_fallthru
      _
    // Predicated region
    $region74: #{tpu_custom_call.1} parent=1 // pred_check
      _
    $region75: #{tpu_custom_call.1} parent=1 // pred_check_branch
      %189 = sbr.rel (0) target = $region77
    $region76: #{tpu_custom_call.1} parent=1 // pred_region
      %191 = dma.done [#allocation14], 4096
    $region77: #{tpu_custom_call.1} parent=1 // pred_fallthru
      _
    // Predicated region
    $region78: #{tpu_custom_call.1} parent=1 // pred_check
      _
    $region79: #{tpu_custom_call.1} parent=1 // pred_check_branch
      %193 = sbr.rel (0) target = $region81
    $region80: #{tpu_custom_call.1} parent=1 // pred_region
      %195 = dma.done [#allocation14], 16
    $region81: #{tpu_custom_call.1} parent=1 // pred_fallthru
      _
    // Predicated region
    $region82: #{tpu_custom_call.1} parent=1 // pred_check
      _
    $region83: #{tpu_custom_call.1} parent=1 // pred_check_branch
      %197 = sbr.rel (0) target = $region85
    $region84: #{tpu_custom_call.1} parent=1 // pred_region
      %199 = dma.done [#allocation17], 6144
    $region85: #{tpu_custom_call.1} parent=1 // pred_fallthru
      _
    // Predicated region
    $region86: #{tpu_custom_call.1} parent=1 // pred_check
      _
    $region87: #{tpu_custom_call.1} parent=1 // pred_check_branch
      %201 = sbr.rel (0) target = $region89
    $region88: #{tpu_custom_call.1} parent=1 // pred_region
      %203 = dma.done [#allocation17], 6144
    $region89: #{tpu_custom_call.1} parent=1 // pred_fallthru
      _
    // Predicated region
    $region90: #{tpu_custom_call.1} parent=1 // pred_check
      _
    $region91: #{tpu_custom_call.1} parent=1 // pred_check_branch
      %205 = sbr.rel (0) target = $region93
    $region92: #{tpu_custom_call.1} parent=1 // pred_region
      %207 = dma.done [#allocation20], 4096
    $region93: #{tpu_custom_call.1} parent=1 // pred_fallthru
      _
    %v208 = vld [vmem:[#allocation7] sm:$0x1]
    %s209 = sld [smem:[#allocation3]]
    %p210 = scmp.gt.s32.totalorder %s209, 0
    %s211 = scalar_select %p210, %s209, 0
    %p212 = scmp.lt.s32.totalorder %s211, 255
    %s213 = scalar_select %p212, %s211, 255
    %s214 = scalar_lea.vmem [#allocation4], %s213
    %v215 = vld [vmem:[%s214] sm:$0x1]
    %v216 = vld [vmem:[#allocation10 + $0x80] sm:$0xff]
    %v217 = vld [vmem:[#allocation10 + $0x88] sm:$0xff]
    %v218 = vld [vmem:[#allocation10 + $0x90] sm:$0xff]
    %v219 = vld [vmem:[#allocation10 + $0x98] sm:$0xff]
    %v220 = vld [vmem:[#allocation10 + $0xa0] sm:$0xff]
    %v221 = vld [vmem:[#allocation10 + $0xa8] sm:$0xff]
    %v222 = vld [vmem:[#allocation10 + $0xb0] sm:$0xff]
    %v223 = vld [vmem:[#allocation10 + $0xb8] sm:$0xff]
    %v224 = vld [vmem:[#allocation10 + $0xc0] sm:$0xff]
    %v225 = vld [vmem:[#allocation10 + $0xc8] sm:$0xff]
    %v226 = vld [vmem:[#allocation10 + $0xd0] sm:$0xff]
    %v227 = vld [vmem:[#allocation10 + $0xd8] sm:$0xff]
    %v228 = vld [vmem:[#allocation10 + $0xe0] sm:$0xff]
    %v229 = vld [vmem:[#allocation10 + $0xe8] sm:$0xff]
    %v230 = vld [vmem:[#allocation10 + $0xf0] sm:$0xff]
    %v231 = vld [vmem:[#allocation10 + $0xf8] sm:$0xff]
    %232 = vmatpush.msra.mxu0 %v231
    %233 = vmatpush.msra.mxu0 %v230
    %234 = vmatpush.msra.mxu0 %v229
    %235 = vmatpush.msra.mxu0 %v228
    %236 = vmatpush.msra.mxu0 %v227
    %237 = vmatpush.msra.mxu0 %v226
    %238 = vmatpush.msra.mxu0 %v225
    %239 = vmatpush.msra.mxu0 %v224
    %240 = vmatpush.msra.mxu0 %v223
    %241 = vmatpush.msra.mxu0 %v222
    %242 = vmatpush.msra.mxu0 %v221
    %243 = vmatpush.msra.mxu0 %v220
    %244 = vmatpush.msra.mxu0 %v219
    %245 = vmatpush.msra.mxu0 %v218
    %246 = vmatpush.msra.mxu0 %v217
    %247 = vmatpush.msra.mxu0 %v216
    %248 = vmatmul.f32.gmra.mxu0 %v208
    %v249 = vpop.f32.mrf.mxu0
    %v250 = vadd.f32 0.0, %v249
    %251 = vdwg.mxu0
    %v252 = vld [vmem:[#allocation18] sm:$0xff]
    %v253 = vld [vmem:[#allocation18 + $0x8] sm:$0xff]
    %v254 = vld [vmem:[#allocation18 + $0x10] sm:$0xff]
    %v255 = vld [vmem:[#allocation18 + $0x18] sm:$0xff]
    %v256 = vld [vmem:[#allocation18 + $0x20] sm:$0xff]
    %v257 = vld [vmem:[#allocation18 + $0x28] sm:$0xff]
    %v258 = vld [vmem:[#allocation18 + $0x30] sm:$0xff]
    %v259 = vld [vmem:[#allocation18 + $0x38] sm:$0xff]
    %v260 = vld [vmem:[#allocation18 + $0x40] sm:$0xff]
    %v261 = vld [vmem:[#allocation18 + $0x48] sm:$0xff]
    %v262 = vld [vmem:[#allocation18 + $0x50] sm:$0xff]
    %v263 = vld [vmem:[#allocation18 + $0x58] sm:$0xff]
    %v264 = vld [vmem:[#allocation18 + $0x60] sm:$0xff]
    %v265 = vld [vmem:[#allocation18 + $0x68] sm:$0xff]
    %v266 = vld [vmem:[#allocation18 + $0x70] sm:$0xff]
    %v267 = vld [vmem:[#allocation18 + $0x78] sm:$0xff]
    %v268 = vld [vmem:[#allocation18 + $0x80] sm:$0xff]
    %v269 = vld [vmem:[#allocation18 + $0x88] sm:$0xff]
    %v270 = vld [vmem:[#allocation18 + $0x90] sm:$0xff]
    %v271 = vld [vmem:[#allocation18 + $0x98] sm:$0xff]
    %v272 = vld [vmem:[#allocation18 + $0xa0] sm:$0xff]
    %v273 = vld [vmem:[#allocation18 + $0xa8] sm:$0xff]
    %v274 = vld [vmem:[#allocation18 + $0xb0] sm:$0xff]
    %v275 = vld [vmem:[#allocation18 + $0xb8] sm:$0xff]
    %v276 = vld [vmem:[#allocation18 + $0xc0] sm:$0xff]
    %v277 = vld [vmem:[#allocation18 + $0xc8] sm:$0xff]
    %v278 = vld [vmem:[#allocation18 + $0xd0] sm:$0xff]
    %v279 = vld [vmem:[#allocation18 + $0xd8] sm:$0xff]
    %v280 = vld [vmem:[#allocation18 + $0xe0] sm:$0xff]
    %v281 = vld [vmem:[#allocation18 + $0xe8] sm:$0xff]
    %v282 = vld [vmem:[#allocation18 + $0xf0] sm:$0xff]
    %v283 = vld [vmem:[#allocation18 + $0xf8] sm:$0xff]
    %v284 = vld [vmem:[#allocation18 + $0x100] sm:$0xff]
    %v285 = vld [vmem:[#allocation18 + $0x108] sm:$0xff]
    %v286 = vld [vmem:[#allocation18 + $0x110] sm:$0xff]
    %v287 = vld [vmem:[#allocation18 + $0x118] sm:$0xff]
    %v288 = vld [vmem:[#allocation18 + $0x120] sm:$0xff]
    %v289 = vld [vmem:[#allocation18 + $0x128] sm:$0xff]
    %v290 = vld [vmem:[#allocation18 + $0x130] sm:$0xff]
    %v291 = vld [vmem:[#allocation18 + $0x138] sm:$0xff]
    %v292 = vld [vmem:[#allocation18 + $0x140] sm:$0xff]
    %v293 = vld [vmem:[#allocation18 + $0x148] sm:$0xff]
    %v294 = vld [vmem:[#allocation18 + $0x150] sm:$0xff]
    %v295 = vld [vmem:[#allocation18 + $0x158] sm:$0xff]
    %v296 = vld [vmem:[#allocation18 + $0x160] sm:$0xff]
    %v297 = vld [vmem:[#allocation18 + $0x168] sm:$0xff]
    %v298 = vld [vmem:[#allocation18 + $0x170] sm:$0xff]
    %v299 = vld [vmem:[#allocation18 + $0x178] sm:$0xff]
    %v300 = vld [vmem:[%s11] sm:$0x7]
    %v302 = vperm.slane %v300, 0
    %v303 = vperm.slane %v300, 1
    %v304 = vperm.slane %v300, 2
    %308 = vmatpush.msra.mxu0 %v297
    %309 = vmatpush.msra.mxu0 %v294
    %310 = vmatpush.msra.mxu0 %v291
    %311 = vmatpush.msra.mxu0 %v288
    %312 = vmatpush.msra.mxu0 %v285
    %313 = vmatpush.msra.mxu0 %v282
    %314 = vmatpush.msra.mxu0 %v279
    %315 = vmatpush.msra.mxu0 %v276
    %316 = vmatpush.msra.mxu0 %v273
    %317 = vmatpush.msra.mxu0 %v270
    %318 = vmatpush.msra.mxu0 %v267
    %319 = vmatpush.msra.mxu0 %v264
    %320 = vmatpush.msra.mxu0 %v261
    %321 = vmatpush.msra.mxu0 %v258
    %322 = vmatpush.msra.mxu0 %v255
    %323 = vmatpush.msra.mxu0 %v252
    %324 = vmatmul.f32.gmra.mxu0 %v208
    %v325 = vpop.f32.mrf.mxu0
    %v326 = vadd.f32 %v302, %v325
    %327 = vdwg.mxu0
    %328 = vmatpush.msra.mxu0 %v298
    %329 = vmatpush.msra.mxu0 %v295
    %330 = vmatpush.msra.mxu0 %v292
    %331 = vmatpush.msra.mxu0 %v289
    %332 = vmatpush.msra.mxu0 %v286
    %333 = vmatpush.msra.mxu0 %v283
    %334 = vmatpush.msra.mxu0 %v280
    %335 = vmatpush.msra.mxu0 %v277
    %336 = vmatpush.msra.mxu0 %v274
    %337 = vmatpush.msra.mxu0 %v271
    %338 = vmatpush.msra.mxu0 %v268
    %339 = vmatpush.msra.mxu0 %v265
    %340 = vmatpush.msra.mxu0 %v262
    %341 = vmatpush.msra.mxu0 %v259
    %342 = vmatpush.msra.mxu0 %v256
    %343 = vmatpush.msra.mxu0 %v253
    %344 = vmatmul.f32.gmra.mxu0 %v208
    %v345 = vpop.f32.mrf.mxu0
    %v346 = vadd.f32 %v303, %v345
    %347 = vdwg.mxu0
    %348 = vmatpush.msra.mxu0 %v299
    %349 = vmatpush.msra.mxu0 %v296
    %350 = vmatpush.msra.mxu0 %v293
    %351 = vmatpush.msra.mxu0 %v290
    %352 = vmatpush.msra.mxu0 %v287
    %353 = vmatpush.msra.mxu0 %v284
    %354 = vmatpush.msra.mxu0 %v281
    %355 = vmatpush.msra.mxu0 %v278
    %356 = vmatpush.msra.mxu0 %v275
    %357 = vmatpush.msra.mxu0 %v272
    %358 = vmatpush.msra.mxu0 %v269
    %359 = vmatpush.msra.mxu0 %v266
    %360 = vmatpush.msra.mxu0 %v263
    %361 = vmatpush.msra.mxu0 %v260
    %362 = vmatpush.msra.mxu0 %v257
    %363 = vmatpush.msra.mxu0 %v254
    %364 = vmatmul.f32.gmra.mxu0 %v208
    %v365 = vpop.f32.mrf.mxu0
    %v366 = vadd.f32 %v304, %v365
    %367 = vdwg.mxu0
    %v368 = vld [vmem:[#allocation10] sm:$0xff]
    %v369 = vld [vmem:[#allocation10 + $0x8] sm:$0xff]
    %v370 = vld [vmem:[#allocation10 + $0x10] sm:$0xff]
    %v371 = vld [vmem:[#allocation10 + $0x18] sm:$0xff]
    %v372 = vld [vmem:[#allocation10 + $0x20] sm:$0xff]
    %v373 = vld [vmem:[#allocation10 + $0x28] sm:$0xff]
    %v374 = vld [vmem:[#allocation10 + $0x30] sm:$0xff]
    %v375 = vld [vmem:[#allocation10 + $0x38] sm:$0xff]
    %v376 = vld [vmem:[#allocation10 + $0x40] sm:$0xff]
    %v377 = vld [vmem:[#allocation10 + $0x48] sm:$0xff]
    %v378 = vld [vmem:[#allocation10 + $0x50] sm:$0xff]
    %v379 = vld [vmem:[#allocation10 + $0x58] sm:$0xff]
    %v380 = vld [vmem:[#allocation10 + $0x60] sm:$0xff]
    %v381 = vld [vmem:[#allocation10 + $0x68] sm:$0xff]
    %v382 = vld [vmem:[#allocation10 + $0x70] sm:$0xff]
    %v383 = vld [vmem:[#allocation10 + $0x78] sm:$0xff]
    %v384 = vld [vmem:[#allocation13] sm:$0xff]
    %v385 = vld [vmem:[#allocation13 + $0x8] sm:$0xff]
    %v386 = vld [vmem:[#allocation13 + $0x10] sm:$0xff]
    %v387 = vld [vmem:[#allocation13 + $0x18] sm:$0xff]
    %v388 = vld [vmem:[#allocation13 + $0x20] sm:$0xff]
    %v389 = vld [vmem:[#allocation13 + $0x28] sm:$0xff]
    %v390 = vld [vmem:[#allocation13 + $0x30] sm:$0xff]
    %v391 = vld [vmem:[#allocation13 + $0x38] sm:$0xff]
    %v392 = vld [vmem:[#allocation13 + $0x40] sm:$0xff]
    %v393 = vld [vmem:[#allocation13 + $0x48] sm:$0xff]
    %v394 = vld [vmem:[#allocation13 + $0x50] sm:$0xff]
    %v395 = vld [vmem:[#allocation13 + $0x58] sm:$0xff]
    %v396 = vld [vmem:[#allocation13 + $0x60] sm:$0xff]
    %v397 = vld [vmem:[#allocation13 + $0x68] sm:$0xff]
    %v398 = vld [vmem:[#allocation13 + $0x70] sm:$0xff]
    %v399 = vld [vmem:[#allocation13 + $0x78] sm:$0xff]
    %400 = vmatpush.msra.mxu0 %v383
    %401 = vmatpush.msra.mxu0 %v382
    %402 = vmatpush.msra.mxu0 %v381
    %403 = vmatpush.msra.mxu0 %v380
    %404 = vmatpush.msra.mxu0 %v379
    %405 = vmatpush.msra.mxu0 %v378
    %406 = vmatpush.msra.mxu0 %v377
    %407 = vmatpush.msra.mxu0 %v376
    %408 = vmatpush.msra.mxu0 %v375
    %409 = vmatpush.msra.mxu0 %v374
    %410 = vmatpush.msra.mxu0 %v373
    %411 = vmatpush.msra.mxu0 %v372
    %412 = vmatpush.msra.mxu0 %v371
    %413 = vmatpush.msra.mxu0 %v370
    %414 = vmatpush.msra.mxu0 %v369
    %415 = vmatpush.msra.mxu0 %v368
    %416 = vmatmul.f32.gmra.mxu0 %v215
    %v417 = vpop.f32.mrf.mxu0
    %v418 = vadd.f32 %v250, %v417
    %419 = vdwg.mxu0
    %v420 = vld [vmem:[#allocation12] sm:$0x1]
    %v421 = vadd.f32 %v418, %v420
    %vm422 = vcmask 1040384
    %v423 = vsel %vm422, %v421, -inf
    %424 = vmax.xlane.f32.xlu0 %v423
    %v425 = vpop.xlane.xlu0 %424
    %v426 = vsub.f32 %v421, %v425
    %v427 = vmul.f32 %v426, 1.442695
    %v428 = vpow.pop %v427
    %v429 = vsel %vm422, %v428, 0.0
    %430 = vadd.xlane.f32.xlu0 %v429
    %v431 = vpop.xlane.xlu0 %430
    %v432 = vrcp.pop %v431
    %v433 = vmul.f32 %v431, %v432
    %v434 = vsub.f32 1.0, %v433
    %v435 = vmul.f32 %v432, %v434
    %v436 = vadd.f32 %v432, %v435
    %vm437 = vweird.f32 %v431
    %vm438 = vweird.f32 %v432
    %vm439 = vmor %vm437, %vm438
    %v440 = vsel %vm439, %v432, %v436
    %v441 = vand.u32 2147483647, %v431
    %vm442 = vcmp.eq.f32.partialorder %v441, 8.507059e+37
    %v443 = vand.u32 %v431, 2147483648
    %v444 = vor.u32 1.1754944e-38, %v443
    %v445 = vsel %vm442, %v444, %v440
    %v446 = vmul.f32 %v428, %v445
    %v447 = vld [vmem:[#allocation9] sm:$0xff]
    %v448 = vld [vmem:[#allocation9 + $0x8] sm:$0xff]
    %v449 = vld [vmem:[#allocation9 + $0x10] sm:$0xff]
    %v450 = vld [vmem:[#allocation9 + $0x18] sm:$0xff]
    %v451 = vld [vmem:[#allocation9 + $0x20] sm:$0xff]
    %v452 = vld [vmem:[#allocation9 + $0x28] sm:$0xff]
    %v453 = vld [vmem:[#allocation9 + $0x30] sm:$0xff]
    %v454 = vld [vmem:[#allocation9 + $0x38] sm:$0xff]
    %v455 = vld [vmem:[#allocation9 + $0x40] sm:$0xff]
    %v456 = vld [vmem:[#allocation9 + $0x48] sm:$0xff]
    %v457 = vld [vmem:[#allocation9 + $0x50] sm:$0xff]
    %v458 = vld [vmem:[#allocation9 + $0x58] sm:$0xff]
    %v459 = vld [vmem:[#allocation9 + $0x60] sm:$0xff]
    %v460 = vld [vmem:[#allocation9 + $0x68] sm:$0xff]
    %v461 = vld [vmem:[#allocation9 + $0x70] sm:$0xff]
    %v462 = vld [vmem:[#allocation9 + $0x78] sm:$0xff]
    %463 = vmatpush.msra.mxu0 %v462
    %464 = vmatpush.msra.mxu0 %v461
    %465 = vmatpush.msra.mxu0 %v460
    %466 = vmatpush.msra.mxu0 %v459
    %467 = vmatpush.msra.mxu0 %v458
    %468 = vmatpush.msra.mxu0 %v457
    %469 = vmatpush.msra.mxu0 %v456
    %470 = vmatpush.msra.mxu0 %v455
    %471 = vmatpush.msra.mxu0 %v454
    %472 = vmatpush.msra.mxu0 %v453
    %473 = vmatpush.msra.mxu0 %v452
    %474 = vmatpush.msra.mxu0 %v451
    %475 = vmatpush.msra.mxu0 %v450
    %476 = vmatpush.msra.mxu0 %v449
    %477 = vmatpush.msra.mxu0 %v448
    %478 = vmatpush.msra.mxu0 %v447
    %479 = vmatmul.f32.gmra.mxu0 %v446
    %v480 = vpop.f32.mrf.mxu0
    %v481 = vadd.f32 0.0, %v480
    %482 = vdwg.mxu0
    %v483 = vld [vmem:[#allocation13 + $0x80] sm:$0xff]
    %v484 = vld [vmem:[#allocation13 + $0x88] sm:$0xff]
    %v485 = vld [vmem:[#allocation13 + $0x90] sm:$0xff]
    %v486 = vld [vmem:[#allocation13 + $0x98] sm:$0xff]
    %v487 = vld [vmem:[#allocation13 + $0xa0] sm:$0xff]
    %v488 = vld [vmem:[#allocation13 + $0xa8] sm:$0xff]
    %v489 = vld [vmem:[#allocation13 + $0xb0] sm:$0xff]
    %v490 = vld [vmem:[#allocation13 + $0xb8] sm:$0xff]
    %v491 = vld [vmem:[#allocation13 + $0xc0] sm:$0xff]
    %v492 = vld [vmem:[#allocation13 + $0xc8] sm:$0xff]
    %v493 = vld [vmem:[#allocation13 + $0xd0] sm:$0xff]
    %v494 = vld [vmem:[#allocation13 + $0xd8] sm:$0xff]
    %v495 = vld [vmem:[#allocation13 + $0xe0] sm:$0xff]
    %v496 = vld [vmem:[#allocation13 + $0xe8] sm:$0xff]
    %v497 = vld [vmem:[#allocation13 + $0xf0] sm:$0xff]
    %v498 = vld [vmem:[#allocation13 + $0xf8] sm:$0xff]
    %499 = vmatpush.msra.mxu0 %v498
    %500 = vmatpush.msra.mxu0 %v497
    %501 = vmatpush.msra.mxu0 %v496
    %502 = vmatpush.msra.mxu0 %v495
    %503 = vmatpush.msra.mxu0 %v494
    %504 = vmatpush.msra.mxu0 %v493
    %505 = vmatpush.msra.mxu0 %v492
    %506 = vmatpush.msra.mxu0 %v491
    %507 = vmatpush.msra.mxu0 %v490
    %508 = vmatpush.msra.mxu0 %v489
    %509 = vmatpush.msra.mxu0 %v488
    %510 = vmatpush.msra.mxu0 %v487
    %511 = vmatpush.msra.mxu0 %v486
    %512 = vmatpush.msra.mxu0 %v485
    %513 = vmatpush.msra.mxu0 %v484
    %514 = vmatpush.msra.mxu0 %v483
    %515 = vmatmul.f32.gmra.mxu0 %v481
    %v516 = vpop.f32.mrf.mxu0
    %v517 = vadd.f32 0.0, %v516
    %518 = vdwg.mxu0
    %519 = vmatpush.msra.mxu0 %v399
    %520 = vmatpush.msra.mxu0 %v398
    %521 = vmatpush.msra.mxu0 %v397
    %522 = vmatpush.msra.mxu0 %v396
    %523 = vmatpush.msra.mxu0 %v395
    %524 = vmatpush.msra.mxu0 %v394
    %525 = vmatpush.msra.mxu0 %v393
    %526 = vmatpush.msra.mxu0 %v392
    %527 = vmatpush.msra.mxu0 %v391
    %528 = vmatpush.msra.mxu0 %v390
    %529 = vmatpush.msra.mxu0 %v389
    %530 = vmatpush.msra.mxu0 %v388
    %531 = vmatpush.msra.mxu0 %v387
    %532 = vmatpush.msra.mxu0 %v386
    %533 = vmatpush.msra.mxu0 %v385
    %534 = vmatpush.msra.mxu0 %v384
    %535 = vmatmul.f32.gmra.mxu0 %v215
    %v536 = vpop.f32.mrf.mxu0
    %v537 = vadd.f32 %v517, %v536
    %538 = vdwg.mxu0
    %v539 = vld [vmem:[#allocation15] sm:$0x1]
    %v540 = vadd.f32 %v537, %v539
    %v541 = vmax.f32 %v540, 0.0
    %v542 = vld [vmem:[#allocation16] sm:$0xff]
    %v543 = vld [vmem:[#allocation16 + $0x8] sm:$0xff]
    %v544 = vld [vmem:[#allocation16 + $0x10] sm:$0xff]
    %v545 = vld [vmem:[#allocation16 + $0x18] sm:$0xff]
    %v546 = vld [vmem:[#allocation16 + $0x20] sm:$0xff]
    %v547 = vld [vmem:[#allocation16 + $0x28] sm:$0xff]
    %v548 = vld [vmem:[#allocation16 + $0x30] sm:$0xff]
    %v549 = vld [vmem:[#allocation16 + $0x38] sm:$0xff]
    %v550 = vld [vmem:[#allocation16 + $0x40] sm:$0xff]
    %v551 = vld [vmem:[#allocation16 + $0x48] sm:$0xff]
    %v552 = vld [vmem:[#allocation16 + $0x50] sm:$0xff]
    %v553 = vld [vmem:[#allocation16 + $0x58] sm:$0xff]
    %v554 = vld [vmem:[#allocation16 + $0x60] sm:$0xff]
    %v555 = vld [vmem:[#allocation16 + $0x68] sm:$0xff]
    %v556 = vld [vmem:[#allocation16 + $0x70] sm:$0xff]
    %v557 = vld [vmem:[#allocation16 + $0x78] sm:$0xff]
    %v558 = vld [vmem:[#allocation16 + $0x80] sm:$0xff]
    %v559 = vld [vmem:[#allocation16 + $0x88] sm:$0xff]
    %v560 = vld [vmem:[#allocation16 + $0x90] sm:$0xff]
    %v561 = vld [vmem:[#allocation16 + $0x98] sm:$0xff]
    %v562 = vld [vmem:[#allocation16 + $0xa0] sm:$0xff]
    %v563 = vld [vmem:[#allocation16 + $0xa8] sm:$0xff]
    %v564 = vld [vmem:[#allocation16 + $0xb0] sm:$0xff]
    %v565 = vld [vmem:[#allocation16 + $0xb8] sm:$0xff]
    %v566 = vld [vmem:[#allocation16 + $0xc0] sm:$0xff]
    %v567 = vld [vmem:[#allocation16 + $0xc8] sm:$0xff]
    %v568 = vld [vmem:[#allocation16 + $0xd0] sm:$0xff]
    %v569 = vld [vmem:[#allocation16 + $0xd8] sm:$0xff]
    %v570 = vld [vmem:[#allocation16 + $0xe0] sm:$0xff]
    %v571 = vld [vmem:[#allocation16 + $0xe8] sm:$0xff]
    %v572 = vld [vmem:[#allocation16 + $0xf0] sm:$0xff]
    %v573 = vld [vmem:[#allocation16 + $0xf8] sm:$0xff]
    %v574 = vld [vmem:[#allocation16 + $0x100] sm:$0xff]
    %v575 = vld [vmem:[#allocation16 + $0x108] sm:$0xff]
    %v576 = vld [vmem:[#allocation16 + $0x110] sm:$0xff]
    %v577 = vld [vmem:[#allocation16 + $0x118] sm:$0xff]
    %v578 = vld [vmem:[#allocation16 + $0x120] sm:$0xff]
    %v579 = vld [vmem:[#allocation16 + $0x128] sm:$0xff]
    %v580 = vld [vmem:[#allocation16 + $0x130] sm:$0xff]
    %v581 = vld [vmem:[#allocation16 + $0x138] sm:$0xff]
    %v582 = vld [vmem:[#allocation16 + $0x140] sm:$0xff]
    %v583 = vld [vmem:[#allocation16 + $0x148] sm:$0xff]
    %v584 = vld [vmem:[#allocation16 + $0x150] sm:$0xff]
    %v585 = vld [vmem:[#allocation16 + $0x158] sm:$0xff]
    %v586 = vld [vmem:[#allocation16 + $0x160] sm:$0xff]
    %v587 = vld [vmem:[#allocation16 + $0x168] sm:$0xff]
    %v588 = vld [vmem:[#allocation16 + $0x170] sm:$0xff]
    %v589 = vld [vmem:[#allocation16 + $0x178] sm:$0xff]
    %v590 = vld [vmem:[%s9] sm:$0x7]
    %v592 = vperm.slane %v590, 0
    %v593 = vperm.slane %v590, 1
    %v594 = vperm.slane %v590, 2
    %598 = vmatpush.msra.mxu0 %v587
    %599 = vmatpush.msra.mxu0 %v584
    %600 = vmatpush.msra.mxu0 %v581
    %601 = vmatpush.msra.mxu0 %v578
    %602 = vmatpush.msra.mxu0 %v575
    %603 = vmatpush.msra.mxu0 %v572
    %604 = vmatpush.msra.mxu0 %v569
    %605 = vmatpush.msra.mxu0 %v566
    %606 = vmatpush.msra.mxu0 %v563
    %607 = vmatpush.msra.mxu0 %v560
    %608 = vmatpush.msra.mxu0 %v557
    %609 = vmatpush.msra.mxu0 %v554
    %610 = vmatpush.msra.mxu0 %v551
    %611 = vmatpush.msra.mxu0 %v548
    %612 = vmatpush.msra.mxu0 %v545
    %613 = vmatpush.msra.mxu0 %v542
    %614 = vmatmul.f32.gmra.mxu0 %v541
    %v615 = vpop.f32.mrf.mxu0
    %v616 = vadd.f32 %v592, %v615
    %617 = vdwg.mxu0
    %618 = vmatpush.msra.mxu0 %v588
    %619 = vmatpush.msra.mxu0 %v585
    %620 = vmatpush.msra.mxu0 %v582
    %621 = vmatpush.msra.mxu0 %v579
    %622 = vmatpush.msra.mxu0 %v576
    %623 = vmatpush.msra.mxu0 %v573
    %624 = vmatpush.msra.mxu0 %v570
    %625 = vmatpush.msra.mxu0 %v567
    %626 = vmatpush.msra.mxu0 %v564
    %627 = vmatpush.msra.mxu0 %v561
    %628 = vmatpush.msra.mxu0 %v558
    %629 = vmatpush.msra.mxu0 %v555
    %630 = vmatpush.msra.mxu0 %v552
    %631 = vmatpush.msra.mxu0 %v549
    %632 = vmatpush.msra.mxu0 %v546
    %633 = vmatpush.msra.mxu0 %v543
    %634 = vmatmul.f32.gmra.mxu0 %v541
    %v635 = vpop.f32.mrf.mxu0
    %v636 = vadd.f32 %v593, %v635
    %637 = vdwg.mxu0
    %638 = vmatpush.msra.mxu0 %v589
    %639 = vmatpush.msra.mxu0 %v586
    %640 = vmatpush.msra.mxu0 %v583
    %641 = vmatpush.msra.mxu0 %v580
    %642 = vmatpush.msra.mxu0 %v577
    %643 = vmatpush.msra.mxu0 %v574
    %644 = vmatpush.msra.mxu0 %v571
    %645 = vmatpush.msra.mxu0 %v568
    %646 = vmatpush.msra.mxu0 %v565
    %647 = vmatpush.msra.mxu0 %v562
    %648 = vmatpush.msra.mxu0 %v559
    %649 = vmatpush.msra.mxu0 %v556
    %650 = vmatpush.msra.mxu0 %v553
    %651 = vmatpush.msra.mxu0 %v550
    %652 = vmatpush.msra.mxu0 %v547
    %653 = vmatpush.msra.mxu0 %v544
    %654 = vmatmul.f32.gmra.mxu0 %v541
    %v655 = vpop.f32.mrf.mxu0
    %v656 = vadd.f32 %v594, %v655
    %657 = vdwg.mxu0
    %v658 = vadd.f32 %v616, %v326
    %v659 = vxor.u32 %v658, 2147483648
    %v660 = vmul.f32 %v659, 1.442695
    %v661 = vpow.pop %v660
    %v662 = vadd.f32 %v661, 1.0
    %v663 = vrcp.pop %v662
    %v664 = vmul.f32 %v662, %v663
    %v665 = vsub.f32 1.0, %v664
    %v666 = vmul.f32 %v663, %v665
    %v667 = vadd.f32 %v663, %v666
    %vm668 = vweird.f32 %v662
    %vm669 = vweird.f32 %v663
    %vm670 = vmor %vm668, %vm669
    %v671 = vsel %vm670, %v663, %v667
    %v672 = vand.u32 2147483647, %v662
    %vm673 = vcmp.eq.f32.partialorder %v672, 8.507059e+37
    %v674 = vand.u32 %v662, 2147483648
    %v675 = vor.u32 1.1754944e-38, %v674
    %v676 = vsel %vm673, %v675, %v671
    %v677 = vmul.f32 1.0, %v676
    %v678 = vadd.f32 %v636, %v346
    %v679 = vxor.u32 %v678, 2147483648
    %v680 = vmul.f32 %v679, 1.442695
    %v681 = vpow.pop %v680
    %v682 = vadd.f32 %v681, 1.0
    %v683 = vrcp.pop %v682
    %v684 = vmul.f32 %v682, %v683
    %v685 = vsub.f32 1.0, %v684
    %v686 = vmul.f32 %v683, %v685
    %v687 = vadd.f32 %v683, %v686
    %vm688 = vweird.f32 %v682
    %vm689 = vweird.f32 %v683
    %vm690 = vmor %vm688, %vm689
    %v691 = vsel %vm690, %v683, %v687
    %v692 = vand.u32 2147483647, %v682
    %vm693 = vcmp.eq.f32.partialorder %v692, 8.507059e+37
    %v694 = vand.u32 %v682, 2147483648
    %v695 = vor.u32 1.1754944e-38, %v694
    %v696 = vsel %vm693, %v695, %v691
    %v697 = vmul.f32 1.0, %v696
    %v698 = vmul.f32 %v677, %v366
    %v699 = vadd.f32 %v656, %v698
    %v700 = vtanh.pop %v699
    %v701 = vsub.f32 1.0, %v697
    %v702 = vmul.f32 %v701, %v700
    %v703 = vmul.f32 %v697, %v208
    %v704 = vadd.f32 %v702, %v703
    %v705 = vld [vmem:[#allocation19] sm:$0xff]
    %v706 = vld [vmem:[#allocation19 + $0x8] sm:$0xff]
    %v707 = vld [vmem:[#allocation19 + $0x10] sm:$0xff]
    %v708 = vld [vmem:[#allocation19 + $0x18] sm:$0xff]
    %v709 = vld [vmem:[#allocation19 + $0x20] sm:$0xff]
    %v710 = vld [vmem:[#allocation19 + $0x28] sm:$0xff]
    %v711 = vld [vmem:[#allocation19 + $0x30] sm:$0xff]
    %v712 = vld [vmem:[#allocation19 + $0x38] sm:$0xff]
    %v713 = vld [vmem:[#allocation19 + $0x40] sm:$0xff]
    %v714 = vld [vmem:[#allocation19 + $0x48] sm:$0xff]
    %v715 = vld [vmem:[#allocation19 + $0x50] sm:$0xff]
    %v716 = vld [vmem:[#allocation19 + $0x58] sm:$0xff]
    %v717 = vld [vmem:[#allocation19 + $0x60] sm:$0xff]
    %v718 = vld [vmem:[#allocation19 + $0x68] sm:$0xff]
    %v719 = vld [vmem:[#allocation19 + $0x70] sm:$0xff]
    %v720 = vld [vmem:[#allocation19 + $0x78] sm:$0xff]
    %v721 = vld [vmem:[#allocation19 + $0x80] sm:$0xff]
    %v722 = vld [vmem:[#allocation19 + $0x88] sm:$0xff]
    %v723 = vld [vmem:[#allocation19 + $0x90] sm:$0xff]
    %v724 = vld [vmem:[#allocation19 + $0x98] sm:$0xff]
    %v725 = vld [vmem:[#allocation19 + $0xa0] sm:$0xff]
    %v726 = vld [vmem:[#allocation19 + $0xa8] sm:$0xff]
    %v727 = vld [vmem:[#allocation19 + $0xb0] sm:$0xff]
    %v728 = vld [vmem:[#allocation19 + $0xb8] sm:$0xff]
    %v729 = vld [vmem:[#allocation19 + $0xc0] sm:$0xff]
    %v730 = vld [vmem:[#allocation19 + $0xc8] sm:$0xff]
    %v731 = vld [vmem:[#allocation19 + $0xd0] sm:$0xff]
    %v732 = vld [vmem:[#allocation19 + $0xd8] sm:$0xff]
    %v733 = vld [vmem:[#allocation19 + $0xe0] sm:$0xff]
    %v734 = vld [vmem:[#allocation19 + $0xe8] sm:$0xff]
    %v735 = vld [vmem:[#allocation19 + $0xf0] sm:$0xff]
    %v736 = vld [vmem:[#allocation19 + $0xf8] sm:$0xff]
    %v737 = vld [vmem:[%s13] sm:$0x3]
    %v739 = vperm.slane %v737, 0
    %v740 = vperm.slane %v737, 1
    %743 = vmatpush.msra.mxu0 %v735
    %744 = vmatpush.msra.mxu0 %v733
    %745 = vmatpush.msra.mxu0 %v731
    %746 = vmatpush.msra.mxu0 %v729
    %747 = vmatpush.msra.mxu0 %v727
    %748 = vmatpush.msra.mxu0 %v725
    %749 = vmatpush.msra.mxu0 %v723
    %750 = vmatpush.msra.mxu0 %v721
    %751 = vmatpush.msra.mxu0 %v719
    %752 = vmatpush.msra.mxu0 %v717
    %753 = vmatpush.msra.mxu0 %v715
    %754 = vmatpush.msra.mxu0 %v713
    %755 = vmatpush.msra.mxu0 %v711
    %756 = vmatpush.msra.mxu0 %v709
    %757 = vmatpush.msra.mxu0 %v707
    %758 = vmatpush.msra.mxu0 %v705
    %759 = vmatmul.f32.gmra.mxu0 %v704
    %v760 = vpop.f32.mrf.mxu0
    %v761 = vadd.f32 %v739, %v760
    %762 = vdwg.mxu0
    %763 = vmatpush.msra.mxu0 %v736
    %764 = vmatpush.msra.mxu0 %v734
    %765 = vmatpush.msra.mxu0 %v732
    %766 = vmatpush.msra.mxu0 %v730
    %767 = vmatpush.msra.mxu0 %v728
    %768 = vmatpush.msra.mxu0 %v726
    %769 = vmatpush.msra.mxu0 %v724
    %770 = vmatpush.msra.mxu0 %v722
    %771 = vmatpush.msra.mxu0 %v720
    %772 = vmatpush.msra.mxu0 %v718
    %773 = vmatpush.msra.mxu0 %v716
    %774 = vmatpush.msra.mxu0 %v714
    %775 = vmatpush.msra.mxu0 %v712
    %776 = vmatpush.msra.mxu0 %v710
    %777 = vmatpush.msra.mxu0 %v708
    %778 = vmatpush.msra.mxu0 %v706
    %779 = vmatmul.f32.gmra.mxu0 %v704
    %v780 = vpop.f32.mrf.mxu0
    %v781 = vadd.f32 %v740, %v780
    %782 = vdwg.mxu0
    %v783 = vsel %vm422, %v761, -inf
    %v784 = vsel %vm422, %v781, -inf
    %v785 = vmax.f32 %v783, %v784
    %786 = vmax.xlane.f32.xlu0 %v785
    %v787 = vpop.xlane.xlu0 %786
    %v788 = vsub.f32 %v761, %v787
    %v789 = vsub.f32 %v781, %v787
    %v790 = vmul.f32 %v788, 1.442695
    %v791 = vpow.pop %v790
    %v792 = vmul.f32 %v789, 1.442695
    %v793 = vpow.pop %v792
    %v794 = vsel %vm422, %v791, 0.0
    %v795 = vsel %vm422, %v793, 0.0
    %v796 = vadd.f32 %v794, %v795
    %797 = vadd.xlane.f32.xlu0 %v796
    %v798 = vpop.xlane.xlu0 %797
    %v799 = vlog2.pop %v798
    %v800 = vmul.f32 %v799, 0.6931472
    %v801 = vadd.f32 %v800, %v787
    %v802 = vsub.f32 %v761, %v801
    %v803 = vsub.f32 %v781, %v801
    %v806 = vrot.slane %v803, 7
    %v807 = vsel %vm422, %v802, %v806
    %v809 = vlaneseq
    %vm810 = vcmp.ge.s32.totalorder %v809, 0
    %vm811 = vcmp.lt.s32.totalorder %v809, 256
    %vm812 = vmand %vm810, %vm811
    %813 = vst.msk [vmem:[#allocation21] ss:$8 sm:$0x3] %vm812, %v807
    %814 = vst.msk [vmem:[#allocation21] ss:$8 sm:$0x0] %vm812, %v807
    %815 = vst [vmem:[#allocation24] sm:$0x1] %v446
    %s816 = sld [smem:[#allocation3 + $0x1]]
    %p817 = scmp.gt.s32.totalorder %s816, 0
    %s818 = scalar_select %p817, %s816, 0
    %p819 = scmp.lt.s32.totalorder %s818, 255
    %s820 = scalar_select %p819, %s818, 255
    %s821 = scalar_lea.vmem [#allocation4], %s820
    %v822 = vld [vmem:[%s821] sm:$0x1]
    %v823 = vld [vmem:[#allocation10 + $0x80] sm:$0xff]
    %v824 = vld [vmem:[#allocation10 + $0x88] sm:$0xff]
    %v825 = vld [vmem:[#allocation10 + $0x90] sm:$0xff]
    %v826 = vld [vmem:[#allocation10 + $0x98] sm:$0xff]
    %v827 = vld [vmem:[#allocation10 + $0xa0] sm:$0xff]
    %v828 = vld [vmem:[#allocation10 + $0xa8] sm:$0xff]
    %v829 = vld [vmem:[#allocation10 + $0xb0] sm:$0xff]
    %v830 = vld [vmem:[#allocation10 + $0xb8] sm:$0xff]
    %v831 = vld [vmem:[#allocation10 + $0xc0] sm:$0xff]
    %v832 = vld [vmem:[#allocation10 + $0xc8] sm:$0xff]
    %v833 = vld [vmem:[#allocation10 + $0xd0] sm:$0xff]
    %v834 = vld [vmem:[#allocation10 + $0xd8] sm:$0xff]
    %v835 = vld [vmem:[#allocation10 + $0xe0] sm:$0xff]
    %v836 = vld [vmem:[#allocation10 + $0xe8] sm:$0xff]
    %v837 = vld [vmem:[#allocation10 + $0xf0] sm:$0xff]
    %v838 = vld [vmem:[#allocation10 + $0xf8] sm:$0xff]
    %839 = vmatpush.msra.mxu0 %v838
    %840 = vmatpush.msra.mxu0 %v837
    %841 = vmatpush.msra.mxu0 %v836
    %842 = vmatpush.msra.mxu0 %v835
    %843 = vmatpush.msra.mxu0 %v834
    %844 = vmatpush.msra.mxu0 %v833
    %845 = vmatpush.msra.mxu0 %v832
    %846 = vmatpush.msra.mxu0 %v831
    %847 = vmatpush.msra.mxu0 %v830
    %848 = vmatpush.msra.mxu0 %v829
    %849 = vmatpush.msra.mxu0 %v828
    %850 = vmatpush.msra.mxu0 %v827
    %851 = vmatpush.msra.mxu0 %v826
    %852 = vmatpush.msra.mxu0 %v825
    %853 = vmatpush.msra.mxu0 %v824
    %854 = vmatpush.msra.mxu0 %v823
    %855 = vmatmul.f32.gmra.mxu0 %v704
    %v856 = vpop.f32.mrf.mxu0
    %v857 = vadd.f32 0.0, %v856
    %858 = vdwg.mxu0
    %v859 = vld [vmem:[#allocation18] sm:$0xff]
    %v860 = vld [vmem:[#allocation18 + $0x8] sm:$0xff]
    %v861 = vld [vmem:[#allocation18 + $0x10] sm:$0xff]
    %v862 = vld [vmem:[#allocation18 + $0x18] sm:$0xff]
    %v863 = vld [vmem:[#allocation18 + $0x20] sm:$0xff]
    %v864 = vld [vmem:[#allocation18 + $0x28] sm:$0xff]
    %v865 = vld [vmem:[#allocation18 + $0x30] sm:$0xff]
    %v866 = vld [vmem:[#allocation18 + $0x38] sm:$0xff]
    %v867 = vld [vmem:[#allocation18 + $0x40] sm:$0xff]
    %v868 = vld [vmem:[#allocation18 + $0x48] sm:$0xff]
    %v869 = vld [vmem:[#allocation18 + $0x50] sm:$0xff]
    %v870 = vld [vmem:[#allocation18 + $0x58] sm:$0xff]
    %v871 = vld [vmem:[#allocation18 + $0x60] sm:$0xff]
    %v872 = vld [vmem:[#allocation18 + $0x68] sm:$0xff]
    %v873 = vld [vmem:[#allocation18 + $0x70] sm:$0xff]
    %v874 = vld [vmem:[#allocation18 + $0x78] sm:$0xff]
    %v875 = vld [vmem:[#allocation18 + $0x80] sm:$0xff]
    %v876 = vld [vmem:[#allocation18 + $0x88] sm:$0xff]
    %v877 = vld [vmem:[#allocation18 + $0x90] sm:$0xff]
    %v878 = vld [vmem:[#allocation18 + $0x98] sm:$0xff]
    %v879 = vld [vmem:[#allocation18 + $0xa0] sm:$0xff]
    %v880 = vld [vmem:[#allocation18 + $0xa8] sm:$0xff]
    %v881 = vld [vmem:[#allocation18 + $0xb0] sm:$0xff]
    %v882 = vld [vmem:[#allocation18 + $0xb8] sm:$0xff]
    %v883 = vld [vmem:[#allocation18 + $0xc0] sm:$0xff]
    %v884 = vld [vmem:[#allocation18 + $0xc8] sm:$0xff]
    %v885 = vld [vmem:[#allocation18 + $0xd0] sm:$0xff]
    %v886 = vld [vmem:[#allocation18 + $0xd8] sm:$0xff]
    %v887 = vld [vmem:[#allocation18 + $0xe0] sm:$0xff]
    %v888 = vld [vmem:[#allocation18 + $0xe8] sm:$0xff]
    %v889 = vld [vmem:[#allocation18 + $0xf0] sm:$0xff]
    %v890 = vld [vmem:[#allocation18 + $0xf8] sm:$0xff]
    %v891 = vld [vmem:[#allocation18 + $0x100] sm:$0xff]
    %v892 = vld [vmem:[#allocation18 + $0x108] sm:$0xff]
    %v893 = vld [vmem:[#allocation18 + $0x110] sm:$0xff]
    %v894 = vld [vmem:[#allocation18 + $0x118] sm:$0xff]
    %v895 = vld [vmem:[#allocation18 + $0x120] sm:$0xff]
    %v896 = vld [vmem:[#allocation18 + $0x128] sm:$0xff]
    %v897 = vld [vmem:[#allocation18 + $0x130] sm:$0xff]
    %v898 = vld [vmem:[#allocation18 + $0x138] sm:$0xff]
    %v899 = vld [vmem:[#allocation18 + $0x140] sm:$0xff]
    %v900 = vld [vmem:[#allocation18 + $0x148] sm:$0xff]
    %v901 = vld [vmem:[#allocation18 + $0x150] sm:$0xff]
    %v902 = vld [vmem:[#allocation18 + $0x158] sm:$0xff]
    %v903 = vld [vmem:[#allocation18 + $0x160] sm:$0xff]
    %v904 = vld [vmem:[#allocation18 + $0x168] sm:$0xff]
    %v905 = vld [vmem:[#allocation18 + $0x170] sm:$0xff]
    %v906 = vld [vmem:[#allocation18 + $0x178] sm:$0xff]
    %v907 = vld [vmem:[%s11] sm:$0x7]
    %v909 = vperm.slane %v907, 0
    %v910 = vperm.slane %v907, 1
    %v911 = vperm.slane %v907, 2
    %915 = vmatpush.msra.mxu0 %v904
    %916 = vmatpush.msra.mxu0 %v901
    %917 = vmatpush.msra.mxu0 %v898
    %918 = vmatpush.msra.mxu0 %v895
    %919 = vmatpush.msra.mxu0 %v892
    %920 = vmatpush.msra.mxu0 %v889
    %921 = vmatpush.msra.mxu0 %v886
    %922 = vmatpush.msra.mxu0 %v883
    %923 = vmatpush.msra.mxu0 %v880
    %924 = vmatpush.msra.mxu0 %v877
    %925 = vmatpush.msra.mxu0 %v874
    %926 = vmatpush.msra.mxu0 %v871
    %927 = vmatpush.msra.mxu0 %v868
    %928 = vmatpush.msra.mxu0 %v865
    %929 = vmatpush.msra.mxu0 %v862
    %930 = vmatpush.msra.mxu0 %v859
    %931 = vmatmul.f32.gmra.mxu0 %v704
    %v932 = vpop.f32.mrf.mxu0
    %v933 = vadd.f32 %v909, %v932
    %934 = vdwg.mxu0
    %935 = vmatpush.msra.mxu0 %v905
    %936 = vmatpush.msra.mxu0 %v902
    %937 = vmatpush.msra.mxu0 %v899
    %938 = vmatpush.msra.mxu0 %v896
    %939 = vmatpush.msra.mxu0 %v893
    %940 = vmatpush.msra.mxu0 %v890
    %941 = vmatpush.msra.mxu0 %v887
    %942 = vmatpush.msra.mxu0 %v884
    %943 = vmatpush.msra.mxu0 %v881
    %944 = vmatpush.msra.mxu0 %v878
    %945 = vmatpush.msra.mxu0 %v875
    %946 = vmatpush.msra.mxu0 %v872
    %947 = vmatpush.msra.mxu0 %v869
    %948 = vmatpush.msra.mxu0 %v866
    %949 = vmatpush.msra.mxu0 %v863
    %950 = vmatpush.msra.mxu0 %v860
    %951 = vmatmul.f32.gmra.mxu0 %v704
    %v952 = vpop.f32.mrf.mxu0
    %v953 = vadd.f32 %v910, %v952
    %954 = vdwg.mxu0
    %955 = vmatpush.msra.mxu0 %v906
    %956 = vmatpush.msra.mxu0 %v903
    %957 = vmatpush.msra.mxu0 %v900
    %958 = vmatpush.msra.mxu0 %v897
    %959 = vmatpush.msra.mxu0 %v894
    %960 = vmatpush.msra.mxu0 %v891
    %961 = vmatpush.msra.mxu0 %v888
    %962 = vmatpush.msra.mxu0 %v885
    %963 = vmatpush.msra.mxu0 %v882
    %964 = vmatpush.msra.mxu0 %v879
    %965 = vmatpush.msra.mxu0 %v876
    %966 = vmatpush.msra.mxu0 %v873
    %967 = vmatpush.msra.mxu0 %v870
    %968 = vmatpush.msra.mxu0 %v867
    %969 = vmatpush.msra.mxu0 %v864
    %970 = vmatpush.msra.mxu0 %v861
    %971 = vmatmul.f32.gmra.mxu0 %v704
    %v972 = vpop.f32.mrf.mxu0
    %v973 = vadd.f32 %v911, %v972
    %974 = vdwg.mxu0
    %v975 = vld [vmem:[#allocation10] sm:$0xff]
    %v976 = vld [vmem:[#allocation10 + $0x8] sm:$0xff]
    %v977 = vld [vmem:[#allocation10 + $0x10] sm:$0xff]
    %v978 = vld [vmem:[#allocation10 + $0x18] sm:$0xff]
    %v979 = vld [vmem:[#allocation10 + $0x20] sm:$0xff]
    %v980 = vld [vmem:[#allocation10 + $0x28] sm:$0xff]
    %v981 = vld [vmem:[#allocation10 + $0x30] sm:$0xff]
    %v982 = vld [vmem:[#allocation10 + $0x38] sm:$0xff]
    %v983 = vld [vmem:[#allocation10 + $0x40] sm:$0xff]
    %v984 = vld [vmem:[#allocation10 + $0x48] sm:$0xff]
    %v985 = vld [vmem:[#allocation10 + $0x50] sm:$0xff]
    %v986 = vld [vmem:[#allocation10 + $0x58] sm:$0xff]
    %v987 = vld [vmem:[#allocation10 + $0x60] sm:$0xff]
    %v988 = vld [vmem:[#allocation10 + $0x68] sm:$0xff]
    %v989 = vld [vmem:[#allocation10 + $0x70] sm:$0xff]
    %v990 = vld [vmem:[#allocation10 + $0x78] sm:$0xff]
    %v991 = vld [vmem:[#allocation13] sm:$0xff]
    %v992 = vld [vmem:[#allocation13 + $0x8] sm:$0xff]
    %v993 = vld [vmem:[#allocation13 + $0x10] sm:$0xff]
    %v994 = vld [vmem:[#allocation13 + $0x18] sm:$0xff]
    %v995 = vld [vmem:[#allocation13 + $0x20] sm:$0xff]
    %v996 = vld [vmem:[#allocation13 + $0x28] sm:$0xff]
    %v997 = vld [vmem:[#allocation13 + $0x30] sm:$0xff]
    %v998 = vld [vmem:[#allocation13 + $0x38] sm:$0xff]
    %v999 = vld [vmem:[#allocation13 + $0x40] sm:$0xff]
    %v1000 = vld [vmem:[#allocation13 + $0x48] sm:$0xff]
    %v1001 = vld [vmem:[#allocation13 + $0x50] sm:$0xff]
    %v1002 = vld [vmem:[#allocation13 + $0x58] sm:$0xff]
    %v1003 = vld [vmem:[#allocation13 + $0x60] sm:$0xff]
    %v1004 = vld [vmem:[#allocation13 + $0x68] sm:$0xff]
    %v1005 = vld [vmem:[#allocation13 + $0x70] sm:$0xff]
    %v1006 = vld [vmem:[#allocation13 + $0x78] sm:$0xff]
    %1007 = vmatpush.msra.mxu0 %v990
    %1008 = vmatpush.msra.mxu0 %v989
    %1009 = vmatpush.msra.mxu0 %v988
    %1010 = vmatpush.msra.mxu0 %v987
    %1011 = vmatpush.msra.mxu0 %v986
    %1012 = vmatpush.msra.mxu0 %v985
    %1013 = vmatpush.msra.mxu0 %v984
    %1014 = vmatpush.msra.mxu0 %v983
    %1015 = vmatpush.msra.mxu0 %v982
    %1016 = vmatpush.msra.mxu0 %v981
    %1017 = vmatpush.msra.mxu0 %v980
    %1018 = vmatpush.msra.mxu0 %v979
    %1019 = vmatpush.msra.mxu0 %v978
    %1020 = vmatpush.msra.mxu0 %v977
    %1021 = vmatpush.msra.mxu0 %v976
    %1022 = vmatpush.msra.mxu0 %v975
    %1023 = vmatmul.f32.gmra.mxu0 %v822
    %v1024 = vpop.f32.mrf.mxu0
    %v1025 = vadd.f32 %v857, %v1024
    %1026 = vdwg.mxu0
    %v1027 = vld [vmem:[#allocation12] sm:$0x1]
    %v1028 = vadd.f32 %v1025, %v1027
    %v1029 = vsel %vm422, %v1028, -inf
    %1030 = vmax.xlane.f32.xlu0 %v1029
    %v1031 = vpop.xlane.xlu0 %1030
    %v1032 = vsub.f32 %v1028, %v1031
    %v1033 = vmul.f32 %v1032, 1.442695
    %v1034 = vpow.pop %v1033
    %v1035 = vsel %vm422, %v1034, 0.0
    %1036 = vadd.xlane.f32.xlu0 %v1035
    %v1037 = vpop.xlane.xlu0 %1036
    %v1038 = vrcp.pop %v1037
    %v1039 = vmul.f32 %v1037, %v1038
    %v1040 = vsub.f32 1.0, %v1039
    %v1041 = vmul.f32 %v1038, %v1040
    %v1042 = vadd.f32 %v1038, %v1041
    %vm1043 = vweird.f32 %v1037
    %vm1044 = vweird.f32 %v1038
    %vm1045 = vmor %vm1043, %vm1044
    %v1046 = vsel %vm1045, %v1038, %v1042
    %v1047 = vand.u32 2147483647, %v1037
    %vm1048 = vcmp.eq.f32.partialorder %v1047, 8.507059e+37
    %v1049 = vand.u32 %v1037, 2147483648
    %v1050 = vor.u32 1.1754944e-38, %v1049
    %v1051 = vsel %vm1048, %v1050, %v1046
    %v1052 = vmul.f32 %v1034, %v1051
    %v1053 = vld [vmem:[#allocation9] sm:$0xff]
    %v1054 = vld [vmem:[#allocation9 + $0x8] sm:$0xff]
    %v1055 = vld [vmem:[#allocation9 + $0x10] sm:$0xff]
    %v1056 = vld [vmem:[#allocation9 + $0x18] sm:$0xff]
    %v1057 = vld [vmem:[#allocation9 + $0x20] sm:$0xff]
    %v1058 = vld [vmem:[#allocation9 + $0x28] sm:$0xff]
    %v1059 = vld [vmem:[#allocation9 + $0x30] sm:$0xff]
    %v1060 = vld [vmem:[#allocation9 + $0x38] sm:$0xff]
    %v1061 = vld [vmem:[#allocation9 + $0x40] sm:$0xff]
    %v1062 = vld [vmem:[#allocation9 + $0x48] sm:$0xff]
    %v1063 = vld [vmem:[#allocation9 + $0x50] sm:$0xff]
    %v1064 = vld [vmem:[#allocation9 + $0x58] sm:$0xff]
    %v1065 = vld [vmem:[#allocation9 + $0x60] sm:$0xff]
    %v1066 = vld [vmem:[#allocation9 + $0x68] sm:$0xff]
    %v1067 = vld [vmem:[#allocation9 + $0x70] sm:$0xff]
    %v1068 = vld [vmem:[#allocation9 + $0x78] sm:$0xff]
    %1069 = vmatpush.msra.mxu0 %v1068
    %1070 = vmatpush.msra.mxu0 %v1067
    %1071 = vmatpush.msra.mxu0 %v1066
    %1072 = vmatpush.msra.mxu0 %v1065
    %1073 = vmatpush.msra.mxu0 %v1064
    %1074 = vmatpush.msra.mxu0 %v1063
    %1075 = vmatpush.msra.mxu0 %v1062
    %1076 = vmatpush.msra.mxu0 %v1061
    %1077 = vmatpush.msra.mxu0 %v1060
    %1078 = vmatpush.msra.mxu0 %v1059
    %1079 = vmatpush.msra.mxu0 %v1058
    %1080 = vmatpush.msra.mxu0 %v1057
    %1081 = vmatpush.msra.mxu0 %v1056
    %1082 = vmatpush.msra.mxu0 %v1055
    %1083 = vmatpush.msra.mxu0 %v1054
    %1084 = vmatpush.msra.mxu0 %v1053
    %1085 = vmatmul.f32.gmra.mxu0 %v1052
    %v1086 = vpop.f32.mrf.mxu0
    %v1087 = vadd.f32 0.0, %v1086
    %1088 = vdwg.mxu0
    %v1089 = vld [vmem:[#allocation13 + $0x80] sm:$0xff]
    %v1090 = vld [vmem:[#allocation13 + $0x88] sm:$0xff]
    %v1091 = vld [vmem:[#allocation13 + $0x90] sm:$0xff]
    %v1092 = vld [vmem:[#allocation13 + $0x98] sm:$0xff]
    %v1093 = vld [vmem:[#allocation13 + $0xa0] sm:$0xff]
    %v1094 = vld [vmem:[#allocation13 + $0xa8] sm:$0xff]
    %v1095 = vld [vmem:[#allocation13 + $0xb0] sm:$0xff]
    %v1096 = vld [vmem:[#allocation13 + $0xb8] sm:$0xff]
    %v1097 = vld [vmem:[#allocation13 + $0xc0] sm:$0xff]
    %v1098 = vld [vmem:[#allocation13 + $0xc8] sm:$0xff]
    %v1099 = vld [vmem:[#allocation13 + $0xd0] sm:$0xff]
    %v1100 = vld [vmem:[#allocation13 + $0xd8] sm:$0xff]
    %v1101 = vld [vmem:[#allocation13 + $0xe0] sm:$0xff]
    %v1102 = vld [vmem:[#allocation13 + $0xe8] sm:$0xff]
    %v1103 = vld [vmem:[#allocation13 + $0xf0] sm:$0xff]
    %v1104 = vld [vmem:[#allocation13 + $0xf8] sm:$0xff]
    %1105 = vmatpush.msra.mxu0 %v1104
    %1106 = vmatpush.msra.mxu0 %v1103
    %1107 = vmatpush.msra.mxu0 %v1102
    %1108 = vmatpush.msra.mxu0 %v1101
    %1109 = vmatpush.msra.mxu0 %v1100
    %1110 = vmatpush.msra.mxu0 %v1099
    %1111 = vmatpush.msra.mxu0 %v1098
    %1112 = vmatpush.msra.mxu0 %v1097
    %1113 = vmatpush.msra.mxu0 %v1096
    %1114 = vmatpush.msra.mxu0 %v1095
    %1115 = vmatpush.msra.mxu0 %v1094
    %1116 = vmatpush.msra.mxu0 %v1093
    %1117 = vmatpush.msra.mxu0 %v1092
    %1118 = vmatpush.msra.mxu0 %v1091
    %1119 = vmatpush.msra.mxu0 %v1090
    %1120 = vmatpush.msra.mxu0 %v1089
    %1121 = vmatmul.f32.gmra.mxu0 %v1087
    %v1122 = vpop.f32.mrf.mxu0
    %v1123 = vadd.f32 0.0, %v1122
    %1124 = vdwg.mxu0
    %1125 = vmatpush.msra.mxu0 %v1006
    %1126 = vmatpush.msra.mxu0 %v1005
    %1127 = vmatpush.msra.mxu0 %v1004
    %1128 = vmatpush.msra.mxu0 %v1003
    %1129 = vmatpush.msra.mxu0 %v1002
    %1130 = vmatpush.msra.mxu0 %v1001
    %1131 = vmatpush.msra.mxu0 %v1000
    %1132 = vmatpush.msra.mxu0 %v999
    %1133 = vmatpush.msra.mxu0 %v998
    %1134 = vmatpush.msra.mxu0 %v997
    %1135 = vmatpush.msra.mxu0 %v996
    %1136 = vmatpush.msra.mxu0 %v995
    %1137 = vmatpush.msra.mxu0 %v994
    %1138 = vmatpush.msra.mxu0 %v993
    %1139 = vmatpush.msra.mxu0 %v992
    %1140 = vmatpush.msra.mxu0 %v991
    %1141 = vmatmul.f32.gmra.mxu0 %v822
    %v1142 = vpop.f32.mrf.mxu0
    %v1143 = vadd.f32 %v1123, %v1142
    %1144 = vdwg.mxu0
    %v1145 = vld [vmem:[#allocation15] sm:$0x1]
    %v1146 = vadd.f32 %v1143, %v1145
    %v1147 = vmax.f32 %v1146, 0.0
    %v1148 = vld [vmem:[#allocation16] sm:$0xff]
    %v1149 = vld [vmem:[#allocation16 + $0x8] sm:$0xff]
    %v1150 = vld [vmem:[#allocation16 + $0x10] sm:$0xff]
    %v1151 = vld [vmem:[#allocation16 + $0x18] sm:$0xff]
    %v1152 = vld [vmem:[#allocation16 + $0x20] sm:$0xff]
    %v1153 = vld [vmem:[#allocation16 + $0x28] sm:$0xff]
    %v1154 = vld [vmem:[#allocation16 + $0x30] sm:$0xff]
    %v1155 = vld [vmem:[#allocation16 + $0x38] sm:$0xff]
    %v1156 = vld [vmem:[#allocation16 + $0x40] sm:$0xff]
    %v1157 = vld [vmem:[#allocation16 + $0x48] sm:$0xff]
    %v1158 = vld [vmem:[#allocation16 + $0x50] sm:$0xff]
    %v1159 = vld [vmem:[#allocation16 + $0x58] sm:$0xff]
    %v1160 = vld [vmem:[#allocation16 + $0x60] sm:$0xff]
    %v1161 = vld [vmem:[#allocation16 + $0x68] sm:$0xff]
    %v1162 = vld [vmem:[#allocation16 + $0x70] sm:$0xff]
    %v1163 = vld [vmem:[#allocation16 + $0x78] sm:$0xff]
    %v1164 = vld [vmem:[#allocation16 + $0x80] sm:$0xff]
    %v1165 = vld [vmem:[#allocation16 + $0x88] sm:$0xff]
    %v1166 = vld [vmem:[#allocation16 + $0x90] sm:$0xff]
    %v1167 = vld [vmem:[#allocation16 + $0x98] sm:$0xff]
    %v1168 = vld [vmem:[#allocation16 + $0xa0] sm:$0xff]
    %v1169 = vld [vmem:[#allocation16 + $0xa8] sm:$0xff]
    %v1170 = vld [vmem:[#allocation16 + $0xb0] sm:$0xff]
    %v1171 = vld [vmem:[#allocation16 + $0xb8] sm:$0xff]
    %v1172 = vld [vmem:[#allocation16 + $0xc0] sm:$0xff]
    %v1173 = vld [vmem:[#allocation16 + $0xc8] sm:$0xff]
    %v1174 = vld [vmem:[#allocation16 + $0xd0] sm:$0xff]
    %v1175 = vld [vmem:[#allocation16 + $0xd8] sm:$0xff]
    %v1176 = vld [vmem:[#allocation16 + $0xe0] sm:$0xff]
    %v1177 = vld [vmem:[#allocation16 + $0xe8] sm:$0xff]
    %v1178 = vld [vmem:[#allocation16 + $0xf0] sm:$0xff]
    %v1179 = vld [vmem:[#allocation16 + $0xf8] sm:$0xff]
    %v1180 = vld [vmem:[#allocation16 + $0x100] sm:$0xff]
    %v1181 = vld [vmem:[#allocation16 + $0x108] sm:$0xff]
    %v1182 = vld [vmem:[#allocation16 + $0x110] sm:$0xff]
    %v1183 = vld [vmem:[#allocation16 + $0x118] sm:$0xff]
    %v1184 = vld [vmem:[#allocation16 + $0x120] sm:$0xff]
    %v1185 = vld [vmem:[#allocation16 + $0x128] sm:$0xff]
    %v1186 = vld [vmem:[#allocation16 + $0x130] sm:$0xff]
    %v1187 = vld [vmem:[#allocation16 + $0x138] sm:$0xff]
    %v1188 = vld [vmem:[#allocation16 + $0x140] sm:$0xff]
    %v1189 = vld [vmem:[#allocation16 + $0x148] sm:$0xff]
    %v1190 = vld [vmem:[#allocation16 + $0x150] sm:$0xff]
    %v1191 = vld [vmem:[#allocation16 + $0x158] sm:$0xff]
    %v1192 = vld [vmem:[#allocation16 + $0x160] sm:$0xff]
    %v1193 = vld [vmem:[#allocation16 + $0x168] sm:$0xff]
    %v1194 = vld [vmem:[#allocation16 + $0x170] sm:$0xff]
    %v1195 = vld [vmem:[#allocation16 + $0x178] sm:$0xff]
    %v1196 = vld [vmem:[%s9] sm:$0x7]
    %v1198 = vperm.slane %v1196, 0
    %v1199 = vperm.slane %v1196, 1
    %v1200 = vperm.slane %v1196, 2
    %1204 = vmatpush.msra.mxu0 %v1193
    %1205 = vmatpush.msra.mxu0 %v1190
    %1206 = vmatpush.msra.mxu0 %v1187
    %1207 = vmatpush.msra.mxu0 %v1184
    %1208 = vmatpush.msra.mxu0 %v1181
    %1209 = vmatpush.msra.mxu0 %v1178
    %1210 = vmatpush.msra.mxu0 %v1175
    %1211 = vmatpush.msra.mxu0 %v1172
    %1212 = vmatpush.msra.mxu0 %v1169
    %1213 = vmatpush.msra.mxu0 %v1166
    %1214 = vmatpush.msra.mxu0 %v1163
    %1215 = vmatpush.msra.mxu0 %v1160
    %1216 = vmatpush.msra.mxu0 %v1157
    %1217 = vmatpush.msra.mxu0 %v1154
    %1218 = vmatpush.msra.mxu0 %v1151
    %1219 = vmatpush.msra.mxu0 %v1148
    %1220 = vmatmul.f32.gmra.mxu0 %v1147
    %v1221 = vpop.f32.mrf.mxu0
    %v1222 = vadd.f32 %v1198, %v1221
    %1223 = vdwg.mxu0
    %1224 = vmatpush.msra.mxu0 %v1194
    %1225 = vmatpush.msra.mxu0 %v1191
    %1226 = vmatpush.msra.mxu0 %v1188
    %1227 = vmatpush.msra.mxu0 %v1185
    %1228 = vmatpush.msra.mxu0 %v1182
    %1229 = vmatpush.msra.mxu0 %v1179
    %1230 = vmatpush.msra.mxu0 %v1176
    %1231 = vmatpush.msra.mxu0 %v1173
    %1232 = vmatpush.msra.mxu0 %v1170
    %1233 = vmatpush.msra.mxu0 %v1167
    %1234 = vmatpush.msra.mxu0 %v1164
    %1235 = vmatpush.msra.mxu0 %v1161
    %1236 = vmatpush.msra.mxu0 %v1158
    %1237 = vmatpush.msra.mxu0 %v1155
    %1238 = vmatpush.msra.mxu0 %v1152
    %1239 = vmatpush.msra.mxu0 %v1149
    %1240 = vmatmul.f32.gmra.mxu0 %v1147
    %v1241 = vpop.f32.mrf.mxu0
    %v1242 = vadd.f32 %v1199, %v1241
    %1243 = vdwg.mxu0
    %1244 = vmatpush.msra.mxu0 %v1195
    %1245 = vmatpush.msra.mxu0 %v1192
    %1246 = vmatpush.msra.mxu0 %v1189
    %1247 = vmatpush.msra.mxu0 %v1186
    %1248 = vmatpush.msra.mxu0 %v1183
    %1249 = vmatpush.msra.mxu0 %v1180
    %1250 = vmatpush.msra.mxu0 %v1177
    %1251 = vmatpush.msra.mxu0 %v1174
    %1252 = vmatpush.msra.mxu0 %v1171
    %1253 = vmatpush.msra.mxu0 %v1168
    %1254 = vmatpush.msra.mxu0 %v1165
    %1255 = vmatpush.msra.mxu0 %v1162
    %1256 = vmatpush.msra.mxu0 %v1159
    %1257 = vmatpush.msra.mxu0 %v1156
    %1258 = vmatpush.msra.mxu0 %v1153
    %1259 = vmatpush.msra.mxu0 %v1150
    %1260 = vmatmul.f32.gmra.mxu0 %v1147
    %v1261 = vpop.f32.mrf.mxu0
    %v1262 = vadd.f32 %v1200, %v1261
    %1263 = vdwg.mxu0
    %v1264 = vadd.f32 %v1222, %v933
    %v1265 = vxor.u32 %v1264, 2147483648
    %v1266 = vmul.f32 %v1265, 1.442695
    %v1267 = vpow.pop %v1266
    %v1268 = vadd.f32 %v1267, 1.0
    %v1269 = vrcp.pop %v1268
    %v1270 = vmul.f32 %v1268, %v1269
    %v1271 = vsub.f32 1.0, %v1270
    %v1272 = vmul.f32 %v1269, %v1271
    %v1273 = vadd.f32 %v1269, %v1272
    %vm1274 = vweird.f32 %v1268
    %vm1275 = vweird.f32 %v1269
    %vm1276 = vmor %vm1274, %vm1275
    %v1277 = vsel %vm1276, %v1269, %v1273
    %v1278 = vand.u32 2147483647, %v1268
    %vm1279 = vcmp.eq.f32.partialorder %v1278, 8.507059e+37
    %v1280 = vand.u32 %v1268, 2147483648
    %v1281 = vor.u32 1.1754944e-38, %v1280
    %v1282 = vsel %vm1279, %v1281, %v1277
    %v1283 = vmul.f32 1.0, %v1282
    %v1284 = vadd.f32 %v1242, %v953
    %v1285 = vxor.u32 %v1284, 2147483648
    %v1286 = vmul.f32 %v1285, 1.442695
    %v1287 = vpow.pop %v1286
    %v1288 = vadd.f32 %v1287, 1.0
    %v1289 = vrcp.pop %v1288
    %v1290 = vmul.f32 %v1288, %v1289
    %v1291 = vsub.f32 1.0, %v1290
    %v1292 = vmul.f32 %v1289, %v1291
    %v1293 = vadd.f32 %v1289, %v1292
    %vm1294 = vweird.f32 %v1288
    %vm1295 = vweird.f32 %v1289
    %vm1296 = vmor %vm1294, %vm1295
    %v1297 = vsel %vm1296, %v1289, %v1293
    %v1298 = vand.u32 2147483647, %v1288
    %vm1299 = vcmp.eq.f32.partialorder %v1298, 8.507059e+37
    %v1300 = vand.u32 %v1288, 2147483648
    %v1301 = vor.u32 1.1754944e-38, %v1300
    %v1302 = vsel %vm1299, %v1301, %v1297
    %v1303 = vmul.f32 1.0, %v1302
    %v1304 = vmul.f32 %v1283, %v973
    %v1305 = vadd.f32 %v1262, %v1304
    %v1306 = vtanh.pop %v1305
    %v1307 = vsub.f32 1.0, %v1303
    %v1308 = vmul.f32 %v1307, %v1306
    %v1309 = vmul.f32 %v1303, %v704
    %v1310 = vadd.f32 %v1308, %v1309
    %v1311 = vld [vmem:[#allocation19] sm:$0xff]
    %v1312 = vld [vmem:[#allocation19 + $0x8] sm:$0xff]
    %v1313 = vld [vmem:[#allocation19 + $0x10] sm:$0xff]
    %v1314 = vld [vmem:[#allocation19 + $0x18] sm:$0xff]
    %v1315 = vld [vmem:[#allocation19 + $0x20] sm:$0xff]
    %v1316 = vld [vmem:[#allocation19 + $0x28] sm:$0xff]
    %v1317 = vld [vmem:[#allocation19 + $0x30] sm:$0xff]
    %v1318 = vld [vmem:[#allocation19 + $0x38] sm:$0xff]
    %v1319 = vld [vmem:[#allocation19 + $0x40] sm:$0xff]
    %v1320 = vld [vmem:[#allocation19 + $0x48] sm:$0xff]
    %v1321 = vld [vmem:[#allocation19 + $0x50] sm:$0xff]
    %v1322 = vld [vmem:[#allocation19 + $0x58] sm:$0xff]
    %v1323 = vld [vmem:[#allocation19 + $0x60] sm:$0xff]
    %v1324 = vld [vmem:[#allocation19 + $0x68] sm:$0xff]
    %v1325 = vld [vmem:[#allocation19 + $0x70] sm:$0xff]
    %v1326 = vld [vmem:[#allocation19 + $0x78] sm:$0xff]
    %v1327 = vld [vmem:[#allocation19 + $0x80] sm:$0xff]
    %v1328 = vld [vmem:[#allocation19 + $0x88] sm:$0xff]
    %v1329 = vld [vmem:[#allocation19 + $0x90] sm:$0xff]
    %v1330 = vld [vmem:[#allocation19 + $0x98] sm:$0xff]
    %v1331 = vld [vmem:[#allocation19 + $0xa0] sm:$0xff]
    %v1332 = vld [vmem:[#allocation19 + $0xa8] sm:$0xff]
    %v1333 = vld [vmem:[#allocation19 + $0xb0] sm:$0xff]
    %v1334 = vld [vmem:[#allocation19 + $0xb8] sm:$0xff]
    %v1335 = vld [vmem:[#allocation19 + $0xc0] sm:$0xff]
    %v1336 = vld [vmem:[#allocation19 + $0xc8] sm:$0xff]
    %v1337 = vld [vmem:[#allocation19 + $0xd0] sm:$0xff]
    %v1338 = vld [vmem:[#allocation19 + $0xd8] sm:$0xff]
    %v1339 = vld [vmem:[#allocation19 + $0xe0] sm:$0xff]
    %v1340 = vld [vmem:[#allocation19 + $0xe8] sm:$0xff]
    %v1341 = vld [vmem:[#allocation19 + $0xf0] sm:$0xff]
    %v1342 = vld [vmem:[#allocation19 + $0xf8] sm:$0xff]
    %v1343 = vld [vmem:[%s13] sm:$0x3]
    %v1345 = vperm.slane %v1343, 0
    %v1346 = vperm.slane %v1343, 1
    %1349 = vmatpush.msra.mxu0 %v1341
    %1350 = vmatpush.msra.mxu0 %v1339
    %1351 = vmatpush.msra.mxu0 %v1337
    %1352 = vmatpush.msra.mxu0 %v1335
    %1353 = vmatpush.msra.mxu0 %v1333
    %1354 = vmatpush.msra.mxu0 %v1331
    %1355 = vmatpush.msra.mxu0 %v1329
    %1356 = vmatpush.msra.mxu0 %v1327
    %1357 = vmatpush.msra.mxu0 %v1325
    %1358 = vmatpush.msra.mxu0 %v1323
    %1359 = vmatpush.msra.mxu0 %v1321
    %1360 = vmatpush.msra.mxu0 %v1319
    %1361 = vmatpush.msra.mxu0 %v1317
    %1362 = vmatpush.msra.mxu0 %v1315
    %1363 = vmatpush.msra.mxu0 %v1313
    %1364 = vmatpush.msra.mxu0 %v1311
    %1365 = vmatmul.f32.gmra.mxu0 %v1310
    %v1366 = vpop.f32.mrf.mxu0
    %v1367 = vadd.f32 %v1345, %v1366
    %1368 = vdwg.mxu0
    %1369 = vmatpush.msra.mxu0 %v1342
    %1370 = vmatpush.msra.mxu0 %v1340
    %1371 = vmatpush.msra.mxu0 %v1338
    %1372 = vmatpush.msra.mxu0 %v1336
    %1373 = vmatpush.msra.mxu0 %v1334
    %1374 = vmatpush.msra.mxu0 %v1332
    %1375 = vmatpush.msra.mxu0 %v1330
    %1376 = vmatpush.msra.mxu0 %v1328
    %1377 = vmatpush.msra.mxu0 %v1326
    %1378 = vmatpush.msra.mxu0 %v1324
    %1379 = vmatpush.msra.mxu0 %v1322
    %1380 = vmatpush.msra.mxu0 %v1320
    %1381 = vmatpush.msra.mxu0 %v1318
    %1382 = vmatpush.msra.mxu0 %v1316
    %1383 = vmatpush.msra.mxu0 %v1314
    %1384 = vmatpush.msra.mxu0 %v1312
    %1385 = vmatmul.f32.gmra.mxu0 %v1310
    %v1386 = vpop.f32.mrf.mxu0
    %v1387 = vadd.f32 %v1346, %v1386
    %1388 = vdwg.mxu0
    %v1389 = vsel %vm422, %v1367, -inf
    %v1390 = vsel %vm422, %v1387, -inf
    %v1391 = vmax.f32 %v1389, %v1390
    %1392 = vmax.xlane.f32.xlu0 %v1391
    %v1393 = vpop.xlane.xlu0 %1392
    %v1394 = vsub.f32 %v1367, %v1393
    %v1395 = vsub.f32 %v1387, %v1393
    %v1396 = vmul.f32 %v1394, 1.442695
    %v1397 = vpow.pop %v1396
    %v1398 = vmul.f32 %v1395, 1.442695
    %v1399 = vpow.pop %v1398
    %v1400 = vsel %vm422, %v1397, 0.0
    %v1401 = vsel %vm422, %v1399, 0.0
    %v1402 = vadd.f32 %v1400, %v1401
    %1403 = vadd.xlane.f32.xlu0 %v1402
    %v1404 = vpop.xlane.xlu0 %1403
    %v1405 = vlog2.pop %v1404
    %v1406 = vmul.f32 %v1405, 0.6931472
    %v1407 = vadd.f32 %v1406, %v1393
    %v1408 = vsub.f32 %v1367, %v1407
    %v1409 = vsub.f32 %v1387, %v1407
    %v1412 = vrot.slane %v1409, 7
    %v1413 = vsel %vm422, %v1408, %v1412
    %s1415 = scalar_lea.vmem [#allocation21], 1
    %1416 = vst.msk [vmem:[%s1415] ss:$8 sm:$0x3] %vm812, %v1413
    %1417 = vst.msk [vmem:[%s1415] ss:$8 sm:$0x0] %vm812, %v1413
    %1418 = vst [vmem:[#allocation24 + $0x1] sm:$0x1] %v1052
    %s1419 = sld [smem:[#allocation3 + $0x2]]
    %p1420 = scmp.gt.s32.totalorder %s1419, 0
    %s1421 = scalar_select %p1420, %s1419, 0
    %p1422 = scmp.lt.s32.totalorder %s1421, 255
    %s1423 = scalar_select %p1422, %s1421, 255
    %s1424 = scalar_lea.vmem [#allocation4], %s1423
    %v1425 = vld [vmem:[%s1424] sm:$0x1]
    %v1426 = vld [vmem:[#allocation10 + $0x80] sm:$0xff]
    %v1427 = vld [vmem:[#allocation10 + $0x88] sm:$0xff]
    %v1428 = vld [vmem:[#allocation10 + $0x90] sm:$0xff]
    %v1429 = vld [vmem:[#allocation10 + $0x98] sm:$0xff]
    %v1430 = vld [vmem:[#allocation10 + $0xa0] sm:$0xff]
    %v1431 = vld [vmem:[#allocation10 + $0xa8] sm:$0xff]
    %v1432 = vld [vmem:[#allocation10 + $0xb0] sm:$0xff]
    %v1433 = vld [vmem:[#allocation10 + $0xb8] sm:$0xff]
    %v1434 = vld [vmem:[#allocation10 + $0xc0] sm:$0xff]
    %v1435 = vld [vmem:[#allocation10 + $0xc8] sm:$0xff]
    %v1436 = vld [vmem:[#allocation10 + $0xd0] sm:$0xff]
    %v1437 = vld [vmem:[#allocation10 + $0xd8] sm:$0xff]
    %v1438 = vld [vmem:[#allocation10 + $0xe0] sm:$0xff]
    %v1439 = vld [vmem:[#allocation10 + $0xe8] sm:$0xff]
    %v1440 = vld [vmem:[#allocation10 + $0xf0] sm:$0xff]
    %v1441 = vld [vmem:[#allocation10 + $0xf8] sm:$0xff]
    %1442 = vmatpush.msra.mxu0 %v1441
    %1443 = vmatpush.msra.mxu0 %v1440
    %1444 = vmatpush.msra.mxu0 %v1439
    %1445 = vmatpush.msra.mxu0 %v1438
    %1446 = vmatpush.msra.mxu0 %v1437
    %1447 = vmatpush.msra.mxu0 %v1436
    %1448 = vmatpush.msra.mxu0 %v1435
    %1449 = vmatpush.msra.mxu0 %v1434
    %1450 = vmatpush.msra.mxu0 %v1433
    %1451 = vmatpush.msra.mxu0 %v1432
    %1452 = vmatpush.msra.mxu0 %v1431
    %1453 = vmatpush.msra.mxu0 %v1430
    %1454 = vmatpush.msra.mxu0 %v1429
    %1455 = vmatpush.msra.mxu0 %v1428
    %1456 = vmatpush.msra.mxu0 %v1427
    %1457 = vmatpush.msra.mxu0 %v1426
    %1458 = vmatmul.f32.gmra.mxu0 %v1310
    %v1459 = vpop.f32.mrf.mxu0
    %v1460 = vadd.f32 0.0, %v1459
    %1461 = vdwg.mxu0
    %v1462 = vld [vmem:[#allocation18] sm:$0xff]
    %v1463 = vld [vmem:[#allocation18 + $0x8] sm:$0xff]
    %v1464 = vld [vmem:[#allocation18 + $0x10] sm:$0xff]
    %v1465 = vld [vmem:[#allocation18 + $0x18] sm:$0xff]
    %v1466 = vld [vmem:[#allocation18 + $0x20] sm:$0xff]
    %v1467 = vld [vmem:[#allocation18 + $0x28] sm:$0xff]
    %v1468 = vld [vmem:[#allocation18 + $0x30] sm:$0xff]
    %v1469 = vld [vmem:[#allocation18 + $0x38] sm:$0xff]
    %v1470 = vld [vmem:[#allocation18 + $0x40] sm:$0xff]
    %v1471 = vld [vmem:[#allocation18 + $0x48] sm:$0xff]
    %v1472 = vld [vmem:[#allocation18 + $0x50] sm:$0xff]
    %v1473 = vld [vmem:[#allocation18 + $0x58] sm:$0xff]
    %v1474 = vld [vmem:[#allocation18 + $0x60] sm:$0xff]
    %v1475 = vld [vmem:[#allocation18 + $0x68] sm:$0xff]
    %v1476 = vld [vmem:[#allocation18 + $0x70] sm:$0xff]
    %v1477 = vld [vmem:[#allocation18 + $0x78] sm:$0xff]
    %v1478 = vld [vmem:[#allocation18 + $0x80] sm:$0xff]
    %v1479 = vld [vmem:[#allocation18 + $0x88] sm:$0xff]
    %v1480 = vld [vmem:[#allocation18 + $0x90] sm:$0xff]
    %v1481 = vld [vmem:[#allocation18 + $0x98] sm:$0xff]
    %v1482 = vld [vmem:[#allocation18 + $0xa0] sm:$0xff]
    %v1483 = vld [vmem:[#allocation18 + $0xa8] sm:$0xff]
    %v1484 = vld [vmem:[#allocation18 + $0xb0] sm:$0xff]
    %v1485 = vld [vmem:[#allocation18 + $0xb8] sm:$0xff]
    %v1486 = vld [vmem:[#allocation18 + $0xc0] sm:$0xff]
    %v1487 = vld [vmem:[#allocation18 + $0xc8] sm:$0xff]
    %v1488 = vld [vmem:[#allocation18 + $0xd0] sm:$0xff]
    %v1489 = vld [vmem:[#allocation18 + $0xd8] sm:$0xff]
    %v1490 = vld [vmem:[#allocation18 + $0xe0] sm:$0xff]
    %v1491 = vld [vmem:[#allocation18 + $0xe8] sm:$0xff]
    %v1492 = vld [vmem:[#allocation18 + $0xf0] sm:$0xff]
    %v1493 = vld [vmem:[#allocation18 + $0xf8] sm:$0xff]
    %v1494 = vld [vmem:[#allocation18 + $0x100] sm:$0xff]
    %v1495 = vld [vmem:[#allocation18 + $0x108] sm:$0xff]
    %v1496 = vld [vmem:[#allocation18 + $0x110] sm:$0xff]
    %v1497 = vld [vmem:[#allocation18 + $0x118] sm:$0xff]
    %v1498 = vld [vmem:[#allocation18 + $0x120] sm:$0xff]
    %v1499 = vld [vmem:[#allocation18 + $0x128] sm:$0xff]
    %v1500 = vld [vmem:[#allocation18 + $0x130] sm:$0xff]
    %v1501 = vld [vmem:[#allocation18 + $0x138] sm:$0xff]
    %v1502 = vld [vmem:[#allocation18 + $0x140] sm:$0xff]
    %v1503 = vld [vmem:[#allocation18 + $0x148] sm:$0xff]
    %v1504 = vld [vmem:[#allocation18 + $0x150] sm:$0xff]
    %v1505 = vld [vmem:[#allocation18 + $0x158] sm:$0xff]
    %v1506 = vld [vmem:[#allocation18 + $0x160] sm:$0xff]
    %v1507 = vld [vmem:[#allocation18 + $0x168] sm:$0xff]
    %v1508 = vld [vmem:[#allocation18 + $0x170] sm:$0xff]
    %v1509 = vld [vmem:[#allocation18 + $0x178] sm:$0xff]
    %v1510 = vld [vmem:[%s11] sm:$0x7]
    %v1512 = vperm.slane %v1510, 0
    %v1513 = vperm.slane %v1510, 1
    %v1514 = vperm.slane %v1510, 2
    %1518 = vmatpush.msra.mxu0 %v1507
    %1519 = vmatpush.msra.mxu0 %v1504
    %1520 = vmatpush.msra.mxu0 %v1501
    %1521 = vmatpush.msra.mxu0 %v1498
    %1522 = vmatpush.msra.mxu0 %v1495
    %1523 = vmatpush.msra.mxu0 %v1492
    %1524 = vmatpush.msra.mxu0 %v1489
    %1525 = vmatpush.msra.mxu0 %v1486
    %1526 = vmatpush.msra.mxu0 %v1483
    %1527 = vmatpush.msra.mxu0 %v1480
    %1528 = vmatpush.msra.mxu0 %v1477
    %1529 = vmatpush.msra.mxu0 %v1474
    %1530 = vmatpush.msra.mxu0 %v1471
    %1531 = vmatpush.msra.mxu0 %v1468
    %1532 = vmatpush.msra.mxu0 %v1465
    %1533 = vmatpush.msra.mxu0 %v1462
    %1534 = vmatmul.f32.gmra.mxu0 %v1310
    %v1535 = vpop.f32.mrf.mxu0
    %v1536 = vadd.f32 %v1512, %v1535
    %1537 = vdwg.mxu0
    %1538 = vmatpush.msra.mxu0 %v1508
    %1539 = vmatpush.msra.mxu0 %v1505
    %1540 = vmatpush.msra.mxu0 %v1502
    %1541 = vmatpush.msra.mxu0 %v1499
    %1542 = vmatpush.msra.mxu0 %v1496
    %1543 = vmatpush.msra.mxu0 %v1493
    %1544 = vmatpush.msra.mxu0 %v1490
    %1545 = vmatpush.msra.mxu0 %v1487
    %1546 = vmatpush.msra.mxu0 %v1484
    %1547 = vmatpush.msra.mxu0 %v1481
    %1548 = vmatpush.msra.mxu0 %v1478
    %1549 = vmatpush.msra.mxu0 %v1475
    %1550 = vmatpush.msra.mxu0 %v1472
    %1551 = vmatpush.msra.mxu0 %v1469
    %1552 = vmatpush.msra.mxu0 %v1466
    %1553 = vmatpush.msra.mxu0 %v1463
    %1554 = vmatmul.f32.gmra.mxu0 %v1310
    %v1555 = vpop.f32.mrf.mxu0
    %v1556 = vadd.f32 %v1513, %v1555
    %1557 = vdwg.mxu0
    %1558 = vmatpush.msra.mxu0 %v1509
    %1559 = vmatpush.msra.mxu0 %v1506
    %1560 = vmatpush.msra.mxu0 %v1503
    %1561 = vmatpush.msra.mxu0 %v1500
    %1562 = vmatpush.msra.mxu0 %v1497
    %1563 = vmatpush.msra.mxu0 %v1494
    %1564 = vmatpush.msra.mxu0 %v1491
    %1565 = vmatpush.msra.mxu0 %v1488
    %1566 = vmatpush.msra.mxu0 %v1485
    %1567 = vmatpush.msra.mxu0 %v1482
    %1568 = vmatpush.msra.mxu0 %v1479
    %1569 = vmatpush.msra.mxu0 %v1476
    %1570 = vmatpush.msra.mxu0 %v1473
    %1571 = vmatpush.msra.mxu0 %v1470
    %1572 = vmatpush.msra.mxu0 %v1467
    %1573 = vmatpush.msra.mxu0 %v1464
    %1574 = vmatmul.f32.gmra.mxu0 %v1310
    %v1575 = vpop.f32.mrf.mxu0
    %v1576 = vadd.f32 %v1514, %v1575
    %1577 = vdwg.mxu0
    %v1578 = vld [vmem:[#allocation10] sm:$0xff]
    %v1579 = vld [vmem:[#allocation10 + $0x8] sm:$0xff]
    %v1580 = vld [vmem:[#allocation10 + $0x10] sm:$0xff]
    %v1581 = vld [vmem:[#allocation10 + $0x18] sm:$0xff]
    %v1582 = vld [vmem:[#allocation10 + $0x20] sm:$0xff]
    %v1583 = vld [vmem:[#allocation10 + $0x28] sm:$0xff]
    %v1584 = vld [vmem:[#allocation10 + $0x30] sm:$0xff]
    %v1585 = vld [vmem:[#allocation10 + $0x38] sm:$0xff]
    %v1586 = vld [vmem:[#allocation10 + $0x40] sm:$0xff]
    %v1587 = vld [vmem:[#allocation10 + $0x48] sm:$0xff]
    %v1588 = vld [vmem:[#allocation10 + $0x50] sm:$0xff]
    %v1589 = vld [vmem:[#allocation10 + $0x58] sm:$0xff]
    %v1590 = vld [vmem:[#allocation10 + $0x60] sm:$0xff]
    %v1591 = vld [vmem:[#allocation10 + $0x68] sm:$0xff]
    %v1592 = vld [vmem:[#allocation10 + $0x70] sm:$0xff]
    %v1593 = vld [vmem:[#allocation10 + $0x78] sm:$0xff]
    %v1594 = vld [vmem:[#allocation13] sm:$0xff]
    %v1595 = vld [vmem:[#allocation13 + $0x8] sm:$0xff]
    %v1596 = vld [vmem:[#allocation13 + $0x10] sm:$0xff]
    %v1597 = vld [vmem:[#allocation13 + $0x18] sm:$0xff]
    %v1598 = vld [vmem:[#allocation13 + $0x20] sm:$0xff]
    %v1599 = vld [vmem:[#allocation13 + $0x28] sm:$0xff]
    %v1600 = vld [vmem:[#allocation13 + $0x30] sm:$0xff]
    %v1601 = vld [vmem:[#allocation13 + $0x38] sm:$0xff]
    %v1602 = vld [vmem:[#allocation13 + $0x40] sm:$0xff]
    %v1603 = vld [vmem:[#allocation13 + $0x48] sm:$0xff]
    %v1604 = vld [vmem:[#allocation13 + $0x50] sm:$0xff]
    %v1605 = vld [vmem:[#allocation13 + $0x58] sm:$0xff]
    %v1606 = vld [vmem:[#allocation13 + $0x60] sm:$0xff]
    %v1607 = vld [vmem:[#allocation13 + $0x68] sm:$0xff]
    %v1608 = vld [vmem:[#allocation13 + $0x70] sm:$0xff]
    %v1609 = vld [vmem:[#allocation13 + $0x78] sm:$0xff]
    %1610 = vmatpush.msra.mxu0 %v1593
    %1611 = vmatpush.msra.mxu0 %v1592
    %1612 = vmatpush.msra.mxu0 %v1591
    %1613 = vmatpush.msra.mxu0 %v1590
    %1614 = vmatpush.msra.mxu0 %v1589
    %1615 = vmatpush.msra.mxu0 %v1588
    %1616 = vmatpush.msra.mxu0 %v1587
    %1617 = vmatpush.msra.mxu0 %v1586
    %1618 = vmatpush.msra.mxu0 %v1585
    %1619 = vmatpush.msra.mxu0 %v1584
    %1620 = vmatpush.msra.mxu0 %v1583
    %1621 = vmatpush.msra.mxu0 %v1582
    %1622 = vmatpush.msra.mxu0 %v1581
    %1623 = vmatpush.msra.mxu0 %v1580
    %1624 = vmatpush.msra.mxu0 %v1579
    %1625 = vmatpush.msra.mxu0 %v1578
    %1626 = vmatmul.f32.gmra.mxu0 %v1425
    %v1627 = vpop.f32.mrf.mxu0
    %v1628 = vadd.f32 %v1460, %v1627
    %1629 = vdwg.mxu0
    %v1630 = vld [vmem:[#allocation12] sm:$0x1]
    %v1631 = vadd.f32 %v1628, %v1630
    %v1632 = vsel %vm422, %v1631, -inf
    %1633 = vmax.xlane.f32.xlu0 %v1632
    %v1634 = vpop.xlane.xlu0 %1633
    %v1635 = vsub.f32 %v1631, %v1634
    %v1636 = vmul.f32 %v1635, 1.442695
    %v1637 = vpow.pop %v1636
    %v1638 = vsel %vm422, %v1637, 0.0
    %1639 = vadd.xlane.f32.xlu0 %v1638
    %v1640 = vpop.xlane.xlu0 %1639
    %v1641 = vrcp.pop %v1640
    %v1642 = vmul.f32 %v1640, %v1641
    %v1643 = vsub.f32 1.0, %v1642
    %v1644 = vmul.f32 %v1641, %v1643
    %v1645 = vadd.f32 %v1641, %v1644
    %vm1646 = vweird.f32 %v1640
    %vm1647 = vweird.f32 %v1641
    %vm1648 = vmor %vm1646, %vm1647
    %v1649 = vsel %vm1648, %v1641, %v1645
    %v1650 = vand.u32 2147483647, %v1640
    %vm1651 = vcmp.eq.f32.partialorder %v1650, 8.507059e+37
    %v1652 = vand.u32 %v1640, 2147483648
    %v1653 = vor.u32 1.1754944e-38, %v1652
    %v1654 = vsel %vm1651, %v1653, %v1649
    %v1655 = vmul.f32 %v1637, %v1654
    %v1656 = vld [vmem:[#allocation9] sm:$0xff]
    %v1657 = vld [vmem:[#allocation9 + $0x8] sm:$0xff]
    %v1658 = vld [vmem:[#allocation9 + $0x10] sm:$0xff]
    %v1659 = vld [vmem:[#allocation9 + $0x18] sm:$0xff]
    %v1660 = vld [vmem:[#allocation9 + $0x20] sm:$0xff]
    %v1661 = vld [vmem:[#allocation9 + $0x28] sm:$0xff]
    %v1662 = vld [vmem:[#allocation9 + $0x30] sm:$0xff]
    %v1663 = vld [vmem:[#allocation9 + $0x38] sm:$0xff]
    %v1664 = vld [vmem:[#allocation9 + $0x40] sm:$0xff]
    %v1665 = vld [vmem:[#allocation9 + $0x48] sm:$0xff]
    %v1666 = vld [vmem:[#allocation9 + $0x50] sm:$0xff]
    %v1667 = vld [vmem:[#allocation9 + $0x58] sm:$0xff]
    %v1668 = vld [vmem:[#allocation9 + $0x60] sm:$0xff]
    %v1669 = vld [vmem:[#allocation9 + $0x68] sm:$0xff]
    %v1670 = vld [vmem:[#allocation9 + $0x70] sm:$0xff]
    %v1671 = vld [vmem:[#allocation9 + $0x78] sm:$0xff]
    %1672 = vmatpush.msra.mxu0 %v1671
    %1673 = vmatpush.msra.mxu0 %v1670
    %1674 = vmatpush.msra.mxu0 %v1669
    %1675 = vmatpush.msra.mxu0 %v1668
    %1676 = vmatpush.msra.mxu0 %v1667
    %1677 = vmatpush.msra.mxu0 %v1666
    %1678 = vmatpush.msra.mxu0 %v1665
    %1679 = vmatpush.msra.mxu0 %v1664
    %1680 = vmatpush.msra.mxu0 %v1663
    %1681 = vmatpush.msra.mxu0 %v1662
    %1682 = vmatpush.msra.mxu0 %v1661
    %1683 = vmatpush.msra.mxu0 %v1660
    %1684 = vmatpush.msra.mxu0 %v1659
    %1685 = vmatpush.msra.mxu0 %v1658
    %1686 = vmatpush.msra.mxu0 %v1657
    %1687 = vmatpush.msra.mxu0 %v1656
    %1688 = vmatmul.f32.gmra.mxu0 %v1655
    %v1689 = vpop.f32.mrf.mxu0
    %v1690 = vadd.f32 0.0, %v1689
    %1691 = vdwg.mxu0
    %v1692 = vld [vmem:[#allocation13 + $0x80] sm:$0xff]
    %v1693 = vld [vmem:[#allocation13 + $0x88] sm:$0xff]
    %v1694 = vld [vmem:[#allocation13 + $0x90] sm:$0xff]
    %v1695 = vld [vmem:[#allocation13 + $0x98] sm:$0xff]
    %v1696 = vld [vmem:[#allocation13 + $0xa0] sm:$0xff]
    %v1697 = vld [vmem:[#allocation13 + $0xa8] sm:$0xff]
    %v1698 = vld [vmem:[#allocation13 + $0xb0] sm:$0xff]
    %v1699 = vld [vmem:[#allocation13 + $0xb8] sm:$0xff]
    %v1700 = vld [vmem:[#allocation13 + $0xc0] sm:$0xff]
    %v1701 = vld [vmem:[#allocation13 + $0xc8] sm:$0xff]
    %v1702 = vld [vmem:[#allocation13 + $0xd0] sm:$0xff]
    %v1703 = vld [vmem:[#allocation13 + $0xd8] sm:$0xff]
    %v1704 = vld [vmem:[#allocation13 + $0xe0] sm:$0xff]
    %v1705 = vld [vmem:[#allocation13 + $0xe8] sm:$0xff]
    %v1706 = vld [vmem:[#allocation13 + $0xf0] sm:$0xff]
    %v1707 = vld [vmem:[#allocation13 + $0xf8] sm:$0xff]
    %1708 = vmatpush.msra.mxu0 %v1707
    %1709 = vmatpush.msra.mxu0 %v1706
    %1710 = vmatpush.msra.mxu0 %v1705
    %1711 = vmatpush.msra.mxu0 %v1704
    %1712 = vmatpush.msra.mxu0 %v1703
    %1713 = vmatpush.msra.mxu0 %v1702
    %1714 = vmatpush.msra.mxu0 %v1701
    %1715 = vmatpush.msra.mxu0 %v1700
    %1716 = vmatpush.msra.mxu0 %v1699
    %1717 = vmatpush.msra.mxu0 %v1698
    %1718 = vmatpush.msra.mxu0 %v1697
    %1719 = vmatpush.msra.mxu0 %v1696
    %1720 = vmatpush.msra.mxu0 %v1695
    %1721 = vmatpush.msra.mxu0 %v1694
    %1722 = vmatpush.msra.mxu0 %v1693
    %1723 = vmatpush.msra.mxu0 %v1692
    %1724 = vmatmul.f32.gmra.mxu0 %v1690
    %v1725 = vpop.f32.mrf.mxu0
    %v1726 = vadd.f32 0.0, %v1725
    %1727 = vdwg.mxu0
    %1728 = vmatpush.msra.mxu0 %v1609
    %1729 = vmatpush.msra.mxu0 %v1608
    %1730 = vmatpush.msra.mxu0 %v1607
    %1731 = vmatpush.msra.mxu0 %v1606
    %1732 = vmatpush.msra.mxu0 %v1605
    %1733 = vmatpush.msra.mxu0 %v1604
    %1734 = vmatpush.msra.mxu0 %v1603
    %1735 = vmatpush.msra.mxu0 %v1602
    %1736 = vmatpush.msra.mxu0 %v1601
    %1737 = vmatpush.msra.mxu0 %v1600
    %1738 = vmatpush.msra.mxu0 %v1599
    %1739 = vmatpush.msra.mxu0 %v1598
    %1740 = vmatpush.msra.mxu0 %v1597
    %1741 = vmatpush.msra.mxu0 %v1596
    %1742 = vmatpush.msra.mxu0 %v1595
    %1743 = vmatpush.msra.mxu0 %v1594
    %1744 = vmatmul.f32.gmra.mxu0 %v1425
    %v1745 = vpop.f32.mrf.mxu0
    %v1746 = vadd.f32 %v1726, %v1745
    %1747 = vdwg.mxu0
    %v1748 = vld [vmem:[#allocation15] sm:$0x1]
    %v1749 = vadd.f32 %v1746, %v1748
    %v1750 = vmax.f32 %v1749, 0.0
    %v1751 = vld [vmem:[#allocation16] sm:$0xff]
    %v1752 = vld [vmem:[#allocation16 + $0x8] sm:$0xff]
    %v1753 = vld [vmem:[#allocation16 + $0x10] sm:$0xff]
    %v1754 = vld [vmem:[#allocation16 + $0x18] sm:$0xff]
    %v1755 = vld [vmem:[#allocation16 + $0x20] sm:$0xff]
    %v1756 = vld [vmem:[#allocation16 + $0x28] sm:$0xff]
    %v1757 = vld [vmem:[#allocation16 + $0x30] sm:$0xff]
    %v1758 = vld [vmem:[#allocation16 + $0x38] sm:$0xff]
    %v1759 = vld [vmem:[#allocation16 + $0x40] sm:$0xff]
    %v1760 = vld [vmem:[#allocation16 + $0x48] sm:$0xff]
    %v1761 = vld [vmem:[#allocation16 + $0x50] sm:$0xff]
    %v1762 = vld [vmem:[#allocation16 + $0x58] sm:$0xff]
    %v1763 = vld [vmem:[#allocation16 + $0x60] sm:$0xff]
    %v1764 = vld [vmem:[#allocation16 + $0x68] sm:$0xff]
    %v1765 = vld [vmem:[#allocation16 + $0x70] sm:$0xff]
    %v1766 = vld [vmem:[#allocation16 + $0x78] sm:$0xff]
    %v1767 = vld [vmem:[#allocation16 + $0x80] sm:$0xff]
    %v1768 = vld [vmem:[#allocation16 + $0x88] sm:$0xff]
    %v1769 = vld [vmem:[#allocation16 + $0x90] sm:$0xff]
    %v1770 = vld [vmem:[#allocation16 + $0x98] sm:$0xff]
    %v1771 = vld [vmem:[#allocation16 + $0xa0] sm:$0xff]
    %v1772 = vld [vmem:[#allocation16 + $0xa8] sm:$0xff]
    %v1773 = vld [vmem:[#allocation16 + $0xb0] sm:$0xff]
    %v1774 = vld [vmem:[#allocation16 + $0xb8] sm:$0xff]
    %v1775 = vld [vmem:[#allocation16 + $0xc0] sm:$0xff]
    %v1776 = vld [vmem:[#allocation16 + $0xc8] sm:$0xff]
    %v1777 = vld [vmem:[#allocation16 + $0xd0] sm:$0xff]
    %v1778 = vld [vmem:[#allocation16 + $0xd8] sm:$0xff]
    %v1779 = vld [vmem:[#allocation16 + $0xe0] sm:$0xff]
    %v1780 = vld [vmem:[#allocation16 + $0xe8] sm:$0xff]
    %v1781 = vld [vmem:[#allocation16 + $0xf0] sm:$0xff]
    %v1782 = vld [vmem:[#allocation16 + $0xf8] sm:$0xff]
    %v1783 = vld [vmem:[#allocation16 + $0x100] sm:$0xff]
    %v1784 = vld [vmem:[#allocation16 + $0x108] sm:$0xff]
    %v1785 = vld [vmem:[#allocation16 + $0x110] sm:$0xff]
    %v1786 = vld [vmem:[#allocation16 + $0x118] sm:$0xff]
    %v1787 = vld [vmem:[#allocation16 + $0x120] sm:$0xff]
    %v1788 = vld [vmem:[#allocation16 + $0x128] sm:$0xff]
    %v1789 = vld [vmem:[#allocation16 + $0x130] sm:$0xff]
    %v1790 = vld [vmem:[#allocation16 + $0x138] sm:$0xff]
    %v1791 = vld [vmem:[#allocation16 + $0x140] sm:$0xff]
    %v1792 = vld [vmem:[#allocation16 + $0x148] sm:$0xff]
    %v1793 = vld [vmem:[#allocation16 + $0x150] sm:$0xff]
    %v1794 = vld [vmem:[#allocation16 + $0x158] sm:$0xff]
    %v1795 = vld [vmem:[#allocation16 + $0x160] sm:$0xff]
    %v1796 = vld [vmem:[#allocation16 + $0x168] sm:$0xff]
    %v1797 = vld [vmem:[#allocation16 + $0x170] sm:$0xff]
    %v1798 = vld [vmem:[#allocation16 + $0x178] sm:$0xff]
    %v1799 = vld [vmem:[%s9] sm:$0x7]
    %v1801 = vperm.slane %v1799, 0
    %v1802 = vperm.slane %v1799, 1
    %v1803 = vperm.slane %v1799, 2
    %1807 = vmatpush.msra.mxu0 %v1796
    %1808 = vmatpush.msra.mxu0 %v1793
    %1809 = vmatpush.msra.mxu0 %v1790
    %1810 = vmatpush.msra.mxu0 %v1787
    %1811 = vmatpush.msra.mxu0 %v1784
    %1812 = vmatpush.msra.mxu0 %v1781
    %1813 = vmatpush.msra.mxu0 %v1778
    %1814 = vmatpush.msra.mxu0 %v1775
    %1815 = vmatpush.msra.mxu0 %v1772
    %1816 = vmatpush.msra.mxu0 %v1769
    %1817 = vmatpush.msra.mxu0 %v1766
    %1818 = vmatpush.msra.mxu0 %v1763
    %1819 = vmatpush.msra.mxu0 %v1760
    %1820 = vmatpush.msra.mxu0 %v1757
    %1821 = vmatpush.msra.mxu0 %v1754
    %1822 = vmatpush.msra.mxu0 %v1751
    %1823 = vmatmul.f32.gmra.mxu0 %v1750
    %v1824 = vpop.f32.mrf.mxu0
    %v1825 = vadd.f32 %v1801, %v1824
    %1826 = vdwg.mxu0
    %1827 = vmatpush.msra.mxu0 %v1797
    %1828 = vmatpush.msra.mxu0 %v1794
    %1829 = vmatpush.msra.mxu0 %v1791
    %1830 = vmatpush.msra.mxu0 %v1788
    %1831 = vmatpush.msra.mxu0 %v1785
    %1832 = vmatpush.msra.mxu0 %v1782
    %1833 = vmatpush.msra.mxu0 %v1779
    %1834 = vmatpush.msra.mxu0 %v1776
    %1835 = vmatpush.msra.mxu0 %v1773
    %1836 = vmatpush.msra.mxu0 %v1770
    %1837 = vmatpush.msra.mxu0 %v1767
    %1838 = vmatpush.msra.mxu0 %v1764
    %1839 = vmatpush.msra.mxu0 %v1761
    %1840 = vmatpush.msra.mxu0 %v1758
    %1841 = vmatpush.msra.mxu0 %v1755
    %1842 = vmatpush.msra.mxu0 %v1752
    %1843 = vmatmul.f32.gmra.mxu0 %v1750
    %v1844 = vpop.f32.mrf.mxu0
    %v1845 = vadd.f32 %v1802, %v1844
    %1846 = vdwg.mxu0
    %1847 = vmatpush.msra.mxu0 %v1798
    %1848 = vmatpush.msra.mxu0 %v1795
    %1849 = vmatpush.msra.mxu0 %v1792
    %1850 = vmatpush.msra.mxu0 %v1789
    %1851 = vmatpush.msra.mxu0 %v1786
    %1852 = vmatpush.msra.mxu0 %v1783
    %1853 = vmatpush.msra.mxu0 %v1780
    %1854 = vmatpush.msra.mxu0 %v1777
    %1855 = vmatpush.msra.mxu0 %v1774
    %1856 = vmatpush.msra.mxu0 %v1771
    %1857 = vmatpush.msra.mxu0 %v1768
    %1858 = vmatpush.msra.mxu0 %v1765
    %1859 = vmatpush.msra.mxu0 %v1762
    %1860 = vmatpush.msra.mxu0 %v1759
    %1861 = vmatpush.msra.mxu0 %v1756
    %1862 = vmatpush.msra.mxu0 %v1753
    %1863 = vmatmul.f32.gmra.mxu0 %v1750
    %v1864 = vpop.f32.mrf.mxu0
    %v1865 = vadd.f32 %v1803, %v1864
    %1866 = vdwg.mxu0
    %v1867 = vadd.f32 %v1825, %v1536
    %v1868 = vxor.u32 %v1867, 2147483648
    %v1869 = vmul.f32 %v1868, 1.442695
    %v1870 = vpow.pop %v1869
    %v1871 = vadd.f32 %v1870, 1.0
    %v1872 = vrcp.pop %v1871
    %v1873 = vmul.f32 %v1871, %v1872
    %v1874 = vsub.f32 1.0, %v1873
    %v1875 = vmul.f32 %v1872, %v1874
    %v1876 = vadd.f32 %v1872, %v1875
    %vm1877 = vweird.f32 %v1871
    %vm1878 = vweird.f32 %v1872
    %vm1879 = vmor %vm1877, %vm1878
    %v1880 = vsel %vm1879, %v1872, %v1876
    %v1881 = vand.u32 2147483647, %v1871
    %vm1882 = vcmp.eq.f32.partialorder %v1881, 8.507059e+37
    %v1883 = vand.u32 %v1871, 2147483648
    %v1884 = vor.u32 1.1754944e-38, %v1883
    %v1885 = vsel %vm1882, %v1884, %v1880
    %v1886 = vmul.f32 1.0, %v1885
    %v1887 = vadd.f32 %v1845, %v1556
    %v1888 = vxor.u32 %v1887, 2147483648
    %v1889 = vmul.f32 %v1888, 1.442695
    %v1890 = vpow.pop %v1889
    %v1891 = vadd.f32 %v1890, 1.0
    %v1892 = vrcp.pop %v1891
    %v1893 = vmul.f32 %v1891, %v1892
    %v1894 = vsub.f32 1.0, %v1893
    %v1895 = vmul.f32 %v1892, %v1894
    %v1896 = vadd.f32 %v1892, %v1895
    %vm1897 = vweird.f32 %v1891
    %vm1898 = vweird.f32 %v1892
    %vm1899 = vmor %vm1897, %vm1898
    %v1900 = vsel %vm1899, %v1892, %v1896
    %v1901 = vand.u32 2147483647, %v1891
    %vm1902 = vcmp.eq.f32.partialorder %v1901, 8.507059e+37
    %v1903 = vand.u32 %v1891, 2147483648
    %v1904 = vor.u32 1.1754944e-38, %v1903
    %v1905 = vsel %vm1902, %v1904, %v1900
    %v1906 = vmul.f32 1.0, %v1905
    %v1907 = vmul.f32 %v1886, %v1576
    %v1908 = vadd.f32 %v1865, %v1907
    %v1909 = vtanh.pop %v1908
    %v1910 = vsub.f32 1.0, %v1906
    %v1911 = vmul.f32 %v1910, %v1909
    %v1912 = vmul.f32 %v1906, %v1310
    %v1913 = vadd.f32 %v1911, %v1912
    %v1914 = vld [vmem:[#allocation19] sm:$0xff]
    %v1915 = vld [vmem:[#allocation19 + $0x8] sm:$0xff]
    %v1916 = vld [vmem:[#allocation19 + $0x10] sm:$0xff]
    %v1917 = vld [vmem:[#allocation19 + $0x18] sm:$0xff]
    %v1918 = vld [vmem:[#allocation19 + $0x20] sm:$0xff]
    %v1919 = vld [vmem:[#allocation19 + $0x28] sm:$0xff]
    %v1920 = vld [vmem:[#allocation19 + $0x30] sm:$0xff]
    %v1921 = vld [vmem:[#allocation19 + $0x38] sm:$0xff]
    %v1922 = vld [vmem:[#allocation19 + $0x40] sm:$0xff]
    %v1923 = vld [vmem:[#allocation19 + $0x48] sm:$0xff]
    %v1924 = vld [vmem:[#allocation19 + $0x50] sm:$0xff]
    %v1925 = vld [vmem:[#allocation19 + $0x58] sm:$0xff]
    %v1926 = vld [vmem:[#allocation19 + $0x60] sm:$0xff]
    %v1927 = vld [vmem:[#allocation19 + $0x68] sm:$0xff]
    %v1928 = vld [vmem:[#allocation19 + $0x70] sm:$0xff]
    %v1929 = vld [vmem:[#allocation19 + $0x78] sm:$0xff]
    %v1930 = vld [vmem:[#allocation19 + $0x80] sm:$0xff]
    %v1931 = vld [vmem:[#allocation19 + $0x88] sm:$0xff]
    %v1932 = vld [vmem:[#allocation19 + $0x90] sm:$0xff]
    %v1933 = vld [vmem:[#allocation19 + $0x98] sm:$0xff]
    %v1934 = vld [vmem:[#allocation19 + $0xa0] sm:$0xff]
    %v1935 = vld [vmem:[#allocation19 + $0xa8] sm:$0xff]
    %v1936 = vld [vmem:[#allocation19 + $0xb0] sm:$0xff]
    %v1937 = vld [vmem:[#allocation19 + $0xb8] sm:$0xff]
    %v1938 = vld [vmem:[#allocation19 + $0xc0] sm:$0xff]
    %v1939 = vld [vmem:[#allocation19 + $0xc8] sm:$0xff]
    %v1940 = vld [vmem:[#allocation19 + $0xd0] sm:$0xff]
    %v1941 = vld [vmem:[#allocation19 + $0xd8] sm:$0xff]
    %v1942 = vld [vmem:[#allocation19 + $0xe0] sm:$0xff]
    %v1943 = vld [vmem:[#allocation19 + $0xe8] sm:$0xff]
    %v1944 = vld [vmem:[#allocation19 + $0xf0] sm:$0xff]
    %v1945 = vld [vmem:[#allocation19 + $0xf8] sm:$0xff]
    %v1946 = vld [vmem:[%s13] sm:$0x3]
    %v1948 = vperm.slane %v1946, 0
    %v1949 = vperm.slane %v1946, 1
    %1952 = vmatpush.msra.mxu0 %v1944
    %1953 = vmatpush.msra.mxu0 %v1942
    %1954 = vmatpush.msra.mxu0 %v1940
    %1955 = vmatpush.msra.mxu0 %v1938
    %1956 = vmatpush.msra.mxu0 %v1936
    %1957 = vmatpush.msra.mxu0 %v1934
    %1958 = vmatpush.msra.mxu0 %v1932
    %1959 = vmatpush.msra.mxu0 %v1930
    %1960 = vmatpush.msra.mxu0 %v1928
    %1961 = vmatpush.msra.mxu0 %v1926
    %1962 = vmatpush.msra.mxu0 %v1924
    %1963 = vmatpush.msra.mxu0 %v1922
    %1964 = vmatpush.msra.mxu0 %v1920
    %1965 = vmatpush.msra.mxu0 %v1918
    %1966 = vmatpush.msra.mxu0 %v1916
    %1967 = vmatpush.msra.mxu0 %v1914
    %1968 = vmatmul.f32.gmra.mxu0 %v1913
    %v1969 = vpop.f32.mrf.mxu0
    %v1970 = vadd.f32 %v1948, %v1969
    %1971 = vdwg.mxu0
    %1972 = vmatpush.msra.mxu0 %v1945
    %1973 = vmatpush.msra.mxu0 %v1943
    %1974 = vmatpush.msra.mxu0 %v1941
    %1975 = vmatpush.msra.mxu0 %v1939
    %1976 = vmatpush.msra.mxu0 %v1937
    %1977 = vmatpush.msra.mxu0 %v1935
    %1978 = vmatpush.msra.mxu0 %v1933
    %1979 = vmatpush.msra.mxu0 %v1931
    %1980 = vmatpush.msra.mxu0 %v1929
    %1981 = vmatpush.msra.mxu0 %v1927
    %1982 = vmatpush.msra.mxu0 %v1925
    %1983 = vmatpush.msra.mxu0 %v1923
    %1984 = vmatpush.msra.mxu0 %v1921
    %1985 = vmatpush.msra.mxu0 %v1919
    %1986 = vmatpush.msra.mxu0 %v1917
    %1987 = vmatpush.msra.mxu0 %v1915
    %1988 = vmatmul.f32.gmra.mxu0 %v1913
    %v1989 = vpop.f32.mrf.mxu0
    %v1990 = vadd.f32 %v1949, %v1989
    %1991 = vdwg.mxu0
    %v1992 = vsel %vm422, %v1970, -inf
    %v1993 = vsel %vm422, %v1990, -inf
    %v1994 = vmax.f32 %v1992, %v1993
    %1995 = vmax.xlane.f32.xlu0 %v1994
    %v1996 = vpop.xlane.xlu0 %1995
    %v1997 = vsub.f32 %v1970, %v1996
    %v1998 = vsub.f32 %v1990, %v1996
    %v1999 = vmul.f32 %v1997, 1.442695
    %v2000 = vpow.pop %v1999
    %v2001 = vmul.f32 %v1998, 1.442695
    %v2002 = vpow.pop %v2001
    %v2003 = vsel %vm422, %v2000, 0.0
    %v2004 = vsel %vm422, %v2002, 0.0
    %v2005 = vadd.f32 %v2003, %v2004
    %2006 = vadd.xlane.f32.xlu0 %v2005
    %v2007 = vpop.xlane.xlu0 %2006
    %v2008 = vlog2.pop %v2007
    %v2009 = vmul.f32 %v2008, 0.6931472
    %v2010 = vadd.f32 %v2009, %v1996
    %v2011 = vsub.f32 %v1970, %v2010
    %v2012 = vsub.f32 %v1990, %v2010
    %v2015 = vrot.slane %v2012, 7
    %v2016 = vsel %vm422, %v2011, %v2015
    %s2018 = scalar_lea.vmem [#allocation21], 2
    %2019 = vst.msk [vmem:[%s2018] ss:$8 sm:$0x3] %vm812, %v2016
    %2020 = vst.msk [vmem:[%s2018] ss:$8 sm:$0x0] %vm812, %v2016
    %2021 = vst [vmem:[#allocation24 + $0x2] sm:$0x1] %v1655
    %s2022 = sld [smem:[#allocation3 + $0x3]]
    %p2023 = scmp.gt.s32.totalorder %s2022, 0
    %s2024 = scalar_select %p2023, %s2022, 0
    %p2025 = scmp.lt.s32.totalorder %s2024, 255
    %s2026 = scalar_select %p2025, %s2024, 255
    %s2027 = scalar_lea.vmem [#allocation4], %s2026
    %v2028 = vld [vmem:[%s2027] sm:$0x1]
    %v2029 = vld [vmem:[#allocation10 + $0x80] sm:$0xff]
    %v2030 = vld [vmem:[#allocation10 + $0x88] sm:$0xff]
    %v2031 = vld [vmem:[#allocation10 + $0x90] sm:$0xff]
    %v2032 = vld [vmem:[#allocation10 + $0x98] sm:$0xff]
    %v2033 = vld [vmem:[#allocation10 + $0xa0] sm:$0xff]
    %v2034 = vld [vmem:[#allocation10 + $0xa8] sm:$0xff]
    %v2035 = vld [vmem:[#allocation10 + $0xb0] sm:$0xff]
    %v2036 = vld [vmem:[#allocation10 + $0xb8] sm:$0xff]
    %v2037 = vld [vmem:[#allocation10 + $0xc0] sm:$0xff]
    %v2038 = vld [vmem:[#allocation10 + $0xc8] sm:$0xff]
    %v2039 = vld [vmem:[#allocation10 + $0xd0] sm:$0xff]
    %v2040 = vld [vmem:[#allocation10 + $0xd8] sm:$0xff]
    %v2041 = vld [vmem:[#allocation10 + $0xe0] sm:$0xff]
    %v2042 = vld [vmem:[#allocation10 + $0xe8] sm:$0xff]
    %v2043 = vld [vmem:[#allocation10 + $0xf0] sm:$0xff]
    %v2044 = vld [vmem:[#allocation10 + $0xf8] sm:$0xff]
    %2045 = vmatpush.msra.mxu0 %v2044
    %2046 = vmatpush.msra.mxu0 %v2043
    %2047 = vmatpush.msra.mxu0 %v2042
    %2048 = vmatpush.msra.mxu0 %v2041
    %2049 = vmatpush.msra.mxu0 %v2040
    %2050 = vmatpush.msra.mxu0 %v2039
    %2051 = vmatpush.msra.mxu0 %v2038
    %2052 = vmatpush.msra.mxu0 %v2037
    %2053 = vmatpush.msra.mxu0 %v2036
    %2054 = vmatpush.msra.mxu0 %v2035
    %2055 = vmatpush.msra.mxu0 %v2034
    %2056 = vmatpush.msra.mxu0 %v2033
    %2057 = vmatpush.msra.mxu0 %v2032
    %2058 = vmatpush.msra.mxu0 %v2031
    %2059 = vmatpush.msra.mxu0 %v2030
    %2060 = vmatpush.msra.mxu0 %v2029
    %2061 = vmatmul.f32.gmra.mxu0 %v1913
    %v2062 = vpop.f32.mrf.mxu0
    %v2063 = vadd.f32 0.0, %v2062
    %2064 = vdwg.mxu0
    %v2065 = vld [vmem:[#allocation18] sm:$0xff]
    %v2066 = vld [vmem:[#allocation18 + $0x8] sm:$0xff]
    %v2067 = vld [vmem:[#allocation18 + $0x10] sm:$0xff]
    %v2068 = vld [vmem:[#allocation18 + $0x18] sm:$0xff]
    %v2069 = vld [vmem:[#allocation18 + $0x20] sm:$0xff]
    %v2070 = vld [vmem:[#allocation18 + $0x28] sm:$0xff]
    %v2071 = vld [vmem:[#allocation18 + $0x30] sm:$0xff]
    %v2072 = vld [vmem:[#allocation18 + $0x38] sm:$0xff]
    %v2073 = vld [vmem:[#allocation18 + $0x40] sm:$0xff]
    %v2074 = vld [vmem:[#allocation18 + $0x48] sm:$0xff]
    %v2075 = vld [vmem:[#allocation18 + $0x50] sm:$0xff]
    %v2076 = vld [vmem:[#allocation18 + $0x58] sm:$0xff]
    %v2077 = vld [vmem:[#allocation18 + $0x60] sm:$0xff]
    %v2078 = vld [vmem:[#allocation18 + $0x68] sm:$0xff]
    %v2079 = vld [vmem:[#allocation18 + $0x70] sm:$0xff]
    %v2080 = vld [vmem:[#allocation18 + $0x78] sm:$0xff]
    %v2081 = vld [vmem:[#allocation18 + $0x80] sm:$0xff]
    %v2082 = vld [vmem:[#allocation18 + $0x88] sm:$0xff]
    %v2083 = vld [vmem:[#allocation18 + $0x90] sm:$0xff]
    %v2084 = vld [vmem:[#allocation18 + $0x98] sm:$0xff]
    %v2085 = vld [vmem:[#allocation18 + $0xa0] sm:$0xff]
    %v2086 = vld [vmem:[#allocation18 + $0xa8] sm:$0xff]
    %v2087 = vld [vmem:[#allocation18 + $0xb0] sm:$0xff]
    %v2088 = vld [vmem:[#allocation18 + $0xb8] sm:$0xff]
    %v2089 = vld [vmem:[#allocation18 + $0xc0] sm:$0xff]
    %v2090 = vld [vmem:[#allocation18 + $0xc8] sm:$0xff]
    %v2091 = vld [vmem:[#allocation18 + $0xd0] sm:$0xff]
    %v2092 = vld [vmem:[#allocation18 + $0xd8] sm:$0xff]
    %v2093 = vld [vmem:[#allocation18 + $0xe0] sm:$0xff]
    %v2094 = vld [vmem:[#allocation18 + $0xe8] sm:$0xff]
    %v2095 = vld [vmem:[#allocation18 + $0xf0] sm:$0xff]
    %v2096 = vld [vmem:[#allocation18 + $0xf8] sm:$0xff]
    %v2097 = vld [vmem:[#allocation18 + $0x100] sm:$0xff]
    %v2098 = vld [vmem:[#allocation18 + $0x108] sm:$0xff]
    %v2099 = vld [vmem:[#allocation18 + $0x110] sm:$0xff]
    %v2100 = vld [vmem:[#allocation18 + $0x118] sm:$0xff]
    %v2101 = vld [vmem:[#allocation18 + $0x120] sm:$0xff]
    %v2102 = vld [vmem:[#allocation18 + $0x128] sm:$0xff]
    %v2103 = vld [vmem:[#allocation18 + $0x130] sm:$0xff]
    %v2104 = vld [vmem:[#allocation18 + $0x138] sm:$0xff]
    %v2105 = vld [vmem:[#allocation18 + $0x140] sm:$0xff]
    %v2106 = vld [vmem:[#allocation18 + $0x148] sm:$0xff]
    %v2107 = vld [vmem:[#allocation18 + $0x150] sm:$0xff]
    %v2108 = vld [vmem:[#allocation18 + $0x158] sm:$0xff]
    %v2109 = vld [vmem:[#allocation18 + $0x160] sm:$0xff]
    %v2110 = vld [vmem:[#allocation18 + $0x168] sm:$0xff]
    %v2111 = vld [vmem:[#allocation18 + $0x170] sm:$0xff]
    %v2112 = vld [vmem:[#allocation18 + $0x178] sm:$0xff]
    %v2113 = vld [vmem:[%s11] sm:$0x7]
    %v2115 = vperm.slane %v2113, 0
    %v2116 = vperm.slane %v2113, 1
    %v2117 = vperm.slane %v2113, 2
    %2121 = vmatpush.msra.mxu0 %v2110
    %2122 = vmatpush.msra.mxu0 %v2107
    %2123 = vmatpush.msra.mxu0 %v2104
    %2124 = vmatpush.msra.mxu0 %v2101
    %2125 = vmatpush.msra.mxu0 %v2098
    %2126 = vmatpush.msra.mxu0 %v2095
    %2127 = vmatpush.msra.mxu0 %v2092
    %2128 = vmatpush.msra.mxu0 %v2089
    %2129 = vmatpush.msra.mxu0 %v2086
    %2130 = vmatpush.msra.mxu0 %v2083
    %2131 = vmatpush.msra.mxu0 %v2080
    %2132 = vmatpush.msra.mxu0 %v2077
    %2133 = vmatpush.msra.mxu0 %v2074
    %2134 = vmatpush.msra.mxu0 %v2071
    %2135 = vmatpush.msra.mxu0 %v2068
    %2136 = vmatpush.msra.mxu0 %v2065
    %2137 = vmatmul.f32.gmra.mxu0 %v1913
    %v2138 = vpop.f32.mrf.mxu0
    %v2139 = vadd.f32 %v2115, %v2138
    %2140 = vdwg.mxu0
    %2141 = vmatpush.msra.mxu0 %v2111
    %2142 = vmatpush.msra.mxu0 %v2108
    %2143 = vmatpush.msra.mxu0 %v2105
    %2144 = vmatpush.msra.mxu0 %v2102
    %2145 = vmatpush.msra.mxu0 %v2099
    %2146 = vmatpush.msra.mxu0 %v2096
    %2147 = vmatpush.msra.mxu0 %v2093
    %2148 = vmatpush.msra.mxu0 %v2090
    %2149 = vmatpush.msra.mxu0 %v2087
    %2150 = vmatpush.msra.mxu0 %v2084
    %2151 = vmatpush.msra.mxu0 %v2081
    %2152 = vmatpush.msra.mxu0 %v2078
    %2153 = vmatpush.msra.mxu0 %v2075
    %2154 = vmatpush.msra.mxu0 %v2072
    %2155 = vmatpush.msra.mxu0 %v2069
    %2156 = vmatpush.msra.mxu0 %v2066
    %2157 = vmatmul.f32.gmra.mxu0 %v1913
    %v2158 = vpop.f32.mrf.mxu0
    %v2159 = vadd.f32 %v2116, %v2158
    %2160 = vdwg.mxu0
    %2161 = vmatpush.msra.mxu0 %v2112
    %2162 = vmatpush.msra.mxu0 %v2109
    %2163 = vmatpush.msra.mxu0 %v2106
    %2164 = vmatpush.msra.mxu0 %v2103
    %2165 = vmatpush.msra.mxu0 %v2100
    %2166 = vmatpush.msra.mxu0 %v2097
    %2167 = vmatpush.msra.mxu0 %v2094
    %2168 = vmatpush.msra.mxu0 %v2091
    %2169 = vmatpush.msra.mxu0 %v2088
    %2170 = vmatpush.msra.mxu0 %v2085
    %2171 = vmatpush.msra.mxu0 %v2082
    %2172 = vmatpush.msra.mxu0 %v2079
    %2173 = vmatpush.msra.mxu0 %v2076
    %2174 = vmatpush.msra.mxu0 %v2073
    %2175 = vmatpush.msra.mxu0 %v2070
    %2176 = vmatpush.msra.mxu0 %v2067
    %2177 = vmatmul.f32.gmra.mxu0 %v1913
    %v2178 = vpop.f32.mrf.mxu0
    %v2179 = vadd.f32 %v2117, %v2178
    %2180 = vdwg.mxu0
    %v2181 = vld [vmem:[#allocation10] sm:$0xff]
    %v2182 = vld [vmem:[#allocation10 + $0x8] sm:$0xff]
    %v2183 = vld [vmem:[#allocation10 + $0x10] sm:$0xff]
    %v2184 = vld [vmem:[#allocation10 + $0x18] sm:$0xff]
    %v2185 = vld [vmem:[#allocation10 + $0x20] sm:$0xff]
    %v2186 = vld [vmem:[#allocation10 + $0x28] sm:$0xff]
    %v2187 = vld [vmem:[#allocation10 + $0x30] sm:$0xff]
    %v2188 = vld [vmem:[#allocation10 + $0x38] sm:$0xff]
    %v2189 = vld [vmem:[#allocation10 + $0x40] sm:$0xff]
    %v2190 = vld [vmem:[#allocation10 + $0x48] sm:$0xff]
    %v2191 = vld [vmem:[#allocation10 + $0x50] sm:$0xff]
    %v2192 = vld [vmem:[#allocation10 + $0x58] sm:$0xff]
    %v2193 = vld [vmem:[#allocation10 + $0x60] sm:$0xff]
    %v2194 = vld [vmem:[#allocation10 + $0x68] sm:$0xff]
    %v2195 = vld [vmem:[#allocation10 + $0x70] sm:$0xff]
    %v2196 = vld [vmem:[#allocation10 + $0x78] sm:$0xff]
    %v2197 = vld [vmem:[#allocation13] sm:$0xff]
    %v2198 = vld [vmem:[#allocation13 + $0x8] sm:$0xff]
    %v2199 = vld [vmem:[#allocation13 + $0x10] sm:$0xff]
    %v2200 = vld [vmem:[#allocation13 + $0x18] sm:$0xff]
    %v2201 = vld [vmem:[#allocation13 + $0x20] sm:$0xff]
    %v2202 = vld [vmem:[#allocation13 + $0x28] sm:$0xff]
    %v2203 = vld [vmem:[#allocation13 + $0x30] sm:$0xff]
    %v2204 = vld [vmem:[#allocation13 + $0x38] sm:$0xff]
    %v2205 = vld [vmem:[#allocation13 + $0x40] sm:$0xff]
    %v2206 = vld [vmem:[#allocation13 + $0x48] sm:$0xff]
    %v2207 = vld [vmem:[#allocation13 + $0x50] sm:$0xff]
    %v2208 = vld [vmem:[#allocation13 + $0x58] sm:$0xff]
    %v2209 = vld [vmem:[#allocation13 + $0x60] sm:$0xff]
    %v2210 = vld [vmem:[#allocation13 + $0x68] sm:$0xff]
    %v2211 = vld [vmem:[#allocation13 + $0x70] sm:$0xff]
    %v2212 = vld [vmem:[#allocation13 + $0x78] sm:$0xff]
    %2213 = vmatpush.msra.mxu0 %v2196
    %2214 = vmatpush.msra.mxu0 %v2195
    %2215 = vmatpush.msra.mxu0 %v2194
    %2216 = vmatpush.msra.mxu0 %v2193
    %2217 = vmatpush.msra.mxu0 %v2192
    %2218 = vmatpush.msra.mxu0 %v2191
    %2219 = vmatpush.msra.mxu0 %v2190
    %2220 = vmatpush.msra.mxu0 %v2189
    %2221 = vmatpush.msra.mxu0 %v2188
    %2222 = vmatpush.msra.mxu0 %v2187
    %2223 = vmatpush.msra.mxu0 %v2186
    %2224 = vmatpush.msra.mxu0 %v2185
    %2225 = vmatpush.msra.mxu0 %v2184
    %2226 = vmatpush.msra.mxu0 %v2183
    %2227 = vmatpush.msra.mxu0 %v2182
    %2228 = vmatpush.msra.mxu0 %v2181
    %2229 = vmatmul.f32.gmra.mxu0 %v2028
    %v2230 = vpop.f32.mrf.mxu0
    %v2231 = vadd.f32 %v2063, %v2230
    %2232 = vdwg.mxu0
    %v2233 = vld [vmem:[#allocation12] sm:$0x1]
    %v2234 = vadd.f32 %v2231, %v2233
    %v2235 = vsel %vm422, %v2234, -inf
    %2236 = vmax.xlane.f32.xlu0 %v2235
    %v2237 = vpop.xlane.xlu0 %2236
    %v2238 = vsub.f32 %v2234, %v2237
    %v2239 = vmul.f32 %v2238, 1.442695
    %v2240 = vpow.pop %v2239
    %v2241 = vsel %vm422, %v2240, 0.0
    %2242 = vadd.xlane.f32.xlu0 %v2241
    %v2243 = vpop.xlane.xlu0 %2242
    %v2244 = vrcp.pop %v2243
    %v2245 = vmul.f32 %v2243, %v2244
    %v2246 = vsub.f32 1.0, %v2245
    %v2247 = vmul.f32 %v2244, %v2246
    %v2248 = vadd.f32 %v2244, %v2247
    %vm2249 = vweird.f32 %v2243
    %vm2250 = vweird.f32 %v2244
    %vm2251 = vmor %vm2249, %vm2250
    %v2252 = vsel %vm2251, %v2244, %v2248
    %v2253 = vand.u32 2147483647, %v2243
    %vm2254 = vcmp.eq.f32.partialorder %v2253, 8.507059e+37
    %v2255 = vand.u32 %v2243, 2147483648
    %v2256 = vor.u32 1.1754944e-38, %v2255
    %v2257 = vsel %vm2254, %v2256, %v2252
    %v2258 = vmul.f32 %v2240, %v2257
    %v2259 = vld [vmem:[#allocation9] sm:$0xff]
    %v2260 = vld [vmem:[#allocation9 + $0x8] sm:$0xff]
    %v2261 = vld [vmem:[#allocation9 + $0x10] sm:$0xff]
    %v2262 = vld [vmem:[#allocation9 + $0x18] sm:$0xff]
    %v2263 = vld [vmem:[#allocation9 + $0x20] sm:$0xff]
    %v2264 = vld [vmem:[#allocation9 + $0x28] sm:$0xff]
    %v2265 = vld [vmem:[#allocation9 + $0x30] sm:$0xff]
    %v2266 = vld [vmem:[#allocation9 + $0x38] sm:$0xff]
    %v2267 = vld [vmem:[#allocation9 + $0x40] sm:$0xff]
    %v2268 = vld [vmem:[#allocation9 + $0x48] sm:$0xff]
    %v2269 = vld [vmem:[#allocation9 + $0x50] sm:$0xff]
    %v2270 = vld [vmem:[#allocation9 + $0x58] sm:$0xff]
    %v2271 = vld [vmem:[#allocation9 + $0x60] sm:$0xff]
    %v2272 = vld [vmem:[#allocation9 + $0x68] sm:$0xff]
    %v2273 = vld [vmem:[#allocation9 + $0x70] sm:$0xff]
    %v2274 = vld [vmem:[#allocation9 + $0x78] sm:$0xff]
    %2275 = vmatpush.msra.mxu0 %v2274
    %2276 = vmatpush.msra.mxu0 %v2273
    %2277 = vmatpush.msra.mxu0 %v2272
    %2278 = vmatpush.msra.mxu0 %v2271
    %2279 = vmatpush.msra.mxu0 %v2270
    %2280 = vmatpush.msra.mxu0 %v2269
    %2281 = vmatpush.msra.mxu0 %v2268
    %2282 = vmatpush.msra.mxu0 %v2267
    %2283 = vmatpush.msra.mxu0 %v2266
    %2284 = vmatpush.msra.mxu0 %v2265
    %2285 = vmatpush.msra.mxu0 %v2264
    %2286 = vmatpush.msra.mxu0 %v2263
    %2287 = vmatpush.msra.mxu0 %v2262
    %2288 = vmatpush.msra.mxu0 %v2261
    %2289 = vmatpush.msra.mxu0 %v2260
    %2290 = vmatpush.msra.mxu0 %v2259
    %2291 = vmatmul.f32.gmra.mxu0 %v2258
    %v2292 = vpop.f32.mrf.mxu0
    %v2293 = vadd.f32 0.0, %v2292
    %2294 = vdwg.mxu0
    %v2295 = vld [vmem:[#allocation13 + $0x80] sm:$0xff]
    %v2296 = vld [vmem:[#allocation13 + $0x88] sm:$0xff]
    %v2297 = vld [vmem:[#allocation13 + $0x90] sm:$0xff]
    %v2298 = vld [vmem:[#allocation13 + $0x98] sm:$0xff]
    %v2299 = vld [vmem:[#allocation13 + $0xa0] sm:$0xff]
    %v2300 = vld [vmem:[#allocation13 + $0xa8] sm:$0xff]
    %v2301 = vld [vmem:[#allocation13 + $0xb0] sm:$0xff]
    %v2302 = vld [vmem:[#allocation13 + $0xb8] sm:$0xff]
    %v2303 = vld [vmem:[#allocation13 + $0xc0] sm:$0xff]
    %v2304 = vld [vmem:[#allocation13 + $0xc8] sm:$0xff]
    %v2305 = vld [vmem:[#allocation13 + $0xd0] sm:$0xff]
    %v2306 = vld [vmem:[#allocation13 + $0xd8] sm:$0xff]
    %v2307 = vld [vmem:[#allocation13 + $0xe0] sm:$0xff]
    %v2308 = vld [vmem:[#allocation13 + $0xe8] sm:$0xff]
    %v2309 = vld [vmem:[#allocation13 + $0xf0] sm:$0xff]
    %v2310 = vld [vmem:[#allocation13 + $0xf8] sm:$0xff]
    %2311 = vmatpush.msra.mxu0 %v2310
    %2312 = vmatpush.msra.mxu0 %v2309
    %2313 = vmatpush.msra.mxu0 %v2308
    %2314 = vmatpush.msra.mxu0 %v2307
    %2315 = vmatpush.msra.mxu0 %v2306
    %2316 = vmatpush.msra.mxu0 %v2305
    %2317 = vmatpush.msra.mxu0 %v2304
    %2318 = vmatpush.msra.mxu0 %v2303
    %2319 = vmatpush.msra.mxu0 %v2302
    %2320 = vmatpush.msra.mxu0 %v2301
    %2321 = vmatpush.msra.mxu0 %v2300
    %2322 = vmatpush.msra.mxu0 %v2299
    %2323 = vmatpush.msra.mxu0 %v2298
    %2324 = vmatpush.msra.mxu0 %v2297
    %2325 = vmatpush.msra.mxu0 %v2296
    %2326 = vmatpush.msra.mxu0 %v2295
    %2327 = vmatmul.f32.gmra.mxu0 %v2293
    %v2328 = vpop.f32.mrf.mxu0
    %v2329 = vadd.f32 0.0, %v2328
    %2330 = vdwg.mxu0
    %2331 = vmatpush.msra.mxu0 %v2212
    %2332 = vmatpush.msra.mxu0 %v2211
    %2333 = vmatpush.msra.mxu0 %v2210
    %2334 = vmatpush.msra.mxu0 %v2209
    %2335 = vmatpush.msra.mxu0 %v2208
    %2336 = vmatpush.msra.mxu0 %v2207
    %2337 = vmatpush.msra.mxu0 %v2206
    %2338 = vmatpush.msra.mxu0 %v2205
    %2339 = vmatpush.msra.mxu0 %v2204
    %2340 = vmatpush.msra.mxu0 %v2203
    %2341 = vmatpush.msra.mxu0 %v2202
    %2342 = vmatpush.msra.mxu0 %v2201
    %2343 = vmatpush.msra.mxu0 %v2200
    %2344 = vmatpush.msra.mxu0 %v2199
    %2345 = vmatpush.msra.mxu0 %v2198
    %2346 = vmatpush.msra.mxu0 %v2197
    %2347 = vmatmul.f32.gmra.mxu0 %v2028
    %v2348 = vpop.f32.mrf.mxu0
    %v2349 = vadd.f32 %v2329, %v2348
    %2350 = vdwg.mxu0
    %v2351 = vld [vmem:[#allocation15] sm:$0x1]
    %v2352 = vadd.f32 %v2349, %v2351
    %v2353 = vmax.f32 %v2352, 0.0
    %v2354 = vld [vmem:[#allocation16] sm:$0xff]
    %v2355 = vld [vmem:[#allocation16 + $0x8] sm:$0xff]
    %v2356 = vld [vmem:[#allocation16 + $0x10] sm:$0xff]
    %v2357 = vld [vmem:[#allocation16 + $0x18] sm:$0xff]
    %v2358 = vld [vmem:[#allocation16 + $0x20] sm:$0xff]
    %v2359 = vld [vmem:[#allocation16 + $0x28] sm:$0xff]
    %v2360 = vld [vmem:[#allocation16 + $0x30] sm:$0xff]
    %v2361 = vld [vmem:[#allocation16 + $0x38] sm:$0xff]
    %v2362 = vld [vmem:[#allocation16 + $0x40] sm:$0xff]
    %v2363 = vld [vmem:[#allocation16 + $0x48] sm:$0xff]
    %v2364 = vld [vmem:[#allocation16 + $0x50] sm:$0xff]
    %v2365 = vld [vmem:[#allocation16 + $0x58] sm:$0xff]
    %v2366 = vld [vmem:[#allocation16 + $0x60] sm:$0xff]
    %v2367 = vld [vmem:[#allocation16 + $0x68] sm:$0xff]
    %v2368 = vld [vmem:[#allocation16 + $0x70] sm:$0xff]
    %v2369 = vld [vmem:[#allocation16 + $0x78] sm:$0xff]
    %v2370 = vld [vmem:[#allocation16 + $0x80] sm:$0xff]
    %v2371 = vld [vmem:[#allocation16 + $0x88] sm:$0xff]
    %v2372 = vld [vmem:[#allocation16 + $0x90] sm:$0xff]
    %v2373 = vld [vmem:[#allocation16 + $0x98] sm:$0xff]
    %v2374 = vld [vmem:[#allocation16 + $0xa0] sm:$0xff]
    %v2375 = vld [vmem:[#allocation16 + $0xa8] sm:$0xff]
    %v2376 = vld [vmem:[#allocation16 + $0xb0] sm:$0xff]
    %v2377 = vld [vmem:[#allocation16 + $0xb8] sm:$0xff]
    %v2378 = vld [vmem:[#allocation16 + $0xc0] sm:$0xff]
    %v2379 = vld [vmem:[#allocation16 + $0xc8] sm:$0xff]
    %v2380 = vld [vmem:[#allocation16 + $0xd0] sm:$0xff]
    %v2381 = vld [vmem:[#allocation16 + $0xd8] sm:$0xff]
    %v2382 = vld [vmem:[#allocation16 + $0xe0] sm:$0xff]
    %v2383 = vld [vmem:[#allocation16 + $0xe8] sm:$0xff]
    %v2384 = vld [vmem:[#allocation16 + $0xf0] sm:$0xff]
    %v2385 = vld [vmem:[#allocation16 + $0xf8] sm:$0xff]
    %v2386 = vld [vmem:[#allocation16 + $0x100] sm:$0xff]
    %v2387 = vld [vmem:[#allocation16 + $0x108] sm:$0xff]
    %v2388 = vld [vmem:[#allocation16 + $0x110] sm:$0xff]
    %v2389 = vld [vmem:[#allocation16 + $0x118] sm:$0xff]
    %v2390 = vld [vmem:[#allocation16 + $0x120] sm:$0xff]
    %v2391 = vld [vmem:[#allocation16 + $0x128] sm:$0xff]
    %v2392 = vld [vmem:[#allocation16 + $0x130] sm:$0xff]
    %v2393 = vld [vmem:[#allocation16 + $0x138] sm:$0xff]
    %v2394 = vld [vmem:[#allocation16 + $0x140] sm:$0xff]
    %v2395 = vld [vmem:[#allocation16 + $0x148] sm:$0xff]
    %v2396 = vld [vmem:[#allocation16 + $0x150] sm:$0xff]
    %v2397 = vld [vmem:[#allocation16 + $0x158] sm:$0xff]
    %v2398 = vld [vmem:[#allocation16 + $0x160] sm:$0xff]
    %v2399 = vld [vmem:[#allocation16 + $0x168] sm:$0xff]
    %v2400 = vld [vmem:[#allocation16 + $0x170] sm:$0xff]
    %v2401 = vld [vmem:[#allocation16 + $0x178] sm:$0xff]
    %v2402 = vld [vmem:[%s9] sm:$0x7]
    %v2404 = vperm.slane %v2402, 0
    %v2405 = vperm.slane %v2402, 1
    %v2406 = vperm.slane %v2402, 2
    %2410 = vmatpush.msra.mxu0 %v2399
    %2411 = vmatpush.msra.mxu0 %v2396
    %2412 = vmatpush.msra.mxu0 %v2393
    %2413 = vmatpush.msra.mxu0 %v2390
    %2414 = vmatpush.msra.mxu0 %v2387
    %2415 = vmatpush.msra.mxu0 %v2384
    %2416 = vmatpush.msra.mxu0 %v2381
    %2417 = vmatpush.msra.mxu0 %v2378
    %2418 = vmatpush.msra.mxu0 %v2375
    %2419 = vmatpush.msra.mxu0 %v2372
    %2420 = vmatpush.msra.mxu0 %v2369
    %2421 = vmatpush.msra.mxu0 %v2366
    %2422 = vmatpush.msra.mxu0 %v2363
    %2423 = vmatpush.msra.mxu0 %v2360
    %2424 = vmatpush.msra.mxu0 %v2357
    %2425 = vmatpush.msra.mxu0 %v2354
    %2426 = vmatmul.f32.gmra.mxu0 %v2353
    %v2427 = vpop.f32.mrf.mxu0
    %v2428 = vadd.f32 %v2404, %v2427
    %2429 = vdwg.mxu0
    %2430 = vmatpush.msra.mxu0 %v2400
    %2431 = vmatpush.msra.mxu0 %v2397
    %2432 = vmatpush.msra.mxu0 %v2394
    %2433 = vmatpush.msra.mxu0 %v2391
    %2434 = vmatpush.msra.mxu0 %v2388
    %2435 = vmatpush.msra.mxu0 %v2385
    %2436 = vmatpush.msra.mxu0 %v2382
    %2437 = vmatpush.msra.mxu0 %v2379
    %2438 = vmatpush.msra.mxu0 %v2376
    %2439 = vmatpush.msra.mxu0 %v2373
    %2440 = vmatpush.msra.mxu0 %v2370
    %2441 = vmatpush.msra.mxu0 %v2367
    %2442 = vmatpush.msra.mxu0 %v2364
    %2443 = vmatpush.msra.mxu0 %v2361
    %2444 = vmatpush.msra.mxu0 %v2358
    %2445 = vmatpush.msra.mxu0 %v2355
    %2446 = vmatmul.f32.gmra.mxu0 %v2353
    %v2447 = vpop.f32.mrf.mxu0
    %v2448 = vadd.f32 %v2405, %v2447
    %2449 = vdwg.mxu0
    %2450 = vmatpush.msra.mxu0 %v2401
    %2451 = vmatpush.msra.mxu0 %v2398
    %2452 = vmatpush.msra.mxu0 %v2395
    %2453 = vmatpush.msra.mxu0 %v2392
    %2454 = vmatpush.msra.mxu0 %v2389
    %2455 = vmatpush.msra.mxu0 %v2386
    %2456 = vmatpush.msra.mxu0 %v2383
    %2457 = vmatpush.msra.mxu0 %v2380
    %2458 = vmatpush.msra.mxu0 %v2377
    %2459 = vmatpush.msra.mxu0 %v2374
    %2460 = vmatpush.msra.mxu0 %v2371
    %2461 = vmatpush.msra.mxu0 %v2368
    %2462 = vmatpush.msra.mxu0 %v2365
    %2463 = vmatpush.msra.mxu0 %v2362
    %2464 = vmatpush.msra.mxu0 %v2359
    %2465 = vmatpush.msra.mxu0 %v2356
    %2466 = vmatmul.f32.gmra.mxu0 %v2353
    %v2467 = vpop.f32.mrf.mxu0
    %v2468 = vadd.f32 %v2406, %v2467
    %2469 = vdwg.mxu0
    %v2470 = vadd.f32 %v2428, %v2139
    %v2471 = vxor.u32 %v2470, 2147483648
    %v2472 = vmul.f32 %v2471, 1.442695
    %v2473 = vpow.pop %v2472
    %v2474 = vadd.f32 %v2473, 1.0
    %v2475 = vrcp.pop %v2474
    %v2476 = vmul.f32 %v2474, %v2475
    %v2477 = vsub.f32 1.0, %v2476
    %v2478 = vmul.f32 %v2475, %v2477
    %v2479 = vadd.f32 %v2475, %v2478
    %vm2480 = vweird.f32 %v2474
    %vm2481 = vweird.f32 %v2475
    %vm2482 = vmor %vm2480, %vm2481
    %v2483 = vsel %vm2482, %v2475, %v2479
    %v2484 = vand.u32 2147483647, %v2474
    %vm2485 = vcmp.eq.f32.partialorder %v2484, 8.507059e+37
    %v2486 = vand.u32 %v2474, 2147483648
    %v2487 = vor.u32 1.1754944e-38, %v2486
    %v2488 = vsel %vm2485, %v2487, %v2483
    %v2489 = vmul.f32 1.0, %v2488
    %v2490 = vadd.f32 %v2448, %v2159
    %v2491 = vxor.u32 %v2490, 2147483648
    %v2492 = vmul.f32 %v2491, 1.442695
    %v2493 = vpow.pop %v2492
    %v2494 = vadd.f32 %v2493, 1.0
    %v2495 = vrcp.pop %v2494
    %v2496 = vmul.f32 %v2494, %v2495
    %v2497 = vsub.f32 1.0, %v2496
    %v2498 = vmul.f32 %v2495, %v2497
    %v2499 = vadd.f32 %v2495, %v2498
    %vm2500 = vweird.f32 %v2494
    %vm2501 = vweird.f32 %v2495
    %vm2502 = vmor %vm2500, %vm2501
    %v2503 = vsel %vm2502, %v2495, %v2499
    %v2504 = vand.u32 2147483647, %v2494
    %vm2505 = vcmp.eq.f32.partialorder %v2504, 8.507059e+37
    %v2506 = vand.u32 %v2494, 2147483648
    %v2507 = vor.u32 1.1754944e-38, %v2506
    %v2508 = vsel %vm2505, %v2507, %v2503
    %v2509 = vmul.f32 1.0, %v2508
    %v2510 = vmul.f32 %v2489, %v2179
    %v2511 = vadd.f32 %v2468, %v2510
    %v2512 = vtanh.pop %v2511
    %v2513 = vsub.f32 1.0, %v2509
    %v2514 = vmul.f32 %v2513, %v2512
    %v2515 = vmul.f32 %v2509, %v1913
    %v2516 = vadd.f32 %v2514, %v2515
    %v2517 = vld [vmem:[#allocation19] sm:$0xff]
    %v2518 = vld [vmem:[#allocation19 + $0x8] sm:$0xff]
    %v2519 = vld [vmem:[#allocation19 + $0x10] sm:$0xff]
    %v2520 = vld [vmem:[#allocation19 + $0x18] sm:$0xff]
    %v2521 = vld [vmem:[#allocation19 + $0x20] sm:$0xff]
    %v2522 = vld [vmem:[#allocation19 + $0x28] sm:$0xff]
    %v2523 = vld [vmem:[#allocation19 + $0x30] sm:$0xff]
    %v2524 = vld [vmem:[#allocation19 + $0x38] sm:$0xff]
    %v2525 = vld [vmem:[#allocation19 + $0x40] sm:$0xff]
    %v2526 = vld [vmem:[#allocation19 + $0x48] sm:$0xff]
    %v2527 = vld [vmem:[#allocation19 + $0x50] sm:$0xff]
    %v2528 = vld [vmem:[#allocation19 + $0x58] sm:$0xff]
    %v2529 = vld [vmem:[#allocation19 + $0x60] sm:$0xff]
    %v2530 = vld [vmem:[#allocation19 + $0x68] sm:$0xff]
    %v2531 = vld [vmem:[#allocation19 + $0x70] sm:$0xff]
    %v2532 = vld [vmem:[#allocation19 + $0x78] sm:$0xff]
    %v2533 = vld [vmem:[#allocation19 + $0x80] sm:$0xff]
    %v2534 = vld [vmem:[#allocation19 + $0x88] sm:$0xff]
    %v2535 = vld [vmem:[#allocation19 + $0x90] sm:$0xff]
    %v2536 = vld [vmem:[#allocation19 + $0x98] sm:$0xff]
    %v2537 = vld [vmem:[#allocation19 + $0xa0] sm:$0xff]
    %v2538 = vld [vmem:[#allocation19 + $0xa8] sm:$0xff]
    %v2539 = vld [vmem:[#allocation19 + $0xb0] sm:$0xff]
    %v2540 = vld [vmem:[#allocation19 + $0xb8] sm:$0xff]
    %v2541 = vld [vmem:[#allocation19 + $0xc0] sm:$0xff]
    %v2542 = vld [vmem:[#allocation19 + $0xc8] sm:$0xff]
    %v2543 = vld [vmem:[#allocation19 + $0xd0] sm:$0xff]
    %v2544 = vld [vmem:[#allocation19 + $0xd8] sm:$0xff]
    %v2545 = vld [vmem:[#allocation19 + $0xe0] sm:$0xff]
    %v2546 = vld [vmem:[#allocation19 + $0xe8] sm:$0xff]
    %v2547 = vld [vmem:[#allocation19 + $0xf0] sm:$0xff]
    %v2548 = vld [vmem:[#allocation19 + $0xf8] sm:$0xff]
    %v2549 = vld [vmem:[%s13] sm:$0x3]
    %v2551 = vperm.slane %v2549, 0
    %v2552 = vperm.slane %v2549, 1
    %2555 = vmatpush.msra.mxu0 %v2547
    %2556 = vmatpush.msra.mxu0 %v2545
    %2557 = vmatpush.msra.mxu0 %v2543
    %2558 = vmatpush.msra.mxu0 %v2541
    %2559 = vmatpush.msra.mxu0 %v2539
    %2560 = vmatpush.msra.mxu0 %v2537
    %2561 = vmatpush.msra.mxu0 %v2535
    %2562 = vmatpush.msra.mxu0 %v2533
    %2563 = vmatpush.msra.mxu0 %v2531
    %2564 = vmatpush.msra.mxu0 %v2529
    %2565 = vmatpush.msra.mxu0 %v2527
    %2566 = vmatpush.msra.mxu0 %v2525
    %2567 = vmatpush.msra.mxu0 %v2523
    %2568 = vmatpush.msra.mxu0 %v2521
    %2569 = vmatpush.msra.mxu0 %v2519
    %2570 = vmatpush.msra.mxu0 %v2517
    %2571 = vmatmul.f32.gmra.mxu0 %v2516
    %v2572 = vpop.f32.mrf.mxu0
    %v2573 = vadd.f32 %v2551, %v2572
    %2574 = vdwg.mxu0
    %2575 = vmatpush.msra.mxu0 %v2548
    %2576 = vmatpush.msra.mxu0 %v2546
    %2577 = vmatpush.msra.mxu0 %v2544
    %2578 = vmatpush.msra.mxu0 %v2542
    %2579 = vmatpush.msra.mxu0 %v2540
    %2580 = vmatpush.msra.mxu0 %v2538
    %2581 = vmatpush.msra.mxu0 %v2536
    %2582 = vmatpush.msra.mxu0 %v2534
    %2583 = vmatpush.msra.mxu0 %v2532
    %2584 = vmatpush.msra.mxu0 %v2530
    %2585 = vmatpush.msra.mxu0 %v2528
    %2586 = vmatpush.msra.mxu0 %v2526
    %2587 = vmatpush.msra.mxu0 %v2524
    %2588 = vmatpush.msra.mxu0 %v2522
    %2589 = vmatpush.msra.mxu0 %v2520
    %2590 = vmatpush.msra.mxu0 %v2518
    %2591 = vmatmul.f32.gmra.mxu0 %v2516
    %v2592 = vpop.f32.mrf.mxu0
    %v2593 = vadd.f32 %v2552, %v2592
    %2594 = vdwg.mxu0
    %v2595 = vsel %vm422, %v2573, -inf
    %v2596 = vsel %vm422, %v2593, -inf
    %v2597 = vmax.f32 %v2595, %v2596
    %2598 = vmax.xlane.f32.xlu0 %v2597
    %v2599 = vpop.xlane.xlu0 %2598
    %v2600 = vsub.f32 %v2573, %v2599
    %v2601 = vsub.f32 %v2593, %v2599
    %v2602 = vmul.f32 %v2600, 1.442695
    %v2603 = vpow.pop %v2602
    %v2604 = vmul.f32 %v2601, 1.442695
    %v2605 = vpow.pop %v2604
    %v2606 = vsel %vm422, %v2603, 0.0
    %v2607 = vsel %vm422, %v2605, 0.0
    %v2608 = vadd.f32 %v2606, %v2607
    %2609 = vadd.xlane.f32.xlu0 %v2608
    %v2610 = vpop.xlane.xlu0 %2609
    %v2611 = vlog2.pop %v2610
    %v2612 = vmul.f32 %v2611, 0.6931472
    %v2613 = vadd.f32 %v2612, %v2599
    %v2614 = vsub.f32 %v2573, %v2613
    %v2615 = vsub.f32 %v2593, %v2613
    %v2618 = vrot.slane %v2615, 7
    %v2619 = vsel %vm422, %v2614, %v2618
    %s2621 = scalar_lea.vmem [#allocation21], 3
    %2622 = vst.msk [vmem:[%s2621] ss:$8 sm:$0x3] %vm812, %v2619
    %2623 = vst.msk [vmem:[%s2621] ss:$8 sm:$0x0] %vm812, %v2619
    %2624 = vst [vmem:[#allocation24 + $0x3] sm:$0x1] %v2258
    %s2625 = sld [smem:[#allocation3 + $0x4]]
    %p2626 = scmp.gt.s32.totalorder %s2625, 0
    %s2627 = scalar_select %p2626, %s2625, 0
    %p2628 = scmp.lt.s32.totalorder %s2627, 255
    %s2629 = scalar_select %p2628, %s2627, 255
    %s2630 = scalar_lea.vmem [#allocation4], %s2629
    %v2631 = vld [vmem:[%s2630] sm:$0x1]
    %v2632 = vld [vmem:[#allocation10 + $0x80] sm:$0xff]
    %v2633 = vld [vmem:[#allocation10 + $0x88] sm:$0xff]
    %v2634 = vld [vmem:[#allocation10 + $0x90] sm:$0xff]
    %v2635 = vld [vmem:[#allocation10 + $0x98] sm:$0xff]
    %v2636 = vld [vmem:[#allocation10 + $0xa0] sm:$0xff]
    %v2637 = vld [vmem:[#allocation10 + $0xa8] sm:$0xff]
    %v2638 = vld [vmem:[#allocation10 + $0xb0] sm:$0xff]
    %v2639 = vld [vmem:[#allocation10 + $0xb8] sm:$0xff]
    %v2640 = vld [vmem:[#allocation10 + $0xc0] sm:$0xff]
    %v2641 = vld [vmem:[#allocation10 + $0xc8] sm:$0xff]
    %v2642 = vld [vmem:[#allocation10 + $0xd0] sm:$0xff]
    %v2643 = vld [vmem:[#allocation10 + $0xd8] sm:$0xff]
    %v2644 = vld [vmem:[#allocation10 + $0xe0] sm:$0xff]
    %v2645 = vld [vmem:[#allocation10 + $0xe8] sm:$0xff]
    %v2646 = vld [vmem:[#allocation10 + $0xf0] sm:$0xff]
    %v2647 = vld [vmem:[#allocation10 + $0xf8] sm:$0xff]
    %2648 = vmatpush.msra.mxu0 %v2647
    %2649 = vmatpush.msra.mxu0 %v2646
    %2650 = vmatpush.msra.mxu0 %v2645
    %2651 = vmatpush.msra.mxu0 %v2644
    %2652 = vmatpush.msra.mxu0 %v2643
    %2653 = vmatpush.msra.mxu0 %v2642
    %2654 = vmatpush.msra.mxu0 %v2641
    %2655 = vmatpush.msra.mxu0 %v2640
    %2656 = vmatpush.msra.mxu0 %v2639
    %2657 = vmatpush.msra.mxu0 %v2638
    %2658 = vmatpush.msra.mxu0 %v2637
    %2659 = vmatpush.msra.mxu0 %v2636
    %2660 = vmatpush.msra.mxu0 %v2635
    %2661 = vmatpush.msra.mxu0 %v2634
    %2662 = vmatpush.msra.mxu0 %v2633
    %2663 = vmatpush.msra.mxu0 %v2632
    %2664 = vmatmul.f32.gmra.mxu0 %v2516
    %v2665 = vpop.f32.mrf.mxu0
    %v2666 = vadd.f32 0.0, %v2665
    %2667 = vdwg.mxu0
    %v2668 = vld [vmem:[#allocation18] sm:$0xff]
    %v2669 = vld [vmem:[#allocation18 + $0x8] sm:$0xff]
    %v2670 = vld [vmem:[#allocation18 + $0x10] sm:$0xff]
    %v2671 = vld [vmem:[#allocation18 + $0x18] sm:$0xff]
    %v2672 = vld [vmem:[#allocation18 + $0x20] sm:$0xff]
    %v2673 = vld [vmem:[#allocation18 + $0x28] sm:$0xff]
    %v2674 = vld [vmem:[#allocation18 + $0x30] sm:$0xff]
    %v2675 = vld [vmem:[#allocation18 + $0x38] sm:$0xff]
    %v2676 = vld [vmem:[#allocation18 + $0x40] sm:$0xff]
    %v2677 = vld [vmem:[#allocation18 + $0x48] sm:$0xff]
    %v2678 = vld [vmem:[#allocation18 + $0x50] sm:$0xff]
    %v2679 = vld [vmem:[#allocation18 + $0x58] sm:$0xff]
    %v2680 = vld [vmem:[#allocation18 + $0x60] sm:$0xff]
    %v2681 = vld [vmem:[#allocation18 + $0x68] sm:$0xff]
    %v2682 = vld [vmem:[#allocation18 + $0x70] sm:$0xff]
    %v2683 = vld [vmem:[#allocation18 + $0x78] sm:$0xff]
    %v2684 = vld [vmem:[#allocation18 + $0x80] sm:$0xff]
    %v2685 = vld [vmem:[#allocation18 + $0x88] sm:$0xff]
    %v2686 = vld [vmem:[#allocation18 + $0x90] sm:$0xff]
    %v2687 = vld [vmem:[#allocation18 + $0x98] sm:$0xff]
    %v2688 = vld [vmem:[#allocation18 + $0xa0] sm:$0xff]
    %v2689 = vld [vmem:[#allocation18 + $0xa8] sm:$0xff]
    %v2690 = vld [vmem:[#allocation18 + $0xb0] sm:$0xff]
    %v2691 = vld [vmem:[#allocation18 + $0xb8] sm:$0xff]
    %v2692 = vld [vmem:[#allocation18 + $0xc0] sm:$0xff]
    %v2693 = vld [vmem:[#allocation18 + $0xc8] sm:$0xff]
    %v2694 = vld [vmem:[#allocation18 + $0xd0] sm:$0xff]
    %v2695 = vld [vmem:[#allocation18 + $0xd8] sm:$0xff]
    %v2696 = vld [vmem:[#allocation18 + $0xe0] sm:$0xff]
    %v2697 = vld [vmem:[#allocation18 + $0xe8] sm:$0xff]
    %v2698 = vld [vmem:[#allocation18 + $0xf0] sm:$0xff]
    %v2699 = vld [vmem:[#allocation18 + $0xf8] sm:$0xff]
    %v2700 = vld [vmem:[#allocation18 + $0x100] sm:$0xff]
    %v2701 = vld [vmem:[#allocation18 + $0x108] sm:$0xff]
    %v2702 = vld [vmem:[#allocation18 + $0x110] sm:$0xff]
    %v2703 = vld [vmem:[#allocation18 + $0x118] sm:$0xff]
    %v2704 = vld [vmem:[#allocation18 + $0x120] sm:$0xff]
    %v2705 = vld [vmem:[#allocation18 + $0x128] sm:$0xff]
    %v2706 = vld [vmem:[#allocation18 + $0x130] sm:$0xff]
    %v2707 = vld [vmem:[#allocation18 + $0x138] sm:$0xff]
    %v2708 = vld [vmem:[#allocation18 + $0x140] sm:$0xff]
    %v2709 = vld [vmem:[#allocation18 + $0x148] sm:$0xff]
    %v2710 = vld [vmem:[#allocation18 + $0x150] sm:$0xff]
    %v2711 = vld [vmem:[#allocation18 + $0x158] sm:$0xff]
    %v2712 = vld [vmem:[#allocation18 + $0x160] sm:$0xff]
    %v2713 = vld [vmem:[#allocation18 + $0x168] sm:$0xff]
    %v2714 = vld [vmem:[#allocation18 + $0x170] sm:$0xff]
    %v2715 = vld [vmem:[#allocation18 + $0x178] sm:$0xff]
    %v2716 = vld [vmem:[%s11] sm:$0x7]
    %v2718 = vperm.slane %v2716, 0
    %v2719 = vperm.slane %v2716, 1
    %v2720 = vperm.slane %v2716, 2
    %2724 = vmatpush.msra.mxu0 %v2713
    %2725 = vmatpush.msra.mxu0 %v2710
    %2726 = vmatpush.msra.mxu0 %v2707
    %2727 = vmatpush.msra.mxu0 %v2704
    %2728 = vmatpush.msra.mxu0 %v2701
    %2729 = vmatpush.msra.mxu0 %v2698
    %2730 = vmatpush.msra.mxu0 %v2695
    %2731 = vmatpush.msra.mxu0 %v2692
    %2732 = vmatpush.msra.mxu0 %v2689
    %2733 = vmatpush.msra.mxu0 %v2686
    %2734 = vmatpush.msra.mxu0 %v2683
    %2735 = vmatpush.msra.mxu0 %v2680
    %2736 = vmatpush.msra.mxu0 %v2677
    %2737 = vmatpush.msra.mxu0 %v2674
    %2738 = vmatpush.msra.mxu0 %v2671
    %2739 = vmatpush.msra.mxu0 %v2668
    %2740 = vmatmul.f32.gmra.mxu0 %v2516
    %v2741 = vpop.f32.mrf.mxu0
    %v2742 = vadd.f32 %v2718, %v2741
    %2743 = vdwg.mxu0
    %2744 = vmatpush.msra.mxu0 %v2714
    %2745 = vmatpush.msra.mxu0 %v2711
    %2746 = vmatpush.msra.mxu0 %v2708
    %2747 = vmatpush.msra.mxu0 %v2705
    %2748 = vmatpush.msra.mxu0 %v2702
    %2749 = vmatpush.msra.mxu0 %v2699
    %2750 = vmatpush.msra.mxu0 %v2696
    %2751 = vmatpush.msra.mxu0 %v2693
    %2752 = vmatpush.msra.mxu0 %v2690
    %2753 = vmatpush.msra.mxu0 %v2687
    %2754 = vmatpush.msra.mxu0 %v2684
    %2755 = vmatpush.msra.mxu0 %v2681
    %2756 = vmatpush.msra.mxu0 %v2678
    %2757 = vmatpush.msra.mxu0 %v2675
    %2758 = vmatpush.msra.mxu0 %v2672
    %2759 = vmatpush.msra.mxu0 %v2669
    %2760 = vmatmul.f32.gmra.mxu0 %v2516
    %v2761 = vpop.f32.mrf.mxu0
    %v2762 = vadd.f32 %v2719, %v2761
    %2763 = vdwg.mxu0
    %2764 = vmatpush.msra.mxu0 %v2715
    %2765 = vmatpush.msra.mxu0 %v2712
    %2766 = vmatpush.msra.mxu0 %v2709
    %2767 = vmatpush.msra.mxu0 %v2706
    %2768 = vmatpush.msra.mxu0 %v2703
    %2769 = vmatpush.msra.mxu0 %v2700
    %2770 = vmatpush.msra.mxu0 %v2697
    %2771 = vmatpush.msra.mxu0 %v2694
    %2772 = vmatpush.msra.mxu0 %v2691
    %2773 = vmatpush.msra.mxu0 %v2688
    %2774 = vmatpush.msra.mxu0 %v2685
    %2775 = vmatpush.msra.mxu0 %v2682
    %2776 = vmatpush.msra.mxu0 %v2679
    %2777 = vmatpush.msra.mxu0 %v2676
    %2778 = vmatpush.msra.mxu0 %v2673
    %2779 = vmatpush.msra.mxu0 %v2670
    %2780 = vmatmul.f32.gmra.mxu0 %v2516
    %v2781 = vpop.f32.mrf.mxu0
    %v2782 = vadd.f32 %v2720, %v2781
    %2783 = vdwg.mxu0
    %v2784 = vld [vmem:[#allocation10] sm:$0xff]
    %v2785 = vld [vmem:[#allocation10 + $0x8] sm:$0xff]
    %v2786 = vld [vmem:[#allocation10 + $0x10] sm:$0xff]
    %v2787 = vld [vmem:[#allocation10 + $0x18] sm:$0xff]
    %v2788 = vld [vmem:[#allocation10 + $0x20] sm:$0xff]
    %v2789 = vld [vmem:[#allocation10 + $0x28] sm:$0xff]
    %v2790 = vld [vmem:[#allocation10 + $0x30] sm:$0xff]
    %v2791 = vld [vmem:[#allocation10 + $0x38] sm:$0xff]
    %v2792 = vld [vmem:[#allocation10 + $0x40] sm:$0xff]
    %v2793 = vld [vmem:[#allocation10 + $0x48] sm:$0xff]
    %v2794 = vld [vmem:[#allocation10 + $0x50] sm:$0xff]
    %v2795 = vld [vmem:[#allocation10 + $0x58] sm:$0xff]
    %v2796 = vld [vmem:[#allocation10 + $0x60] sm:$0xff]
    %v2797 = vld [vmem:[#allocation10 + $0x68] sm:$0xff]
    %v2798 = vld [vmem:[#allocation10 + $0x70] sm:$0xff]
    %v2799 = vld [vmem:[#allocation10 + $0x78] sm:$0xff]
    %v2800 = vld [vmem:[#allocation13] sm:$0xff]
    %v2801 = vld [vmem:[#allocation13 + $0x8] sm:$0xff]
    %v2802 = vld [vmem:[#allocation13 + $0x10] sm:$0xff]
    %v2803 = vld [vmem:[#allocation13 + $0x18] sm:$0xff]
    %v2804 = vld [vmem:[#allocation13 + $0x20] sm:$0xff]
    %v2805 = vld [vmem:[#allocation13 + $0x28] sm:$0xff]
    %v2806 = vld [vmem:[#allocation13 + $0x30] sm:$0xff]
    %v2807 = vld [vmem:[#allocation13 + $0x38] sm:$0xff]
    %v2808 = vld [vmem:[#allocation13 + $0x40] sm:$0xff]
    %v2809 = vld [vmem:[#allocation13 + $0x48] sm:$0xff]
    %v2810 = vld [vmem:[#allocation13 + $0x50] sm:$0xff]
    %v2811 = vld [vmem:[#allocation13 + $0x58] sm:$0xff]
    %v2812 = vld [vmem:[#allocation13 + $0x60] sm:$0xff]
    %v2813 = vld [vmem:[#allocation13 + $0x68] sm:$0xff]
    %v2814 = vld [vmem:[#allocation13 + $0x70] sm:$0xff]
    %v2815 = vld [vmem:[#allocation13 + $0x78] sm:$0xff]
    %2816 = vmatpush.msra.mxu0 %v2799
    %2817 = vmatpush.msra.mxu0 %v2798
    %2818 = vmatpush.msra.mxu0 %v2797
    %2819 = vmatpush.msra.mxu0 %v2796
    %2820 = vmatpush.msra.mxu0 %v2795
    %2821 = vmatpush.msra.mxu0 %v2794
    %2822 = vmatpush.msra.mxu0 %v2793
    %2823 = vmatpush.msra.mxu0 %v2792
    %2824 = vmatpush.msra.mxu0 %v2791
    %2825 = vmatpush.msra.mxu0 %v2790
    %2826 = vmatpush.msra.mxu0 %v2789
    %2827 = vmatpush.msra.mxu0 %v2788
    %2828 = vmatpush.msra.mxu0 %v2787
    %2829 = vmatpush.msra.mxu0 %v2786
    %2830 = vmatpush.msra.mxu0 %v2785
    %2831 = vmatpush.msra.mxu0 %v2784
    %2832 = vmatmul.f32.gmra.mxu0 %v2631
    %v2833 = vpop.f32.mrf.mxu0
    %v2834 = vadd.f32 %v2666, %v2833
    %2835 = vdwg.mxu0
    %v2836 = vld [vmem:[#allocation12] sm:$0x1]
    %v2837 = vadd.f32 %v2834, %v2836
    %v2838 = vsel %vm422, %v2837, -inf
    %2839 = vmax.xlane.f32.xlu0 %v2838
    %v2840 = vpop.xlane.xlu0 %2839
    %v2841 = vsub.f32 %v2837, %v2840
    %v2842 = vmul.f32 %v2841, 1.442695
    %v2843 = vpow.pop %v2842
    %v2844 = vsel %vm422, %v2843, 0.0
    %2845 = vadd.xlane.f32.xlu0 %v2844
    %v2846 = vpop.xlane.xlu0 %2845
    %v2847 = vrcp.pop %v2846
    %v2848 = vmul.f32 %v2846, %v2847
    %v2849 = vsub.f32 1.0, %v2848
    %v2850 = vmul.f32 %v2847, %v2849
    %v2851 = vadd.f32 %v2847, %v2850
    %vm2852 = vweird.f32 %v2846
    %vm2853 = vweird.f32 %v2847
    %vm2854 = vmor %vm2852, %vm2853
    %v2855 = vsel %vm2854, %v2847, %v2851
    %v2856 = vand.u32 2147483647, %v2846
    %vm2857 = vcmp.eq.f32.partialorder %v2856, 8.507059e+37
    %v2858 = vand.u32 %v2846, 2147483648
    %v2859 = vor.u32 1.1754944e-38, %v2858
    %v2860 = vsel %vm2857, %v2859, %v2855
    %v2861 = vmul.f32 %v2843, %v2860
    %v2862 = vld [vmem:[#allocation9] sm:$0xff]
    %v2863 = vld [vmem:[#allocation9 + $0x8] sm:$0xff]
    %v2864 = vld [vmem:[#allocation9 + $0x10] sm:$0xff]
    %v2865 = vld [vmem:[#allocation9 + $0x18] sm:$0xff]
    %v2866 = vld [vmem:[#allocation9 + $0x20] sm:$0xff]
    %v2867 = vld [vmem:[#allocation9 + $0x28] sm:$0xff]
    %v2868 = vld [vmem:[#allocation9 + $0x30] sm:$0xff]
    %v2869 = vld [vmem:[#allocation9 + $0x38] sm:$0xff]
    %v2870 = vld [vmem:[#allocation9 + $0x40] sm:$0xff]
    %v2871 = vld [vmem:[#allocation9 + $0x48] sm:$0xff]
    %v2872 = vld [vmem:[#allocation9 + $0x50] sm:$0xff]
    %v2873 = vld [vmem:[#allocation9 + $0x58] sm:$0xff]
    %v2874 = vld [vmem:[#allocation9 + $0x60] sm:$0xff]
    %v2875 = vld [vmem:[#allocation9 + $0x68] sm:$0xff]
    %v2876 = vld [vmem:[#allocation9 + $0x70] sm:$0xff]
    %v2877 = vld [vmem:[#allocation9 + $0x78] sm:$0xff]
    %2878 = vmatpush.msra.mxu0 %v2877
    %2879 = vmatpush.msra.mxu0 %v2876
    %2880 = vmatpush.msra.mxu0 %v2875
    %2881 = vmatpush.msra.mxu0 %v2874
    %2882 = vmatpush.msra.mxu0 %v2873
    %2883 = vmatpush.msra.mxu0 %v2872
    %2884 = vmatpush.msra.mxu0 %v2871
    %2885 = vmatpush.msra.mxu0 %v2870
    %2886 = vmatpush.msra.mxu0 %v2869
    %2887 = vmatpush.msra.mxu0 %v2868
    %2888 = vmatpush.msra.mxu0 %v2867
    %2889 = vmatpush.msra.mxu0 %v2866
    %2890 = vmatpush.msra.mxu0 %v2865
    %2891 = vmatpush.msra.mxu0 %v2864
    %2892 = vmatpush.msra.mxu0 %v2863
    %2893 = vmatpush.msra.mxu0 %v2862
    %2894 = vmatmul.f32.gmra.mxu0 %v2861
    %v2895 = vpop.f32.mrf.mxu0
    %v2896 = vadd.f32 0.0, %v2895
    %2897 = vdwg.mxu0
    %v2898 = vld [vmem:[#allocation13 + $0x80] sm:$0xff]
    %v2899 = vld [vmem:[#allocation13 + $0x88] sm:$0xff]
    %v2900 = vld [vmem:[#allocation13 + $0x90] sm:$0xff]
    %v2901 = vld [vmem:[#allocation13 + $0x98] sm:$0xff]
    %v2902 = vld [vmem:[#allocation13 + $0xa0] sm:$0xff]
    %v2903 = vld [vmem:[#allocation13 + $0xa8] sm:$0xff]
    %v2904 = vld [vmem:[#allocation13 + $0xb0] sm:$0xff]
    %v2905 = vld [vmem:[#allocation13 + $0xb8] sm:$0xff]
    %v2906 = vld [vmem:[#allocation13 + $0xc0] sm:$0xff]
    %v2907 = vld [vmem:[#allocation13 + $0xc8] sm:$0xff]
    %v2908 = vld [vmem:[#allocation13 + $0xd0] sm:$0xff]
    %v2909 = vld [vmem:[#allocation13 + $0xd8] sm:$0xff]
    %v2910 = vld [vmem:[#allocation13 + $0xe0] sm:$0xff]
    %v2911 = vld [vmem:[#allocation13 + $0xe8] sm:$0xff]
    %v2912 = vld [vmem:[#allocation13 + $0xf0] sm:$0xff]
    %v2913 = vld [vmem:[#allocation13 + $0xf8] sm:$0xff]
    %2914 = vmatpush.msra.mxu0 %v2913
    %2915 = vmatpush.msra.mxu0 %v2912
    %2916 = vmatpush.msra.mxu0 %v2911
    %2917 = vmatpush.msra.mxu0 %v2910
    %2918 = vmatpush.msra.mxu0 %v2909
    %2919 = vmatpush.msra.mxu0 %v2908
    %2920 = vmatpush.msra.mxu0 %v2907
    %2921 = vmatpush.msra.mxu0 %v2906
    %2922 = vmatpush.msra.mxu0 %v2905
    %2923 = vmatpush.msra.mxu0 %v2904
    %2924 = vmatpush.msra.mxu0 %v2903
    %2925 = vmatpush.msra.mxu0 %v2902
    %2926 = vmatpush.msra.mxu0 %v2901
    %2927 = vmatpush.msra.mxu0 %v2900
    %2928 = vmatpush.msra.mxu0 %v2899
    %2929 = vmatpush.msra.mxu0 %v2898
    %2930 = vmatmul.f32.gmra.mxu0 %v2896
    %v2931 = vpop.f32.mrf.mxu0
    %v2932 = vadd.f32 0.0, %v2931
    %2933 = vdwg.mxu0
    %2934 = vmatpush.msra.mxu0 %v2815
    %2935 = vmatpush.msra.mxu0 %v2814
    %2936 = vmatpush.msra.mxu0 %v2813
    %2937 = vmatpush.msra.mxu0 %v2812
    %2938 = vmatpush.msra.mxu0 %v2811
    %2939 = vmatpush.msra.mxu0 %v2810
    %2940 = vmatpush.msra.mxu0 %v2809
    %2941 = vmatpush.msra.mxu0 %v2808
    %2942 = vmatpush.msra.mxu0 %v2807
    %2943 = vmatpush.msra.mxu0 %v2806
    %2944 = vmatpush.msra.mxu0 %v2805
    %2945 = vmatpush.msra.mxu0 %v2804
    %2946 = vmatpush.msra.mxu0 %v2803
    %2947 = vmatpush.msra.mxu0 %v2802
    %2948 = vmatpush.msra.mxu0 %v2801
    %2949 = vmatpush.msra.mxu0 %v2800
    %2950 = vmatmul.f32.gmra.mxu0 %v2631
    %v2951 = vpop.f32.mrf.mxu0
    %v2952 = vadd.f32 %v2932, %v2951
    %2953 = vdwg.mxu0
    %v2954 = vld [vmem:[#allocation15] sm:$0x1]
    %v2955 = vadd.f32 %v2952, %v2954
    %v2956 = vmax.f32 %v2955, 0.0
    %v2957 = vld [vmem:[#allocation16] sm:$0xff]
    %v2958 = vld [vmem:[#allocation16 + $0x8] sm:$0xff]
    %v2959 = vld [vmem:[#allocation16 + $0x10] sm:$0xff]
    %v2960 = vld [vmem:[#allocation16 + $0x18] sm:$0xff]
    %v2961 = vld [vmem:[#allocation16 + $0x20] sm:$0xff]
    %v2962 = vld [vmem:[#allocation16 + $0x28] sm:$0xff]
    %v2963 = vld [vmem:[#allocation16 + $0x30] sm:$0xff]
    %v2964 = vld [vmem:[#allocation16 + $0x38] sm:$0xff]
    %v2965 = vld [vmem:[#allocation16 + $0x40] sm:$0xff]
    %v2966 = vld [vmem:[#allocation16 + $0x48] sm:$0xff]
    %v2967 = vld [vmem:[#allocation16 + $0x50] sm:$0xff]
    %v2968 = vld [vmem:[#allocation16 + $0x58] sm:$0xff]
    %v2969 = vld [vmem:[#allocation16 + $0x60] sm:$0xff]
    %v2970 = vld [vmem:[#allocation16 + $0x68] sm:$0xff]
    %v2971 = vld [vmem:[#allocation16 + $0x70] sm:$0xff]
    %v2972 = vld [vmem:[#allocation16 + $0x78] sm:$0xff]
    %v2973 = vld [vmem:[#allocation16 + $0x80] sm:$0xff]
    %v2974 = vld [vmem:[#allocation16 + $0x88] sm:$0xff]
    %v2975 = vld [vmem:[#allocation16 + $0x90] sm:$0xff]
    %v2976 = vld [vmem:[#allocation16 + $0x98] sm:$0xff]
    %v2977 = vld [vmem:[#allocation16 + $0xa0] sm:$0xff]
    %v2978 = vld [vmem:[#allocation16 + $0xa8] sm:$0xff]
    %v2979 = vld [vmem:[#allocation16 + $0xb0] sm:$0xff]
    %v2980 = vld [vmem:[#allocation16 + $0xb8] sm:$0xff]
    %v2981 = vld [vmem:[#allocation16 + $0xc0] sm:$0xff]
    %v2982 = vld [vmem:[#allocation16 + $0xc8] sm:$0xff]
    %v2983 = vld [vmem:[#allocation16 + $0xd0] sm:$0xff]
    %v2984 = vld [vmem:[#allocation16 + $0xd8] sm:$0xff]
    %v2985 = vld [vmem:[#allocation16 + $0xe0] sm:$0xff]
    %v2986 = vld [vmem:[#allocation16 + $0xe8] sm:$0xff]
    %v2987 = vld [vmem:[#allocation16 + $0xf0] sm:$0xff]
    %v2988 = vld [vmem:[#allocation16 + $0xf8] sm:$0xff]
    %v2989 = vld [vmem:[#allocation16 + $0x100] sm:$0xff]
    %v2990 = vld [vmem:[#allocation16 + $0x108] sm:$0xff]
    %v2991 = vld [vmem:[#allocation16 + $0x110] sm:$0xff]
    %v2992 = vld [vmem:[#allocation16 + $0x118] sm:$0xff]
    %v2993 = vld [vmem:[#allocation16 + $0x120] sm:$0xff]
    %v2994 = vld [vmem:[#allocation16 + $0x128] sm:$0xff]
    %v2995 = vld [vmem:[#allocation16 + $0x130] sm:$0xff]
    %v2996 = vld [vmem:[#allocation16 + $0x138] sm:$0xff]
    %v2997 = vld [vmem:[#allocation16 + $0x140] sm:$0xff]
    %v2998 = vld [vmem:[#allocation16 + $0x148] sm:$0xff]
    %v2999 = vld [vmem:[#allocation16 + $0x150] sm:$0xff]
    %v3000 = vld [vmem:[#allocation16 + $0x158] sm:$0xff]
    %v3001 = vld [vmem:[#allocation16 + $0x160] sm:$0xff]
    %v3002 = vld [vmem:[#allocation16 + $0x168] sm:$0xff]
    %v3003 = vld [vmem:[#allocation16 + $0x170] sm:$0xff]
    %v3004 = vld [vmem:[#allocation16 + $0x178] sm:$0xff]
    %v3005 = vld [vmem:[%s9] sm:$0x7]
    %v3007 = vperm.slane %v3005, 0
    %v3008 = vperm.slane %v3005, 1
    %v3009 = vperm.slane %v3005, 2
    %3013 = vmatpush.msra.mxu0 %v3002
    %3014 = vmatpush.msra.mxu0 %v2999
    %3015 = vmatpush.msra.mxu0 %v2996
    %3016 = vmatpush.msra.mxu0 %v2993
    %3017 = vmatpush.msra.mxu0 %v2990
    %3018 = vmatpush.msra.mxu0 %v2987
    %3019 = vmatpush.msra.mxu0 %v2984
    %3020 = vmatpush.msra.mxu0 %v2981
    %3021 = vmatpush.msra.mxu0 %v2978
    %3022 = vmatpush.msra.mxu0 %v2975
    %3023 = vmatpush.msra.mxu0 %v2972
    %3024 = vmatpush.msra.mxu0 %v2969
    %3025 = vmatpush.msra.mxu0 %v2966
    %3026 = vmatpush.msra.mxu0 %v2963
    %3027 = vmatpush.msra.mxu0 %v2960
    %3028 = vmatpush.msra.mxu0 %v2957
    %3029 = vmatmul.f32.gmra.mxu0 %v2956
    %v3030 = vpop.f32.mrf.mxu0
    %v3031 = vadd.f32 %v3007, %v3030
    %3032 = vdwg.mxu0
    %3033 = vmatpush.msra.mxu0 %v3003
    %3034 = vmatpush.msra.mxu0 %v3000
    %3035 = vmatpush.msra.mxu0 %v2997
    %3036 = vmatpush.msra.mxu0 %v2994
    %3037 = vmatpush.msra.mxu0 %v2991
    %3038 = vmatpush.msra.mxu0 %v2988
    %3039 = vmatpush.msra.mxu0 %v2985
    %3040 = vmatpush.msra.mxu0 %v2982
    %3041 = vmatpush.msra.mxu0 %v2979
    %3042 = vmatpush.msra.mxu0 %v2976
    %3043 = vmatpush.msra.mxu0 %v2973
    %3044 = vmatpush.msra.mxu0 %v2970
    %3045 = vmatpush.msra.mxu0 %v2967
    %3046 = vmatpush.msra.mxu0 %v2964
    %3047 = vmatpush.msra.mxu0 %v2961
    %3048 = vmatpush.msra.mxu0 %v2958
    %3049 = vmatmul.f32.gmra.mxu0 %v2956
    %v3050 = vpop.f32.mrf.mxu0
    %v3051 = vadd.f32 %v3008, %v3050
    %3052 = vdwg.mxu0
    %3053 = vmatpush.msra.mxu0 %v3004
    %3054 = vmatpush.msra.mxu0 %v3001
    %3055 = vmatpush.msra.mxu0 %v2998
    %3056 = vmatpush.msra.mxu0 %v2995
    %3057 = vmatpush.msra.mxu0 %v2992
    %3058 = vmatpush.msra.mxu0 %v2989
    %3059 = vmatpush.msra.mxu0 %v2986
    %3060 = vmatpush.msra.mxu0 %v2983
    %3061 = vmatpush.msra.mxu0 %v2980
    %3062 = vmatpush.msra.mxu0 %v2977
    %3063 = vmatpush.msra.mxu0 %v2974
    %3064 = vmatpush.msra.mxu0 %v2971
    %3065 = vmatpush.msra.mxu0 %v2968
    %3066 = vmatpush.msra.mxu0 %v2965
    %3067 = vmatpush.msra.mxu0 %v2962
    %3068 = vmatpush.msra.mxu0 %v2959
    %3069 = vmatmul.f32.gmra.mxu0 %v2956
    %v3070 = vpop.f32.mrf.mxu0
    %v3071 = vadd.f32 %v3009, %v3070
    %3072 = vdwg.mxu0
    %v3073 = vadd.f32 %v3031, %v2742
    %v3074 = vxor.u32 %v3073, 2147483648
    %v3075 = vmul.f32 %v3074, 1.442695
    %v3076 = vpow.pop %v3075
    %v3077 = vadd.f32 %v3076, 1.0
    %v3078 = vrcp.pop %v3077
    %v3079 = vmul.f32 %v3077, %v3078
    %v3080 = vsub.f32 1.0, %v3079
    %v3081 = vmul.f32 %v3078, %v3080
    %v3082 = vadd.f32 %v3078, %v3081
    %vm3083 = vweird.f32 %v3077
    %vm3084 = vweird.f32 %v3078
    %vm3085 = vmor %vm3083, %vm3084
    %v3086 = vsel %vm3085, %v3078, %v3082
    %v3087 = vand.u32 2147483647, %v3077
    %vm3088 = vcmp.eq.f32.partialorder %v3087, 8.507059e+37
    %v3089 = vand.u32 %v3077, 2147483648
    %v3090 = vor.u32 1.1754944e-38, %v3089
    %v3091 = vsel %vm3088, %v3090, %v3086
    %v3092 = vmul.f32 1.0, %v3091
    %v3093 = vadd.f32 %v3051, %v2762
    %v3094 = vxor.u32 %v3093, 2147483648
    %v3095 = vmul.f32 %v3094, 1.442695
    %v3096 = vpow.pop %v3095
    %v3097 = vadd.f32 %v3096, 1.0
    %v3098 = vrcp.pop %v3097
    %v3099 = vmul.f32 %v3097, %v3098
    %v3100 = vsub.f32 1.0, %v3099
    %v3101 = vmul.f32 %v3098, %v3100
    %v3102 = vadd.f32 %v3098, %v3101
    %vm3103 = vweird.f32 %v3097
    %vm3104 = vweird.f32 %v3098
    %vm3105 = vmor %vm3103, %vm3104
    %v3106 = vsel %vm3105, %v3098, %v3102
    %v3107 = vand.u32 2147483647, %v3097
    %vm3108 = vcmp.eq.f32.partialorder %v3107, 8.507059e+37
    %v3109 = vand.u32 %v3097, 2147483648
    %v3110 = vor.u32 1.1754944e-38, %v3109
    %v3111 = vsel %vm3108, %v3110, %v3106
    %v3112 = vmul.f32 1.0, %v3111
    %v3113 = vmul.f32 %v3092, %v2782
    %v3114 = vadd.f32 %v3071, %v3113
    %v3115 = vtanh.pop %v3114
    %v3116 = vsub.f32 1.0, %v3112
    %v3117 = vmul.f32 %v3116, %v3115
    %v3118 = vmul.f32 %v3112, %v2516
    %v3119 = vadd.f32 %v3117, %v3118
    %v3120 = vld [vmem:[#allocation19] sm:$0xff]
    %v3121 = vld [vmem:[#allocation19 + $0x8] sm:$0xff]
    %v3122 = vld [vmem:[#allocation19 + $0x10] sm:$0xff]
    %v3123 = vld [vmem:[#allocation19 + $0x18] sm:$0xff]
    %v3124 = vld [vmem:[#allocation19 + $0x20] sm:$0xff]
    %v3125 = vld [vmem:[#allocation19 + $0x28] sm:$0xff]
    %v3126 = vld [vmem:[#allocation19 + $0x30] sm:$0xff]
    %v3127 = vld [vmem:[#allocation19 + $0x38] sm:$0xff]
    %v3128 = vld [vmem:[#allocation19 + $0x40] sm:$0xff]
    %v3129 = vld [vmem:[#allocation19 + $0x48] sm:$0xff]
    %v3130 = vld [vmem:[#allocation19 + $0x50] sm:$0xff]
    %v3131 = vld [vmem:[#allocation19 + $0x58] sm:$0xff]
    %v3132 = vld [vmem:[#allocation19 + $0x60] sm:$0xff]
    %v3133 = vld [vmem:[#allocation19 + $0x68] sm:$0xff]
    %v3134 = vld [vmem:[#allocation19 + $0x70] sm:$0xff]
    %v3135 = vld [vmem:[#allocation19 + $0x78] sm:$0xff]
    %v3136 = vld [vmem:[#allocation19 + $0x80] sm:$0xff]
    %v3137 = vld [vmem:[#allocation19 + $0x88] sm:$0xff]
    %v3138 = vld [vmem:[#allocation19 + $0x90] sm:$0xff]
    %v3139 = vld [vmem:[#allocation19 + $0x98] sm:$0xff]
    %v3140 = vld [vmem:[#allocation19 + $0xa0] sm:$0xff]
    %v3141 = vld [vmem:[#allocation19 + $0xa8] sm:$0xff]
    %v3142 = vld [vmem:[#allocation19 + $0xb0] sm:$0xff]
    %v3143 = vld [vmem:[#allocation19 + $0xb8] sm:$0xff]
    %v3144 = vld [vmem:[#allocation19 + $0xc0] sm:$0xff]
    %v3145 = vld [vmem:[#allocation19 + $0xc8] sm:$0xff]
    %v3146 = vld [vmem:[#allocation19 + $0xd0] sm:$0xff]
    %v3147 = vld [vmem:[#allocation19 + $0xd8] sm:$0xff]
    %v3148 = vld [vmem:[#allocation19 + $0xe0] sm:$0xff]
    %v3149 = vld [vmem:[#allocation19 + $0xe8] sm:$0xff]
    %v3150 = vld [vmem:[#allocation19 + $0xf0] sm:$0xff]
    %v3151 = vld [vmem:[#allocation19 + $0xf8] sm:$0xff]
    %v3152 = vld [vmem:[%s13] sm:$0x3]
    %v3154 = vperm.slane %v3152, 0
    %v3155 = vperm.slane %v3152, 1
    %3158 = vmatpush.msra.mxu0 %v3150
    %3159 = vmatpush.msra.mxu0 %v3148
    %3160 = vmatpush.msra.mxu0 %v3146
    %3161 = vmatpush.msra.mxu0 %v3144
    %3162 = vmatpush.msra.mxu0 %v3142
    %3163 = vmatpush.msra.mxu0 %v3140
    %3164 = vmatpush.msra.mxu0 %v3138
    %3165 = vmatpush.msra.mxu0 %v3136
    %3166 = vmatpush.msra.mxu0 %v3134
    %3167 = vmatpush.msra.mxu0 %v3132
    %3168 = vmatpush.msra.mxu0 %v3130
    %3169 = vmatpush.msra.mxu0 %v3128
    %3170 = vmatpush.msra.mxu0 %v3126
    %3171 = vmatpush.msra.mxu0 %v3124
    %3172 = vmatpush.msra.mxu0 %v3122
    %3173 = vmatpush.msra.mxu0 %v3120
    %3174 = vmatmul.f32.gmra.mxu0 %v3119
    %v3175 = vpop.f32.mrf.mxu0
    %v3176 = vadd.f32 %v3154, %v3175
    %3177 = vdwg.mxu0
    %3178 = vmatpush.msra.mxu0 %v3151
    %3179 = vmatpush.msra.mxu0 %v3149
    %3180 = vmatpush.msra.mxu0 %v3147
    %3181 = vmatpush.msra.mxu0 %v3145
    %3182 = vmatpush.msra.mxu0 %v3143
    %3183 = vmatpush.msra.mxu0 %v3141
    %3184 = vmatpush.msra.mxu0 %v3139
    %3185 = vmatpush.msra.mxu0 %v3137
    %3186 = vmatpush.msra.mxu0 %v3135
    %3187 = vmatpush.msra.mxu0 %v3133
    %3188 = vmatpush.msra.mxu0 %v3131
    %3189 = vmatpush.msra.mxu0 %v3129
    %3190 = vmatpush.msra.mxu0 %v3127
    %3191 = vmatpush.msra.mxu0 %v3125
    %3192 = vmatpush.msra.mxu0 %v3123
    %3193 = vmatpush.msra.mxu0 %v3121
    %3194 = vmatmul.f32.gmra.mxu0 %v3119
    %v3195 = vpop.f32.mrf.mxu0
    %v3196 = vadd.f32 %v3155, %v3195
    %3197 = vdwg.mxu0
    %v3198 = vsel %vm422, %v3176, -inf
    %v3199 = vsel %vm422, %v3196, -inf
    %v3200 = vmax.f32 %v3198, %v3199
    %3201 = vmax.xlane.f32.xlu0 %v3200
    %v3202 = vpop.xlane.xlu0 %3201
    %v3203 = vsub.f32 %v3176, %v3202
    %v3204 = vsub.f32 %v3196, %v3202
    %v3205 = vmul.f32 %v3203, 1.442695
    %v3206 = vpow.pop %v3205
    %v3207 = vmul.f32 %v3204, 1.442695
    %v3208 = vpow.pop %v3207
    %v3209 = vsel %vm422, %v3206, 0.0
    %v3210 = vsel %vm422, %v3208, 0.0
    %v3211 = vadd.f32 %v3209, %v3210
    %3212 = vadd.xlane.f32.xlu0 %v3211
    %v3213 = vpop.xlane.xlu0 %3212
    %v3214 = vlog2.pop %v3213
    %v3215 = vmul.f32 %v3214, 0.6931472
    %v3216 = vadd.f32 %v3215, %v3202
    %v3217 = vsub.f32 %v3176, %v3216
    %v3218 = vsub.f32 %v3196, %v3216
    %v3221 = vrot.slane %v3218, 7
    %v3222 = vsel %vm422, %v3217, %v3221
    %s3224 = scalar_lea.vmem [#allocation21], 4
    %3225 = vst.msk [vmem:[%s3224] ss:$8 sm:$0x3] %vm812, %v3222
    %3226 = vst.msk [vmem:[%s3224] ss:$8 sm:$0x0] %vm812, %v3222
    %3227 = vst [vmem:[#allocation24 + $0x4] sm:$0x1] %v2861
    %s3228 = sld [smem:[#allocation3 + $0x5]]
    %p3229 = scmp.gt.s32.totalorder %s3228, 0
    %s3230 = scalar_select %p3229, %s3228, 0
    %p3231 = scmp.lt.s32.totalorder %s3230, 255
    %s3232 = scalar_select %p3231, %s3230, 255
    %s3233 = scalar_lea.vmem [#allocation4], %s3232
    %v3234 = vld [vmem:[%s3233] sm:$0x1]
    %v3235 = vld [vmem:[#allocation10 + $0x80] sm:$0xff]
    %v3236 = vld [vmem:[#allocation10 + $0x88] sm:$0xff]
    %v3237 = vld [vmem:[#allocation10 + $0x90] sm:$0xff]
    %v3238 = vld [vmem:[#allocation10 + $0x98] sm:$0xff]
    %v3239 = vld [vmem:[#allocation10 + $0xa0] sm:$0xff]
    %v3240 = vld [vmem:[#allocation10 + $0xa8] sm:$0xff]
    %v3241 = vld [vmem:[#allocation10 + $0xb0] sm:$0xff]
    %v3242 = vld [vmem:[#allocation10 + $0xb8] sm:$0xff]
    %v3243 = vld [vmem:[#allocation10 + $0xc0] sm:$0xff]
    %v3244 = vld [vmem:[#allocation10 + $0xc8] sm:$0xff]
    %v3245 = vld [vmem:[#allocation10 + $0xd0] sm:$0xff]
    %v3246 = vld [vmem:[#allocation10 + $0xd8] sm:$0xff]
    %v3247 = vld [vmem:[#allocation10 + $0xe0] sm:$0xff]
    %v3248 = vld [vmem:[#allocation10 + $0xe8] sm:$0xff]
    %v3249 = vld [vmem:[#allocation10 + $0xf0] sm:$0xff]
    %v3250 = vld [vmem:[#allocation10 + $0xf8] sm:$0xff]
    %3251 = vmatpush.msra.mxu0 %v3250
    %3252 = vmatpush.msra.mxu0 %v3249
    %3253 = vmatpush.msra.mxu0 %v3248
    %3254 = vmatpush.msra.mxu0 %v3247
    %3255 = vmatpush.msra.mxu0 %v3246
    %3256 = vmatpush.msra.mxu0 %v3245
    %3257 = vmatpush.msra.mxu0 %v3244
    %3258 = vmatpush.msra.mxu0 %v3243
    %3259 = vmatpush.msra.mxu0 %v3242
    %3260 = vmatpush.msra.mxu0 %v3241
    %3261 = vmatpush.msra.mxu0 %v3240
    %3262 = vmatpush.msra.mxu0 %v3239
    %3263 = vmatpush.msra.mxu0 %v3238
    %3264 = vmatpush.msra.mxu0 %v3237
    %3265 = vmatpush.msra.mxu0 %v3236
    %3266 = vmatpush.msra.mxu0 %v3235
    %3267 = vmatmul.f32.gmra.mxu0 %v3119
    %v3268 = vpop.f32.mrf.mxu0
    %v3269 = vadd.f32 0.0, %v3268
    %3270 = vdwg.mxu0
    %v3271 = vld [vmem:[#allocation18] sm:$0xff]
    %v3272 = vld [vmem:[#allocation18 + $0x8] sm:$0xff]
    %v3273 = vld [vmem:[#allocation18 + $0x10] sm:$0xff]
    %v3274 = vld [vmem:[#allocation18 + $0x18] sm:$0xff]
    %v3275 = vld [vmem:[#allocation18 + $0x20] sm:$0xff]
    %v3276 = vld [vmem:[#allocation18 + $0x28] sm:$0xff]
    %v3277 = vld [vmem:[#allocation18 + $0x30] sm:$0xff]
    %v3278 = vld [vmem:[#allocation18 + $0x38] sm:$0xff]
    %v3279 = vld [vmem:[#allocation18 + $0x40] sm:$0xff]
    %v3280 = vld [vmem:[#allocation18 + $0x48] sm:$0xff]
    %v3281 = vld [vmem:[#allocation18 + $0x50] sm:$0xff]
    %v3282 = vld [vmem:[#allocation18 + $0x58] sm:$0xff]
    %v3283 = vld [vmem:[#allocation18 + $0x60] sm:$0xff]
    %v3284 = vld [vmem:[#allocation18 + $0x68] sm:$0xff]
    %v3285 = vld [vmem:[#allocation18 + $0x70] sm:$0xff]
    %v3286 = vld [vmem:[#allocation18 + $0x78] sm:$0xff]
    %v3287 = vld [vmem:[#allocation18 + $0x80] sm:$0xff]
    %v3288 = vld [vmem:[#allocation18 + $0x88] sm:$0xff]
    %v3289 = vld [vmem:[#allocation18 + $0x90] sm:$0xff]
    %v3290 = vld [vmem:[#allocation18 + $0x98] sm:$0xff]
    %v3291 = vld [vmem:[#allocation18 + $0xa0] sm:$0xff]
    %v3292 = vld [vmem:[#allocation18 + $0xa8] sm:$0xff]
    %v3293 = vld [vmem:[#allocation18 + $0xb0] sm:$0xff]
    %v3294 = vld [vmem:[#allocation18 + $0xb8] sm:$0xff]
    %v3295 = vld [vmem:[#allocation18 + $0xc0] sm:$0xff]
    %v3296 = vld [vmem:[#allocation18 + $0xc8] sm:$0xff]
    %v3297 = vld [vmem:[#allocation18 + $0xd0] sm:$0xff]
    %v3298 = vld [vmem:[#allocation18 + $0xd8] sm:$0xff]
    %v3299 = vld [vmem:[#allocation18 + $0xe0] sm:$0xff]
    %v3300 = vld [vmem:[#allocation18 + $0xe8] sm:$0xff]
    %v3301 = vld [vmem:[#allocation18 + $0xf0] sm:$0xff]
    %v3302 = vld [vmem:[#allocation18 + $0xf8] sm:$0xff]
    %v3303 = vld [vmem:[#allocation18 + $0x100] sm:$0xff]
    %v3304 = vld [vmem:[#allocation18 + $0x108] sm:$0xff]
    %v3305 = vld [vmem:[#allocation18 + $0x110] sm:$0xff]
    %v3306 = vld [vmem:[#allocation18 + $0x118] sm:$0xff]
    %v3307 = vld [vmem:[#allocation18 + $0x120] sm:$0xff]
    %v3308 = vld [vmem:[#allocation18 + $0x128] sm:$0xff]
    %v3309 = vld [vmem:[#allocation18 + $0x130] sm:$0xff]
    %v3310 = vld [vmem:[#allocation18 + $0x138] sm:$0xff]
    %v3311 = vld [vmem:[#allocation18 + $0x140] sm:$0xff]
    %v3312 = vld [vmem:[#allocation18 + $0x148] sm:$0xff]
    %v3313 = vld [vmem:[#allocation18 + $0x150] sm:$0xff]
    %v3314 = vld [vmem:[#allocation18 + $0x158] sm:$0xff]
    %v3315 = vld [vmem:[#allocation18 + $0x160] sm:$0xff]
    %v3316 = vld [vmem:[#allocation18 + $0x168] sm:$0xff]
    %v3317 = vld [vmem:[#allocation18 + $0x170] sm:$0xff]
    %v3318 = vld [vmem:[#allocation18 + $0x178] sm:$0xff]
    %v3319 = vld [vmem:[%s11] sm:$0x7]
    %v3321 = vperm.slane %v3319, 0
    %v3322 = vperm.slane %v3319, 1
    %v3323 = vperm.slane %v3319, 2
    %3327 = vmatpush.msra.mxu0 %v3316
    %3328 = vmatpush.msra.mxu0 %v3313
    %3329 = vmatpush.msra.mxu0 %v3310
    %3330 = vmatpush.msra.mxu0 %v3307
    %3331 = vmatpush.msra.mxu0 %v3304
    %3332 = vmatpush.msra.mxu0 %v3301
    %3333 = vmatpush.msra.mxu0 %v3298
    %3334 = vmatpush.msra.mxu0 %v3295
    %3335 = vmatpush.msra.mxu0 %v3292
    %3336 = vmatpush.msra.mxu0 %v3289
    %3337 = vmatpush.msra.mxu0 %v3286
    %3338 = vmatpush.msra.mxu0 %v3283
    %3339 = vmatpush.msra.mxu0 %v3280
    %3340 = vmatpush.msra.mxu0 %v3277
    %3341 = vmatpush.msra.mxu0 %v3274
    %3342 = vmatpush.msra.mxu0 %v3271
    %3343 = vmatmul.f32.gmra.mxu0 %v3119
    %v3344 = vpop.f32.mrf.mxu0
    %v3345 = vadd.f32 %v3321, %v3344
    %3346 = vdwg.mxu0
    %3347 = vmatpush.msra.mxu0 %v3317
    %3348 = vmatpush.msra.mxu0 %v3314
    %3349 = vmatpush.msra.mxu0 %v3311
    %3350 = vmatpush.msra.mxu0 %v3308
    %3351 = vmatpush.msra.mxu0 %v3305
    %3352 = vmatpush.msra.mxu0 %v3302
    %3353 = vmatpush.msra.mxu0 %v3299
    %3354 = vmatpush.msra.mxu0 %v3296
    %3355 = vmatpush.msra.mxu0 %v3293
    %3356 = vmatpush.msra.mxu0 %v3290
    %3357 = vmatpush.msra.mxu0 %v3287
    %3358 = vmatpush.msra.mxu0 %v3284
    %3359 = vmatpush.msra.mxu0 %v3281
    %3360 = vmatpush.msra.mxu0 %v3278
    %3361 = vmatpush.msra.mxu0 %v3275
    %3362 = vmatpush.msra.mxu0 %v3272
    %3363 = vmatmul.f32.gmra.mxu0 %v3119
    %v3364 = vpop.f32.mrf.mxu0
    %v3365 = vadd.f32 %v3322, %v3364
    %3366 = vdwg.mxu0
    %3367 = vmatpush.msra.mxu0 %v3318
    %3368 = vmatpush.msra.mxu0 %v3315
    %3369 = vmatpush.msra.mxu0 %v3312
    %3370 = vmatpush.msra.mxu0 %v3309
    %3371 = vmatpush.msra.mxu0 %v3306
    %3372 = vmatpush.msra.mxu0 %v3303
    %3373 = vmatpush.msra.mxu0 %v3300
    %3374 = vmatpush.msra.mxu0 %v3297
    %3375 = vmatpush.msra.mxu0 %v3294
    %3376 = vmatpush.msra.mxu0 %v3291
    %3377 = vmatpush.msra.mxu0 %v3288
    %3378 = vmatpush.msra.mxu0 %v3285
    %3379 = vmatpush.msra.mxu0 %v3282
    %3380 = vmatpush.msra.mxu0 %v3279
    %3381 = vmatpush.msra.mxu0 %v3276
    %3382 = vmatpush.msra.mxu0 %v3273
    %3383 = vmatmul.f32.gmra.mxu0 %v3119
    %v3384 = vpop.f32.mrf.mxu0
    %v3385 = vadd.f32 %v3323, %v3384
    %3386 = vdwg.mxu0
    %v3387 = vld [vmem:[#allocation10] sm:$0xff]
    %v3388 = vld [vmem:[#allocation10 + $0x8] sm:$0xff]
    %v3389 = vld [vmem:[#allocation10 + $0x10] sm:$0xff]
    %v3390 = vld [vmem:[#allocation10 + $0x18] sm:$0xff]
    %v3391 = vld [vmem:[#allocation10 + $0x20] sm:$0xff]
    %v3392 = vld [vmem:[#allocation10 + $0x28] sm:$0xff]
    %v3393 = vld [vmem:[#allocation10 + $0x30] sm:$0xff]
    %v3394 = vld [vmem:[#allocation10 + $0x38] sm:$0xff]
    %v3395 = vld [vmem:[#allocation10 + $0x40] sm:$0xff]
    %v3396 = vld [vmem:[#allocation10 + $0x48] sm:$0xff]
    %v3397 = vld [vmem:[#allocation10 + $0x50] sm:$0xff]
    %v3398 = vld [vmem:[#allocation10 + $0x58] sm:$0xff]
    %v3399 = vld [vmem:[#allocation10 + $0x60] sm:$0xff]
    %v3400 = vld [vmem:[#allocation10 + $0x68] sm:$0xff]
    %v3401 = vld [vmem:[#allocation10 + $0x70] sm:$0xff]
    %v3402 = vld [vmem:[#allocation10 + $0x78] sm:$0xff]
    %v3403 = vld [vmem:[#allocation13] sm:$0xff]
    %v3404 = vld [vmem:[#allocation13 + $0x8] sm:$0xff]
    %v3405 = vld [vmem:[#allocation13 + $0x10] sm:$0xff]
    %v3406 = vld [vmem:[#allocation13 + $0x18] sm:$0xff]
    %v3407 = vld [vmem:[#allocation13 + $0x20] sm:$0xff]
    %v3408 = vld [vmem:[#allocation13 + $0x28] sm:$0xff]
    %v3409 = vld [vmem:[#allocation13 + $0x30] sm:$0xff]
    %v3410 = vld [vmem:[#allocation13 + $0x38] sm:$0xff]
    %v3411 = vld [vmem:[#allocation13 + $0x40] sm:$0xff]
    %v3412 = vld [vmem:[#allocation13 + $0x48] sm:$0xff]
    %v3413 = vld [vmem:[#allocation13 + $0x50] sm:$0xff]
    %v3414 = vld [vmem:[#allocation13 + $0x58] sm:$0xff]
    %v3415 = vld [vmem:[#allocation13 + $0x60] sm:$0xff]
    %v3416 = vld [vmem:[#allocation13 + $0x68] sm:$0xff]
    %v3417 = vld [vmem:[#allocation13 + $0x70] sm:$0xff]
    %v3418 = vld [vmem:[#allocation13 + $0x78] sm:$0xff]
    %3419 = vmatpush.msra.mxu0 %v3402
    %3420 = vmatpush.msra.mxu0 %v3401
    %3421 = vmatpush.msra.mxu0 %v3400
    %3422 = vmatpush.msra.mxu0 %v3399
    %3423 = vmatpush.msra.mxu0 %v3398
    %3424 = vmatpush.msra.mxu0 %v3397
    %3425 = vmatpush.msra.mxu0 %v3396
    %3426 = vmatpush.msra.mxu0 %v3395
    %3427 = vmatpush.msra.mxu0 %v3394
    %3428 = vmatpush.msra.mxu0 %v3393
    %3429 = vmatpush.msra.mxu0 %v3392
    %3430 = vmatpush.msra.mxu0 %v3391
    %3431 = vmatpush.msra.mxu0 %v3390
    %3432 = vmatpush.msra.mxu0 %v3389
    %3433 = vmatpush.msra.mxu0 %v3388
    %3434 = vmatpush.msra.mxu0 %v3387
    %3435 = vmatmul.f32.gmra.mxu0 %v3234
    %v3436 = vpop.f32.mrf.mxu0
    %v3437 = vadd.f32 %v3269, %v3436
    %3438 = vdwg.mxu0
    %v3439 = vld [vmem:[#allocation12] sm:$0x1]
    %v3440 = vadd.f32 %v3437, %v3439
    %v3441 = vsel %vm422, %v3440, -inf
    %3442 = vmax.xlane.f32.xlu0 %v3441
    %v3443 = vpop.xlane.xlu0 %3442
    %v3444 = vsub.f32 %v3440, %v3443
    %v3445 = vmul.f32 %v3444, 1.442695
    %v3446 = vpow.pop %v3445
    %v3447 = vsel %vm422, %v3446, 0.0
    %3448 = vadd.xlane.f32.xlu0 %v3447
    %v3449 = vpop.xlane.xlu0 %3448
    %v3450 = vrcp.pop %v3449
    %v3451 = vmul.f32 %v3449, %v3450
    %v3452 = vsub.f32 1.0, %v3451
    %v3453 = vmul.f32 %v3450, %v3452
    %v3454 = vadd.f32 %v3450, %v3453
    %vm3455 = vweird.f32 %v3449
    %vm3456 = vweird.f32 %v3450
    %vm3457 = vmor %vm3455, %vm3456
    %v3458 = vsel %vm3457, %v3450, %v3454
    %v3459 = vand.u32 2147483647, %v3449
    %vm3460 = vcmp.eq.f32.partialorder %v3459, 8.507059e+37
    %v3461 = vand.u32 %v3449, 2147483648
    %v3462 = vor.u32 1.1754944e-38, %v3461
    %v3463 = vsel %vm3460, %v3462, %v3458
    %v3464 = vmul.f32 %v3446, %v3463
    %v3465 = vld [vmem:[#allocation9] sm:$0xff]
    %v3466 = vld [vmem:[#allocation9 + $0x8] sm:$0xff]
    %v3467 = vld [vmem:[#allocation9 + $0x10] sm:$0xff]
    %v3468 = vld [vmem:[#allocation9 + $0x18] sm:$0xff]
    %v3469 = vld [vmem:[#allocation9 + $0x20] sm:$0xff]
    %v3470 = vld [vmem:[#allocation9 + $0x28] sm:$0xff]
    %v3471 = vld [vmem:[#allocation9 + $0x30] sm:$0xff]
    %v3472 = vld [vmem:[#allocation9 + $0x38] sm:$0xff]
    %v3473 = vld [vmem:[#allocation9 + $0x40] sm:$0xff]
    %v3474 = vld [vmem:[#allocation9 + $0x48] sm:$0xff]
    %v3475 = vld [vmem:[#allocation9 + $0x50] sm:$0xff]
    %v3476 = vld [vmem:[#allocation9 + $0x58] sm:$0xff]
    %v3477 = vld [vmem:[#allocation9 + $0x60] sm:$0xff]
    %v3478 = vld [vmem:[#allocation9 + $0x68] sm:$0xff]
    %v3479 = vld [vmem:[#allocation9 + $0x70] sm:$0xff]
    %v3480 = vld [vmem:[#allocation9 + $0x78] sm:$0xff]
    %3481 = vmatpush.msra.mxu0 %v3480
    %3482 = vmatpush.msra.mxu0 %v3479
    %3483 = vmatpush.msra.mxu0 %v3478
    %3484 = vmatpush.msra.mxu0 %v3477
    %3485 = vmatpush.msra.mxu0 %v3476
    %3486 = vmatpush.msra.mxu0 %v3475
    %3487 = vmatpush.msra.mxu0 %v3474
    %3488 = vmatpush.msra.mxu0 %v3473
    %3489 = vmatpush.msra.mxu0 %v3472
    %3490 = vmatpush.msra.mxu0 %v3471
    %3491 = vmatpush.msra.mxu0 %v3470
    %3492 = vmatpush.msra.mxu0 %v3469
    %3493 = vmatpush.msra.mxu0 %v3468
    %3494 = vmatpush.msra.mxu0 %v3467
    %3495 = vmatpush.msra.mxu0 %v3466
    %3496 = vmatpush.msra.mxu0 %v3465
    %3497 = vmatmul.f32.gmra.mxu0 %v3464
    %v3498 = vpop.f32.mrf.mxu0
    %v3499 = vadd.f32 0.0, %v3498
    %3500 = vdwg.mxu0
    %v3501 = vld [vmem:[#allocation13 + $0x80] sm:$0xff]
    %v3502 = vld [vmem:[#allocation13 + $0x88] sm:$0xff]
    %v3503 = vld [vmem:[#allocation13 + $0x90] sm:$0xff]
    %v3504 = vld [vmem:[#allocation13 + $0x98] sm:$0xff]
    %v3505 = vld [vmem:[#allocation13 + $0xa0] sm:$0xff]
    %v3506 = vld [vmem:[#allocation13 + $0xa8] sm:$0xff]
    %v3507 = vld [vmem:[#allocation13 + $0xb0] sm:$0xff]
    %v3508 = vld [vmem:[#allocation13 + $0xb8] sm:$0xff]
    %v3509 = vld [vmem:[#allocation13 + $0xc0] sm:$0xff]
    %v3510 = vld [vmem:[#allocation13 + $0xc8] sm:$0xff]
    %v3511 = vld [vmem:[#allocation13 + $0xd0] sm:$0xff]
    %v3512 = vld [vmem:[#allocation13 + $0xd8] sm:$0xff]
    %v3513 = vld [vmem:[#allocation13 + $0xe0] sm:$0xff]
    %v3514 = vld [vmem:[#allocation13 + $0xe8] sm:$0xff]
    %v3515 = vld [vmem:[#allocation13 + $0xf0] sm:$0xff]
    %v3516 = vld [vmem:[#allocation13 + $0xf8] sm:$0xff]
    %3517 = vmatpush.msra.mxu0 %v3516
    %3518 = vmatpush.msra.mxu0 %v3515
    %3519 = vmatpush.msra.mxu0 %v3514
    %3520 = vmatpush.msra.mxu0 %v3513
    %3521 = vmatpush.msra.mxu0 %v3512
    %3522 = vmatpush.msra.mxu0 %v3511
    %3523 = vmatpush.msra.mxu0 %v3510
    %3524 = vmatpush.msra.mxu0 %v3509
    %3525 = vmatpush.msra.mxu0 %v3508
    %3526 = vmatpush.msra.mxu0 %v3507
    %3527 = vmatpush.msra.mxu0 %v3506
    %3528 = vmatpush.msra.mxu0 %v3505
    %3529 = vmatpush.msra.mxu0 %v3504
    %3530 = vmatpush.msra.mxu0 %v3503
    %3531 = vmatpush.msra.mxu0 %v3502
    %3532 = vmatpush.msra.mxu0 %v3501
    %3533 = vmatmul.f32.gmra.mxu0 %v3499
    %v3534 = vpop.f32.mrf.mxu0
    %v3535 = vadd.f32 0.0, %v3534
    %3536 = vdwg.mxu0
    %3537 = vmatpush.msra.mxu0 %v3418
    %3538 = vmatpush.msra.mxu0 %v3417
    %3539 = vmatpush.msra.mxu0 %v3416
    %3540 = vmatpush.msra.mxu0 %v3415
    %3541 = vmatpush.msra.mxu0 %v3414
    %3542 = vmatpush.msra.mxu0 %v3413
    %3543 = vmatpush.msra.mxu0 %v3412
    %3544 = vmatpush.msra.mxu0 %v3411
    %3545 = vmatpush.msra.mxu0 %v3410
    %3546 = vmatpush.msra.mxu0 %v3409
    %3547 = vmatpush.msra.mxu0 %v3408
    %3548 = vmatpush.msra.mxu0 %v3407
    %3549 = vmatpush.msra.mxu0 %v3406
    %3550 = vmatpush.msra.mxu0 %v3405
    %3551 = vmatpush.msra.mxu0 %v3404
    %3552 = vmatpush.msra.mxu0 %v3403
    %3553 = vmatmul.f32.gmra.mxu0 %v3234
    %v3554 = vpop.f32.mrf.mxu0
    %v3555 = vadd.f32 %v3535, %v3554
    %3556 = vdwg.mxu0
    %v3557 = vld [vmem:[#allocation15] sm:$0x1]
    %v3558 = vadd.f32 %v3555, %v3557
    %v3559 = vmax.f32 %v3558, 0.0
    %v3560 = vld [vmem:[#allocation16] sm:$0xff]
    %v3561 = vld [vmem:[#allocation16 + $0x8] sm:$0xff]
    %v3562 = vld [vmem:[#allocation16 + $0x10] sm:$0xff]
    %v3563 = vld [vmem:[#allocation16 + $0x18] sm:$0xff]
    %v3564 = vld [vmem:[#allocation16 + $0x20] sm:$0xff]
    %v3565 = vld [vmem:[#allocation16 + $0x28] sm:$0xff]
    %v3566 = vld [vmem:[#allocation16 + $0x30] sm:$0xff]
    %v3567 = vld [vmem:[#allocation16 + $0x38] sm:$0xff]
    %v3568 = vld [vmem:[#allocation16 + $0x40] sm:$0xff]
    %v3569 = vld [vmem:[#allocation16 + $0x48] sm:$0xff]
    %v3570 = vld [vmem:[#allocation16 + $0x50] sm:$0xff]
    %v3571 = vld [vmem:[#allocation16 + $0x58] sm:$0xff]
    %v3572 = vld [vmem:[#allocation16 + $0x60] sm:$0xff]
    %v3573 = vld [vmem:[#allocation16 + $0x68] sm:$0xff]
    %v3574 = vld [vmem:[#allocation16 + $0x70] sm:$0xff]
    %v3575 = vld [vmem:[#allocation16 + $0x78] sm:$0xff]
    %v3576 = vld [vmem:[#allocation16 + $0x80] sm:$0xff]
    %v3577 = vld [vmem:[#allocation16 + $0x88] sm:$0xff]
    %v3578 = vld [vmem:[#allocation16 + $0x90] sm:$0xff]
    %v3579 = vld [vmem:[#allocation16 + $0x98] sm:$0xff]
    %v3580 = vld [vmem:[#allocation16 + $0xa0] sm:$0xff]
    %v3581 = vld [vmem:[#allocation16 + $0xa8] sm:$0xff]
    %v3582 = vld [vmem:[#allocation16 + $0xb0] sm:$0xff]
    %v3583 = vld [vmem:[#allocation16 + $0xb8] sm:$0xff]
    %v3584 = vld [vmem:[#allocation16 + $0xc0] sm:$0xff]
    %v3585 = vld [vmem:[#allocation16 + $0xc8] sm:$0xff]
    %v3586 = vld [vmem:[#allocation16 + $0xd0] sm:$0xff]
    %v3587 = vld [vmem:[#allocation16 + $0xd8] sm:$0xff]
    %v3588 = vld [vmem:[#allocation16 + $0xe0] sm:$0xff]
    %v3589 = vld [vmem:[#allocation16 + $0xe8] sm:$0xff]
    %v3590 = vld [vmem:[#allocation16 + $0xf0] sm:$0xff]
    %v3591 = vld [vmem:[#allocation16 + $0xf8] sm:$0xff]
    %v3592 = vld [vmem:[#allocation16 + $0x100] sm:$0xff]
    %v3593 = vld [vmem:[#allocation16 + $0x108] sm:$0xff]
    %v3594 = vld [vmem:[#allocation16 + $0x110] sm:$0xff]
    %v3595 = vld [vmem:[#allocation16 + $0x118] sm:$0xff]
    %v3596 = vld [vmem:[#allocation16 + $0x120] sm:$0xff]
    %v3597 = vld [vmem:[#allocation16 + $0x128] sm:$0xff]
    %v3598 = vld [vmem:[#allocation16 + $0x130] sm:$0xff]
    %v3599 = vld [vmem:[#allocation16 + $0x138] sm:$0xff]
    %v3600 = vld [vmem:[#allocation16 + $0x140] sm:$0xff]
    %v3601 = vld [vmem:[#allocation16 + $0x148] sm:$0xff]
    %v3602 = vld [vmem:[#allocation16 + $0x150] sm:$0xff]
    %v3603 = vld [vmem:[#allocation16 + $0x158] sm:$0xff]
    %v3604 = vld [vmem:[#allocation16 + $0x160] sm:$0xff]
    %v3605 = vld [vmem:[#allocation16 + $0x168] sm:$0xff]
    %v3606 = vld [vmem:[#allocation16 + $0x170] sm:$0xff]
    %v3607 = vld [vmem:[#allocation16 + $0x178] sm:$0xff]
    %v3608 = vld [vmem:[%s9] sm:$0x7]
    %v3610 = vperm.slane %v3608, 0
    %v3611 = vperm.slane %v3608, 1
    %v3612 = vperm.slane %v3608, 2
    %3616 = vmatpush.msra.mxu0 %v3605
    %3617 = vmatpush.msra.mxu0 %v3602
    %3618 = vmatpush.msra.mxu0 %v3599
    %3619 = vmatpush.msra.mxu0 %v3596
    %3620 = vmatpush.msra.mxu0 %v3593
    %3621 = vmatpush.msra.mxu0 %v3590
    %3622 = vmatpush.msra.mxu0 %v3587
    %3623 = vmatpush.msra.mxu0 %v3584
    %3624 = vmatpush.msra.mxu0 %v3581
    %3625 = vmatpush.msra.mxu0 %v3578
    %3626 = vmatpush.msra.mxu0 %v3575
    %3627 = vmatpush.msra.mxu0 %v3572
    %3628 = vmatpush.msra.mxu0 %v3569
    %3629 = vmatpush.msra.mxu0 %v3566
    %3630 = vmatpush.msra.mxu0 %v3563
    %3631 = vmatpush.msra.mxu0 %v3560
    %3632 = vmatmul.f32.gmra.mxu0 %v3559
    %v3633 = vpop.f32.mrf.mxu0
    %v3634 = vadd.f32 %v3610, %v3633
    %3635 = vdwg.mxu0
    %3636 = vmatpush.msra.mxu0 %v3606
    %3637 = vmatpush.msra.mxu0 %v3603
    %3638 = vmatpush.msra.mxu0 %v3600
    %3639 = vmatpush.msra.mxu0 %v3597
    %3640 = vmatpush.msra.mxu0 %v3594
    %3641 = vmatpush.msra.mxu0 %v3591
    %3642 = vmatpush.msra.mxu0 %v3588
    %3643 = vmatpush.msra.mxu0 %v3585
    %3644 = vmatpush.msra.mxu0 %v3582
    %3645 = vmatpush.msra.mxu0 %v3579
    %3646 = vmatpush.msra.mxu0 %v3576
    %3647 = vmatpush.msra.mxu0 %v3573
    %3648 = vmatpush.msra.mxu0 %v3570
    %3649 = vmatpush.msra.mxu0 %v3567
    %3650 = vmatpush.msra.mxu0 %v3564
    %3651 = vmatpush.msra.mxu0 %v3561
    %3652 = vmatmul.f32.gmra.mxu0 %v3559
    %v3653 = vpop.f32.mrf.mxu0
    %v3654 = vadd.f32 %v3611, %v3653
    %3655 = vdwg.mxu0
    %3656 = vmatpush.msra.mxu0 %v3607
    %3657 = vmatpush.msra.mxu0 %v3604
    %3658 = vmatpush.msra.mxu0 %v3601
    %3659 = vmatpush.msra.mxu0 %v3598
    %3660 = vmatpush.msra.mxu0 %v3595
    %3661 = vmatpush.msra.mxu0 %v3592
    %3662 = vmatpush.msra.mxu0 %v3589
    %3663 = vmatpush.msra.mxu0 %v3586
    %3664 = vmatpush.msra.mxu0 %v3583
    %3665 = vmatpush.msra.mxu0 %v3580
    %3666 = vmatpush.msra.mxu0 %v3577
    %3667 = vmatpush.msra.mxu0 %v3574
    %3668 = vmatpush.msra.mxu0 %v3571
    %3669 = vmatpush.msra.mxu0 %v3568
    %3670 = vmatpush.msra.mxu0 %v3565
    %3671 = vmatpush.msra.mxu0 %v3562
    %3672 = vmatmul.f32.gmra.mxu0 %v3559
    %v3673 = vpop.f32.mrf.mxu0
    %v3674 = vadd.f32 %v3612, %v3673
    %3675 = vdwg.mxu0
    %v3676 = vadd.f32 %v3634, %v3345
    %v3677 = vxor.u32 %v3676, 2147483648
    %v3678 = vmul.f32 %v3677, 1.442695
    %v3679 = vpow.pop %v3678
    %v3680 = vadd.f32 %v3679, 1.0
    %v3681 = vrcp.pop %v3680
    %v3682 = vmul.f32 %v3680, %v3681
    %v3683 = vsub.f32 1.0, %v3682
    %v3684 = vmul.f32 %v3681, %v3683
    %v3685 = vadd.f32 %v3681, %v3684
    %vm3686 = vweird.f32 %v3680
    %vm3687 = vweird.f32 %v3681
    %vm3688 = vmor %vm3686, %vm3687
    %v3689 = vsel %vm3688, %v3681, %v3685
    %v3690 = vand.u32 2147483647, %v3680
    %vm3691 = vcmp.eq.f32.partialorder %v3690, 8.507059e+37
    %v3692 = vand.u32 %v3680, 2147483648
    %v3693 = vor.u32 1.1754944e-38, %v3692
    %v3694 = vsel %vm3691, %v3693, %v3689
    %v3695 = vmul.f32 1.0, %v3694
    %v3696 = vadd.f32 %v3654, %v3365
    %v3697 = vxor.u32 %v3696, 2147483648
    %v3698 = vmul.f32 %v3697, 1.442695
    %v3699 = vpow.pop %v3698
    %v3700 = vadd.f32 %v3699, 1.0
    %v3701 = vrcp.pop %v3700
    %v3702 = vmul.f32 %v3700, %v3701
    %v3703 = vsub.f32 1.0, %v3702
    %v3704 = vmul.f32 %v3701, %v3703
    %v3705 = vadd.f32 %v3701, %v3704
    %vm3706 = vweird.f32 %v3700
    %vm3707 = vweird.f32 %v3701
    %vm3708 = vmor %vm3706, %vm3707
    %v3709 = vsel %vm3708, %v3701, %v3705
    %v3710 = vand.u32 2147483647, %v3700
    %vm3711 = vcmp.eq.f32.partialorder %v3710, 8.507059e+37
    %v3712 = vand.u32 %v3700, 2147483648
    %v3713 = vor.u32 1.1754944e-38, %v3712
    %v3714 = vsel %vm3711, %v3713, %v3709
    %v3715 = vmul.f32 1.0, %v3714
    %v3716 = vmul.f32 %v3695, %v3385
    %v3717 = vadd.f32 %v3674, %v3716
    %v3718 = vtanh.pop %v3717
    %v3719 = vsub.f32 1.0, %v3715
    %v3720 = vmul.f32 %v3719, %v3718
    %v3721 = vmul.f32 %v3715, %v3119
    %v3722 = vadd.f32 %v3720, %v3721
    %v3723 = vld [vmem:[#allocation19] sm:$0xff]
    %v3724 = vld [vmem:[#allocation19 + $0x8] sm:$0xff]
    %v3725 = vld [vmem:[#allocation19 + $0x10] sm:$0xff]
    %v3726 = vld [vmem:[#allocation19 + $0x18] sm:$0xff]
    %v3727 = vld [vmem:[#allocation19 + $0x20] sm:$0xff]
    %v3728 = vld [vmem:[#allocation19 + $0x28] sm:$0xff]
    %v3729 = vld [vmem:[#allocation19 + $0x30] sm:$0xff]
    %v3730 = vld [vmem:[#allocation19 + $0x38] sm:$0xff]
    %v3731 = vld [vmem:[#allocation19 + $0x40] sm:$0xff]
    %v3732 = vld [vmem:[#allocation19 + $0x48] sm:$0xff]
    %v3733 = vld [vmem:[#allocation19 + $0x50] sm:$0xff]
    %v3734 = vld [vmem:[#allocation19 + $0x58] sm:$0xff]
    %v3735 = vld [vmem:[#allocation19 + $0x60] sm:$0xff]
    %v3736 = vld [vmem:[#allocation19 + $0x68] sm:$0xff]
    %v3737 = vld [vmem:[#allocation19 + $0x70] sm:$0xff]
    %v3738 = vld [vmem:[#allocation19 + $0x78] sm:$0xff]
    %v3739 = vld [vmem:[#allocation19 + $0x80] sm:$0xff]
    %v3740 = vld [vmem:[#allocation19 + $0x88] sm:$0xff]
    %v3741 = vld [vmem:[#allocation19 + $0x90] sm:$0xff]
    %v3742 = vld [vmem:[#allocation19 + $0x98] sm:$0xff]
    %v3743 = vld [vmem:[#allocation19 + $0xa0] sm:$0xff]
    %v3744 = vld [vmem:[#allocation19 + $0xa8] sm:$0xff]
    %v3745 = vld [vmem:[#allocation19 + $0xb0] sm:$0xff]
    %v3746 = vld [vmem:[#allocation19 + $0xb8] sm:$0xff]
    %v3747 = vld [vmem:[#allocation19 + $0xc0] sm:$0xff]
    %v3748 = vld [vmem:[#allocation19 + $0xc8] sm:$0xff]
    %v3749 = vld [vmem:[#allocation19 + $0xd0] sm:$0xff]
    %v3750 = vld [vmem:[#allocation19 + $0xd8] sm:$0xff]
    %v3751 = vld [vmem:[#allocation19 + $0xe0] sm:$0xff]
    %v3752 = vld [vmem:[#allocation19 + $0xe8] sm:$0xff]
    %v3753 = vld [vmem:[#allocation19 + $0xf0] sm:$0xff]
    %v3754 = vld [vmem:[#allocation19 + $0xf8] sm:$0xff]
    %v3755 = vld [vmem:[%s13] sm:$0x3]
    %v3757 = vperm.slane %v3755, 0
    %v3758 = vperm.slane %v3755, 1
    %3761 = vmatpush.msra.mxu0 %v3753
    %3762 = vmatpush.msra.mxu0 %v3751
    %3763 = vmatpush.msra.mxu0 %v3749
    %3764 = vmatpush.msra.mxu0 %v3747
    %3765 = vmatpush.msra.mxu0 %v3745
    %3766 = vmatpush.msra.mxu0 %v3743
    %3767 = vmatpush.msra.mxu0 %v3741
    %3768 = vmatpush.msra.mxu0 %v3739
    %3769 = vmatpush.msra.mxu0 %v3737
    %3770 = vmatpush.msra.mxu0 %v3735
    %3771 = vmatpush.msra.mxu0 %v3733
    %3772 = vmatpush.msra.mxu0 %v3731
    %3773 = vmatpush.msra.mxu0 %v3729
    %3774 = vmatpush.msra.mxu0 %v3727
    %3775 = vmatpush.msra.mxu0 %v3725
    %3776 = vmatpush.msra.mxu0 %v3723
    %3777 = vmatmul.f32.gmra.mxu0 %v3722
    %v3778 = vpop.f32.mrf.mxu0
    %v3779 = vadd.f32 %v3757, %v3778
    %3780 = vdwg.mxu0
    %3781 = vmatpush.msra.mxu0 %v3754
    %3782 = vmatpush.msra.mxu0 %v3752
    %3783 = vmatpush.msra.mxu0 %v3750
    %3784 = vmatpush.msra.mxu0 %v3748
    %3785 = vmatpush.msra.mxu0 %v3746
    %3786 = vmatpush.msra.mxu0 %v3744
    %3787 = vmatpush.msra.mxu0 %v3742
    %3788 = vmatpush.msra.mxu0 %v3740
    %3789 = vmatpush.msra.mxu0 %v3738
    %3790 = vmatpush.msra.mxu0 %v3736
    %3791 = vmatpush.msra.mxu0 %v3734
    %3792 = vmatpush.msra.mxu0 %v3732
    %3793 = vmatpush.msra.mxu0 %v3730
    %3794 = vmatpush.msra.mxu0 %v3728
    %3795 = vmatpush.msra.mxu0 %v3726
    %3796 = vmatpush.msra.mxu0 %v3724
    %3797 = vmatmul.f32.gmra.mxu0 %v3722
    %v3798 = vpop.f32.mrf.mxu0
    %v3799 = vadd.f32 %v3758, %v3798
    %3800 = vdwg.mxu0
    %v3801 = vsel %vm422, %v3779, -inf
    %v3802 = vsel %vm422, %v3799, -inf
    %v3803 = vmax.f32 %v3801, %v3802
    %3804 = vmax.xlane.f32.xlu0 %v3803
    %v3805 = vpop.xlane.xlu0 %3804
    %v3806 = vsub.f32 %v3779, %v3805
    %v3807 = vsub.f32 %v3799, %v3805
    %v3808 = vmul.f32 %v3806, 1.442695
    %v3809 = vpow.pop %v3808
    %v3810 = vmul.f32 %v3807, 1.442695
    %v3811 = vpow.pop %v3810
    %v3812 = vsel %vm422, %v3809, 0.0
    %v3813 = vsel %vm422, %v3811, 0.0
    %v3814 = vadd.f32 %v3812, %v3813
    %3815 = vadd.xlane.f32.xlu0 %v3814
    %v3816 = vpop.xlane.xlu0 %3815
    %v3817 = vlog2.pop %v3816
    %v3818 = vmul.f32 %v3817, 0.6931472
    %v3819 = vadd.f32 %v3818, %v3805
    %v3820 = vsub.f32 %v3779, %v3819
    %v3821 = vsub.f32 %v3799, %v3819
    %v3824 = vrot.slane %v3821, 7
    %v3825 = vsel %vm422, %v3820, %v3824
    %s3827 = scalar_lea.vmem [#allocation21], 5
    %3828 = vst.msk [vmem:[%s3827] ss:$8 sm:$0x3] %vm812, %v3825
    %3829 = vst.msk [vmem:[%s3827] ss:$8 sm:$0x0] %vm812, %v3825
    %3830 = vst [vmem:[#allocation24 + $0x5] sm:$0x1] %v3464
    %s3831 = sld [smem:[#allocation3 + $0x6]]
    %p3832 = scmp.gt.s32.totalorder %s3831, 0
    %s3833 = scalar_select %p3832, %s3831, 0
    %p3834 = scmp.lt.s32.totalorder %s3833, 255
    %s3835 = scalar_select %p3834, %s3833, 255
    %s3836 = scalar_lea.vmem [#allocation4], %s3835
    %v3837 = vld [vmem:[%s3836] sm:$0x1]
    %v3838 = vld [vmem:[#allocation10 + $0x80] sm:$0xff]
    %v3839 = vld [vmem:[#allocation10 + $0x88] sm:$0xff]
    %v3840 = vld [vmem:[#allocation10 + $0x90] sm:$0xff]
    %v3841 = vld [vmem:[#allocation10 + $0x98] sm:$0xff]
    %v3842 = vld [vmem:[#allocation10 + $0xa0] sm:$0xff]
    %v3843 = vld [vmem:[#allocation10 + $0xa8] sm:$0xff]
    %v3844 = vld [vmem:[#allocation10 + $0xb0] sm:$0xff]
    %v3845 = vld [vmem:[#allocation10 + $0xb8] sm:$0xff]
    %v3846 = vld [vmem:[#allocation10 + $0xc0] sm:$0xff]
    %v3847 = vld [vmem:[#allocation10 + $0xc8] sm:$0xff]
    %v3848 = vld [vmem:[#allocation10 + $0xd0] sm:$0xff]
    %v3849 = vld [vmem:[#allocation10 + $0xd8] sm:$0xff]
    %v3850 = vld [vmem:[#allocation10 + $0xe0] sm:$0xff]
    %v3851 = vld [vmem:[#allocation10 + $0xe8] sm:$0xff]
    %v3852 = vld [vmem:[#allocation10 + $0xf0] sm:$0xff]
    %v3853 = vld [vmem:[#allocation10 + $0xf8] sm:$0xff]
    %3854 = vmatpush.msra.mxu0 %v3853
    %3855 = vmatpush.msra.mxu0 %v3852
    %3856 = vmatpush.msra.mxu0 %v3851
    %3857 = vmatpush.msra.mxu0 %v3850
    %3858 = vmatpush.msra.mxu0 %v3849
    %3859 = vmatpush.msra.mxu0 %v3848
    %3860 = vmatpush.msra.mxu0 %v3847
    %3861 = vmatpush.msra.mxu0 %v3846
    %3862 = vmatpush.msra.mxu0 %v3845
    %3863 = vmatpush.msra.mxu0 %v3844
    %3864 = vmatpush.msra.mxu0 %v3843
    %3865 = vmatpush.msra.mxu0 %v3842
    %3866 = vmatpush.msra.mxu0 %v3841
    %3867 = vmatpush.msra.mxu0 %v3840
    %3868 = vmatpush.msra.mxu0 %v3839
    %3869 = vmatpush.msra.mxu0 %v3838
    %3870 = vmatmul.f32.gmra.mxu0 %v3722
    %v3871 = vpop.f32.mrf.mxu0
    %v3872 = vadd.f32 0.0, %v3871
    %3873 = vdwg.mxu0
    %v3874 = vld [vmem:[#allocation18] sm:$0xff]
    %v3875 = vld [vmem:[#allocation18 + $0x8] sm:$0xff]
    %v3876 = vld [vmem:[#allocation18 + $0x10] sm:$0xff]
    %v3877 = vld [vmem:[#allocation18 + $0x18] sm:$0xff]
    %v3878 = vld [vmem:[#allocation18 + $0x20] sm:$0xff]
    %v3879 = vld [vmem:[#allocation18 + $0x28] sm:$0xff]
    %v3880 = vld [vmem:[#allocation18 + $0x30] sm:$0xff]
    %v3881 = vld [vmem:[#allocation18 + $0x38] sm:$0xff]
    %v3882 = vld [vmem:[#allocation18 + $0x40] sm:$0xff]
    %v3883 = vld [vmem:[#allocation18 + $0x48] sm:$0xff]
    %v3884 = vld [vmem:[#allocation18 + $0x50] sm:$0xff]
    %v3885 = vld [vmem:[#allocation18 + $0x58] sm:$0xff]
    %v3886 = vld [vmem:[#allocation18 + $0x60] sm:$0xff]
    %v3887 = vld [vmem:[#allocation18 + $0x68] sm:$0xff]
    %v3888 = vld [vmem:[#allocation18 + $0x70] sm:$0xff]
    %v3889 = vld [vmem:[#allocation18 + $0x78] sm:$0xff]
    %v3890 = vld [vmem:[#allocation18 + $0x80] sm:$0xff]
    %v3891 = vld [vmem:[#allocation18 + $0x88] sm:$0xff]
    %v3892 = vld [vmem:[#allocation18 + $0x90] sm:$0xff]
    %v3893 = vld [vmem:[#allocation18 + $0x98] sm:$0xff]
    %v3894 = vld [vmem:[#allocation18 + $0xa0] sm:$0xff]
    %v3895 = vld [vmem:[#allocation18 + $0xa8] sm:$0xff]
    %v3896 = vld [vmem:[#allocation18 + $0xb0] sm:$0xff]
    %v3897 = vld [vmem:[#allocation18 + $0xb8] sm:$0xff]
    %v3898 = vld [vmem:[#allocation18 + $0xc0] sm:$0xff]
    %v3899 = vld [vmem:[#allocation18 + $0xc8] sm:$0xff]
    %v3900 = vld [vmem:[#allocation18 + $0xd0] sm:$0xff]
    %v3901 = vld [vmem:[#allocation18 + $0xd8] sm:$0xff]
    %v3902 = vld [vmem:[#allocation18 + $0xe0] sm:$0xff]
    %v3903 = vld [vmem:[#allocation18 + $0xe8] sm:$0xff]
    %v3904 = vld [vmem:[#allocation18 + $0xf0] sm:$0xff]
    %v3905 = vld [vmem:[#allocation18 + $0xf8] sm:$0xff]
    %v3906 = vld [vmem:[#allocation18 + $0x100] sm:$0xff]
    %v3907 = vld [vmem:[#allocation18 + $0x108] sm:$0xff]
    %v3908 = vld [vmem:[#allocation18 + $0x110] sm:$0xff]
    %v3909 = vld [vmem:[#allocation18 + $0x118] sm:$0xff]
    %v3910 = vld [vmem:[#allocation18 + $0x120] sm:$0xff]
    %v3911 = vld [vmem:[#allocation18 + $0x128] sm:$0xff]
    %v3912 = vld [vmem:[#allocation18 + $0x130] sm:$0xff]
    %v3913 = vld [vmem:[#allocation18 + $0x138] sm:$0xff]
    %v3914 = vld [vmem:[#allocation18 + $0x140] sm:$0xff]
    %v3915 = vld [vmem:[#allocation18 + $0x148] sm:$0xff]
    %v3916 = vld [vmem:[#allocation18 + $0x150] sm:$0xff]
    %v3917 = vld [vmem:[#allocation18 + $0x158] sm:$0xff]
    %v3918 = vld [vmem:[#allocation18 + $0x160] sm:$0xff]
    %v3919 = vld [vmem:[#allocation18 + $0x168] sm:$0xff]
    %v3920 = vld [vmem:[#allocation18 + $0x170] sm:$0xff]
    %v3921 = vld [vmem:[#allocation18 + $0x178] sm:$0xff]
    %v3922 = vld [vmem:[%s11] sm:$0x7]
    %v3924 = vperm.slane %v3922, 0
    %v3925 = vperm.slane %v3922, 1
    %v3926 = vperm.slane %v3922, 2
    %3930 = vmatpush.msra.mxu0 %v3919
    %3931 = vmatpush.msra.mxu0 %v3916
    %3932 = vmatpush.msra.mxu0 %v3913
    %3933 = vmatpush.msra.mxu0 %v3910
    %3934 = vmatpush.msra.mxu0 %v3907
    %3935 = vmatpush.msra.mxu0 %v3904
    %3936 = vmatpush.msra.mxu0 %v3901
    %3937 = vmatpush.msra.mxu0 %v3898
    %3938 = vmatpush.msra.mxu0 %v3895
    %3939 = vmatpush.msra.mxu0 %v3892
    %3940 = vmatpush.msra.mxu0 %v3889
    %3941 = vmatpush.msra.mxu0 %v3886
    %3942 = vmatpush.msra.mxu0 %v3883
    %3943 = vmatpush.msra.mxu0 %v3880
    %3944 = vmatpush.msra.mxu0 %v3877
    %3945 = vmatpush.msra.mxu0 %v3874
    %3946 = vmatmul.f32.gmra.mxu0 %v3722
    %v3947 = vpop.f32.mrf.mxu0
    %v3948 = vadd.f32 %v3924, %v3947
    %3949 = vdwg.mxu0
    %3950 = vmatpush.msra.mxu0 %v3920
    %3951 = vmatpush.msra.mxu0 %v3917
    %3952 = vmatpush.msra.mxu0 %v3914
    %3953 = vmatpush.msra.mxu0 %v3911
    %3954 = vmatpush.msra.mxu0 %v3908
    %3955 = vmatpush.msra.mxu0 %v3905
    %3956 = vmatpush.msra.mxu0 %v3902
    %3957 = vmatpush.msra.mxu0 %v3899
    %3958 = vmatpush.msra.mxu0 %v3896
    %3959 = vmatpush.msra.mxu0 %v3893
    %3960 = vmatpush.msra.mxu0 %v3890
    %3961 = vmatpush.msra.mxu0 %v3887
    %3962 = vmatpush.msra.mxu0 %v3884
    %3963 = vmatpush.msra.mxu0 %v3881
    %3964 = vmatpush.msra.mxu0 %v3878
    %3965 = vmatpush.msra.mxu0 %v3875
    %3966 = vmatmul.f32.gmra.mxu0 %v3722
    %v3967 = vpop.f32.mrf.mxu0
    %v3968 = vadd.f32 %v3925, %v3967
    %3969 = vdwg.mxu0
    %3970 = vmatpush.msra.mxu0 %v3921
    %3971 = vmatpush.msra.mxu0 %v3918
    %3972 = vmatpush.msra.mxu0 %v3915
    %3973 = vmatpush.msra.mxu0 %v3912
    %3974 = vmatpush.msra.mxu0 %v3909
    %3975 = vmatpush.msra.mxu0 %v3906
    %3976 = vmatpush.msra.mxu0 %v3903
    %3977 = vmatpush.msra.mxu0 %v3900
    %3978 = vmatpush.msra.mxu0 %v3897
    %3979 = vmatpush.msra.mxu0 %v3894
    %3980 = vmatpush.msra.mxu0 %v3891
    %3981 = vmatpush.msra.mxu0 %v3888
    %3982 = vmatpush.msra.mxu0 %v3885
    %3983 = vmatpush.msra.mxu0 %v3882
    %3984 = vmatpush.msra.mxu0 %v3879
    %3985 = vmatpush.msra.mxu0 %v3876
    %3986 = vmatmul.f32.gmra.mxu0 %v3722
    %v3987 = vpop.f32.mrf.mxu0
    %v3988 = vadd.f32 %v3926, %v3987
    %3989 = vdwg.mxu0
    %v3990 = vld [vmem:[#allocation10] sm:$0xff]
    %v3991 = vld [vmem:[#allocation10 + $0x8] sm:$0xff]
    %v3992 = vld [vmem:[#allocation10 + $0x10] sm:$0xff]
    %v3993 = vld [vmem:[#allocation10 + $0x18] sm:$0xff]
    %v3994 = vld [vmem:[#allocation10 + $0x20] sm:$0xff]
    %v3995 = vld [vmem:[#allocation10 + $0x28] sm:$0xff]
    %v3996 = vld [vmem:[#allocation10 + $0x30] sm:$0xff]
    %v3997 = vld [vmem:[#allocation10 + $0x38] sm:$0xff]
    %v3998 = vld [vmem:[#allocation10 + $0x40] sm:$0xff]
    %v3999 = vld [vmem:[#allocation10 + $0x48] sm:$0xff]
    %v4000 = vld [vmem:[#allocation10 + $0x50] sm:$0xff]
    %v4001 = vld [vmem:[#allocation10 + $0x58] sm:$0xff]
    %v4002 = vld [vmem:[#allocation10 + $0x60] sm:$0xff]
    %v4003 = vld [vmem:[#allocation10 + $0x68] sm:$0xff]
    %v4004 = vld [vmem:[#allocation10 + $0x70] sm:$0xff]
    %v4005 = vld [vmem:[#allocation10 + $0x78] sm:$0xff]
    %v4006 = vld [vmem:[#allocation13] sm:$0xff]
    %v4007 = vld [vmem:[#allocation13 + $0x8] sm:$0xff]
    %v4008 = vld [vmem:[#allocation13 + $0x10] sm:$0xff]
    %v4009 = vld [vmem:[#allocation13 + $0x18] sm:$0xff]
    %v4010 = vld [vmem:[#allocation13 + $0x20] sm:$0xff]
    %v4011 = vld [vmem:[#allocation13 + $0x28] sm:$0xff]
    %v4012 = vld [vmem:[#allocation13 + $0x30] sm:$0xff]
    %v4013 = vld [vmem:[#allocation13 + $0x38] sm:$0xff]
    %v4014 = vld [vmem:[#allocation13 + $0x40] sm:$0xff]
    %v4015 = vld [vmem:[#allocation13 + $0x48] sm:$0xff]
    %v4016 = vld [vmem:[#allocation13 + $0x50] sm:$0xff]
    %v4017 = vld [vmem:[#allocation13 + $0x58] sm:$0xff]
    %v4018 = vld [vmem:[#allocation13 + $0x60] sm:$0xff]
    %v4019 = vld [vmem:[#allocation13 + $0x68] sm:$0xff]
    %v4020 = vld [vmem:[#allocation13 + $0x70] sm:$0xff]
    %v4021 = vld [vmem:[#allocation13 + $0x78] sm:$0xff]
    %4022 = vmatpush.msra.mxu0 %v4005
    %4023 = vmatpush.msra.mxu0 %v4004
    %4024 = vmatpush.msra.mxu0 %v4003
    %4025 = vmatpush.msra.mxu0 %v4002
    %4026 = vmatpush.msra.mxu0 %v4001
    %4027 = vmatpush.msra.mxu0 %v4000
    %4028 = vmatpush.msra.mxu0 %v3999
    %4029 = vmatpush.msra.mxu0 %v3998
    %4030 = vmatpush.msra.mxu0 %v3997
    %4031 = vmatpush.msra.mxu0 %v3996
    %4032 = vmatpush.msra.mxu0 %v3995
    %4033 = vmatpush.msra.mxu0 %v3994
    %4034 = vmatpush.msra.mxu0 %v3993
    %4035 = vmatpush.msra.mxu0 %v3992
    %4036 = vmatpush.msra.mxu0 %v3991
    %4037 = vmatpush.msra.mxu0 %v3990
    %4038 = vmatmul.f32.gmra.mxu0 %v3837
    %v4039 = vpop.f32.mrf.mxu0
    %v4040 = vadd.f32 %v3872, %v4039
    %4041 = vdwg.mxu0
    %v4042 = vld [vmem:[#allocation12] sm:$0x1]
    %v4043 = vadd.f32 %v4040, %v4042
    %v4044 = vsel %vm422, %v4043, -inf
    %4045 = vmax.xlane.f32.xlu0 %v4044
    %v4046 = vpop.xlane.xlu0 %4045
    %v4047 = vsub.f32 %v4043, %v4046
    %v4048 = vmul.f32 %v4047, 1.442695
    %v4049 = vpow.pop %v4048
    %v4050 = vsel %vm422, %v4049, 0.0
    %4051 = vadd.xlane.f32.xlu0 %v4050
    %v4052 = vpop.xlane.xlu0 %4051
    %v4053 = vrcp.pop %v4052
    %v4054 = vmul.f32 %v4052, %v4053
    %v4055 = vsub.f32 1.0, %v4054
    %v4056 = vmul.f32 %v4053, %v4055
    %v4057 = vadd.f32 %v4053, %v4056
    %vm4058 = vweird.f32 %v4052
    %vm4059 = vweird.f32 %v4053
    %vm4060 = vmor %vm4058, %vm4059
    %v4061 = vsel %vm4060, %v4053, %v4057
    %v4062 = vand.u32 2147483647, %v4052
    %vm4063 = vcmp.eq.f32.partialorder %v4062, 8.507059e+37
    %v4064 = vand.u32 %v4052, 2147483648
    %v4065 = vor.u32 1.1754944e-38, %v4064
    %v4066 = vsel %vm4063, %v4065, %v4061
    %v4067 = vmul.f32 %v4049, %v4066
    %v4068 = vld [vmem:[#allocation9] sm:$0xff]
    %v4069 = vld [vmem:[#allocation9 + $0x8] sm:$0xff]
    %v4070 = vld [vmem:[#allocation9 + $0x10] sm:$0xff]
    %v4071 = vld [vmem:[#allocation9 + $0x18] sm:$0xff]
    %v4072 = vld [vmem:[#allocation9 + $0x20] sm:$0xff]
    %v4073 = vld [vmem:[#allocation9 + $0x28] sm:$0xff]
    %v4074 = vld [vmem:[#allocation9 + $0x30] sm:$0xff]
    %v4075 = vld [vmem:[#allocation9 + $0x38] sm:$0xff]
    %v4076 = vld [vmem:[#allocation9 + $0x40] sm:$0xff]
    %v4077 = vld [vmem:[#allocation9 + $0x48] sm:$0xff]
    %v4078 = vld [vmem:[#allocation9 + $0x50] sm:$0xff]
    %v4079 = vld [vmem:[#allocation9 + $0x58] sm:$0xff]
    %v4080 = vld [vmem:[#allocation9 + $0x60] sm:$0xff]
    %v4081 = vld [vmem:[#allocation9 + $0x68] sm:$0xff]
    %v4082 = vld [vmem:[#allocation9 + $0x70] sm:$0xff]
    %v4083 = vld [vmem:[#allocation9 + $0x78] sm:$0xff]
    %4084 = vmatpush.msra.mxu0 %v4083
    %4085 = vmatpush.msra.mxu0 %v4082
    %4086 = vmatpush.msra.mxu0 %v4081
    %4087 = vmatpush.msra.mxu0 %v4080
    %4088 = vmatpush.msra.mxu0 %v4079
    %4089 = vmatpush.msra.mxu0 %v4078
    %4090 = vmatpush.msra.mxu0 %v4077
    %4091 = vmatpush.msra.mxu0 %v4076
    %4092 = vmatpush.msra.mxu0 %v4075
    %4093 = vmatpush.msra.mxu0 %v4074
    %4094 = vmatpush.msra.mxu0 %v4073
    %4095 = vmatpush.msra.mxu0 %v4072
    %4096 = vmatpush.msra.mxu0 %v4071
    %4097 = vmatpush.msra.mxu0 %v4070
    %4098 = vmatpush.msra.mxu0 %v4069
    %4099 = vmatpush.msra.mxu0 %v4068
    %4100 = vmatmul.f32.gmra.mxu0 %v4067
    %v4101 = vpop.f32.mrf.mxu0
    %v4102 = vadd.f32 0.0, %v4101
    %4103 = vdwg.mxu0
    %v4104 = vld [vmem:[#allocation13 + $0x80] sm:$0xff]
    %v4105 = vld [vmem:[#allocation13 + $0x88] sm:$0xff]
    %v4106 = vld [vmem:[#allocation13 + $0x90] sm:$0xff]
    %v4107 = vld [vmem:[#allocation13 + $0x98] sm:$0xff]
    %v4108 = vld [vmem:[#allocation13 + $0xa0] sm:$0xff]
    %v4109 = vld [vmem:[#allocation13 + $0xa8] sm:$0xff]
    %v4110 = vld [vmem:[#allocation13 + $0xb0] sm:$0xff]
    %v4111 = vld [vmem:[#allocation13 + $0xb8] sm:$0xff]
    %v4112 = vld [vmem:[#allocation13 + $0xc0] sm:$0xff]
    %v4113 = vld [vmem:[#allocation13 + $0xc8] sm:$0xff]
    %v4114 = vld [vmem:[#allocation13 + $0xd0] sm:$0xff]
    %v4115 = vld [vmem:[#allocation13 + $0xd8] sm:$0xff]
    %v4116 = vld [vmem:[#allocation13 + $0xe0] sm:$0xff]
    %v4117 = vld [vmem:[#allocation13 + $0xe8] sm:$0xff]
    %v4118 = vld [vmem:[#allocation13 + $0xf0] sm:$0xff]
    %v4119 = vld [vmem:[#allocation13 + $0xf8] sm:$0xff]
    %4120 = vmatpush.msra.mxu0 %v4119
    %4121 = vmatpush.msra.mxu0 %v4118
    %4122 = vmatpush.msra.mxu0 %v4117
    %4123 = vmatpush.msra.mxu0 %v4116
    %4124 = vmatpush.msra.mxu0 %v4115
    %4125 = vmatpush.msra.mxu0 %v4114
    %4126 = vmatpush.msra.mxu0 %v4113
    %4127 = vmatpush.msra.mxu0 %v4112
    %4128 = vmatpush.msra.mxu0 %v4111
    %4129 = vmatpush.msra.mxu0 %v4110
    %4130 = vmatpush.msra.mxu0 %v4109
    %4131 = vmatpush.msra.mxu0 %v4108
    %4132 = vmatpush.msra.mxu0 %v4107
    %4133 = vmatpush.msra.mxu0 %v4106
    %4134 = vmatpush.msra.mxu0 %v4105
    %4135 = vmatpush.msra.mxu0 %v4104
    %4136 = vmatmul.f32.gmra.mxu0 %v4102
    %v4137 = vpop.f32.mrf.mxu0
    %v4138 = vadd.f32 0.0, %v4137
    %4139 = vdwg.mxu0
    %4140 = vmatpush.msra.mxu0 %v4021
    %4141 = vmatpush.msra.mxu0 %v4020
    %4142 = vmatpush.msra.mxu0 %v4019
    %4143 = vmatpush.msra.mxu0 %v4018
    %4144 = vmatpush.msra.mxu0 %v4017
    %4145 = vmatpush.msra.mxu0 %v4016
    %4146 = vmatpush.msra.mxu0 %v4015
    %4147 = vmatpush.msra.mxu0 %v4014
    %4148 = vmatpush.msra.mxu0 %v4013
    %4149 = vmatpush.msra.mxu0 %v4012
    %4150 = vmatpush.msra.mxu0 %v4011
    %4151 = vmatpush.msra.mxu0 %v4010
    %4152 = vmatpush.msra.mxu0 %v4009
    %4153 = vmatpush.msra.mxu0 %v4008
    %4154 = vmatpush.msra.mxu0 %v4007
    %4155 = vmatpush.msra.mxu0 %v4006
    %4156 = vmatmul.f32.gmra.mxu0 %v3837
    %v4157 = vpop.f32.mrf.mxu0
    %v4158 = vadd.f32 %v4138, %v4157
    %4159 = vdwg.mxu0
    %v4160 = vld [vmem:[#allocation15] sm:$0x1]
    %v4161 = vadd.f32 %v4158, %v4160
    %v4162 = vmax.f32 %v4161, 0.0
    %v4163 = vld [vmem:[#allocation16] sm:$0xff]
    %v4164 = vld [vmem:[#allocation16 + $0x8] sm:$0xff]
    %v4165 = vld [vmem:[#allocation16 + $0x10] sm:$0xff]
    %v4166 = vld [vmem:[#allocation16 + $0x18] sm:$0xff]
    %v4167 = vld [vmem:[#allocation16 + $0x20] sm:$0xff]
    %v4168 = vld [vmem:[#allocation16 + $0x28] sm:$0xff]
    %v4169 = vld [vmem:[#allocation16 + $0x30] sm:$0xff]
    %v4170 = vld [vmem:[#allocation16 + $0x38] sm:$0xff]
    %v4171 = vld [vmem:[#allocation16 + $0x40] sm:$0xff]
    %v4172 = vld [vmem:[#allocation16 + $0x48] sm:$0xff]
    %v4173 = vld [vmem:[#allocation16 + $0x50] sm:$0xff]
    %v4174 = vld [vmem:[#allocation16 + $0x58] sm:$0xff]
    %v4175 = vld [vmem:[#allocation16 + $0x60] sm:$0xff]
    %v4176 = vld [vmem:[#allocation16 + $0x68] sm:$0xff]
    %v4177 = vld [vmem:[#allocation16 + $0x70] sm:$0xff]
    %v4178 = vld [vmem:[#allocation16 + $0x78] sm:$0xff]
    %v4179 = vld [vmem:[#allocation16 + $0x80] sm:$0xff]
    %v4180 = vld [vmem:[#allocation16 + $0x88] sm:$0xff]
    %v4181 = vld [vmem:[#allocation16 + $0x90] sm:$0xff]
    %v4182 = vld [vmem:[#allocation16 + $0x98] sm:$0xff]
    %v4183 = vld [vmem:[#allocation16 + $0xa0] sm:$0xff]
    %v4184 = vld [vmem:[#allocation16 + $0xa8] sm:$0xff]
    %v4185 = vld [vmem:[#allocation16 + $0xb0] sm:$0xff]
    %v4186 = vld [vmem:[#allocation16 + $0xb8] sm:$0xff]
    %v4187 = vld [vmem:[#allocation16 + $0xc0] sm:$0xff]
    %v4188 = vld [vmem:[#allocation16 + $0xc8] sm:$0xff]
    %v4189 = vld [vmem:[#allocation16 + $0xd0] sm:$0xff]
    %v4190 = vld [vmem:[#allocation16 + $0xd8] sm:$0xff]
    %v4191 = vld [vmem:[#allocation16 + $0xe0] sm:$0xff]
    %v4192 = vld [vmem:[#allocation16 + $0xe8] sm:$0xff]
    %v4193 = vld [vmem:[#allocation16 + $0xf0] sm:$0xff]
    %v4194 = vld [vmem:[#allocation16 + $0xf8] sm:$0xff]
    %v4195 = vld [vmem:[#allocation16 + $0x100] sm:$0xff]
    %v4196 = vld [vmem:[#allocation16 + $0x108] sm:$0xff]
    %v4197 = vld [vmem:[#allocation16 + $0x110] sm:$0xff]
    %v4198 = vld [vmem:[#allocation16 + $0x118] sm:$0xff]
    %v4199 = vld [vmem:[#allocation16 + $0x120] sm:$0xff]
    %v4200 = vld [vmem:[#allocation16 + $0x128] sm:$0xff]
    %v4201 = vld [vmem:[#allocation16 + $0x130] sm:$0xff]
    %v4202 = vld [vmem:[#allocation16 + $0x138] sm:$0xff]
    %v4203 = vld [vmem:[#allocation16 + $0x140] sm:$0xff]
    %v4204 = vld [vmem:[#allocation16 + $0x148] sm:$0xff]
    %v4205 = vld [vmem:[#allocation16 + $0x150] sm:$0xff]
    %v4206 = vld [vmem:[#allocation16 + $0x158] sm:$0xff]
    %v4207 = vld [vmem:[#allocation16 + $0x160] sm:$0xff]
    %v4208 = vld [vmem:[#allocation16 + $0x168] sm:$0xff]
    %v4209 = vld [vmem:[#allocation16 + $0x170] sm:$0xff]
    %v4210 = vld [vmem:[#allocation16 + $0x178] sm:$0xff]
    %v4211 = vld [vmem:[%s9] sm:$0x7]
    %v4213 = vperm.slane %v4211, 0
    %v4214 = vperm.slane %v4211, 1
    %v4215 = vperm.slane %v4211, 2
    %4219 = vmatpush.msra.mxu0 %v4208
    %4220 = vmatpush.msra.mxu0 %v4205
    %4221 = vmatpush.msra.mxu0 %v4202
    %4222 = vmatpush.msra.mxu0 %v4199
    %4223 = vmatpush.msra.mxu0 %v4196
    %4224 = vmatpush.msra.mxu0 %v4193
    %4225 = vmatpush.msra.mxu0 %v4190
    %4226 = vmatpush.msra.mxu0 %v4187
    %4227 = vmatpush.msra.mxu0 %v4184
    %4228 = vmatpush.msra.mxu0 %v4181
    %4229 = vmatpush.msra.mxu0 %v4178
    %4230 = vmatpush.msra.mxu0 %v4175
    %4231 = vmatpush.msra.mxu0 %v4172
    %4232 = vmatpush.msra.mxu0 %v4169
    %4233 = vmatpush.msra.mxu0 %v4166
    %4234 = vmatpush.msra.mxu0 %v4163
    %4235 = vmatmul.f32.gmra.mxu0 %v4162
    %v4236 = vpop.f32.mrf.mxu0
    %v4237 = vadd.f32 %v4213, %v4236
    %4238 = vdwg.mxu0
    %4239 = vmatpush.msra.mxu0 %v4209
    %4240 = vmatpush.msra.mxu0 %v4206
    %4241 = vmatpush.msra.mxu0 %v4203
    %4242 = vmatpush.msra.mxu0 %v4200
    %4243 = vmatpush.msra.mxu0 %v4197
    %4244 = vmatpush.msra.mxu0 %v4194
    %4245 = vmatpush.msra.mxu0 %v4191
    %4246 = vmatpush.msra.mxu0 %v4188
    %4247 = vmatpush.msra.mxu0 %v4185
    %4248 = vmatpush.msra.mxu0 %v4182
    %4249 = vmatpush.msra.mxu0 %v4179
    %4250 = vmatpush.msra.mxu0 %v4176
    %4251 = vmatpush.msra.mxu0 %v4173
    %4252 = vmatpush.msra.mxu0 %v4170
    %4253 = vmatpush.msra.mxu0 %v4167
    %4254 = vmatpush.msra.mxu0 %v4164
    %4255 = vmatmul.f32.gmra.mxu0 %v4162
    %v4256 = vpop.f32.mrf.mxu0
    %v4257 = vadd.f32 %v4214, %v4256
    %4258 = vdwg.mxu0
    %4259 = vmatpush.msra.mxu0 %v4210
    %4260 = vmatpush.msra.mxu0 %v4207
    %4261 = vmatpush.msra.mxu0 %v4204
    %4262 = vmatpush.msra.mxu0 %v4201
    %4263 = vmatpush.msra.mxu0 %v4198
    %4264 = vmatpush.msra.mxu0 %v4195
    %4265 = vmatpush.msra.mxu0 %v4192
    %4266 = vmatpush.msra.mxu0 %v4189
    %4267 = vmatpush.msra.mxu0 %v4186
    %4268 = vmatpush.msra.mxu0 %v4183
    %4269 = vmatpush.msra.mxu0 %v4180
    %4270 = vmatpush.msra.mxu0 %v4177
    %4271 = vmatpush.msra.mxu0 %v4174
    %4272 = vmatpush.msra.mxu0 %v4171
    %4273 = vmatpush.msra.mxu0 %v4168
    %4274 = vmatpush.msra.mxu0 %v4165
    %4275 = vmatmul.f32.gmra.mxu0 %v4162
    %v4276 = vpop.f32.mrf.mxu0
    %v4277 = vadd.f32 %v4215, %v4276
    %4278 = vdwg.mxu0
    %v4279 = vadd.f32 %v4237, %v3948
    %v4280 = vxor.u32 %v4279, 2147483648
    %v4281 = vmul.f32 %v4280, 1.442695
    %v4282 = vpow.pop %v4281
    %v4283 = vadd.f32 %v4282, 1.0
    %v4284 = vrcp.pop %v4283
    %v4285 = vmul.f32 %v4283, %v4284
    %v4286 = vsub.f32 1.0, %v4285
    %v4287 = vmul.f32 %v4284, %v4286
    %v4288 = vadd.f32 %v4284, %v4287
    %vm4289 = vweird.f32 %v4283
    %vm4290 = vweird.f32 %v4284
    %vm4291 = vmor %vm4289, %vm4290
    %v4292 = vsel %vm4291, %v4284, %v4288
    %v4293 = vand.u32 2147483647, %v4283
    %vm4294 = vcmp.eq.f32.partialorder %v4293, 8.507059e+37
    %v4295 = vand.u32 %v4283, 2147483648
    %v4296 = vor.u32 1.1754944e-38, %v4295
    %v4297 = vsel %vm4294, %v4296, %v4292
    %v4298 = vmul.f32 1.0, %v4297
    %v4299 = vadd.f32 %v4257, %v3968
    %v4300 = vxor.u32 %v4299, 2147483648
    %v4301 = vmul.f32 %v4300, 1.442695
    %v4302 = vpow.pop %v4301
    %v4303 = vadd.f32 %v4302, 1.0
    %v4304 = vrcp.pop %v4303
    %v4305 = vmul.f32 %v4303, %v4304
    %v4306 = vsub.f32 1.0, %v4305
    %v4307 = vmul.f32 %v4304, %v4306
    %v4308 = vadd.f32 %v4304, %v4307
    %vm4309 = vweird.f32 %v4303
    %vm4310 = vweird.f32 %v4304
    %vm4311 = vmor %vm4309, %vm4310
    %v4312 = vsel %vm4311, %v4304, %v4308
    %v4313 = vand.u32 2147483647, %v4303
    %vm4314 = vcmp.eq.f32.partialorder %v4313, 8.507059e+37
    %v4315 = vand.u32 %v4303, 2147483648
    %v4316 = vor.u32 1.1754944e-38, %v4315
    %v4317 = vsel %vm4314, %v4316, %v4312
    %v4318 = vmul.f32 1.0, %v4317
    %v4319 = vmul.f32 %v4298, %v3988
    %v4320 = vadd.f32 %v4277, %v4319
    %v4321 = vtanh.pop %v4320
    %v4322 = vsub.f32 1.0, %v4318
    %v4323 = vmul.f32 %v4322, %v4321
    %v4324 = vmul.f32 %v4318, %v3722
    %v4325 = vadd.f32 %v4323, %v4324
    %v4326 = vld [vmem:[#allocation19] sm:$0xff]
    %v4327 = vld [vmem:[#allocation19 + $0x8] sm:$0xff]
    %v4328 = vld [vmem:[#allocation19 + $0x10] sm:$0xff]
    %v4329 = vld [vmem:[#allocation19 + $0x18] sm:$0xff]
    %v4330 = vld [vmem:[#allocation19 + $0x20] sm:$0xff]
    %v4331 = vld [vmem:[#allocation19 + $0x28] sm:$0xff]
    %v4332 = vld [vmem:[#allocation19 + $0x30] sm:$0xff]
    %v4333 = vld [vmem:[#allocation19 + $0x38] sm:$0xff]
    %v4334 = vld [vmem:[#allocation19 + $0x40] sm:$0xff]
    %v4335 = vld [vmem:[#allocation19 + $0x48] sm:$0xff]
    %v4336 = vld [vmem:[#allocation19 + $0x50] sm:$0xff]
    %v4337 = vld [vmem:[#allocation19 + $0x58] sm:$0xff]
    %v4338 = vld [vmem:[#allocation19 + $0x60] sm:$0xff]
    %v4339 = vld [vmem:[#allocation19 + $0x68] sm:$0xff]
    %v4340 = vld [vmem:[#allocation19 + $0x70] sm:$0xff]
    %v4341 = vld [vmem:[#allocation19 + $0x78] sm:$0xff]
    %v4342 = vld [vmem:[#allocation19 + $0x80] sm:$0xff]
    %v4343 = vld [vmem:[#allocation19 + $0x88] sm:$0xff]
    %v4344 = vld [vmem:[#allocation19 + $0x90] sm:$0xff]
    %v4345 = vld [vmem:[#allocation19 + $0x98] sm:$0xff]
    %v4346 = vld [vmem:[#allocation19 + $0xa0] sm:$0xff]
    %v4347 = vld [vmem:[#allocation19 + $0xa8] sm:$0xff]
    %v4348 = vld [vmem:[#allocation19 + $0xb0] sm:$0xff]
    %v4349 = vld [vmem:[#allocation19 + $0xb8] sm:$0xff]
    %v4350 = vld [vmem:[#allocation19 + $0xc0] sm:$0xff]
    %v4351 = vld [vmem:[#allocation19 + $0xc8] sm:$0xff]
    %v4352 = vld [vmem:[#allocation19 + $0xd0] sm:$0xff]
    %v4353 = vld [vmem:[#allocation19 + $0xd8] sm:$0xff]
    %v4354 = vld [vmem:[#allocation19 + $0xe0] sm:$0xff]
    %v4355 = vld [vmem:[#allocation19 + $0xe8] sm:$0xff]
    %v4356 = vld [vmem:[#allocation19 + $0xf0] sm:$0xff]
    %v4357 = vld [vmem:[#allocation19 + $0xf8] sm:$0xff]
    %v4358 = vld [vmem:[%s13] sm:$0x3]
    %v4360 = vperm.slane %v4358, 0
    %v4361 = vperm.slane %v4358, 1
    %4364 = vmatpush.msra.mxu0 %v4356
    %4365 = vmatpush.msra.mxu0 %v4354
    %4366 = vmatpush.msra.mxu0 %v4352
    %4367 = vmatpush.msra.mxu0 %v4350
    %4368 = vmatpush.msra.mxu0 %v4348
    %4369 = vmatpush.msra.mxu0 %v4346
    %4370 = vmatpush.msra.mxu0 %v4344
    %4371 = vmatpush.msra.mxu0 %v4342
    %4372 = vmatpush.msra.mxu0 %v4340
    %4373 = vmatpush.msra.mxu0 %v4338
    %4374 = vmatpush.msra.mxu0 %v4336
    %4375 = vmatpush.msra.mxu0 %v4334
    %4376 = vmatpush.msra.mxu0 %v4332
    %4377 = vmatpush.msra.mxu0 %v4330
    %4378 = vmatpush.msra.mxu0 %v4328
    %4379 = vmatpush.msra.mxu0 %v4326
    %4380 = vmatmul.f32.gmra.mxu0 %v4325
    %v4381 = vpop.f32.mrf.mxu0
    %v4382 = vadd.f32 %v4360, %v4381
    %4383 = vdwg.mxu0
    %4384 = vmatpush.msra.mxu0 %v4357
    %4385 = vmatpush.msra.mxu0 %v4355
    %4386 = vmatpush.msra.mxu0 %v4353
    %4387 = vmatpush.msra.mxu0 %v4351
    %4388 = vmatpush.msra.mxu0 %v4349
    %4389 = vmatpush.msra.mxu0 %v4347
    %4390 = vmatpush.msra.mxu0 %v4345
    %4391 = vmatpush.msra.mxu0 %v4343
    %4392 = vmatpush.msra.mxu0 %v4341
    %4393 = vmatpush.msra.mxu0 %v4339
    %4394 = vmatpush.msra.mxu0 %v4337
    %4395 = vmatpush.msra.mxu0 %v4335
    %4396 = vmatpush.msra.mxu0 %v4333
    %4397 = vmatpush.msra.mxu0 %v4331
    %4398 = vmatpush.msra.mxu0 %v4329
    %4399 = vmatpush.msra.mxu0 %v4327
    %4400 = vmatmul.f32.gmra.mxu0 %v4325
    %v4401 = vpop.f32.mrf.mxu0
    %v4402 = vadd.f32 %v4361, %v4401
    %4403 = vdwg.mxu0
    %v4404 = vsel %vm422, %v4382, -inf
    %v4405 = vsel %vm422, %v4402, -inf
    %v4406 = vmax.f32 %v4404, %v4405
    %4407 = vmax.xlane.f32.xlu0 %v4406
    %v4408 = vpop.xlane.xlu0 %4407
    %v4409 = vsub.f32 %v4382, %v4408
    %v4410 = vsub.f32 %v4402, %v4408
    %v4411 = vmul.f32 %v4409, 1.442695
    %v4412 = vpow.pop %v4411
    %v4413 = vmul.f32 %v4410, 1.442695
    %v4414 = vpow.pop %v4413
    %v4415 = vsel %vm422, %v4412, 0.0
    %v4416 = vsel %vm422, %v4414, 0.0
    %v4417 = vadd.f32 %v4415, %v4416
    %4418 = vadd.xlane.f32.xlu0 %v4417
    %v4419 = vpop.xlane.xlu0 %4418
    %v4420 = vlog2.pop %v4419
    %v4421 = vmul.f32 %v4420, 0.6931472
    %v4422 = vadd.f32 %v4421, %v4408
    %v4423 = vsub.f32 %v4382, %v4422
    %v4424 = vsub.f32 %v4402, %v4422
    %v4427 = vrot.slane %v4424, 7
    %v4428 = vsel %vm422, %v4423, %v4427
    %s4430 = scalar_lea.vmem [#allocation21], 6
    %4431 = vst.msk [vmem:[%s4430] ss:$8 sm:$0x3] %vm812, %v4428
    %4432 = vst.msk [vmem:[%s4430] ss:$8 sm:$0x0] %vm812, %v4428
    %4433 = vst [vmem:[#allocation24 + $0x6] sm:$0x1] %v4067
    %s4434 = sld [smem:[#allocation3 + $0x7]]
    %p4435 = scmp.gt.s32.totalorder %s4434, 0
    %s4436 = scalar_select %p4435, %s4434, 0
    %p4437 = scmp.lt.s32.totalorder %s4436, 255
    %s4438 = scalar_select %p4437, %s4436, 255
    %s4439 = scalar_lea.vmem [#allocation4], %s4438
    %v4440 = vld [vmem:[%s4439] sm:$0x1]
    %v4441 = vld [vmem:[#allocation10 + $0x80] sm:$0xff]
    %v4442 = vld [vmem:[#allocation10 + $0x88] sm:$0xff]
    %v4443 = vld [vmem:[#allocation10 + $0x90] sm:$0xff]
    %v4444 = vld [vmem:[#allocation10 + $0x98] sm:$0xff]
    %v4445 = vld [vmem:[#allocation10 + $0xa0] sm:$0xff]
    %v4446 = vld [vmem:[#allocation10 + $0xa8] sm:$0xff]
    %v4447 = vld [vmem:[#allocation10 + $0xb0] sm:$0xff]
    %v4448 = vld [vmem:[#allocation10 + $0xb8] sm:$0xff]
    %v4449 = vld [vmem:[#allocation10 + $0xc0] sm:$0xff]
    %v4450 = vld [vmem:[#allocation10 + $0xc8] sm:$0xff]
    %v4451 = vld [vmem:[#allocation10 + $0xd0] sm:$0xff]
    %v4452 = vld [vmem:[#allocation10 + $0xd8] sm:$0xff]
    %v4453 = vld [vmem:[#allocation10 + $0xe0] sm:$0xff]
    %v4454 = vld [vmem:[#allocation10 + $0xe8] sm:$0xff]
    %v4455 = vld [vmem:[#allocation10 + $0xf0] sm:$0xff]
    %v4456 = vld [vmem:[#allocation10 + $0xf8] sm:$0xff]
    %4457 = vmatpush.msra.mxu0 %v4456
    %4458 = vmatpush.msra.mxu0 %v4455
    %4459 = vmatpush.msra.mxu0 %v4454
    %4460 = vmatpush.msra.mxu0 %v4453
    %4461 = vmatpush.msra.mxu0 %v4452
    %4462 = vmatpush.msra.mxu0 %v4451
    %4463 = vmatpush.msra.mxu0 %v4450
    %4464 = vmatpush.msra.mxu0 %v4449
    %4465 = vmatpush.msra.mxu0 %v4448
    %4466 = vmatpush.msra.mxu0 %v4447
    %4467 = vmatpush.msra.mxu0 %v4446
    %4468 = vmatpush.msra.mxu0 %v4445
    %4469 = vmatpush.msra.mxu0 %v4444
    %4470 = vmatpush.msra.mxu0 %v4443
    %4471 = vmatpush.msra.mxu0 %v4442
    %4472 = vmatpush.msra.mxu0 %v4441
    %4473 = vmatmul.f32.gmra.mxu0 %v4325
    %v4474 = vpop.f32.mrf.mxu0
    %v4475 = vadd.f32 0.0, %v4474
    %4476 = vdwg.mxu0
    %v4477 = vld [vmem:[#allocation18] sm:$0xff]
    %v4478 = vld [vmem:[#allocation18 + $0x8] sm:$0xff]
    %v4479 = vld [vmem:[#allocation18 + $0x10] sm:$0xff]
    %v4480 = vld [vmem:[#allocation18 + $0x18] sm:$0xff]
    %v4481 = vld [vmem:[#allocation18 + $0x20] sm:$0xff]
    %v4482 = vld [vmem:[#allocation18 + $0x28] sm:$0xff]
    %v4483 = vld [vmem:[#allocation18 + $0x30] sm:$0xff]
    %v4484 = vld [vmem:[#allocation18 + $0x38] sm:$0xff]
    %v4485 = vld [vmem:[#allocation18 + $0x40] sm:$0xff]
    %v4486 = vld [vmem:[#allocation18 + $0x48] sm:$0xff]
    %v4487 = vld [vmem:[#allocation18 + $0x50] sm:$0xff]
    %v4488 = vld [vmem:[#allocation18 + $0x58] sm:$0xff]
    %v4489 = vld [vmem:[#allocation18 + $0x60] sm:$0xff]
    %v4490 = vld [vmem:[#allocation18 + $0x68] sm:$0xff]
    %v4491 = vld [vmem:[#allocation18 + $0x70] sm:$0xff]
    %v4492 = vld [vmem:[#allocation18 + $0x78] sm:$0xff]
    %v4493 = vld [vmem:[#allocation18 + $0x80] sm:$0xff]
    %v4494 = vld [vmem:[#allocation18 + $0x88] sm:$0xff]
    %v4495 = vld [vmem:[#allocation18 + $0x90] sm:$0xff]
    %v4496 = vld [vmem:[#allocation18 + $0x98] sm:$0xff]
    %v4497 = vld [vmem:[#allocation18 + $0xa0] sm:$0xff]
    %v4498 = vld [vmem:[#allocation18 + $0xa8] sm:$0xff]
    %v4499 = vld [vmem:[#allocation18 + $0xb0] sm:$0xff]
    %v4500 = vld [vmem:[#allocation18 + $0xb8] sm:$0xff]
    %v4501 = vld [vmem:[#allocation18 + $0xc0] sm:$0xff]
    %v4502 = vld [vmem:[#allocation18 + $0xc8] sm:$0xff]
    %v4503 = vld [vmem:[#allocation18 + $0xd0] sm:$0xff]
    %v4504 = vld [vmem:[#allocation18 + $0xd8] sm:$0xff]
    %v4505 = vld [vmem:[#allocation18 + $0xe0] sm:$0xff]
    %v4506 = vld [vmem:[#allocation18 + $0xe8] sm:$0xff]
    %v4507 = vld [vmem:[#allocation18 + $0xf0] sm:$0xff]
    %v4508 = vld [vmem:[#allocation18 + $0xf8] sm:$0xff]
    %v4509 = vld [vmem:[#allocation18 + $0x100] sm:$0xff]
    %v4510 = vld [vmem:[#allocation18 + $0x108] sm:$0xff]
    %v4511 = vld [vmem:[#allocation18 + $0x110] sm:$0xff]
    %v4512 = vld [vmem:[#allocation18 + $0x118] sm:$0xff]
    %v4513 = vld [vmem:[#allocation18 + $0x120] sm:$0xff]
    %v4514 = vld [vmem:[#allocation18 + $0x128] sm:$0xff]
    %v4515 = vld [vmem:[#allocation18 + $0x130] sm:$0xff]
    %v4516 = vld [vmem:[#allocation18 + $0x138] sm:$0xff]
    %v4517 = vld [vmem:[#allocation18 + $0x140] sm:$0xff]
    %v4518 = vld [vmem:[#allocation18 + $0x148] sm:$0xff]
    %v4519 = vld [vmem:[#allocation18 + $0x150] sm:$0xff]
    %v4520 = vld [vmem:[#allocation18 + $0x158] sm:$0xff]
    %v4521 = vld [vmem:[#allocation18 + $0x160] sm:$0xff]
    %v4522 = vld [vmem:[#allocation18 + $0x168] sm:$0xff]
    %v4523 = vld [vmem:[#allocation18 + $0x170] sm:$0xff]
    %v4524 = vld [vmem:[#allocation18 + $0x178] sm:$0xff]
    %v4525 = vld [vmem:[%s11] sm:$0x7]
    %v4527 = vperm.slane %v4525, 0
    %v4528 = vperm.slane %v4525, 1
    %v4529 = vperm.slane %v4525, 2
    %4533 = vmatpush.msra.mxu0 %v4522
    %4534 = vmatpush.msra.mxu0 %v4519
    %4535 = vmatpush.msra.mxu0 %v4516
    %4536 = vmatpush.msra.mxu0 %v4513
    %4537 = vmatpush.msra.mxu0 %v4510
    %4538 = vmatpush.msra.mxu0 %v4507
    %4539 = vmatpush.msra.mxu0 %v4504
    %4540 = vmatpush.msra.mxu0 %v4501
    %4541 = vmatpush.msra.mxu0 %v4498
    %4542 = vmatpush.msra.mxu0 %v4495
    %4543 = vmatpush.msra.mxu0 %v4492
    %4544 = vmatpush.msra.mxu0 %v4489
    %4545 = vmatpush.msra.mxu0 %v4486
    %4546 = vmatpush.msra.mxu0 %v4483
    %4547 = vmatpush.msra.mxu0 %v4480
    %4548 = vmatpush.msra.mxu0 %v4477
    %4549 = vmatmul.f32.gmra.mxu0 %v4325
    %v4550 = vpop.f32.mrf.mxu0
    %v4551 = vadd.f32 %v4527, %v4550
    %4552 = vdwg.mxu0
    %4553 = vmatpush.msra.mxu0 %v4523
    %4554 = vmatpush.msra.mxu0 %v4520
    %4555 = vmatpush.msra.mxu0 %v4517
    %4556 = vmatpush.msra.mxu0 %v4514
    %4557 = vmatpush.msra.mxu0 %v4511
    %4558 = vmatpush.msra.mxu0 %v4508
    %4559 = vmatpush.msra.mxu0 %v4505
    %4560 = vmatpush.msra.mxu0 %v4502
    %4561 = vmatpush.msra.mxu0 %v4499
    %4562 = vmatpush.msra.mxu0 %v4496
    %4563 = vmatpush.msra.mxu0 %v4493
    %4564 = vmatpush.msra.mxu0 %v4490
    %4565 = vmatpush.msra.mxu0 %v4487
    %4566 = vmatpush.msra.mxu0 %v4484
    %4567 = vmatpush.msra.mxu0 %v4481
    %4568 = vmatpush.msra.mxu0 %v4478
    %4569 = vmatmul.f32.gmra.mxu0 %v4325
    %v4570 = vpop.f32.mrf.mxu0
    %v4571 = vadd.f32 %v4528, %v4570
    %4572 = vdwg.mxu0
    %4573 = vmatpush.msra.mxu0 %v4524
    %4574 = vmatpush.msra.mxu0 %v4521
    %4575 = vmatpush.msra.mxu0 %v4518
    %4576 = vmatpush.msra.mxu0 %v4515
    %4577 = vmatpush.msra.mxu0 %v4512
    %4578 = vmatpush.msra.mxu0 %v4509
    %4579 = vmatpush.msra.mxu0 %v4506
    %4580 = vmatpush.msra.mxu0 %v4503
    %4581 = vmatpush.msra.mxu0 %v4500
    %4582 = vmatpush.msra.mxu0 %v4497
    %4583 = vmatpush.msra.mxu0 %v4494
    %4584 = vmatpush.msra.mxu0 %v4491
    %4585 = vmatpush.msra.mxu0 %v4488
    %4586 = vmatpush.msra.mxu0 %v4485
    %4587 = vmatpush.msra.mxu0 %v4482
    %4588 = vmatpush.msra.mxu0 %v4479
    %4589 = vmatmul.f32.gmra.mxu0 %v4325
    %v4590 = vpop.f32.mrf.mxu0
    %v4591 = vadd.f32 %v4529, %v4590
    %4592 = vdwg.mxu0
    %v4593 = vld [vmem:[#allocation10] sm:$0xff]
    %v4594 = vld [vmem:[#allocation10 + $0x8] sm:$0xff]
    %v4595 = vld [vmem:[#allocation10 + $0x10] sm:$0xff]
    %v4596 = vld [vmem:[#allocation10 + $0x18] sm:$0xff]
    %v4597 = vld [vmem:[#allocation10 + $0x20] sm:$0xff]
    %v4598 = vld [vmem:[#allocation10 + $0x28] sm:$0xff]
    %v4599 = vld [vmem:[#allocation10 + $0x30] sm:$0xff]
    %v4600 = vld [vmem:[#allocation10 + $0x38] sm:$0xff]
    %v4601 = vld [vmem:[#allocation10 + $0x40] sm:$0xff]
    %v4602 = vld [vmem:[#allocation10 + $0x48] sm:$0xff]
    %v4603 = vld [vmem:[#allocation10 + $0x50] sm:$0xff]
    %v4604 = vld [vmem:[#allocation10 + $0x58] sm:$0xff]
    %v4605 = vld [vmem:[#allocation10 + $0x60] sm:$0xff]
    %v4606 = vld [vmem:[#allocation10 + $0x68] sm:$0xff]
    %v4607 = vld [vmem:[#allocation10 + $0x70] sm:$0xff]
    %v4608 = vld [vmem:[#allocation10 + $0x78] sm:$0xff]
    %v4609 = vld [vmem:[#allocation13] sm:$0xff]
    %v4610 = vld [vmem:[#allocation13 + $0x8] sm:$0xff]
    %v4611 = vld [vmem:[#allocation13 + $0x10] sm:$0xff]
    %v4612 = vld [vmem:[#allocation13 + $0x18] sm:$0xff]
    %v4613 = vld [vmem:[#allocation13 + $0x20] sm:$0xff]
    %v4614 = vld [vmem:[#allocation13 + $0x28] sm:$0xff]
    %v4615 = vld [vmem:[#allocation13 + $0x30] sm:$0xff]
    %v4616 = vld [vmem:[#allocation13 + $0x38] sm:$0xff]
    %v4617 = vld [vmem:[#allocation13 + $0x40] sm:$0xff]
    %v4618 = vld [vmem:[#allocation13 + $0x48] sm:$0xff]
    %v4619 = vld [vmem:[#allocation13 + $0x50] sm:$0xff]
    %v4620 = vld [vmem:[#allocation13 + $0x58] sm:$0xff]
    %v4621 = vld [vmem:[#allocation13 + $0x60] sm:$0xff]
    %v4622 = vld [vmem:[#allocation13 + $0x68] sm:$0xff]
    %v4623 = vld [vmem:[#allocation13 + $0x70] sm:$0xff]
    %v4624 = vld [vmem:[#allocation13 + $0x78] sm:$0xff]
    %4625 = vmatpush.msra.mxu0 %v4608
    %4626 = vmatpush.msra.mxu0 %v4607
    %4627 = vmatpush.msra.mxu0 %v4606
    %4628 = vmatpush.msra.mxu0 %v4605
    %4629 = vmatpush.msra.mxu0 %v4604
    %4630 = vmatpush.msra.mxu0 %v4603
    %4631 = vmatpush.msra.mxu0 %v4602
    %4632 = vmatpush.msra.mxu0 %v4601
    %4633 = vmatpush.msra.mxu0 %v4600
    %4634 = vmatpush.msra.mxu0 %v4599
    %4635 = vmatpush.msra.mxu0 %v4598
    %4636 = vmatpush.msra.mxu0 %v4597
    %4637 = vmatpush.msra.mxu0 %v4596
    %4638 = vmatpush.msra.mxu0 %v4595
    %4639 = vmatpush.msra.mxu0 %v4594
    %4640 = vmatpush.msra.mxu0 %v4593
    %4641 = vmatmul.f32.gmra.mxu0 %v4440
    %v4642 = vpop.f32.mrf.mxu0
    %v4643 = vadd.f32 %v4475, %v4642
    %4644 = vdwg.mxu0
    %v4645 = vld [vmem:[#allocation12] sm:$0x1]
    %v4646 = vadd.f32 %v4643, %v4645
    %v4647 = vsel %vm422, %v4646, -inf
    %4648 = vmax.xlane.f32.xlu0 %v4647
    %v4649 = vpop.xlane.xlu0 %4648
    %v4650 = vsub.f32 %v4646, %v4649
    %v4651 = vmul.f32 %v4650, 1.442695
    %v4652 = vpow.pop %v4651
    %v4653 = vsel %vm422, %v4652, 0.0
    %4654 = vadd.xlane.f32.xlu0 %v4653
    %v4655 = vpop.xlane.xlu0 %4654
    %v4656 = vrcp.pop %v4655
    %v4657 = vmul.f32 %v4655, %v4656
    %v4658 = vsub.f32 1.0, %v4657
    %v4659 = vmul.f32 %v4656, %v4658
    %v4660 = vadd.f32 %v4656, %v4659
    %vm4661 = vweird.f32 %v4655
    %vm4662 = vweird.f32 %v4656
    %vm4663 = vmor %vm4661, %vm4662
    %v4664 = vsel %vm4663, %v4656, %v4660
    %v4665 = vand.u32 2147483647, %v4655
    %vm4666 = vcmp.eq.f32.partialorder %v4665, 8.507059e+37
    %v4667 = vand.u32 %v4655, 2147483648
    %v4668 = vor.u32 1.1754944e-38, %v4667
    %v4669 = vsel %vm4666, %v4668, %v4664
    %v4670 = vmul.f32 %v4652, %v4669
    %v4671 = vld [vmem:[#allocation9] sm:$0xff]
    %v4672 = vld [vmem:[#allocation9 + $0x8] sm:$0xff]
    %v4673 = vld [vmem:[#allocation9 + $0x10] sm:$0xff]
    %v4674 = vld [vmem:[#allocation9 + $0x18] sm:$0xff]
    %v4675 = vld [vmem:[#allocation9 + $0x20] sm:$0xff]
    %v4676 = vld [vmem:[#allocation9 + $0x28] sm:$0xff]
    %v4677 = vld [vmem:[#allocation9 + $0x30] sm:$0xff]
    %v4678 = vld [vmem:[#allocation9 + $0x38] sm:$0xff]
    %v4679 = vld [vmem:[#allocation9 + $0x40] sm:$0xff]
    %v4680 = vld [vmem:[#allocation9 + $0x48] sm:$0xff]
    %v4681 = vld [vmem:[#allocation9 + $0x50] sm:$0xff]
    %v4682 = vld [vmem:[#allocation9 + $0x58] sm:$0xff]
    %v4683 = vld [vmem:[#allocation9 + $0x60] sm:$0xff]
    %v4684 = vld [vmem:[#allocation9 + $0x68] sm:$0xff]
    %v4685 = vld [vmem:[#allocation9 + $0x70] sm:$0xff]
    %v4686 = vld [vmem:[#allocation9 + $0x78] sm:$0xff]
    %4687 = vmatpush.msra.mxu0 %v4686
    %4688 = vmatpush.msra.mxu0 %v4685
    %4689 = vmatpush.msra.mxu0 %v4684
    %4690 = vmatpush.msra.mxu0 %v4683
    %4691 = vmatpush.msra.mxu0 %v4682
    %4692 = vmatpush.msra.mxu0 %v4681
    %4693 = vmatpush.msra.mxu0 %v4680
    %4694 = vmatpush.msra.mxu0 %v4679
    %4695 = vmatpush.msra.mxu0 %v4678
    %4696 = vmatpush.msra.mxu0 %v4677
    %4697 = vmatpush.msra.mxu0 %v4676
    %4698 = vmatpush.msra.mxu0 %v4675
    %4699 = vmatpush.msra.mxu0 %v4674
    %4700 = vmatpush.msra.mxu0 %v4673
    %4701 = vmatpush.msra.mxu0 %v4672
    %4702 = vmatpush.msra.mxu0 %v4671
    %4703 = vmatmul.f32.gmra.mxu0 %v4670
    %v4704 = vpop.f32.mrf.mxu0
    %v4705 = vadd.f32 0.0, %v4704
    %4706 = vdwg.mxu0
    %v4707 = vld [vmem:[#allocation13 + $0x80] sm:$0xff]
    %v4708 = vld [vmem:[#allocation13 + $0x88] sm:$0xff]
    %v4709 = vld [vmem:[#allocation13 + $0x90] sm:$0xff]
    %v4710 = vld [vmem:[#allocation13 + $0x98] sm:$0xff]
    %v4711 = vld [vmem:[#allocation13 + $0xa0] sm:$0xff]
    %v4712 = vld [vmem:[#allocation13 + $0xa8] sm:$0xff]
    %v4713 = vld [vmem:[#allocation13 + $0xb0] sm:$0xff]
    %v4714 = vld [vmem:[#allocation13 + $0xb8] sm:$0xff]
    %v4715 = vld [vmem:[#allocation13 + $0xc0] sm:$0xff]
    %v4716 = vld [vmem:[#allocation13 + $0xc8] sm:$0xff]
    %v4717 = vld [vmem:[#allocation13 + $0xd0] sm:$0xff]
    %v4718 = vld [vmem:[#allocation13 + $0xd8] sm:$0xff]
    %v4719 = vld [vmem:[#allocation13 + $0xe0] sm:$0xff]
    %v4720 = vld [vmem:[#allocation13 + $0xe8] sm:$0xff]
    %v4721 = vld [vmem:[#allocation13 + $0xf0] sm:$0xff]
    %v4722 = vld [vmem:[#allocation13 + $0xf8] sm:$0xff]
    %4723 = vmatpush.msra.mxu0 %v4722
    %4724 = vmatpush.msra.mxu0 %v4721
    %4725 = vmatpush.msra.mxu0 %v4720
    %4726 = vmatpush.msra.mxu0 %v4719
    %4727 = vmatpush.msra.mxu0 %v4718
    %4728 = vmatpush.msra.mxu0 %v4717
    %4729 = vmatpush.msra.mxu0 %v4716
    %4730 = vmatpush.msra.mxu0 %v4715
    %4731 = vmatpush.msra.mxu0 %v4714
    %4732 = vmatpush.msra.mxu0 %v4713
    %4733 = vmatpush.msra.mxu0 %v4712
    %4734 = vmatpush.msra.mxu0 %v4711
    %4735 = vmatpush.msra.mxu0 %v4710
    %4736 = vmatpush.msra.mxu0 %v4709
    %4737 = vmatpush.msra.mxu0 %v4708
    %4738 = vmatpush.msra.mxu0 %v4707
    %4739 = vmatmul.f32.gmra.mxu0 %v4705
    %v4740 = vpop.f32.mrf.mxu0
    %v4741 = vadd.f32 0.0, %v4740
    %4742 = vdwg.mxu0
    %4743 = vmatpush.msra.mxu0 %v4624
    %4744 = vmatpush.msra.mxu0 %v4623
    %4745 = vmatpush.msra.mxu0 %v4622
    %4746 = vmatpush.msra.mxu0 %v4621
    %4747 = vmatpush.msra.mxu0 %v4620
    %4748 = vmatpush.msra.mxu0 %v4619
    %4749 = vmatpush.msra.mxu0 %v4618
    %4750 = vmatpush.msra.mxu0 %v4617
    %4751 = vmatpush.msra.mxu0 %v4616
    %4752 = vmatpush.msra.mxu0 %v4615
    %4753 = vmatpush.msra.mxu0 %v4614
    %4754 = vmatpush.msra.mxu0 %v4613
    %4755 = vmatpush.msra.mxu0 %v4612
    %4756 = vmatpush.msra.mxu0 %v4611
    %4757 = vmatpush.msra.mxu0 %v4610
    %4758 = vmatpush.msra.mxu0 %v4609
    %4759 = vmatmul.f32.gmra.mxu0 %v4440
    %v4760 = vpop.f32.mrf.mxu0
    %v4761 = vadd.f32 %v4741, %v4760
    %4762 = vdwg.mxu0
    %v4763 = vld [vmem:[#allocation15] sm:$0x1]
    %v4764 = vadd.f32 %v4761, %v4763
    %v4765 = vmax.f32 %v4764, 0.0
    %v4766 = vld [vmem:[#allocation16] sm:$0xff]
    %v4767 = vld [vmem:[#allocation16 + $0x8] sm:$0xff]
    %v4768 = vld [vmem:[#allocation16 + $0x10] sm:$0xff]
    %v4769 = vld [vmem:[#allocation16 + $0x18] sm:$0xff]
    %v4770 = vld [vmem:[#allocation16 + $0x20] sm:$0xff]
    %v4771 = vld [vmem:[#allocation16 + $0x28] sm:$0xff]
    %v4772 = vld [vmem:[#allocation16 + $0x30] sm:$0xff]
    %v4773 = vld [vmem:[#allocation16 + $0x38] sm:$0xff]
    %v4774 = vld [vmem:[#allocation16 + $0x40] sm:$0xff]
    %v4775 = vld [vmem:[#allocation16 + $0x48] sm:$0xff]
    %v4776 = vld [vmem:[#allocation16 + $0x50] sm:$0xff]
    %v4777 = vld [vmem:[#allocation16 + $0x58] sm:$0xff]
    %v4778 = vld [vmem:[#allocation16 + $0x60] sm:$0xff]
    %v4779 = vld [vmem:[#allocation16 + $0x68] sm:$0xff]
    %v4780 = vld [vmem:[#allocation16 + $0x70] sm:$0xff]
    %v4781 = vld [vmem:[#allocation16 + $0x78] sm:$0xff]
    %v4782 = vld [vmem:[#allocation16 + $0x80] sm:$0xff]
    %v4783 = vld [vmem:[#allocation16 + $0x88] sm:$0xff]
    %v4784 = vld [vmem:[#allocation16 + $0x90] sm:$0xff]
    %v4785 = vld [vmem:[#allocation16 + $0x98] sm:$0xff]
    %v4786 = vld [vmem:[#allocation16 + $0xa0] sm:$0xff]
    %v4787 = vld [vmem:[#allocation16 + $0xa8] sm:$0xff]
    %v4788 = vld [vmem:[#allocation16 + $0xb0] sm:$0xff]
    %v4789 = vld [vmem:[#allocation16 + $0xb8] sm:$0xff]
    %v4790 = vld [vmem:[#allocation16 + $0xc0] sm:$0xff]
    %v4791 = vld [vmem:[#allocation16 + $0xc8] sm:$0xff]
    %v4792 = vld [vmem:[#allocation16 + $0xd0] sm:$0xff]
    %v4793 = vld [vmem:[#allocation16 + $0xd8] sm:$0xff]
    %v4794 = vld [vmem:[#allocation16 + $0xe0] sm:$0xff]
    %v4795 = vld [vmem:[#allocation16 + $0xe8] sm:$0xff]
    %v4796 = vld [vmem:[#allocation16 + $0xf0] sm:$0xff]
    %v4797 = vld [vmem:[#allocation16 + $0xf8] sm:$0xff]
    %v4798 = vld [vmem:[#allocation16 + $0x100] sm:$0xff]
    %v4799 = vld [vmem:[#allocation16 + $0x108] sm:$0xff]
    %v4800 = vld [vmem:[#allocation16 + $0x110] sm:$0xff]
    %v4801 = vld [vmem:[#allocation16 + $0x118] sm:$0xff]
    %v4802 = vld [vmem:[#allocation16 + $0x120] sm:$0xff]
    %v4803 = vld [vmem:[#allocation16 + $0x128] sm:$0xff]
    %v4804 = vld [vmem:[#allocation16 + $0x130] sm:$0xff]
    %v4805 = vld [vmem:[#allocation16 + $0x138] sm:$0xff]
    %v4806 = vld [vmem:[#allocation16 + $0x140] sm:$0xff]
    %v4807 = vld [vmem:[#allocation16 + $0x148] sm:$0xff]
    %v4808 = vld [vmem:[#allocation16 + $0x150] sm:$0xff]
    %v4809 = vld [vmem:[#allocation16 + $0x158] sm:$0xff]
    %v4810 = vld [vmem:[#allocation16 + $0x160] sm:$0xff]
    %v4811 = vld [vmem:[#allocation16 + $0x168] sm:$0xff]
    %v4812 = vld [vmem:[#allocation16 + $0x170] sm:$0xff]
    %v4813 = vld [vmem:[#allocation16 + $0x178] sm:$0xff]
    %v4814 = vld [vmem:[%s9] sm:$0x7]
    %v4816 = vperm.slane %v4814, 0
    %v4817 = vperm.slane %v4814, 1
    %v4818 = vperm.slane %v4814, 2
    %4822 = vmatpush.msra.mxu0 %v4811
    %4823 = vmatpush.msra.mxu0 %v4808
    %4824 = vmatpush.msra.mxu0 %v4805
    %4825 = vmatpush.msra.mxu0 %v4802
    %4826 = vmatpush.msra.mxu0 %v4799
    %4827 = vmatpush.msra.mxu0 %v4796
    %4828 = vmatpush.msra.mxu0 %v4793
    %4829 = vmatpush.msra.mxu0 %v4790
    %4830 = vmatpush.msra.mxu0 %v4787
    %4831 = vmatpush.msra.mxu0 %v4784
    %4832 = vmatpush.msra.mxu0 %v4781
    %4833 = vmatpush.msra.mxu0 %v4778
    %4834 = vmatpush.msra.mxu0 %v4775
    %4835 = vmatpush.msra.mxu0 %v4772
    %4836 = vmatpush.msra.mxu0 %v4769
    %4837 = vmatpush.msra.mxu0 %v4766
    %4838 = vmatmul.f32.gmra.mxu0 %v4765
    %v4839 = vpop.f32.mrf.mxu0
    %v4840 = vadd.f32 %v4816, %v4839
    %4841 = vdwg.mxu0
    %4842 = vmatpush.msra.mxu0 %v4812
    %4843 = vmatpush.msra.mxu0 %v4809
    %4844 = vmatpush.msra.mxu0 %v4806
    %4845 = vmatpush.msra.mxu0 %v4803
    %4846 = vmatpush.msra.mxu0 %v4800
    %4847 = vmatpush.msra.mxu0 %v4797
    %4848 = vmatpush.msra.mxu0 %v4794
    %4849 = vmatpush.msra.mxu0 %v4791
    %4850 = vmatpush.msra.mxu0 %v4788
    %4851 = vmatpush.msra.mxu0 %v4785
    %4852 = vmatpush.msra.mxu0 %v4782
    %4853 = vmatpush.msra.mxu0 %v4779
    %4854 = vmatpush.msra.mxu0 %v4776
    %4855 = vmatpush.msra.mxu0 %v4773
    %4856 = vmatpush.msra.mxu0 %v4770
    %4857 = vmatpush.msra.mxu0 %v4767
    %4858 = vmatmul.f32.gmra.mxu0 %v4765
    %v4859 = vpop.f32.mrf.mxu0
    %v4860 = vadd.f32 %v4817, %v4859
    %4861 = vdwg.mxu0
    %4862 = vmatpush.msra.mxu0 %v4813
    %4863 = vmatpush.msra.mxu0 %v4810
    %4864 = vmatpush.msra.mxu0 %v4807
    %4865 = vmatpush.msra.mxu0 %v4804
    %4866 = vmatpush.msra.mxu0 %v4801
    %4867 = vmatpush.msra.mxu0 %v4798
    %4868 = vmatpush.msra.mxu0 %v4795
    %4869 = vmatpush.msra.mxu0 %v4792
    %4870 = vmatpush.msra.mxu0 %v4789
    %4871 = vmatpush.msra.mxu0 %v4786
    %4872 = vmatpush.msra.mxu0 %v4783
    %4873 = vmatpush.msra.mxu0 %v4780
    %4874 = vmatpush.msra.mxu0 %v4777
    %4875 = vmatpush.msra.mxu0 %v4774
    %4876 = vmatpush.msra.mxu0 %v4771
    %4877 = vmatpush.msra.mxu0 %v4768
    %4878 = vmatmul.f32.gmra.mxu0 %v4765
    %v4879 = vpop.f32.mrf.mxu0
    %v4880 = vadd.f32 %v4818, %v4879
    %4881 = vdwg.mxu0
    %v4882 = vadd.f32 %v4840, %v4551
    %v4883 = vxor.u32 %v4882, 2147483648
    %v4884 = vmul.f32 %v4883, 1.442695
    %v4885 = vpow.pop %v4884
    %v4886 = vadd.f32 %v4885, 1.0
    %v4887 = vrcp.pop %v4886
    %v4888 = vmul.f32 %v4886, %v4887
    %v4889 = vsub.f32 1.0, %v4888
    %v4890 = vmul.f32 %v4887, %v4889
    %v4891 = vadd.f32 %v4887, %v4890
    %vm4892 = vweird.f32 %v4886
    %vm4893 = vweird.f32 %v4887
    %vm4894 = vmor %vm4892, %vm4893
    %v4895 = vsel %vm4894, %v4887, %v4891
    %v4896 = vand.u32 2147483647, %v4886
    %vm4897 = vcmp.eq.f32.partialorder %v4896, 8.507059e+37
    %v4898 = vand.u32 %v4886, 2147483648
    %v4899 = vor.u32 1.1754944e-38, %v4898
    %v4900 = vsel %vm4897, %v4899, %v4895
    %v4901 = vmul.f32 1.0, %v4900
    %v4902 = vadd.f32 %v4860, %v4571
    %v4903 = vxor.u32 %v4902, 2147483648
    %v4904 = vmul.f32 %v4903, 1.442695
    %v4905 = vpow.pop %v4904
    %v4906 = vadd.f32 %v4905, 1.0
    %v4907 = vrcp.pop %v4906
    %v4908 = vmul.f32 %v4906, %v4907
    %v4909 = vsub.f32 1.0, %v4908
    %v4910 = vmul.f32 %v4907, %v4909
    %v4911 = vadd.f32 %v4907, %v4910
    %vm4912 = vweird.f32 %v4906
    %vm4913 = vweird.f32 %v4907
    %vm4914 = vmor %vm4912, %vm4913
    %v4915 = vsel %vm4914, %v4907, %v4911
    %v4916 = vand.u32 2147483647, %v4906
    %vm4917 = vcmp.eq.f32.partialorder %v4916, 8.507059e+37
    %v4918 = vand.u32 %v4906, 2147483648
    %v4919 = vor.u32 1.1754944e-38, %v4918
    %v4920 = vsel %vm4917, %v4919, %v4915
    %v4921 = vmul.f32 1.0, %v4920
    %v4922 = vmul.f32 %v4901, %v4591
    %v4923 = vadd.f32 %v4880, %v4922
    %v4924 = vtanh.pop %v4923
    %v4925 = vsub.f32 1.0, %v4921
    %v4926 = vmul.f32 %v4925, %v4924
    %v4927 = vmul.f32 %v4921, %v4325
    %v4928 = vadd.f32 %v4926, %v4927
    %v4929 = vld [vmem:[#allocation19] sm:$0xff]
    %v4930 = vld [vmem:[#allocation19 + $0x8] sm:$0xff]
    %v4931 = vld [vmem:[#allocation19 + $0x10] sm:$0xff]
    %v4932 = vld [vmem:[#allocation19 + $0x18] sm:$0xff]
    %v4933 = vld [vmem:[#allocation19 + $0x20] sm:$0xff]
    %v4934 = vld [vmem:[#allocation19 + $0x28] sm:$0xff]
    %v4935 = vld [vmem:[#allocation19 + $0x30] sm:$0xff]
    %v4936 = vld [vmem:[#allocation19 + $0x38] sm:$0xff]
    %v4937 = vld [vmem:[#allocation19 + $0x40] sm:$0xff]
    %v4938 = vld [vmem:[#allocation19 + $0x48] sm:$0xff]
    %v4939 = vld [vmem:[#allocation19 + $0x50] sm:$0xff]
    %v4940 = vld [vmem:[#allocation19 + $0x58] sm:$0xff]
    %v4941 = vld [vmem:[#allocation19 + $0x60] sm:$0xff]
    %v4942 = vld [vmem:[#allocation19 + $0x68] sm:$0xff]
    %v4943 = vld [vmem:[#allocation19 + $0x70] sm:$0xff]
    %v4944 = vld [vmem:[#allocation19 + $0x78] sm:$0xff]
    %v4945 = vld [vmem:[#allocation19 + $0x80] sm:$0xff]
    %v4946 = vld [vmem:[#allocation19 + $0x88] sm:$0xff]
    %v4947 = vld [vmem:[#allocation19 + $0x90] sm:$0xff]
    %v4948 = vld [vmem:[#allocation19 + $0x98] sm:$0xff]
    %v4949 = vld [vmem:[#allocation19 + $0xa0] sm:$0xff]
    %v4950 = vld [vmem:[#allocation19 + $0xa8] sm:$0xff]
    %v4951 = vld [vmem:[#allocation19 + $0xb0] sm:$0xff]
    %v4952 = vld [vmem:[#allocation19 + $0xb8] sm:$0xff]
    %v4953 = vld [vmem:[#allocation19 + $0xc0] sm:$0xff]
    %v4954 = vld [vmem:[#allocation19 + $0xc8] sm:$0xff]
    %v4955 = vld [vmem:[#allocation19 + $0xd0] sm:$0xff]
    %v4956 = vld [vmem:[#allocation19 + $0xd8] sm:$0xff]
    %v4957 = vld [vmem:[#allocation19 + $0xe0] sm:$0xff]
    %v4958 = vld [vmem:[#allocation19 + $0xe8] sm:$0xff]
    %v4959 = vld [vmem:[#allocation19 + $0xf0] sm:$0xff]
    %v4960 = vld [vmem:[#allocation19 + $0xf8] sm:$0xff]
    %v4961 = vld [vmem:[%s13] sm:$0x3]
    %v4963 = vperm.slane %v4961, 0
    %v4964 = vperm.slane %v4961, 1
    %4967 = vmatpush.msra.mxu0 %v4959
    %4968 = vmatpush.msra.mxu0 %v4957
    %4969 = vmatpush.msra.mxu0 %v4955
    %4970 = vmatpush.msra.mxu0 %v4953
    %4971 = vmatpush.msra.mxu0 %v4951
    %4972 = vmatpush.msra.mxu0 %v4949
    %4973 = vmatpush.msra.mxu0 %v4947
    %4974 = vmatpush.msra.mxu0 %v4945
    %4975 = vmatpush.msra.mxu0 %v4943
    %4976 = vmatpush.msra.mxu0 %v4941
    %4977 = vmatpush.msra.mxu0 %v4939
    %4978 = vmatpush.msra.mxu0 %v4937
    %4979 = vmatpush.msra.mxu0 %v4935
    %4980 = vmatpush.msra.mxu0 %v4933
    %4981 = vmatpush.msra.mxu0 %v4931
    %4982 = vmatpush.msra.mxu0 %v4929
    %4983 = vmatmul.f32.gmra.mxu0 %v4928
    %v4984 = vpop.f32.mrf.mxu0
    %v4985 = vadd.f32 %v4963, %v4984
    %4986 = vdwg.mxu0
    %4987 = vmatpush.msra.mxu0 %v4960
    %4988 = vmatpush.msra.mxu0 %v4958
    %4989 = vmatpush.msra.mxu0 %v4956
    %4990 = vmatpush.msra.mxu0 %v4954
    %4991 = vmatpush.msra.mxu0 %v4952
    %4992 = vmatpush.msra.mxu0 %v4950
    %4993 = vmatpush.msra.mxu0 %v4948
    %4994 = vmatpush.msra.mxu0 %v4946
    %4995 = vmatpush.msra.mxu0 %v4944
    %4996 = vmatpush.msra.mxu0 %v4942
    %4997 = vmatpush.msra.mxu0 %v4940
    %4998 = vmatpush.msra.mxu0 %v4938
    %4999 = vmatpush.msra.mxu0 %v4936
    %5000 = vmatpush.msra.mxu0 %v4934
    %5001 = vmatpush.msra.mxu0 %v4932
    %5002 = vmatpush.msra.mxu0 %v4930
    %5003 = vmatmul.f32.gmra.mxu0 %v4928
    %v5004 = vpop.f32.mrf.mxu0
    %v5005 = vadd.f32 %v4964, %v5004
    %5006 = vdwg.mxu0
    %v5007 = vsel %vm422, %v4985, -inf
    %v5008 = vsel %vm422, %v5005, -inf
    %v5009 = vmax.f32 %v5007, %v5008
    %5010 = vmax.xlane.f32.xlu0 %v5009
    %v5011 = vpop.xlane.xlu0 %5010
    %v5012 = vsub.f32 %v4985, %v5011
    %v5013 = vsub.f32 %v5005, %v5011
    %v5014 = vmul.f32 %v5012, 1.442695
    %v5015 = vpow.pop %v5014
    %v5016 = vmul.f32 %v5013, 1.442695
    %v5017 = vpow.pop %v5016
    %v5018 = vsel %vm422, %v5015, 0.0
    %v5019 = vsel %vm422, %v5017, 0.0
    %v5020 = vadd.f32 %v5018, %v5019
    %5021 = vadd.xlane.f32.xlu0 %v5020
    %v5022 = vpop.xlane.xlu0 %5021
    %v5023 = vlog2.pop %v5022
    %v5024 = vmul.f32 %v5023, 0.6931472
    %v5025 = vadd.f32 %v5024, %v5011
    %v5026 = vsub.f32 %v4985, %v5025
    %v5027 = vsub.f32 %v5005, %v5025
    %v5030 = vrot.slane %v5027, 7
    %v5031 = vsel %vm422, %v5026, %v5030
    %s5033 = scalar_lea.vmem [#allocation21], 7
    %5034 = vst.msk [vmem:[%s5033] ss:$8 sm:$0x3] %vm812, %v5031
    %5035 = vst.msk [vmem:[%s5033] ss:$8 sm:$0x0] %vm812, %v5031
    %5036 = vst [vmem:[#allocation24 + $0x7] sm:$0x1] %v4670
    %5037 = vst [vmem:[#allocation22] sm:$0x1] %v4928
    // Predicated region
    $region94: #{tpu_custom_call.1} parent=1 // pred_check
      _
    $region95: #{tpu_custom_call.1} parent=1 // pred_check_branch
      %5039 = sbr.rel (0) target = $region97
    $region96: #{tpu_custom_call.1} parent=1 // pred_region
      %5041 = vsyncadd [#allocation6], 0
      %s5043 = sshll.u32 [#allocation21], 4
      %s5044 = int_to_ptr.vmem [resolvable:$true] %s5043
      %s5045 = sshll.u32 %s14, 4
      %s5046 = int_to_ptr.hbm [resolvable:$true] %s5045
      %5048 = dma.vmem_to_hbm [thread:$0]  %s5044, 256, %s5046, [#allocation6]
    $region97: #{tpu_custom_call.1} parent=1 // pred_fallthru
      _
    // Predicated region
    $region98: #{tpu_custom_call.1} parent=1 // pred_check
      _
    $region99: #{tpu_custom_call.1} parent=1 // pred_check_branch
      %5050 = sbr.rel (0) target = $region101
    $region100: #{tpu_custom_call.1} parent=1 // pred_region
      %5052 = vsyncadd [#allocation23], 0
      %s5054 = sshll.u32 [#allocation22], 4
      %s5055 = int_to_ptr.vmem [resolvable:$true] %s5054
      %s5056 = sshll.u32 %s15, 4
      %s5057 = int_to_ptr.hbm [resolvable:$true] %s5056
      %5059 = dma.vmem_to_hbm [thread:$0]  %s5055, 16, %s5057, [#allocation23]
    $region101: #{tpu_custom_call.1} parent=1 // pred_fallthru
      _
    // Predicated region
    $region102: #{tpu_custom_call.1} parent=1 // pred_check
      _
    $region103: #{tpu_custom_call.1} parent=1 // pred_check_branch
      %5061 = sbr.rel (0) target = $region105
    $region104: #{tpu_custom_call.1} parent=1 // pred_region
      %5063 = vsyncadd [#allocation23], 0
      %s5065 = sshll.u32 [#allocation24], 4
      %s5066 = int_to_ptr.vmem [resolvable:$true] %s5065
      %s5067 = sshll.u32 %s16, 4
      %s5068 = int_to_ptr.hbm [resolvable:$true] %s5067
      %5070 = dma.vmem_to_hbm [thread:$0]  %s5066, 128, %s5068, [#allocation23]
    $region105: #{tpu_custom_call.1} parent=1 // pred_fallthru
      _
    // Predicated region
    $region106: #{tpu_custom_call.1} parent=1 // pred_check
      _
    $region107: #{tpu_custom_call.1} parent=1 // pred_check_branch
      %5072 = sbr.rel (0) target = $region109
    $region108: #{tpu_custom_call.1} parent=1 // pred_region
      %5074 = dma.done [#allocation6], 256
    $region109: #{tpu_custom_call.1} parent=1 // pred_fallthru
      _
    // Predicated region
    $region110: #{tpu_custom_call.1} parent=1 // pred_check
      _
    $region111: #{tpu_custom_call.1} parent=1 // pred_check_branch
      %5076 = sbr.rel (0) target = $region113
    $region112: #{tpu_custom_call.1} parent=1 // pred_region
      %5078 = dma.done [#allocation23], 16
    $region113: #{tpu_custom_call.1} parent=1 // pred_fallthru
      _
    // Predicated region
    $region114: #{tpu_custom_call.1} parent=1 // pred_check
      _
    $region115: #{tpu_custom_call.1} parent=1 // pred_check_branch
      %5080 = sbr.rel (0) target = $region117
    $region116: #{tpu_custom_call.1} parent=1 // pred_region
      %5082 = dma.done [#allocation23], 128
    $region117: #{tpu_custom_call.1} parent=1 // pred_fallthru
      _
    %5083 = vsyncpa [#allocation5], 1
    %5084 = vsyncpa [#allocation8], 1
    %5085 = vsyncpa [#allocation11], 1
    %5086 = vsyncpa [#allocation14], 1
    %5087 = vsyncpa [#allocation17], 1
    %5088 = vsyncpa [#allocation20], 1
    %5089 = vsyncpa [#allocation6], 1
    %5090 = vsyncpa [#allocation23], 1

</llo_original>
